<compile_context>
chip_gen: v5e
topology: v5e:2x2
jax: 0.10.0
libtpu: 0.0.40
codegen_flags: <defaults>
</compile_context>

<pallas_src>
import numpy as np
import jax
import jax.numpy as jnp
from jax.experimental import pallas as pl
from jax.experimental.pallas import tpu as pltpu

_LANES = 128  # TPU vreg lane width


def _embedding_kernel(x_ref, sel_ref, phase_ref, o_ref):
    # x_ref:     (tile_rows, 128)          128 consecutive input scalars / row
    # sel_ref:   (128, 128*channels)       constant selection/frequency matrix
    # phase_ref: (1, 128*channels)         0 for sin lanes, pi/2 for cos lanes
    # o_ref:     (tile_rows, 128*channels) lane-dense output rows
    t = jnp.dot(x_ref[...], sel_ref[...],
                preferred_element_type=jnp.float32,
                precision=jax.lax.Precision.HIGHEST)
    o_ref[...] = jnp.sin(t + phase_ref[...]).astype(o_ref.dtype)


def _round_up(a, b):
    return (a + b - 1) // b * b


def embedding_forward(x, channels, scale=10, *,
                      max_out_block_bytes=8 * 1024 * 1024,
                      out_dtype=jnp.float32):
    """Pallas port of Embedding.forward. `scale` is unused (matches PyTorch)."""
    del scale  # stored by the module but never used in the reference forward
    assert channels % 2 == 0, "channels must be even"
    chalf = channels // 2
    # 2**(chalf-1) must be representable in float32 (same limit as the ref).
    assert chalf <= 128, "channels too large for float32 2**k coefficients"
    width = _LANES * channels  # output row width, always a multiple of 128

    x = jnp.asarray(x, jnp.float32)
    orig_shape = x.shape
    n = int(np.prod(orig_shape))
    rows = -(-n // _LANES)

    # ---- tile sizing -------------------------------------------------------
    out_itemsize = jnp.dtype(out_dtype).itemsize
    tile_rows = max(8, (max_out_block_bytes // (width * out_itemsize)) // 8 * 8)
    tile_rows = min(tile_rows, _round_up(rows, 8))   # don't over-pad tiny inputs
    if rows > 8 and tile_rows >= rows:
        # Guarantee >= 2 grid steps so v7x can shard the parallel axis across
        # both TensorCores (no effect on single-TC v5e/v6e).
        tile_rows = max(8, _round_up(-(-rows // 2), 8))
    rows_pad = _round_up(rows, tile_rows)
    n_pad = rows_pad * _LANES
    grid = rows_pad // tile_rows

    # ---- inputs ------------------------------------------------------------
    x_flat = x.reshape(-1)
    if n_pad != n:
        x_flat = jnp.pad(x_flat, (0, n_pad - n))
    x2d = x_flat.reshape(rows_pad, _LANES)

    # Constant selection/frequency matrix: sel[j, j*C + k] = 2**(k % C/2).
    coef = (2.0 ** np.arange(chalf, dtype=np.float32)).astype(np.float32)
    row = np.concatenate([coef, coef]).astype(np.float32)              # (C,)
    sel = np.kron(np.eye(_LANES, dtype=np.float32),
                  row[None, :]).astype(np.float32)                     # (128, width)
    phase = np.tile(
        np.concatenate([np.zeros(chalf, np.float32),
                        np.full(chalf, np.pi / 2.0, np.float32)]),
        _LANES).reshape(1, width).astype(np.float32)                   # (1, width)
    sel = jnp.asarray(sel)
    phase = jnp.asarray(phase)

    # ---- VMEM budget (double-buffered blocks + constants + matmul temp) ----
    out_block = tile_rows * width * out_itemsize
    in_block = tile_rows * _LANES * 4
    const_bytes = (_LANES * width + 8 * width) * 4
    vmem_limit = 2 * (out_block + in_block) + 2 * const_bytes \
        + tile_rows * width * 4 + (8 << 20)

    out2d = pl.pallas_call(
        _embedding_kernel,
        out_shape=jax.ShapeDtypeStruct((rows_pad, width), out_dtype),
        grid=(grid,),
        in_specs=[
            pl.BlockSpec((tile_rows, _LANES), lambda i: (i, 0)),
            pl.BlockSpec((_LANES, width), lambda i: (0, 0)),   # fetched once
            pl.BlockSpec((1, width), lambda i: (0, 0)),        # fetched once
        ],
        out_specs=pl.BlockSpec((tile_rows, width), lambda i: (i, 0)),
        compiler_params=pltpu.CompilerParams(
            dimension_semantics=("parallel",),
            vmem_limit_bytes=int(vmem_limit)),
    )(x2d, sel, phase)

    # Row-major (rows_pad, 128*C) is byte-identical to flat (n_pad, C).
    out_flat = out2d.reshape(n_pad * channels)
    if n_pad != n:
        out_flat = out_flat[: n * channels]
    return out_flat.reshape(*orig_shape[:-1], orig_shape[-1] * channels)


def embedding_ref(x, channels):
    """Pure-JAX reference (mirrors the PyTorch forward)."""
    chalf = channels // 2
    coef = 2.0 ** jnp.arange(chalf, dtype=jnp.float32)
    ev = x[..., None].astype(jnp.float32) * coef                  # (..., D, C/2)
    emb = jnp.concatenate([jnp.sin(ev), jnp.cos(ev)], axis=-1)    # (..., D, C)
    return emb.reshape(*emb.shape[:-2], -1)


if __name__ == "__main__":
    key = jax.random.PRNGKey(0)
    channels = 16                                   # channels // 2 = 8 bands

    # Main case: 2048 scalars -> 16 lane-dense rows, 2-step parallel grid.
    x = jax.random.normal(key, (2, 4, 16, 16), dtype=jnp.float32)
    out = jax.block_until_ready(embedding_forward(x, channels))
    ref = embedding_ref(x, channels)
    assert out.shape == (2, 4, 16, 16 * channels), out.shape
    np.testing.assert_allclose(np.asarray(out), np.asarray(ref),
                               atol=2e-3, rtol=2e-3)

    # Ragged case: exercises the padding + output-slicing path.
    x2 = jax.random.normal(jax.random.fold_in(key, 1), (3, 7, 5),
                           dtype=jnp.float32)
    out2 = jax.block_until_ready(embedding_forward(x2, channels))
    ref2 = embedding_ref(x2, channels)
    assert out2.shape == (3, 7, 5 * channels), out2.shape
    np.testing.assert_allclose(np.asarray(out2), np.asarray(ref2),
                               atol=2e-3, rtol=2e-3)

    print("KERNEL_OK")
</pallas_src>

<mosaic_0001>
module attributes {stable_mosaic.version = 11 : i64} {
  func.func @_embedding_kernel(%arg0: i32, %arg1: memref<8x128xf32, #tpu.memory_space<vmem>>, %arg2: memref<128x2048xf32, #tpu.memory_space<vmem>>, %arg3: memref<1x2048xf32, #tpu.memory_space<vmem>>, %arg4: memref<8x2048xf32, #tpu.memory_space<vmem>>) attributes {dimension_semantics = [#tpu.dimension_semantics<parallel>], iteration_bounds = array<i64: 2>, scalar_prefetch = 0 : i64, scratch_operands = 0 : i64, tpu.core_type = #tpu.core_type<tc>, window_params = [{transform_indices = @transform_0, window_bounds = array<i64: 8, 128>}, {pipeline_mode = #tpu.pipeline_mode<synchronous>, transform_indices = @transform_1, window_bounds = array<i64: 128, 2048>}, {pipeline_mode = #tpu.pipeline_mode<synchronous>, transform_indices = @transform_2, window_bounds = array<i64: 1, 2048>}, {transform_indices = @transform_3, window_bounds = array<i64: 8, 2048>}]} {
    %c0 = arith.constant 0 : index
    %c0_0 = arith.constant 0 : index
    %0 = vector.load %arg1[%c0, %c0_0] : memref<8x128xf32, #tpu.memory_space<vmem>>, vector<8x128xf32>
    %c0_1 = arith.constant 0 : index
    %c0_2 = arith.constant 0 : index
    %1 = vector.load %arg2[%c0_1, %c0_2] : memref<128x2048xf32, #tpu.memory_space<vmem>>, vector<128x2048xf32>
    %cst = arith.constant dense<0.000000e+00> : vector<8x2048xf32>
    %2 = tpu.matmul %0, %1, %cst {dimension_numbers = #tpu.dot_dimension_numbers<[1], [0], [0], [1], [0, 0, 1, 1], [], []>, precision = #tpu.contract_precision<fp32>} : vector<8x128xf32>, vector<128x2048xf32>, vector<8x2048xf32> -> vector<8x2048xf32>
    %c0_3 = arith.constant 0 : index
    %c0_4 = arith.constant 0 : index
    %3 = vector.load %arg3[%c0_3, %c0_4] : memref<1x2048xf32, #tpu.memory_space<vmem>>, vector<1x2048xf32>
    %4 = vector.broadcast %3 : vector<1x2048xf32> to vector<8x2048xf32>
    %5 = arith.addf %2, %4 : vector<8x2048xf32>
    %6 = math.sin %5 : vector<8x2048xf32>
    %c0_5 = arith.constant 0 : index
    %c0_6 = arith.constant 0 : index
    %7 = vector.load %arg4[%c0_5, %c0_6] : memref<8x2048xf32, #tpu.memory_space<vmem>>, vector<8x2048xf32>
    tpu.vector_store %arg4[%c0_5, %c0_6], %6 {strides = array<i32>} : memref<8x2048xf32, #tpu.memory_space<vmem>>, vector<8x2048xf32>,
    return
  }
  func.func @transform_0(%arg0: i32) -> (i32, i32) {
    %c0_i32 = arith.constant 0 : i32
    %c0_i32_0 = arith.constant 0 : i32
    return %arg0, %c0_i32 : i32, i32
  }
  func.func @transform_1(%arg0: i32) -> (i32, i32) {
    %c0_i32 = arith.constant 0 : i32
    %c0_i32_0 = arith.constant 0 : i32
    %c0_i32_1 = arith.constant 0 : i32
    return %c0_i32, %c0_i32_0 : i32, i32
  }
  func.func @transform_2(%arg0: i32) -> (i32, i32) {
    %c0_i32 = arith.constant 0 : i32
    %c0_i32_0 = arith.constant 0 : i32
    %c0_i32_1 = arith.constant 0 : i32
    return %c0_i32, %c0_i32_0 : i32, i32
  }
  func.func @transform_3(%arg0: i32) -> (i32, i32) {
    %c0_i32 = arith.constant 0 : i32
    %c0_i32_0 = arith.constant 0 : i32
    return %arg0, %c0_i32 : i32, i32
  }
}

</mosaic_0001>

<llo_original>
// kernel: tpu_custom_call.1
$region0: #{tpu_custom_call.1}
  #allocation0 [shape = 'u32[]', space=smem, size = 0x4, offset = 0x4, fixed_abs, tag = 'smem constant byte address 0x4 - core index']
  #allocation1 [shape = 'u32[72,128]{1,0:T(1,128)}', space=vmem, size = 0x9000, scoped, tag = 'internal scratch']
  %s0 = inlined_call_operand.hbm [shape: f32[16,128], index: 0, kind: input, shape index: {}]
  %s1 = inlined_call_operand.hbm [shape: f32[128,2048], index: 1, kind: input, shape index: {}]
  %s2 = inlined_call_operand.hbm [shape: f32[1,2048], index: 2, kind: input, shape index: {}]
  %s3 = inlined_call_operand.hbm [shape: f32[16,2048], index: 3, kind: output, shape index: {}]
  %s4 = sld [smem:[#allocation0]]
  $region57: #{tpu_custom_call.1} parent=0
    _
  %s6 = ssub.s32 1, %s4
  %s7 = scalar_select 0, %s6, %s4
  $region1: #{tpu_custom_call.1} parent=0
    #allocation2 [shape = 'u8[8192]{0}', space=vmem, size = 0x2000, scoped, tag = 'input window, operand 0']
    #allocation3 [shape = 's32[2]{0}', space=sflag, size = 0x8, scoped, tag = 'scoped memory for tpu_custom_call.1']
    #allocation4 [shape = 's32[2]{0}', space=sflag, size = 0x8, scoped, tag = 'scoped memory for tpu_custom_call.1']
    #allocation5 [shape = 'u8[1048576]{0}', space=vmem, size = 0x100000, scoped, tag = 'input window, operand 1, single buffered']
    #allocation6 [shape = 's32[1]{0}', space=sflag, size = 0x4, scoped, tag = 'scoped memory for tpu_custom_call.1']
    #allocation7 [shape = 'u8[8192]{0}', space=vmem, size = 0x2000, scoped, tag = 'input window, operand 2, single buffered']
    #allocation8 [shape = 'u8[131072]{0}', space=vmem, size = 0x20000, scoped, tag = 'output window, operand 0']
    %8 = vsyncpa [#allocation3], 0
    %s9 = scalar_lea.sflag [#allocation3], 1
    %10 = vsyncpa %s9, 0
    %11 = vsyncpa [#allocation6], 0
    %12 = vsyncpa [#allocation4], 0
    %s13 = scalar_lea.sflag [#allocation4], 1
    %14 = vsyncpa %s13, 0
    loop: start=0, step=1, limit=4
    $region2: #{tpu_custom_call.1} parent=1 // loop_pre_header
      _
    $region3: #{tpu_custom_call.1} parent=1 // loop_header
      %s16 = sphi 0, %s20
      %p17 = scmp.ge.s32.totalorder %s16, 4
      %s26 = sphi 0, %s28
      %s29 = sphi 0, %s26
      %s30 = sphi 0, %s29
      %s46 = sphi 0, %s30
      %s50 = sphi 0, %s50
      %s52 = sphi 0, %s50
      %s53 = sphi 0, %s52
      %s67 = sphi 0, %s53
      %s71 = sphi 0, %s71
      %s73 = sphi 0, %s71
      %s74 = sphi 0, %s73
      %s88 = sphi 0, %s74
      %s94 = sphi 0, %s96
      %s97 = sphi 0, %s94
      %s98 = sphi 0, %s97
      %s114 = sphi 0, %s98
    $region4: #{tpu_custom_call.1} parent=1 // loop_header_branch
      %19 = sbr.rel (%p17) target = $region8
    $region5: #{tpu_custom_call.1} parent=1 // loop_body
      %s21 = ssub.s32 %s16, 1
      %s22 = ssub.s32 %s16, 2
      %s23 = sadd.s32 %s16, 1
      %s24 = ssub.s32 %s16, %s23
      %p25 = scmp.eq.s32.totalorder %s24, 0
      %s27 = sadd.s32 %s26, 1
      %s28 = scalar_select %p25, %s26, %s27
      %p31 = pneg %p25
      %p32 = scmp.eq.s32.totalorder %s16, 1
      %p33 = por %p31, %p32
      %p34 = scmp.ne.s32.totalorder %s26, %s29
      %p35 = scmp.eq.s32.totalorder %s16, 0
      %p36 = por %p34, %p35
      %p37 = scmp.ne.s32.totalorder %s26, %s29
      %p38 = scmp.eq.s32.totalorder %s21, 1
      %p39 = por %p37, %p38
      %p40 = scmp.ne.s32.totalorder %s29, %s30
      %p41 = scmp.eq.s32.totalorder %s21, 0
      %p42 = por %p40, %p41
      %p43 = scmp.ne.s32.totalorder %s29, %s30
      %p44 = scmp.eq.s32.totalorder %s22, 1
      %p45 = por %p43, %p44
      %p47 = scmp.ne.s32.totalorder %s30, %s46
      %p48 = scmp.eq.s32.totalorder %s22, 0
      %p49 = por %p47, %p48
      %s51 = sadd.s32 %s50, 1
      %p54 = scmp.eq.s32.totalorder %s16, 1
      %p55 = scmp.ne.s32.totalorder %s50, %s52
      %p56 = scmp.eq.s32.totalorder %s16, 0
      %p57 = por %p55, %p56
      %p58 = scmp.ne.s32.totalorder %s50, %s52
      %p59 = scmp.eq.s32.totalorder %s21, 1
      %p60 = por %p58, %p59
      %p61 = scmp.ne.s32.totalorder %s52, %s53
      %p62 = scmp.eq.s32.totalorder %s21, 0
      %p63 = por %p61, %p62
      %p64 = scmp.ne.s32.totalorder %s52, %s53
      %p65 = scmp.eq.s32.totalorder %s22, 1
      %p66 = por %p64, %p65
      %p68 = scmp.ne.s32.totalorder %s53, %s67
      %p69 = scmp.eq.s32.totalorder %s22, 0
      %p70 = por %p68, %p69
      %s72 = sadd.s32 %s71, 1
      %p75 = scmp.eq.s32.totalorder %s16, 1
      %p76 = scmp.ne.s32.totalorder %s71, %s73
      %p77 = scmp.eq.s32.totalorder %s16, 0
      %p78 = por %p76, %p77
      %p79 = scmp.ne.s32.totalorder %s71, %s73
      %p80 = scmp.eq.s32.totalorder %s21, 1
      %p81 = por %p79, %p80
      %p82 = scmp.ne.s32.totalorder %s73, %s74
      %p83 = scmp.eq.s32.totalorder %s21, 0
      %p84 = por %p82, %p83
      %p85 = scmp.ne.s32.totalorder %s73, %s74
      %p86 = scmp.eq.s32.totalorder %s22, 1
      %p87 = por %p85, %p86
      %p89 = scmp.ne.s32.totalorder %s74, %s88
      %p90 = scmp.eq.s32.totalorder %s22, 0
      %p91 = por %p89, %p90
      %s92 = ssub.s32 %s16, %s23
      %p93 = scmp.eq.s32.totalorder %s92, 0
      %s95 = sadd.s32 %s94, 1
      %s96 = scalar_select %p93, %s94, %s95
      %p99 = pneg %p93
      %p100 = scmp.eq.s32.totalorder %s16, 1
      %p101 = por %p99, %p100
      %p102 = scmp.ne.s32.totalorder %s94, %s97
      %p103 = scmp.eq.s32.totalorder %s16, 0
      %p104 = por %p102, %p103
      %p105 = scmp.ne.s32.totalorder %s94, %s97
      %p106 = scmp.eq.s32.totalorder %s21, 1
      %p107 = por %p105, %p106
      %p108 = scmp.ne.s32.totalorder %s97, %s98
      %p109 = scmp.eq.s32.totalorder %s21, 0
      %p110 = por %p108, %p109
      %p111 = scmp.ne.s32.totalorder %s97, %s98
      %p112 = scmp.eq.s32.totalorder %s22, 1
      %p113 = por %p111, %p112
      %p115 = scmp.ne.s32.totalorder %s98, %s114
      %p116 = scmp.eq.s32.totalorder %s22, 0
      %p117 = por %p115, %p116
      %p118 = scmp.le.s32.totalorder 1, %s16
      %p119 = scmp.lt.s32.totalorder %s16, 3
      %p120 = pnand %p118, %p119
      %p121 = pneg %p120
      // Predicated region
      $region9: #{tpu_custom_call.1} parent=5 // pred_check
        _
      $region10: #{tpu_custom_call.1} parent=5 // pred_check_branch
        %123 = sbr.rel (%p120) target = $region12
      $region11: #{tpu_custom_call.1} parent=5 // pred_region
        %s124 = ssub.s32 %s16, 1
        // Predicated region
        $region13: #{tpu_custom_call.1} parent=11 // pred_check
          %p125 = pneg %p63
        $region14: #{tpu_custom_call.1} parent=11 // pred_check_branch
          %127 = sbr.rel (%p125) target = $region16
        $region15: #{tpu_custom_call.1} parent=11 // pred_region
          %129 = vsyncadd [#allocation6], 0
          %s130 = sshll.u32 %s1, 4
          %s131 = int_to_ptr.hbm [resolvable:$true] %s130
          %s132 = sshll.u32 [#allocation5], 4
          %s133 = int_to_ptr.vmem [resolvable:$true] %s132
          %138 = dma.hbm_to_vmem [thread:$0]  %s131, 32768, %s133, [#allocation6], 2048, 2048, 128
        $region16: #{tpu_custom_call.1} parent=11 // pred_fallthru
          _
        // Predicated region
        $region17: #{tpu_custom_call.1} parent=11 // pred_check
          %p139 = pneg %p84
        $region18: #{tpu_custom_call.1} parent=11 // pred_check_branch
          %141 = sbr.rel (%p139) target = $region20
        $region19: #{tpu_custom_call.1} parent=11 // pred_region
          %143 = vsyncadd [#allocation6], 0
          %s145 = sshll.u32 %s2, 4
          %s146 = int_to_ptr.hbm [resolvable:$true] %s145
          %s147 = sshll.u32 [#allocation7], 4
          %s148 = int_to_ptr.vmem [resolvable:$true] %s147
          %150 = dma.hbm_to_vmem [thread:$0]  %s146, 256, %s148, [#allocation6]
        $region20: #{tpu_custom_call.1} parent=11 // pred_fallthru
          _
      $region12: #{tpu_custom_call.1} parent=5 // pred_fallthru
        _
      %p151 = scmp.lt.s32.totalorder %s16, 2
      // Predicated region
      $region21: #{tpu_custom_call.1} parent=5 // pred_check
        %p152 = pneg %p151
      $region22: #{tpu_custom_call.1} parent=5 // pred_check_branch
        %154 = sbr.rel (%p152) target = $region24
      $region23: #{tpu_custom_call.1} parent=5 // pred_region
        // Predicated region
        $region25: #{tpu_custom_call.1} parent=23 // pred_check
          %p155 = pneg %p36
        $region26: #{tpu_custom_call.1} parent=23 // pred_check_branch
          %157 = sbr.rel (%p155) target = $region28
        $region27: #{tpu_custom_call.1} parent=23 // pred_region
          %s158 = sand.u32 %s26, 1
          %s159 = scalar_lea.sflag [#allocation3], %s158
          %s160 = sand.u32 %s26, 1
          %s161 = smul.addr %s160, 8
          %s162 = scalar_lea.vmem [#allocation2], %s161
          %164 = vsyncadd %s159, 0
          %s165 = smul.addr %s16, 8
          %s166 = scalar_lea.hbm %s0, %s165
          %s168 = sshll.u32 %s166, 4
          %s169 = int_to_ptr.hbm [resolvable:$true] %s168
          %s170 = sshll.u32 %s162, 4
          %s171 = int_to_ptr.vmem [resolvable:$true] %s170
          %173 = dma.hbm_to_vmem [thread:$0]  %s169, 128, %s171, %s159
        $region28: #{tpu_custom_call.1} parent=23 // pred_fallthru
          _
      $region24: #{tpu_custom_call.1} parent=5 // pred_fallthru
        _
      %p174 = scmp.le.s32.totalorder 1, %s16
      %p175 = scmp.lt.s32.totalorder %s16, 3
      %p176 = pnand %p174, %p175
      %p177 = pneg %p176
      // Predicated region
      $region29: #{tpu_custom_call.1} parent=5 // pred_check
        _
      $region30: #{tpu_custom_call.1} parent=5 // pred_check_branch
        %179 = sbr.rel (%p176) target = $region32
      $region31: #{tpu_custom_call.1} parent=5 // pred_region
        %s180 = ssub.s32 %s16, 1
        %s181 = sand.u32 %s29, 1
        %s182 = scalar_lea.sflag [#allocation3], %s181
        %s183 = sand.u32 %s29, 1
        %s184 = smul.addr %s183, 8
        %s185 = scalar_lea.vmem [#allocation2], %s184
        // Predicated region
        $region33: #{tpu_custom_call.1} parent=31 // pred_check
          %p186 = pneg %p42
        $region34: #{tpu_custom_call.1} parent=31 // pred_check_branch
          %188 = sbr.rel (%p186) target = $region36
        $region35: #{tpu_custom_call.1} parent=31 // pred_region
          %190 = dma.done %s182, 128
        $region36: #{tpu_custom_call.1} parent=31 // pred_fallthru
          _
        // Predicated region
        $region37: #{tpu_custom_call.1} parent=31 // pred_check
          %p191 = pneg %p63
        $region38: #{tpu_custom_call.1} parent=31 // pred_check_branch
          %193 = sbr.rel (%p191) target = $region40
        $region39: #{tpu_custom_call.1} parent=31 // pred_region
          %195 = dma.done [#allocation6], 32768
        $region40: #{tpu_custom_call.1} parent=31 // pred_fallthru
          _
        // Predicated region
        $region41: #{tpu_custom_call.1} parent=31 // pred_check
          %p196 = pneg %p84
        $region42: #{tpu_custom_call.1} parent=31 // pred_check_branch
          %198 = sbr.rel (%p196) target = $region44
        $region43: #{tpu_custom_call.1} parent=31 // pred_region
          %200 = dma.done [#allocation6], 256
        $region44: #{tpu_custom_call.1} parent=31 // pred_fallthru
          _
        %s201 = sand.u32 %s29, 1
        %s202 = scalar_lea.sflag [#allocation3], %s201
        %s203 = sand.u32 %s29, 1
        %s204 = smul.addr %s203, 8
        %s205 = scalar_lea.vmem [#allocation2], %s204
        %p206 = pneg %p42
        %p207 = pneg %p39
        %p208 = pneg %p63
        %p209 = pneg %p60
        %p210 = pneg %p84
        %p211 = pneg %p81
        %p212 = pneg %p110
        %p213 = pneg %p107
        %s214 = sand.u32 %s97, 1
        %s215 = scalar_lea.sflag [#allocation4], %s214
        %s216 = sand.u32 %s97, 1
        %s217 = smul.addr %s216, 128
        %s218 = scalar_lea.vmem [#allocation8], %s217
        %v219 = vld [vmem:[%s185] sm:$0xff]
        %v220 = vld [vmem:[#allocation5] sm:$0xff]
        %v221 = vld [vmem:[#allocation5 + $0x8] sm:$0xff]
        %v222 = vld [vmem:[#allocation5 + $0x10] sm:$0xff]
        %v223 = vld [vmem:[#allocation5 + $0x18] sm:$0xff]
        %v224 = vld [vmem:[#allocation5 + $0x20] sm:$0xff]
        %v225 = vld [vmem:[#allocation5 + $0x28] sm:$0xff]
        %v226 = vld [vmem:[#allocation5 + $0x30] sm:$0xff]
        %v227 = vld [vmem:[#allocation5 + $0x38] sm:$0xff]
        %v228 = vld [vmem:[#allocation5 + $0x40] sm:$0xff]
        %v229 = vld [vmem:[#allocation5 + $0x48] sm:$0xff]
        %v230 = vld [vmem:[#allocation5 + $0x50] sm:$0xff]
        %v231 = vld [vmem:[#allocation5 + $0x58] sm:$0xff]
        %v232 = vld [vmem:[#allocation5 + $0x60] sm:$0xff]
        %v233 = vld [vmem:[#allocation5 + $0x68] sm:$0xff]
        %v234 = vld [vmem:[#allocation5 + $0x70] sm:$0xff]
        %v235 = vld [vmem:[#allocation5 + $0x78] sm:$0xff]
        %v236 = vld [vmem:[#allocation5 + $0x80] sm:$0xff]
        %v237 = vld [vmem:[#allocation5 + $0x88] sm:$0xff]
        %v238 = vld [vmem:[#allocation5 + $0x90] sm:$0xff]
        %v239 = vld [vmem:[#allocation5 + $0x98] sm:$0xff]
        %v240 = vld [vmem:[#allocation5 + $0xa0] sm:$0xff]
        %v241 = vld [vmem:[#allocation5 + $0xa8] sm:$0xff]
        %v242 = vld [vmem:[#allocation5 + $0xb0] sm:$0xff]
        %v243 = vld [vmem:[#allocation5 + $0xb8] sm:$0xff]
        %v244 = vld [vmem:[#allocation5 + $0xc0] sm:$0xff]
        %v245 = vld [vmem:[#allocation5 + $0xc8] sm:$0xff]
        %v246 = vld [vmem:[#allocation5 + $0xd0] sm:$0xff]
        %v247 = vld [vmem:[#allocation5 + $0xd8] sm:$0xff]
        %v248 = vld [vmem:[#allocation5 + $0xe0] sm:$0xff]
        %v249 = vld [vmem:[#allocation5 + $0xe8] sm:$0xff]
        %v250 = vld [vmem:[#allocation5 + $0xf0] sm:$0xff]
        %v251 = vld [vmem:[#allocation5 + $0xf8] sm:$0xff]
        %v252 = vld [vmem:[#allocation5 + $0x100] sm:$0xff]
        %v253 = vld [vmem:[#allocation5 + $0x108] sm:$0xff]
        %v254 = vld [vmem:[#allocation5 + $0x110] sm:$0xff]
        %v255 = vld [vmem:[#allocation5 + $0x118] sm:$0xff]
        %v256 = vld [vmem:[#allocation5 + $0x120] sm:$0xff]
        %v257 = vld [vmem:[#allocation5 + $0x128] sm:$0xff]
        %v258 = vld [vmem:[#allocation5 + $0x130] sm:$0xff]
        %v259 = vld [vmem:[#allocation5 + $0x138] sm:$0xff]
        %v260 = vld [vmem:[#allocation5 + $0x140] sm:$0xff]
        %v261 = vld [vmem:[#allocation5 + $0x148] sm:$0xff]
        %v262 = vld [vmem:[#allocation5 + $0x150] sm:$0xff]
        %v263 = vld [vmem:[#allocation5 + $0x158] sm:$0xff]
        %v264 = vld [vmem:[#allocation5 + $0x160] sm:$0xff]
        %v265 = vld [vmem:[#allocation5 + $0x168] sm:$0xff]
        %v266 = vld [vmem:[#allocation5 + $0x170] sm:$0xff]
        %v267 = vld [vmem:[#allocation5 + $0x178] sm:$0xff]
        %v268 = vld [vmem:[#allocation5 + $0x180] sm:$0xff]
        %v269 = vld [vmem:[#allocation5 + $0x188] sm:$0xff]
        %v270 = vld [vmem:[#allocation5 + $0x190] sm:$0xff]
        %v271 = vld [vmem:[#allocation5 + $0x198] sm:$0xff]
        %v272 = vld [vmem:[#allocation5 + $0x1a0] sm:$0xff]
        %v273 = vld [vmem:[#allocation5 + $0x1a8] sm:$0xff]
        %v274 = vld [vmem:[#allocation5 + $0x1b0] sm:$0xff]
        %v275 = vld [vmem:[#allocation5 + $0x1b8] sm:$0xff]
        %v276 = vld [vmem:[#allocation5 + $0x1c0] sm:$0xff]
        %v277 = vld [vmem:[#allocation5 + $0x1c8] sm:$0xff]
        %v278 = vld [vmem:[#allocation5 + $0x1d0] sm:$0xff]
        %v279 = vld [vmem:[#allocation5 + $0x1d8] sm:$0xff]
        %v280 = vld [vmem:[#allocation5 + $0x1e0] sm:$0xff]
        %v281 = vld [vmem:[#allocation5 + $0x1e8] sm:$0xff]
        %v282 = vld [vmem:[#allocation5 + $0x1f0] sm:$0xff]
        %v283 = vld [vmem:[#allocation5 + $0x1f8] sm:$0xff]
        %v284 = vld [vmem:[#allocation5 + $0x200] sm:$0xff]
        %v285 = vld [vmem:[#allocation5 + $0x208] sm:$0xff]
        %v286 = vld [vmem:[#allocation5 + $0x210] sm:$0xff]
        %v287 = vld [vmem:[#allocation5 + $0x218] sm:$0xff]
        %v288 = vld [vmem:[#allocation5 + $0x220] sm:$0xff]
        %v289 = vld [vmem:[#allocation5 + $0x228] sm:$0xff]
        %v290 = vld [vmem:[#allocation5 + $0x230] sm:$0xff]
        %v291 = vld [vmem:[#allocation5 + $0x238] sm:$0xff]
        %v292 = vld [vmem:[#allocation5 + $0x240] sm:$0xff]
        %v293 = vld [vmem:[#allocation5 + $0x248] sm:$0xff]
        %v294 = vld [vmem:[#allocation5 + $0x250] sm:$0xff]
        %v295 = vld [vmem:[#allocation5 + $0x258] sm:$0xff]
        %v296 = vld [vmem:[#allocation5 + $0x260] sm:$0xff]
        %v297 = vld [vmem:[#allocation5 + $0x268] sm:$0xff]
        %v298 = vld [vmem:[#allocation5 + $0x270] sm:$0xff]
        %v299 = vld [vmem:[#allocation5 + $0x278] sm:$0xff]
        %v300 = vld [vmem:[#allocation5 + $0x280] sm:$0xff]
        %v301 = vld [vmem:[#allocation5 + $0x288] sm:$0xff]
        %v302 = vld [vmem:[#allocation5 + $0x290] sm:$0xff]
        %v303 = vld [vmem:[#allocation5 + $0x298] sm:$0xff]
        %v304 = vld [vmem:[#allocation5 + $0x2a0] sm:$0xff]
        %v305 = vld [vmem:[#allocation5 + $0x2a8] sm:$0xff]
        %v306 = vld [vmem:[#allocation5 + $0x2b0] sm:$0xff]
        %v307 = vld [vmem:[#allocation5 + $0x2b8] sm:$0xff]
        %v308 = vld [vmem:[#allocation5 + $0x2c0] sm:$0xff]
        %v309 = vld [vmem:[#allocation5 + $0x2c8] sm:$0xff]
        %v310 = vld [vmem:[#allocation5 + $0x2d0] sm:$0xff]
        %v311 = vld [vmem:[#allocation5 + $0x2d8] sm:$0xff]
        %v312 = vld [vmem:[#allocation5 + $0x2e0] sm:$0xff]
        %v313 = vld [vmem:[#allocation5 + $0x2e8] sm:$0xff]
        %v314 = vld [vmem:[#allocation5 + $0x2f0] sm:$0xff]
        %v315 = vld [vmem:[#allocation5 + $0x2f8] sm:$0xff]
        %v316 = vld [vmem:[#allocation5 + $0x300] sm:$0xff]
        %v317 = vld [vmem:[#allocation5 + $0x308] sm:$0xff]
        %v318 = vld [vmem:[#allocation5 + $0x310] sm:$0xff]
        %v319 = vld [vmem:[#allocation5 + $0x318] sm:$0xff]
        %v320 = vld [vmem:[#allocation5 + $0x320] sm:$0xff]
        %v321 = vld [vmem:[#allocation5 + $0x328] sm:$0xff]
        %v322 = vld [vmem:[#allocation5 + $0x330] sm:$0xff]
        %v323 = vld [vmem:[#allocation5 + $0x338] sm:$0xff]
        %v324 = vld [vmem:[#allocation5 + $0x340] sm:$0xff]
        %v325 = vld [vmem:[#allocation5 + $0x348] sm:$0xff]
        %v326 = vld [vmem:[#allocation5 + $0x350] sm:$0xff]
        %v327 = vld [vmem:[#allocation5 + $0x358] sm:$0xff]
        %v328 = vld [vmem:[#allocation5 + $0x360] sm:$0xff]
        %v329 = vld [vmem:[#allocation5 + $0x368] sm:$0xff]
        %v330 = vld [vmem:[#allocation5 + $0x370] sm:$0xff]
        %v331 = vld [vmem:[#allocation5 + $0x378] sm:$0xff]
        %v332 = vld [vmem:[#allocation5 + $0x380] sm:$0xff]
        %v333 = vld [vmem:[#allocation5 + $0x388] sm:$0xff]
        %v334 = vld [vmem:[#allocation5 + $0x390] sm:$0xff]
        %v335 = vld [vmem:[#allocation5 + $0x398] sm:$0xff]
        %v336 = vld [vmem:[#allocation5 + $0x3a0] sm:$0xff]
        %v337 = vld [vmem:[#allocation5 + $0x3a8] sm:$0xff]
        %v338 = vld [vmem:[#allocation5 + $0x3b0] sm:$0xff]
        %v339 = vld [vmem:[#allocation5 + $0x3b8] sm:$0xff]
        %v340 = vld [vmem:[#allocation5 + $0x3c0] sm:$0xff]
        %v341 = vld [vmem:[#allocation5 + $0x3c8] sm:$0xff]
        %v342 = vld [vmem:[#allocation5 + $0x3d0] sm:$0xff]
        %v343 = vld [vmem:[#allocation5 + $0x3d8] sm:$0xff]
        %v344 = vld [vmem:[#allocation5 + $0x3e0] sm:$0xff]
        %v345 = vld [vmem:[#allocation5 + $0x3e8] sm:$0xff]
        %v346 = vld [vmem:[#allocation5 + $0x3f0] sm:$0xff]
        %v347 = vld [vmem:[#allocation5 + $0x3f8] sm:$0xff]
        %v348 = vld [vmem:[#allocation5 + $0x400] sm:$0xff]
        %v349 = vld [vmem:[#allocation5 + $0x408] sm:$0xff]
        %v350 = vld [vmem:[#allocation5 + $0x410] sm:$0xff]
        %v351 = vld [vmem:[#allocation5 + $0x418] sm:$0xff]
        %v352 = vld [vmem:[#allocation5 + $0x420] sm:$0xff]
        %v353 = vld [vmem:[#allocation5 + $0x428] sm:$0xff]
        %v354 = vld [vmem:[#allocation5 + $0x430] sm:$0xff]
        %v355 = vld [vmem:[#allocation5 + $0x438] sm:$0xff]
        %v356 = vld [vmem:[#allocation5 + $0x440] sm:$0xff]
        %v357 = vld [vmem:[#allocation5 + $0x448] sm:$0xff]
        %v358 = vld [vmem:[#allocation5 + $0x450] sm:$0xff]
        %v359 = vld [vmem:[#allocation5 + $0x458] sm:$0xff]
        %v360 = vld [vmem:[#allocation5 + $0x460] sm:$0xff]
        %v361 = vld [vmem:[#allocation5 + $0x468] sm:$0xff]
        %v362 = vld [vmem:[#allocation5 + $0x470] sm:$0xff]
        %v363 = vld [vmem:[#allocation5 + $0x478] sm:$0xff]
        %v364 = vld [vmem:[#allocation5 + $0x480] sm:$0xff]
        %v365 = vld [vmem:[#allocation5 + $0x488] sm:$0xff]
        %v366 = vld [vmem:[#allocation5 + $0x490] sm:$0xff]
        %v367 = vld [vmem:[#allocation5 + $0x498] sm:$0xff]
        %v368 = vld [vmem:[#allocation5 + $0x4a0] sm:$0xff]
        %v369 = vld [vmem:[#allocation5 + $0x4a8] sm:$0xff]
        %v370 = vld [vmem:[#allocation5 + $0x4b0] sm:$0xff]
        %v371 = vld [vmem:[#allocation5 + $0x4b8] sm:$0xff]
        %v372 = vld [vmem:[#allocation5 + $0x4c0] sm:$0xff]
        %v373 = vld [vmem:[#allocation5 + $0x4c8] sm:$0xff]
        %v374 = vld [vmem:[#allocation5 + $0x4d0] sm:$0xff]
        %v375 = vld [vmem:[#allocation5 + $0x4d8] sm:$0xff]
        %v376 = vld [vmem:[#allocation5 + $0x4e0] sm:$0xff]
        %v377 = vld [vmem:[#allocation5 + $0x4e8] sm:$0xff]
        %v378 = vld [vmem:[#allocation5 + $0x4f0] sm:$0xff]
        %v379 = vld [vmem:[#allocation5 + $0x4f8] sm:$0xff]
        %v380 = vld [vmem:[#allocation5 + $0x500] sm:$0xff]
        %v381 = vld [vmem:[#allocation5 + $0x508] sm:$0xff]
        %v382 = vld [vmem:[#allocation5 + $0x510] sm:$0xff]
        %v383 = vld [vmem:[#allocation5 + $0x518] sm:$0xff]
        %v384 = vld [vmem:[#allocation5 + $0x520] sm:$0xff]
        %v385 = vld [vmem:[#allocation5 + $0x528] sm:$0xff]
        %v386 = vld [vmem:[#allocation5 + $0x530] sm:$0xff]
        %v387 = vld [vmem:[#allocation5 + $0x538] sm:$0xff]
        %v388 = vld [vmem:[#allocation5 + $0x540] sm:$0xff]
        %v389 = vld [vmem:[#allocation5 + $0x548] sm:$0xff]
        %v390 = vld [vmem:[#allocation5 + $0x550] sm:$0xff]
        %v391 = vld [vmem:[#allocation5 + $0x558] sm:$0xff]
        %v392 = vld [vmem:[#allocation5 + $0x560] sm:$0xff]
        %v393 = vld [vmem:[#allocation5 + $0x568] sm:$0xff]
        %v394 = vld [vmem:[#allocation5 + $0x570] sm:$0xff]
        %v395 = vld [vmem:[#allocation5 + $0x578] sm:$0xff]
        %v396 = vld [vmem:[#allocation5 + $0x580] sm:$0xff]
        %v397 = vld [vmem:[#allocation5 + $0x588] sm:$0xff]
        %v398 = vld [vmem:[#allocation5 + $0x590] sm:$0xff]
        %v399 = vld [vmem:[#allocation5 + $0x598] sm:$0xff]
        %v400 = vld [vmem:[#allocation5 + $0x5a0] sm:$0xff]
        %v401 = vld [vmem:[#allocation5 + $0x5a8] sm:$0xff]
        %v402 = vld [vmem:[#allocation5 + $0x5b0] sm:$0xff]
        %v403 = vld [vmem:[#allocation5 + $0x5b8] sm:$0xff]
        %v404 = vld [vmem:[#allocation5 + $0x5c0] sm:$0xff]
        %v405 = vld [vmem:[#allocation5 + $0x5c8] sm:$0xff]
        %v406 = vld [vmem:[#allocation5 + $0x5d0] sm:$0xff]
        %v407 = vld [vmem:[#allocation5 + $0x5d8] sm:$0xff]
        %v408 = vld [vmem:[#allocation5 + $0x5e0] sm:$0xff]
        %v409 = vld [vmem:[#allocation5 + $0x5e8] sm:$0xff]
        %v410 = vld [vmem:[#allocation5 + $0x5f0] sm:$0xff]
        %v411 = vld [vmem:[#allocation5 + $0x5f8] sm:$0xff]
        %v412 = vld [vmem:[#allocation5 + $0x600] sm:$0xff]
        %v413 = vld [vmem:[#allocation5 + $0x608] sm:$0xff]
        %v414 = vld [vmem:[#allocation5 + $0x610] sm:$0xff]
        %v415 = vld [vmem:[#allocation5 + $0x618] sm:$0xff]
        %v416 = vld [vmem:[#allocation5 + $0x620] sm:$0xff]
        %v417 = vld [vmem:[#allocation5 + $0x628] sm:$0xff]
        %v418 = vld [vmem:[#allocation5 + $0x630] sm:$0xff]
        %v419 = vld [vmem:[#allocation5 + $0x638] sm:$0xff]
        %v420 = vld [vmem:[#allocation5 + $0x640] sm:$0xff]
        %v421 = vld [vmem:[#allocation5 + $0x648] sm:$0xff]
        %v422 = vld [vmem:[#allocation5 + $0x650] sm:$0xff]
        %v423 = vld [vmem:[#allocation5 + $0x658] sm:$0xff]
        %v424 = vld [vmem:[#allocation5 + $0x660] sm:$0xff]
        %v425 = vld [vmem:[#allocation5 + $0x668] sm:$0xff]
        %v426 = vld [vmem:[#allocation5 + $0x670] sm:$0xff]
        %v427 = vld [vmem:[#allocation5 + $0x678] sm:$0xff]
        %v428 = vld [vmem:[#allocation5 + $0x680] sm:$0xff]
        %v429 = vld [vmem:[#allocation5 + $0x688] sm:$0xff]
        %v430 = vld [vmem:[#allocation5 + $0x690] sm:$0xff]
        %v431 = vld [vmem:[#allocation5 + $0x698] sm:$0xff]
        %v432 = vld [vmem:[#allocation5 + $0x6a0] sm:$0xff]
        %v433 = vld [vmem:[#allocation5 + $0x6a8] sm:$0xff]
        %v434 = vld [vmem:[#allocation5 + $0x6b0] sm:$0xff]
        %v435 = vld [vmem:[#allocation5 + $0x6b8] sm:$0xff]
        %v436 = vld [vmem:[#allocation5 + $0x6c0] sm:$0xff]
        %v437 = vld [vmem:[#allocation5 + $0x6c8] sm:$0xff]
        %v438 = vld [vmem:[#allocation5 + $0x6d0] sm:$0xff]
        %v439 = vld [vmem:[#allocation5 + $0x6d8] sm:$0xff]
        %v440 = vld [vmem:[#allocation5 + $0x6e0] sm:$0xff]
        %v441 = vld [vmem:[#allocation5 + $0x6e8] sm:$0xff]
        %v442 = vld [vmem:[#allocation5 + $0x6f0] sm:$0xff]
        %v443 = vld [vmem:[#allocation5 + $0x6f8] sm:$0xff]
        %v444 = vld [vmem:[#allocation5 + $0x700] sm:$0xff]
        %v445 = vld [vmem:[#allocation5 + $0x708] sm:$0xff]
        %v446 = vld [vmem:[#allocation5 + $0x710] sm:$0xff]
        %v447 = vld [vmem:[#allocation5 + $0x718] sm:$0xff]
        %v448 = vld [vmem:[#allocation5 + $0x720] sm:$0xff]
        %v449 = vld [vmem:[#allocation5 + $0x728] sm:$0xff]
        %v450 = vld [vmem:[#allocation5 + $0x730] sm:$0xff]
        %v451 = vld [vmem:[#allocation5 + $0x738] sm:$0xff]
        %v452 = vld [vmem:[#allocation5 + $0x740] sm:$0xff]
        %v453 = vld [vmem:[#allocation5 + $0x748] sm:$0xff]
        %v454 = vld [vmem:[#allocation5 + $0x750] sm:$0xff]
        %v455 = vld [vmem:[#allocation5 + $0x758] sm:$0xff]
        %v456 = vld [vmem:[#allocation5 + $0x760] sm:$0xff]
        %v457 = vld [vmem:[#allocation5 + $0x768] sm:$0xff]
        %v458 = vld [vmem:[#allocation5 + $0x770] sm:$0xff]
        %v459 = vld [vmem:[#allocation5 + $0x778] sm:$0xff]
        %v460 = vld [vmem:[#allocation5 + $0x780] sm:$0xff]
        %v461 = vld [vmem:[#allocation5 + $0x788] sm:$0xff]
        %v462 = vld [vmem:[#allocation5 + $0x790] sm:$0xff]
        %v463 = vld [vmem:[#allocation5 + $0x798] sm:$0xff]
        %v464 = vld [vmem:[#allocation5 + $0x7a0] sm:$0xff]
        %v465 = vld [vmem:[#allocation5 + $0x7a8] sm:$0xff]
        %v466 = vld [vmem:[#allocation5 + $0x7b0] sm:$0xff]
        %v467 = vld [vmem:[#allocation5 + $0x7b8] sm:$0xff]
        %v468 = vld [vmem:[#allocation5 + $0x7c0] sm:$0xff]
        %v469 = vld [vmem:[#allocation5 + $0x7c8] sm:$0xff]
        %v470 = vld [vmem:[#allocation5 + $0x7d0] sm:$0xff]
        %v471 = vld [vmem:[#allocation5 + $0x7d8] sm:$0xff]
        %v472 = vld [vmem:[#allocation5 + $0x7e0] sm:$0xff]
        %v473 = vld [vmem:[#allocation5 + $0x7e8] sm:$0xff]
        %v474 = vld [vmem:[#allocation5 + $0x7f0] sm:$0xff]
        %v475 = vld [vmem:[#allocation5 + $0x7f8] sm:$0xff]
        %v476 = vld [vmem:[#allocation7] sm:$0xff]
        %v477 = vld [vmem:[#allocation7 + $0x8] sm:$0xff]
        %v480 = vperm.slane %v476, 0
        %v481 = vperm.slane %v476, 1
        %v482 = vperm.slane %v476, 2
        %v483 = vperm.slane %v476, 3
        %v484 = vperm.slane %v476, 4
        %v485 = vperm.slane %v476, 5
        %v486 = vperm.slane %v476, 6
        %v487 = vperm.slane %v476, 7
        %v488 = vperm.slane %v477, 0
        %v489 = vperm.slane %v477, 1
        %v490 = vperm.slane %v477, 2
        %v491 = vperm.slane %v477, 3
        %v492 = vperm.slane %v477, 4
        %v493 = vperm.slane %v477, 5
        %v494 = vperm.slane %v477, 6
        %v495 = vperm.slane %v477, 7
        %v512 = vand.u32 %v460, 4294901760
        %513 = vmatpush.msra.mxu0 %v512
        %v514 = vand.u32 %v444, 4294901760
        %515 = vmatpush.msra.mxu0 %v514
        %v516 = vand.u32 %v428, 4294901760
        %517 = vmatpush.msra.mxu0 %v516
        %v518 = vand.u32 %v412, 4294901760
        %519 = vmatpush.msra.mxu0 %v518
        %v520 = vand.u32 %v396, 4294901760
        %521 = vmatpush.msra.mxu0 %v520
        %v522 = vand.u32 %v380, 4294901760
        %523 = vmatpush.msra.mxu0 %v522
        %v524 = vand.u32 %v364, 4294901760
        %525 = vmatpush.msra.mxu0 %v524
        %v526 = vand.u32 %v348, 4294901760
        %527 = vmatpush.msra.mxu0 %v526
        %v528 = vand.u32 %v332, 4294901760
        %529 = vmatpush.msra.mxu0 %v528
        %v530 = vand.u32 %v316, 4294901760
        %531 = vmatpush.msra.mxu0 %v530
        %v532 = vand.u32 %v300, 4294901760
        %533 = vmatpush.msra.mxu0 %v532
        %v534 = vand.u32 %v284, 4294901760
        %535 = vmatpush.msra.mxu0 %v534
        %v536 = vand.u32 %v268, 4294901760
        %537 = vmatpush.msra.mxu0 %v536
        %v538 = vand.u32 %v252, 4294901760
        %539 = vmatpush.msra.mxu0 %v538
        %v540 = vand.u32 %v236, 4294901760
        %541 = vmatpush.msra.mxu0 %v540
        %v542 = vand.u32 %v220, 4294901760
        %543 = vmatpush.msra.mxu0 %v542
        %v544 = vand.u32 %v219, 4294901760
        %v545 = vsub.f32 %v219, %v544
        %v546 = vand.u32 %v545, 4294901760
        %v547 = vsub.f32 %v545, %v546
        %v548 = vand.u32 %v547, 4294901760
        %549 = vmatmul.f32.gmra.mxu0 %v548
        %v550 = vpop.f32.mrf.mxu0
        %v551 = vadd.f32 %v480, %v550
        %552 = vdwg.mxu0
        %v553 = vand.u32 %v460, 4294901760
        %v554 = vsub.f32 %v460, %v553
        %v555 = vand.u32 %v554, 4294901760
        %v556 = vsub.f32 %v554, %v555
        %v557 = vand.u32 %v556, 4294901760
        %558 = vmatpush.msra.mxu0 %v557
        %v559 = vand.u32 %v444, 4294901760
        %v560 = vsub.f32 %v444, %v559
        %v561 = vand.u32 %v560, 4294901760
        %v562 = vsub.f32 %v560, %v561
        %v563 = vand.u32 %v562, 4294901760
        %564 = vmatpush.msra.mxu0 %v563
        %v565 = vand.u32 %v428, 4294901760
        %v566 = vsub.f32 %v428, %v565
        %v567 = vand.u32 %v566, 4294901760
        %v568 = vsub.f32 %v566, %v567
        %v569 = vand.u32 %v568, 4294901760
        %570 = vmatpush.msra.mxu0 %v569
        %v571 = vand.u32 %v412, 4294901760
        %v572 = vsub.f32 %v412, %v571
        %v573 = vand.u32 %v572, 4294901760
        %v574 = vsub.f32 %v572, %v573
        %v575 = vand.u32 %v574, 4294901760
        %576 = vmatpush.msra.mxu0 %v575
        %v577 = vand.u32 %v396, 4294901760
        %v578 = vsub.f32 %v396, %v577
        %v579 = vand.u32 %v578, 4294901760
        %v580 = vsub.f32 %v578, %v579
        %v581 = vand.u32 %v580, 4294901760
        %582 = vmatpush.msra.mxu0 %v581
        %v583 = vand.u32 %v380, 4294901760
        %v584 = vsub.f32 %v380, %v583
        %v585 = vand.u32 %v584, 4294901760
        %v586 = vsub.f32 %v584, %v585
        %v587 = vand.u32 %v586, 4294901760
        %588 = vmatpush.msra.mxu0 %v587
        %v589 = vand.u32 %v364, 4294901760
        %v590 = vsub.f32 %v364, %v589
        %v591 = vand.u32 %v590, 4294901760
        %v592 = vsub.f32 %v590, %v591
        %v593 = vand.u32 %v592, 4294901760
        %594 = vmatpush.msra.mxu0 %v593
        %v595 = vand.u32 %v348, 4294901760
        %v596 = vsub.f32 %v348, %v595
        %v597 = vand.u32 %v596, 4294901760
        %v598 = vsub.f32 %v596, %v597
        %v599 = vand.u32 %v598, 4294901760
        %600 = vmatpush.msra.mxu0 %v599
        %v601 = vand.u32 %v332, 4294901760
        %v602 = vsub.f32 %v332, %v601
        %v603 = vand.u32 %v602, 4294901760
        %v604 = vsub.f32 %v602, %v603
        %v605 = vand.u32 %v604, 4294901760
        %606 = vmatpush.msra.mxu0 %v605
        %v607 = vand.u32 %v316, 4294901760
        %v608 = vsub.f32 %v316, %v607
        %v609 = vand.u32 %v608, 4294901760
        %v610 = vsub.f32 %v608, %v609
        %v611 = vand.u32 %v610, 4294901760
        %612 = vmatpush.msra.mxu0 %v611
        %v613 = vand.u32 %v300, 4294901760
        %v614 = vsub.f32 %v300, %v613
        %v615 = vand.u32 %v614, 4294901760
        %v616 = vsub.f32 %v614, %v615
        %v617 = vand.u32 %v616, 4294901760
        %618 = vmatpush.msra.mxu0 %v617
        %v619 = vand.u32 %v284, 4294901760
        %v620 = vsub.f32 %v284, %v619
        %v621 = vand.u32 %v620, 4294901760
        %v622 = vsub.f32 %v620, %v621
        %v623 = vand.u32 %v622, 4294901760
        %624 = vmatpush.msra.mxu0 %v623
        %v625 = vand.u32 %v268, 4294901760
        %v626 = vsub.f32 %v268, %v625
        %v627 = vand.u32 %v626, 4294901760
        %v628 = vsub.f32 %v626, %v627
        %v629 = vand.u32 %v628, 4294901760
        %630 = vmatpush.msra.mxu0 %v629
        %v631 = vand.u32 %v252, 4294901760
        %v632 = vsub.f32 %v252, %v631
        %v633 = vand.u32 %v632, 4294901760
        %v634 = vsub.f32 %v632, %v633
        %v635 = vand.u32 %v634, 4294901760
        %636 = vmatpush.msra.mxu0 %v635
        %v637 = vand.u32 %v236, 4294901760
        %v638 = vsub.f32 %v236, %v637
        %v639 = vand.u32 %v638, 4294901760
        %v640 = vsub.f32 %v638, %v639
        %v641 = vand.u32 %v640, 4294901760
        %642 = vmatpush.msra.mxu0 %v641
        %v643 = vand.u32 %v220, 4294901760
        %v644 = vsub.f32 %v220, %v643
        %v645 = vand.u32 %v644, 4294901760
        %v646 = vsub.f32 %v644, %v645
        %v647 = vand.u32 %v646, 4294901760
        %648 = vmatpush.msra.mxu0 %v647
        %v649 = vand.u32 %v219, 4294901760
        %650 = vmatmul.f32.gmra.mxu0 %v649
        %v651 = vpop.f32.mrf.mxu0
        %v652 = vadd.f32 %v551, %v651
        %653 = vdwg.mxu0
        %v654 = vand.u32 %v460, 4294901760
        %v655 = vsub.f32 %v460, %v654
        %656 = vmatpush.msra.mxu0 %v655
        %v657 = vand.u32 %v444, 4294901760
        %v658 = vsub.f32 %v444, %v657
        %659 = vmatpush.msra.mxu0 %v658
        %v660 = vand.u32 %v428, 4294901760
        %v661 = vsub.f32 %v428, %v660
        %662 = vmatpush.msra.mxu0 %v661
        %v663 = vand.u32 %v412, 4294901760
        %v664 = vsub.f32 %v412, %v663
        %665 = vmatpush.msra.mxu0 %v664
        %v666 = vand.u32 %v396, 4294901760
        %v667 = vsub.f32 %v396, %v666
        %668 = vmatpush.msra.mxu0 %v667
        %v669 = vand.u32 %v380, 4294901760
        %v670 = vsub.f32 %v380, %v669
        %671 = vmatpush.msra.mxu0 %v670
        %v672 = vand.u32 %v364, 4294901760
        %v673 = vsub.f32 %v364, %v672
        %674 = vmatpush.msra.mxu0 %v673
        %v675 = vand.u32 %v348, 4294901760
        %v676 = vsub.f32 %v348, %v675
        %677 = vmatpush.msra.mxu0 %v676
        %v678 = vand.u32 %v332, 4294901760
        %v679 = vsub.f32 %v332, %v678
        %680 = vmatpush.msra.mxu0 %v679
        %v681 = vand.u32 %v316, 4294901760
        %v682 = vsub.f32 %v316, %v681
        %683 = vmatpush.msra.mxu0 %v682
        %v684 = vand.u32 %v300, 4294901760
        %v685 = vsub.f32 %v300, %v684
        %686 = vmatpush.msra.mxu0 %v685
        %v687 = vand.u32 %v284, 4294901760
        %v688 = vsub.f32 %v284, %v687
        %689 = vmatpush.msra.mxu0 %v688
        %v690 = vand.u32 %v268, 4294901760
        %v691 = vsub.f32 %v268, %v690
        %692 = vmatpush.msra.mxu0 %v691
        %v693 = vand.u32 %v252, 4294901760
        %v694 = vsub.f32 %v252, %v693
        %695 = vmatpush.msra.mxu0 %v694
        %v696 = vand.u32 %v236, 4294901760
        %v697 = vsub.f32 %v236, %v696
        %698 = vmatpush.msra.mxu0 %v697
        %v699 = vand.u32 %v220, 4294901760
        %v700 = vsub.f32 %v220, %v699
        %701 = vmatpush.msra.mxu0 %v700
        %v702 = vand.u32 %v219, 4294901760
        %v703 = vsub.f32 %v219, %v702
        %704 = vmatmul.f32.gmra.mxu0 %v703
        %v705 = vpop.f32.mrf.mxu0
        %v706 = vadd.f32 %v652, %v705
        %707 = vdwg.mxu0
        %v708 = vand.u32 %v460, 4294901760
        %709 = vmatpush.msra.mxu0 %v708
        %v710 = vand.u32 %v444, 4294901760
        %711 = vmatpush.msra.mxu0 %v710
        %v712 = vand.u32 %v428, 4294901760
        %713 = vmatpush.msra.mxu0 %v712
        %v714 = vand.u32 %v412, 4294901760
        %715 = vmatpush.msra.mxu0 %v714
        %v716 = vand.u32 %v396, 4294901760
        %717 = vmatpush.msra.mxu0 %v716
        %v718 = vand.u32 %v380, 4294901760
        %719 = vmatpush.msra.mxu0 %v718
        %v720 = vand.u32 %v364, 4294901760
        %721 = vmatpush.msra.mxu0 %v720
        %v722 = vand.u32 %v348, 4294901760
        %723 = vmatpush.msra.mxu0 %v722
        %v724 = vand.u32 %v332, 4294901760
        %725 = vmatpush.msra.mxu0 %v724
        %v726 = vand.u32 %v316, 4294901760
        %727 = vmatpush.msra.mxu0 %v726
        %v728 = vand.u32 %v300, 4294901760
        %729 = vmatpush.msra.mxu0 %v728
        %v730 = vand.u32 %v284, 4294901760
        %731 = vmatpush.msra.mxu0 %v730
        %v732 = vand.u32 %v268, 4294901760
        %733 = vmatpush.msra.mxu0 %v732
        %v734 = vand.u32 %v252, 4294901760
        %735 = vmatpush.msra.mxu0 %v734
        %v736 = vand.u32 %v236, 4294901760
        %737 = vmatpush.msra.mxu0 %v736
        %v738 = vand.u32 %v220, 4294901760
        %739 = vmatpush.msra.mxu0 %v738
        %v740 = vand.u32 %v219, 4294901760
        %v741 = vsub.f32 %v219, %v740
        %v742 = vand.u32 %v741, 4294901760
        %743 = vmatmul.f32.gmra.mxu0 %v742
        %v744 = vpop.f32.mrf.mxu0
        %v745 = vadd.f32 %v706, %v744
        %746 = vdwg.mxu0
        %v747 = vand.u32 %v460, 4294901760
        %v748 = vsub.f32 %v460, %v747
        %v749 = vand.u32 %v748, 4294901760
        %750 = vmatpush.msra.mxu0 %v749
        %v751 = vand.u32 %v444, 4294901760
        %v752 = vsub.f32 %v444, %v751
        %v753 = vand.u32 %v752, 4294901760
        %754 = vmatpush.msra.mxu0 %v753
        %v755 = vand.u32 %v428, 4294901760
        %v756 = vsub.f32 %v428, %v755
        %v757 = vand.u32 %v756, 4294901760
        %758 = vmatpush.msra.mxu0 %v757
        %v759 = vand.u32 %v412, 4294901760
        %v760 = vsub.f32 %v412, %v759
        %v761 = vand.u32 %v760, 4294901760
        %762 = vmatpush.msra.mxu0 %v761
        %v763 = vand.u32 %v396, 4294901760
        %v764 = vsub.f32 %v396, %v763
        %v765 = vand.u32 %v764, 4294901760
        %766 = vmatpush.msra.mxu0 %v765
        %v767 = vand.u32 %v380, 4294901760
        %v768 = vsub.f32 %v380, %v767
        %v769 = vand.u32 %v768, 4294901760
        %770 = vmatpush.msra.mxu0 %v769
        %v771 = vand.u32 %v364, 4294901760
        %v772 = vsub.f32 %v364, %v771
        %v773 = vand.u32 %v772, 4294901760
        %774 = vmatpush.msra.mxu0 %v773
        %v775 = vand.u32 %v348, 4294901760
        %v776 = vsub.f32 %v348, %v775
        %v777 = vand.u32 %v776, 4294901760
        %778 = vmatpush.msra.mxu0 %v777
        %v779 = vand.u32 %v332, 4294901760
        %v780 = vsub.f32 %v332, %v779
        %v781 = vand.u32 %v780, 4294901760
        %782 = vmatpush.msra.mxu0 %v781
        %v783 = vand.u32 %v316, 4294901760
        %v784 = vsub.f32 %v316, %v783
        %v785 = vand.u32 %v784, 4294901760
        %786 = vmatpush.msra.mxu0 %v785
        %v787 = vand.u32 %v300, 4294901760
        %v788 = vsub.f32 %v300, %v787
        %v789 = vand.u32 %v788, 4294901760
        %790 = vmatpush.msra.mxu0 %v789
        %v791 = vand.u32 %v284, 4294901760
        %v792 = vsub.f32 %v284, %v791
        %v793 = vand.u32 %v792, 4294901760
        %794 = vmatpush.msra.mxu0 %v793
        %v795 = vand.u32 %v268, 4294901760
        %v796 = vsub.f32 %v268, %v795
        %v797 = vand.u32 %v796, 4294901760
        %798 = vmatpush.msra.mxu0 %v797
        %v799 = vand.u32 %v252, 4294901760
        %v800 = vsub.f32 %v252, %v799
        %v801 = vand.u32 %v800, 4294901760
        %802 = vmatpush.msra.mxu0 %v801
        %v803 = vand.u32 %v236, 4294901760
        %v804 = vsub.f32 %v236, %v803
        %v805 = vand.u32 %v804, 4294901760
        %806 = vmatpush.msra.mxu0 %v805
        %v807 = vand.u32 %v220, 4294901760
        %v808 = vsub.f32 %v220, %v807
        %v809 = vand.u32 %v808, 4294901760
        %810 = vmatpush.msra.mxu0 %v809
        %v811 = vand.u32 %v219, 4294901760
        %812 = vmatmul.f32.gmra.mxu0 %v811
        %v813 = vpop.f32.mrf.mxu0
        %v814 = vadd.f32 %v745, %v813
        %815 = vdwg.mxu0
        %v816 = vand.u32 %v460, 4294901760
        %817 = vmatpush.msra.mxu0 %v816
        %v818 = vand.u32 %v444, 4294901760
        %819 = vmatpush.msra.mxu0 %v818
        %v820 = vand.u32 %v428, 4294901760
        %821 = vmatpush.msra.mxu0 %v820
        %v822 = vand.u32 %v412, 4294901760
        %823 = vmatpush.msra.mxu0 %v822
        %v824 = vand.u32 %v396, 4294901760
        %825 = vmatpush.msra.mxu0 %v824
        %v826 = vand.u32 %v380, 4294901760
        %827 = vmatpush.msra.mxu0 %v826
        %v828 = vand.u32 %v364, 4294901760
        %829 = vmatpush.msra.mxu0 %v828
        %v830 = vand.u32 %v348, 4294901760
        %831 = vmatpush.msra.mxu0 %v830
        %v832 = vand.u32 %v332, 4294901760
        %833 = vmatpush.msra.mxu0 %v832
        %v834 = vand.u32 %v316, 4294901760
        %835 = vmatpush.msra.mxu0 %v834
        %v836 = vand.u32 %v300, 4294901760
        %837 = vmatpush.msra.mxu0 %v836
        %v838 = vand.u32 %v284, 4294901760
        %839 = vmatpush.msra.mxu0 %v838
        %v840 = vand.u32 %v268, 4294901760
        %841 = vmatpush.msra.mxu0 %v840
        %v842 = vand.u32 %v252, 4294901760
        %843 = vmatpush.msra.mxu0 %v842
        %v844 = vand.u32 %v236, 4294901760
        %845 = vmatpush.msra.mxu0 %v844
        %v846 = vand.u32 %v220, 4294901760
        %847 = vmatpush.msra.mxu0 %v846
        %v848 = vand.u32 %v219, 4294901760
        %849 = vmatmul.f32.gmra.mxu0 %v848
        %v850 = vpop.f32.mrf.mxu0
        %v851 = vadd.f32 %v814, %v850
        %852 = vdwg.mxu0
        %v853 = vand.u32 %v461, 4294901760
        %854 = vmatpush.msra.mxu0 %v853
        %v855 = vand.u32 %v445, 4294901760
        %856 = vmatpush.msra.mxu0 %v855
        %v857 = vand.u32 %v429, 4294901760
        %858 = vmatpush.msra.mxu0 %v857
        %v859 = vand.u32 %v413, 4294901760
        %860 = vmatpush.msra.mxu0 %v859
        %v861 = vand.u32 %v397, 4294901760
        %862 = vmatpush.msra.mxu0 %v861
        %v863 = vand.u32 %v381, 4294901760
        %864 = vmatpush.msra.mxu0 %v863
        %v865 = vand.u32 %v365, 4294901760
        %866 = vmatpush.msra.mxu0 %v865
        %v867 = vand.u32 %v349, 4294901760
        %868 = vmatpush.msra.mxu0 %v867
        %v869 = vand.u32 %v333, 4294901760
        %870 = vmatpush.msra.mxu0 %v869
        %v871 = vand.u32 %v317, 4294901760
        %872 = vmatpush.msra.mxu0 %v871
        %v873 = vand.u32 %v301, 4294901760
        %874 = vmatpush.msra.mxu0 %v873
        %v875 = vand.u32 %v285, 4294901760
        %876 = vmatpush.msra.mxu0 %v875
        %v877 = vand.u32 %v269, 4294901760
        %878 = vmatpush.msra.mxu0 %v877
        %v879 = vand.u32 %v253, 4294901760
        %880 = vmatpush.msra.mxu0 %v879
        %v881 = vand.u32 %v237, 4294901760
        %882 = vmatpush.msra.mxu0 %v881
        %v883 = vand.u32 %v221, 4294901760
        %884 = vmatpush.msra.mxu0 %v883
        %v885 = vand.u32 %v219, 4294901760
        %v886 = vsub.f32 %v219, %v885
        %v887 = vand.u32 %v886, 4294901760
        %v888 = vsub.f32 %v886, %v887
        %v889 = vand.u32 %v888, 4294901760
        %890 = vmatmul.f32.gmra.mxu0 %v889
        %v891 = vpop.f32.mrf.mxu0
        %v892 = vadd.f32 %v481, %v891
        %893 = vdwg.mxu0
        %v894 = vand.u32 %v461, 4294901760
        %v895 = vsub.f32 %v461, %v894
        %v896 = vand.u32 %v895, 4294901760
        %v897 = vsub.f32 %v895, %v896
        %v898 = vand.u32 %v897, 4294901760
        %899 = vmatpush.msra.mxu0 %v898
        %v900 = vand.u32 %v445, 4294901760
        %v901 = vsub.f32 %v445, %v900
        %v902 = vand.u32 %v901, 4294901760
        %v903 = vsub.f32 %v901, %v902
        %v904 = vand.u32 %v903, 4294901760
        %905 = vmatpush.msra.mxu0 %v904
        %v906 = vand.u32 %v429, 4294901760
        %v907 = vsub.f32 %v429, %v906
        %v908 = vand.u32 %v907, 4294901760
        %v909 = vsub.f32 %v907, %v908
        %v910 = vand.u32 %v909, 4294901760
        %911 = vmatpush.msra.mxu0 %v910
        %v912 = vand.u32 %v413, 4294901760
        %v913 = vsub.f32 %v413, %v912
        %v914 = vand.u32 %v913, 4294901760
        %v915 = vsub.f32 %v913, %v914
        %v916 = vand.u32 %v915, 4294901760
        %917 = vmatpush.msra.mxu0 %v916
        %v918 = vand.u32 %v397, 4294901760
        %v919 = vsub.f32 %v397, %v918
        %v920 = vand.u32 %v919, 4294901760
        %v921 = vsub.f32 %v919, %v920
        %v922 = vand.u32 %v921, 4294901760
        %923 = vmatpush.msra.mxu0 %v922
        %v924 = vand.u32 %v381, 4294901760
        %v925 = vsub.f32 %v381, %v924
        %v926 = vand.u32 %v925, 4294901760
        %v927 = vsub.f32 %v925, %v926
        %v928 = vand.u32 %v927, 4294901760
        %929 = vmatpush.msra.mxu0 %v928
        %v930 = vand.u32 %v365, 4294901760
        %v931 = vsub.f32 %v365, %v930
        %v932 = vand.u32 %v931, 4294901760
        %v933 = vsub.f32 %v931, %v932
        %v934 = vand.u32 %v933, 4294901760
        %935 = vmatpush.msra.mxu0 %v934
        %v936 = vand.u32 %v349, 4294901760
        %v937 = vsub.f32 %v349, %v936
        %v938 = vand.u32 %v937, 4294901760
        %v939 = vsub.f32 %v937, %v938
        %v940 = vand.u32 %v939, 4294901760
        %941 = vmatpush.msra.mxu0 %v940
        %v942 = vand.u32 %v333, 4294901760
        %v943 = vsub.f32 %v333, %v942
        %v944 = vand.u32 %v943, 4294901760
        %v945 = vsub.f32 %v943, %v944
        %v946 = vand.u32 %v945, 4294901760
        %947 = vmatpush.msra.mxu0 %v946
        %v948 = vand.u32 %v317, 4294901760
        %v949 = vsub.f32 %v317, %v948
        %v950 = vand.u32 %v949, 4294901760
        %v951 = vsub.f32 %v949, %v950
        %v952 = vand.u32 %v951, 4294901760
        %953 = vmatpush.msra.mxu0 %v952
        %v954 = vand.u32 %v301, 4294901760
        %v955 = vsub.f32 %v301, %v954
        %v956 = vand.u32 %v955, 4294901760
        %v957 = vsub.f32 %v955, %v956
        %v958 = vand.u32 %v957, 4294901760
        %959 = vmatpush.msra.mxu0 %v958
        %v960 = vand.u32 %v285, 4294901760
        %v961 = vsub.f32 %v285, %v960
        %v962 = vand.u32 %v961, 4294901760
        %v963 = vsub.f32 %v961, %v962
        %v964 = vand.u32 %v963, 4294901760
        %965 = vmatpush.msra.mxu0 %v964
        %v966 = vand.u32 %v269, 4294901760
        %v967 = vsub.f32 %v269, %v966
        %v968 = vand.u32 %v967, 4294901760
        %v969 = vsub.f32 %v967, %v968
        %v970 = vand.u32 %v969, 4294901760
        %971 = vmatpush.msra.mxu0 %v970
        %v972 = vand.u32 %v253, 4294901760
        %v973 = vsub.f32 %v253, %v972
        %v974 = vand.u32 %v973, 4294901760
        %v975 = vsub.f32 %v973, %v974
        %v976 = vand.u32 %v975, 4294901760
        %977 = vmatpush.msra.mxu0 %v976
        %v978 = vand.u32 %v237, 4294901760
        %v979 = vsub.f32 %v237, %v978
        %v980 = vand.u32 %v979, 4294901760
        %v981 = vsub.f32 %v979, %v980
        %v982 = vand.u32 %v981, 4294901760
        %983 = vmatpush.msra.mxu0 %v982
        %v984 = vand.u32 %v221, 4294901760
        %v985 = vsub.f32 %v221, %v984
        %v986 = vand.u32 %v985, 4294901760
        %v987 = vsub.f32 %v985, %v986
        %v988 = vand.u32 %v987, 4294901760
        %989 = vmatpush.msra.mxu0 %v988
        %v990 = vand.u32 %v219, 4294901760
        %991 = vmatmul.f32.gmra.mxu0 %v990
        %v992 = vpop.f32.mrf.mxu0
        %v993 = vadd.f32 %v892, %v992
        %994 = vdwg.mxu0
        %v995 = vand.u32 %v461, 4294901760
        %v996 = vsub.f32 %v461, %v995
        %997 = vmatpush.msra.mxu0 %v996
        %v998 = vand.u32 %v445, 4294901760
        %v999 = vsub.f32 %v445, %v998
        %1000 = vmatpush.msra.mxu0 %v999
        %v1001 = vand.u32 %v429, 4294901760
        %v1002 = vsub.f32 %v429, %v1001
        %1003 = vmatpush.msra.mxu0 %v1002
        %v1004 = vand.u32 %v413, 4294901760
        %v1005 = vsub.f32 %v413, %v1004
        %1006 = vmatpush.msra.mxu0 %v1005
        %v1007 = vand.u32 %v397, 4294901760
        %v1008 = vsub.f32 %v397, %v1007
        %1009 = vmatpush.msra.mxu0 %v1008
        %v1010 = vand.u32 %v381, 4294901760
        %v1011 = vsub.f32 %v381, %v1010
        %1012 = vmatpush.msra.mxu0 %v1011
        %v1013 = vand.u32 %v365, 4294901760
        %v1014 = vsub.f32 %v365, %v1013
        %1015 = vmatpush.msra.mxu0 %v1014
        %v1016 = vand.u32 %v349, 4294901760
        %v1017 = vsub.f32 %v349, %v1016
        %1018 = vmatpush.msra.mxu0 %v1017
        %v1019 = vand.u32 %v333, 4294901760
        %v1020 = vsub.f32 %v333, %v1019
        %1021 = vmatpush.msra.mxu0 %v1020
        %v1022 = vand.u32 %v317, 4294901760
        %v1023 = vsub.f32 %v317, %v1022
        %1024 = vmatpush.msra.mxu0 %v1023
        %v1025 = vand.u32 %v301, 4294901760
        %v1026 = vsub.f32 %v301, %v1025
        %1027 = vmatpush.msra.mxu0 %v1026
        %v1028 = vand.u32 %v285, 4294901760
        %v1029 = vsub.f32 %v285, %v1028
        %1030 = vmatpush.msra.mxu0 %v1029
        %v1031 = vand.u32 %v269, 4294901760
        %v1032 = vsub.f32 %v269, %v1031
        %1033 = vmatpush.msra.mxu0 %v1032
        %v1034 = vand.u32 %v253, 4294901760
        %v1035 = vsub.f32 %v253, %v1034
        %1036 = vmatpush.msra.mxu0 %v1035
        %v1037 = vand.u32 %v237, 4294901760
        %v1038 = vsub.f32 %v237, %v1037
        %1039 = vmatpush.msra.mxu0 %v1038
        %v1040 = vand.u32 %v221, 4294901760
        %v1041 = vsub.f32 %v221, %v1040
        %1042 = vmatpush.msra.mxu0 %v1041
        %v1043 = vand.u32 %v219, 4294901760
        %v1044 = vsub.f32 %v219, %v1043
        %1045 = vmatmul.f32.gmra.mxu0 %v1044
        %v1046 = vpop.f32.mrf.mxu0
        %v1047 = vadd.f32 %v993, %v1046
        %1048 = vdwg.mxu0
        %v1049 = vand.u32 %v461, 4294901760
        %1050 = vmatpush.msra.mxu0 %v1049
        %v1051 = vand.u32 %v445, 4294901760
        %1052 = vmatpush.msra.mxu0 %v1051
        %v1053 = vand.u32 %v429, 4294901760
        %1054 = vmatpush.msra.mxu0 %v1053
        %v1055 = vand.u32 %v413, 4294901760
        %1056 = vmatpush.msra.mxu0 %v1055
        %v1057 = vand.u32 %v397, 4294901760
        %1058 = vmatpush.msra.mxu0 %v1057
        %v1059 = vand.u32 %v381, 4294901760
        %1060 = vmatpush.msra.mxu0 %v1059
        %v1061 = vand.u32 %v365, 4294901760
        %1062 = vmatpush.msra.mxu0 %v1061
        %v1063 = vand.u32 %v349, 4294901760
        %1064 = vmatpush.msra.mxu0 %v1063
        %v1065 = vand.u32 %v333, 4294901760
        %1066 = vmatpush.msra.mxu0 %v1065
        %v1067 = vand.u32 %v317, 4294901760
        %1068 = vmatpush.msra.mxu0 %v1067
        %v1069 = vand.u32 %v301, 4294901760
        %1070 = vmatpush.msra.mxu0 %v1069
        %v1071 = vand.u32 %v285, 4294901760
        %1072 = vmatpush.msra.mxu0 %v1071
        %v1073 = vand.u32 %v269, 4294901760
        %1074 = vmatpush.msra.mxu0 %v1073
        %v1075 = vand.u32 %v253, 4294901760
        %1076 = vmatpush.msra.mxu0 %v1075
        %v1077 = vand.u32 %v237, 4294901760
        %1078 = vmatpush.msra.mxu0 %v1077
        %v1079 = vand.u32 %v221, 4294901760
        %1080 = vmatpush.msra.mxu0 %v1079
        %v1081 = vand.u32 %v219, 4294901760
        %v1082 = vsub.f32 %v219, %v1081
        %v1083 = vand.u32 %v1082, 4294901760
        %1084 = vmatmul.f32.gmra.mxu0 %v1083
        %v1085 = vpop.f32.mrf.mxu0
        %v1086 = vadd.f32 %v1047, %v1085
        %1087 = vdwg.mxu0
        %v1088 = vand.u32 %v461, 4294901760
        %v1089 = vsub.f32 %v461, %v1088
        %v1090 = vand.u32 %v1089, 4294901760
        %1091 = vmatpush.msra.mxu0 %v1090
        %v1092 = vand.u32 %v445, 4294901760
        %v1093 = vsub.f32 %v445, %v1092
        %v1094 = vand.u32 %v1093, 4294901760
        %1095 = vmatpush.msra.mxu0 %v1094
        %v1096 = vand.u32 %v429, 4294901760
        %v1097 = vsub.f32 %v429, %v1096
        %v1098 = vand.u32 %v1097, 4294901760
        %1099 = vmatpush.msra.mxu0 %v1098
        %v1100 = vand.u32 %v413, 4294901760
        %v1101 = vsub.f32 %v413, %v1100
        %v1102 = vand.u32 %v1101, 4294901760
        %1103 = vmatpush.msra.mxu0 %v1102
        %v1104 = vand.u32 %v397, 4294901760
        %v1105 = vsub.f32 %v397, %v1104
        %v1106 = vand.u32 %v1105, 4294901760
        %1107 = vmatpush.msra.mxu0 %v1106
        %v1108 = vand.u32 %v381, 4294901760
        %v1109 = vsub.f32 %v381, %v1108
        %v1110 = vand.u32 %v1109, 4294901760
        %1111 = vmatpush.msra.mxu0 %v1110
        %v1112 = vand.u32 %v365, 4294901760
        %v1113 = vsub.f32 %v365, %v1112
        %v1114 = vand.u32 %v1113, 4294901760
        %1115 = vmatpush.msra.mxu0 %v1114
        %v1116 = vand.u32 %v349, 4294901760
        %v1117 = vsub.f32 %v349, %v1116
        %v1118 = vand.u32 %v1117, 4294901760
        %1119 = vmatpush.msra.mxu0 %v1118
        %v1120 = vand.u32 %v333, 4294901760
        %v1121 = vsub.f32 %v333, %v1120
        %v1122 = vand.u32 %v1121, 4294901760
        %1123 = vmatpush.msra.mxu0 %v1122
        %v1124 = vand.u32 %v317, 4294901760
        %v1125 = vsub.f32 %v317, %v1124
        %v1126 = vand.u32 %v1125, 4294901760
        %1127 = vmatpush.msra.mxu0 %v1126
        %v1128 = vand.u32 %v301, 4294901760
        %v1129 = vsub.f32 %v301, %v1128
        %v1130 = vand.u32 %v1129, 4294901760
        %1131 = vmatpush.msra.mxu0 %v1130
        %v1132 = vand.u32 %v285, 4294901760
        %v1133 = vsub.f32 %v285, %v1132
        %v1134 = vand.u32 %v1133, 4294901760
        %1135 = vmatpush.msra.mxu0 %v1134
        %v1136 = vand.u32 %v269, 4294901760
        %v1137 = vsub.f32 %v269, %v1136
        %v1138 = vand.u32 %v1137, 4294901760
        %1139 = vmatpush.msra.mxu0 %v1138
        %v1140 = vand.u32 %v253, 4294901760
        %v1141 = vsub.f32 %v253, %v1140
        %v1142 = vand.u32 %v1141, 4294901760
        %1143 = vmatpush.msra.mxu0 %v1142
        %v1144 = vand.u32 %v237, 4294901760
        %v1145 = vsub.f32 %v237, %v1144
        %v1146 = vand.u32 %v1145, 4294901760
        %1147 = vmatpush.msra.mxu0 %v1146
        %v1148 = vand.u32 %v221, 4294901760
        %v1149 = vsub.f32 %v221, %v1148
        %v1150 = vand.u32 %v1149, 4294901760
        %1151 = vmatpush.msra.mxu0 %v1150
        %v1152 = vand.u32 %v219, 4294901760
        %1153 = vmatmul.f32.gmra.mxu0 %v1152
        %v1154 = vpop.f32.mrf.mxu0
        %v1155 = vadd.f32 %v1086, %v1154
        %1156 = vdwg.mxu0
        %v1157 = vand.u32 %v461, 4294901760
        %1158 = vmatpush.msra.mxu0 %v1157
        %v1159 = vand.u32 %v445, 4294901760
        %1160 = vmatpush.msra.mxu0 %v1159
        %v1161 = vand.u32 %v429, 4294901760
        %1162 = vmatpush.msra.mxu0 %v1161
        %v1163 = vand.u32 %v413, 4294901760
        %1164 = vmatpush.msra.mxu0 %v1163
        %v1165 = vand.u32 %v397, 4294901760
        %1166 = vmatpush.msra.mxu0 %v1165
        %v1167 = vand.u32 %v381, 4294901760
        %1168 = vmatpush.msra.mxu0 %v1167
        %v1169 = vand.u32 %v365, 4294901760
        %1170 = vmatpush.msra.mxu0 %v1169
        %v1171 = vand.u32 %v349, 4294901760
        %1172 = vmatpush.msra.mxu0 %v1171
        %v1173 = vand.u32 %v333, 4294901760
        %1174 = vmatpush.msra.mxu0 %v1173
        %v1175 = vand.u32 %v317, 4294901760
        %1176 = vmatpush.msra.mxu0 %v1175
        %v1177 = vand.u32 %v301, 4294901760
        %1178 = vmatpush.msra.mxu0 %v1177
        %v1179 = vand.u32 %v285, 4294901760
        %1180 = vmatpush.msra.mxu0 %v1179
        %v1181 = vand.u32 %v269, 4294901760
        %1182 = vmatpush.msra.mxu0 %v1181
        %v1183 = vand.u32 %v253, 4294901760
        %1184 = vmatpush.msra.mxu0 %v1183
        %v1185 = vand.u32 %v237, 4294901760
        %1186 = vmatpush.msra.mxu0 %v1185
        %v1187 = vand.u32 %v221, 4294901760
        %1188 = vmatpush.msra.mxu0 %v1187
        %v1189 = vand.u32 %v219, 4294901760
        %1190 = vmatmul.f32.gmra.mxu0 %v1189
        %v1191 = vpop.f32.mrf.mxu0
        %v1192 = vadd.f32 %v1155, %v1191
        %1193 = vdwg.mxu0
        %v1194 = vand.u32 %v462, 4294901760
        %1195 = vmatpush.msra.mxu0 %v1194
        %v1196 = vand.u32 %v446, 4294901760
        %1197 = vmatpush.msra.mxu0 %v1196
        %v1198 = vand.u32 %v430, 4294901760
        %1199 = vmatpush.msra.mxu0 %v1198
        %v1200 = vand.u32 %v414, 4294901760
        %1201 = vmatpush.msra.mxu0 %v1200
        %v1202 = vand.u32 %v398, 4294901760
        %1203 = vmatpush.msra.mxu0 %v1202
        %v1204 = vand.u32 %v382, 4294901760
        %1205 = vmatpush.msra.mxu0 %v1204
        %v1206 = vand.u32 %v366, 4294901760
        %1207 = vmatpush.msra.mxu0 %v1206
        %v1208 = vand.u32 %v350, 4294901760
        %1209 = vmatpush.msra.mxu0 %v1208
        %v1210 = vand.u32 %v334, 4294901760
        %1211 = vmatpush.msra.mxu0 %v1210
        %v1212 = vand.u32 %v318, 4294901760
        %1213 = vmatpush.msra.mxu0 %v1212
        %v1214 = vand.u32 %v302, 4294901760
        %1215 = vmatpush.msra.mxu0 %v1214
        %v1216 = vand.u32 %v286, 4294901760
        %1217 = vmatpush.msra.mxu0 %v1216
        %v1218 = vand.u32 %v270, 4294901760
        %1219 = vmatpush.msra.mxu0 %v1218
        %v1220 = vand.u32 %v254, 4294901760
        %1221 = vmatpush.msra.mxu0 %v1220
        %v1222 = vand.u32 %v238, 4294901760
        %1223 = vmatpush.msra.mxu0 %v1222
        %v1224 = vand.u32 %v222, 4294901760
        %1225 = vmatpush.msra.mxu0 %v1224
        %v1226 = vand.u32 %v219, 4294901760
        %v1227 = vsub.f32 %v219, %v1226
        %v1228 = vand.u32 %v1227, 4294901760
        %v1229 = vsub.f32 %v1227, %v1228
        %v1230 = vand.u32 %v1229, 4294901760
        %1231 = vmatmul.f32.gmra.mxu0 %v1230
        %v1232 = vpop.f32.mrf.mxu0
        %v1233 = vadd.f32 %v482, %v1232
        %1234 = vdwg.mxu0
        %v1235 = vand.u32 %v462, 4294901760
        %v1236 = vsub.f32 %v462, %v1235
        %v1237 = vand.u32 %v1236, 4294901760
        %v1238 = vsub.f32 %v1236, %v1237
        %v1239 = vand.u32 %v1238, 4294901760
        %1240 = vmatpush.msra.mxu0 %v1239
        %v1241 = vand.u32 %v446, 4294901760
        %v1242 = vsub.f32 %v446, %v1241
        %v1243 = vand.u32 %v1242, 4294901760
        %v1244 = vsub.f32 %v1242, %v1243
        %v1245 = vand.u32 %v1244, 4294901760
        %1246 = vmatpush.msra.mxu0 %v1245
        %v1247 = vand.u32 %v430, 4294901760
        %v1248 = vsub.f32 %v430, %v1247
        %v1249 = vand.u32 %v1248, 4294901760
        %v1250 = vsub.f32 %v1248, %v1249
        %v1251 = vand.u32 %v1250, 4294901760
        %1252 = vmatpush.msra.mxu0 %v1251
        %v1253 = vand.u32 %v414, 4294901760
        %v1254 = vsub.f32 %v414, %v1253
        %v1255 = vand.u32 %v1254, 4294901760
        %v1256 = vsub.f32 %v1254, %v1255
        %v1257 = vand.u32 %v1256, 4294901760
        %1258 = vmatpush.msra.mxu0 %v1257
        %v1259 = vand.u32 %v398, 4294901760
        %v1260 = vsub.f32 %v398, %v1259
        %v1261 = vand.u32 %v1260, 4294901760
        %v1262 = vsub.f32 %v1260, %v1261
        %v1263 = vand.u32 %v1262, 4294901760
        %1264 = vmatpush.msra.mxu0 %v1263
        %v1265 = vand.u32 %v382, 4294901760
        %v1266 = vsub.f32 %v382, %v1265
        %v1267 = vand.u32 %v1266, 4294901760
        %v1268 = vsub.f32 %v1266, %v1267
        %v1269 = vand.u32 %v1268, 4294901760
        %1270 = vmatpush.msra.mxu0 %v1269
        %v1271 = vand.u32 %v366, 4294901760
        %v1272 = vsub.f32 %v366, %v1271
        %v1273 = vand.u32 %v1272, 4294901760
        %v1274 = vsub.f32 %v1272, %v1273
        %v1275 = vand.u32 %v1274, 4294901760
        %1276 = vmatpush.msra.mxu0 %v1275
        %v1277 = vand.u32 %v350, 4294901760
        %v1278 = vsub.f32 %v350, %v1277
        %v1279 = vand.u32 %v1278, 4294901760
        %v1280 = vsub.f32 %v1278, %v1279
        %v1281 = vand.u32 %v1280, 4294901760
        %1282 = vmatpush.msra.mxu0 %v1281
        %v1283 = vand.u32 %v334, 4294901760
        %v1284 = vsub.f32 %v334, %v1283
        %v1285 = vand.u32 %v1284, 4294901760
        %v1286 = vsub.f32 %v1284, %v1285
        %v1287 = vand.u32 %v1286, 4294901760
        %1288 = vmatpush.msra.mxu0 %v1287
        %v1289 = vand.u32 %v318, 4294901760
        %v1290 = vsub.f32 %v318, %v1289
        %v1291 = vand.u32 %v1290, 4294901760
        %v1292 = vsub.f32 %v1290, %v1291
        %v1293 = vand.u32 %v1292, 4294901760
        %1294 = vmatpush.msra.mxu0 %v1293
        %v1295 = vand.u32 %v302, 4294901760
        %v1296 = vsub.f32 %v302, %v1295
        %v1297 = vand.u32 %v1296, 4294901760
        %v1298 = vsub.f32 %v1296, %v1297
        %v1299 = vand.u32 %v1298, 4294901760
        %1300 = vmatpush.msra.mxu0 %v1299
        %v1301 = vand.u32 %v286, 4294901760
        %v1302 = vsub.f32 %v286, %v1301
        %v1303 = vand.u32 %v1302, 4294901760
        %v1304 = vsub.f32 %v1302, %v1303
        %v1305 = vand.u32 %v1304, 4294901760
        %1306 = vmatpush.msra.mxu0 %v1305
        %v1307 = vand.u32 %v270, 4294901760
        %v1308 = vsub.f32 %v270, %v1307
        %v1309 = vand.u32 %v1308, 4294901760
        %v1310 = vsub.f32 %v1308, %v1309
        %v1311 = vand.u32 %v1310, 4294901760
        %1312 = vmatpush.msra.mxu0 %v1311
        %v1313 = vand.u32 %v254, 4294901760
        %v1314 = vsub.f32 %v254, %v1313
        %v1315 = vand.u32 %v1314, 4294901760
        %v1316 = vsub.f32 %v1314, %v1315
        %v1317 = vand.u32 %v1316, 4294901760
        %1318 = vmatpush.msra.mxu0 %v1317
        %v1319 = vand.u32 %v238, 4294901760
        %v1320 = vsub.f32 %v238, %v1319
        %v1321 = vand.u32 %v1320, 4294901760
        %v1322 = vsub.f32 %v1320, %v1321
        %v1323 = vand.u32 %v1322, 4294901760
        %1324 = vmatpush.msra.mxu0 %v1323
        %v1325 = vand.u32 %v222, 4294901760
        %v1326 = vsub.f32 %v222, %v1325
        %v1327 = vand.u32 %v1326, 4294901760
        %v1328 = vsub.f32 %v1326, %v1327
        %v1329 = vand.u32 %v1328, 4294901760
        %1330 = vmatpush.msra.mxu0 %v1329
        %v1331 = vand.u32 %v219, 4294901760
        %1332 = vmatmul.f32.gmra.mxu0 %v1331
        %v1333 = vpop.f32.mrf.mxu0
        %v1334 = vadd.f32 %v1233, %v1333
        %1335 = vdwg.mxu0
        %v1336 = vand.u32 %v462, 4294901760
        %v1337 = vsub.f32 %v462, %v1336
        %1338 = vmatpush.msra.mxu0 %v1337
        %v1339 = vand.u32 %v446, 4294901760
        %v1340 = vsub.f32 %v446, %v1339
        %1341 = vmatpush.msra.mxu0 %v1340
        %v1342 = vand.u32 %v430, 4294901760
        %v1343 = vsub.f32 %v430, %v1342
        %1344 = vmatpush.msra.mxu0 %v1343
        %v1345 = vand.u32 %v414, 4294901760
        %v1346 = vsub.f32 %v414, %v1345
        %1347 = vmatpush.msra.mxu0 %v1346
        %v1348 = vand.u32 %v398, 4294901760
        %v1349 = vsub.f32 %v398, %v1348
        %1350 = vmatpush.msra.mxu0 %v1349
        %v1351 = vand.u32 %v382, 4294901760
        %v1352 = vsub.f32 %v382, %v1351
        %1353 = vmatpush.msra.mxu0 %v1352
        %v1354 = vand.u32 %v366, 4294901760
        %v1355 = vsub.f32 %v366, %v1354
        %1356 = vmatpush.msra.mxu0 %v1355
        %v1357 = vand.u32 %v350, 4294901760
        %v1358 = vsub.f32 %v350, %v1357
        %1359 = vmatpush.msra.mxu0 %v1358
        %v1360 = vand.u32 %v334, 4294901760
        %v1361 = vsub.f32 %v334, %v1360
        %1362 = vmatpush.msra.mxu0 %v1361
        %v1363 = vand.u32 %v318, 4294901760
        %v1364 = vsub.f32 %v318, %v1363
        %1365 = vmatpush.msra.mxu0 %v1364
        %v1366 = vand.u32 %v302, 4294901760
        %v1367 = vsub.f32 %v302, %v1366
        %1368 = vmatpush.msra.mxu0 %v1367
        %v1369 = vand.u32 %v286, 4294901760
        %v1370 = vsub.f32 %v286, %v1369
        %1371 = vmatpush.msra.mxu0 %v1370
        %v1372 = vand.u32 %v270, 4294901760
        %v1373 = vsub.f32 %v270, %v1372
        %1374 = vmatpush.msra.mxu0 %v1373
        %v1375 = vand.u32 %v254, 4294901760
        %v1376 = vsub.f32 %v254, %v1375
        %1377 = vmatpush.msra.mxu0 %v1376
        %v1378 = vand.u32 %v238, 4294901760
        %v1379 = vsub.f32 %v238, %v1378
        %1380 = vmatpush.msra.mxu0 %v1379
        %v1381 = vand.u32 %v222, 4294901760
        %v1382 = vsub.f32 %v222, %v1381
        %1383 = vmatpush.msra.mxu0 %v1382
        %v1384 = vand.u32 %v219, 4294901760
        %v1385 = vsub.f32 %v219, %v1384
        %1386 = vmatmul.f32.gmra.mxu0 %v1385
        %v1387 = vpop.f32.mrf.mxu0
        %v1388 = vadd.f32 %v1334, %v1387
        %1389 = vdwg.mxu0
        %v1390 = vand.u32 %v462, 4294901760
        %1391 = vmatpush.msra.mxu0 %v1390
        %v1392 = vand.u32 %v446, 4294901760
        %1393 = vmatpush.msra.mxu0 %v1392
        %v1394 = vand.u32 %v430, 4294901760
        %1395 = vmatpush.msra.mxu0 %v1394
        %v1396 = vand.u32 %v414, 4294901760
        %1397 = vmatpush.msra.mxu0 %v1396
        %v1398 = vand.u32 %v398, 4294901760
        %1399 = vmatpush.msra.mxu0 %v1398
        %v1400 = vand.u32 %v382, 4294901760
        %1401 = vmatpush.msra.mxu0 %v1400
        %v1402 = vand.u32 %v366, 4294901760
        %1403 = vmatpush.msra.mxu0 %v1402
        %v1404 = vand.u32 %v350, 4294901760
        %1405 = vmatpush.msra.mxu0 %v1404
        %v1406 = vand.u32 %v334, 4294901760
        %1407 = vmatpush.msra.mxu0 %v1406
        %v1408 = vand.u32 %v318, 4294901760
        %1409 = vmatpush.msra.mxu0 %v1408
        %v1410 = vand.u32 %v302, 4294901760
        %1411 = vmatpush.msra.mxu0 %v1410
        %v1412 = vand.u32 %v286, 4294901760
        %1413 = vmatpush.msra.mxu0 %v1412
        %v1414 = vand.u32 %v270, 4294901760
        %1415 = vmatpush.msra.mxu0 %v1414
        %v1416 = vand.u32 %v254, 4294901760
        %1417 = vmatpush.msra.mxu0 %v1416
        %v1418 = vand.u32 %v238, 4294901760
        %1419 = vmatpush.msra.mxu0 %v1418
        %v1420 = vand.u32 %v222, 4294901760
        %1421 = vmatpush.msra.mxu0 %v1420
        %v1422 = vand.u32 %v219, 4294901760
        %v1423 = vsub.f32 %v219, %v1422
        %v1424 = vand.u32 %v1423, 4294901760
        %1425 = vmatmul.f32.gmra.mxu0 %v1424
        %v1426 = vpop.f32.mrf.mxu0
        %v1427 = vadd.f32 %v1388, %v1426
        %1428 = vdwg.mxu0
        %v1429 = vand.u32 %v462, 4294901760
        %v1430 = vsub.f32 %v462, %v1429
        %v1431 = vand.u32 %v1430, 4294901760
        %1432 = vmatpush.msra.mxu0 %v1431
        %v1433 = vand.u32 %v446, 4294901760
        %v1434 = vsub.f32 %v446, %v1433
        %v1435 = vand.u32 %v1434, 4294901760
        %1436 = vmatpush.msra.mxu0 %v1435
        %v1437 = vand.u32 %v430, 4294901760
        %v1438 = vsub.f32 %v430, %v1437
        %v1439 = vand.u32 %v1438, 4294901760
        %1440 = vmatpush.msra.mxu0 %v1439
        %v1441 = vand.u32 %v414, 4294901760
        %v1442 = vsub.f32 %v414, %v1441
        %v1443 = vand.u32 %v1442, 4294901760
        %1444 = vmatpush.msra.mxu0 %v1443
        %v1445 = vand.u32 %v398, 4294901760
        %v1446 = vsub.f32 %v398, %v1445
        %v1447 = vand.u32 %v1446, 4294901760
        %1448 = vmatpush.msra.mxu0 %v1447
        %v1449 = vand.u32 %v382, 4294901760
        %v1450 = vsub.f32 %v382, %v1449
        %v1451 = vand.u32 %v1450, 4294901760
        %1452 = vmatpush.msra.mxu0 %v1451
        %v1453 = vand.u32 %v366, 4294901760
        %v1454 = vsub.f32 %v366, %v1453
        %v1455 = vand.u32 %v1454, 4294901760
        %1456 = vmatpush.msra.mxu0 %v1455
        %v1457 = vand.u32 %v350, 4294901760
        %v1458 = vsub.f32 %v350, %v1457
        %v1459 = vand.u32 %v1458, 4294901760
        %1460 = vmatpush.msra.mxu0 %v1459
        %v1461 = vand.u32 %v334, 4294901760
        %v1462 = vsub.f32 %v334, %v1461
        %v1463 = vand.u32 %v1462, 4294901760
        %1464 = vmatpush.msra.mxu0 %v1463
        %v1465 = vand.u32 %v318, 4294901760
        %v1466 = vsub.f32 %v318, %v1465
        %v1467 = vand.u32 %v1466, 4294901760
        %1468 = vmatpush.msra.mxu0 %v1467
        %v1469 = vand.u32 %v302, 4294901760
        %v1470 = vsub.f32 %v302, %v1469
        %v1471 = vand.u32 %v1470, 4294901760
        %1472 = vmatpush.msra.mxu0 %v1471
        %v1473 = vand.u32 %v286, 4294901760
        %v1474 = vsub.f32 %v286, %v1473
        %v1475 = vand.u32 %v1474, 4294901760
        %1476 = vmatpush.msra.mxu0 %v1475
        %v1477 = vand.u32 %v270, 4294901760
        %v1478 = vsub.f32 %v270, %v1477
        %v1479 = vand.u32 %v1478, 4294901760
        %1480 = vmatpush.msra.mxu0 %v1479
        %v1481 = vand.u32 %v254, 4294901760
        %v1482 = vsub.f32 %v254, %v1481
        %v1483 = vand.u32 %v1482, 4294901760
        %1484 = vmatpush.msra.mxu0 %v1483
        %v1485 = vand.u32 %v238, 4294901760
        %v1486 = vsub.f32 %v238, %v1485
        %v1487 = vand.u32 %v1486, 4294901760
        %1488 = vmatpush.msra.mxu0 %v1487
        %v1489 = vand.u32 %v222, 4294901760
        %v1490 = vsub.f32 %v222, %v1489
        %v1491 = vand.u32 %v1490, 4294901760
        %1492 = vmatpush.msra.mxu0 %v1491
        %v1493 = vand.u32 %v219, 4294901760
        %1494 = vmatmul.f32.gmra.mxu0 %v1493
        %v1495 = vpop.f32.mrf.mxu0
        %v1496 = vadd.f32 %v1427, %v1495
        %1497 = vdwg.mxu0
        %v1498 = vand.u32 %v462, 4294901760
        %1499 = vmatpush.msra.mxu0 %v1498
        %v1500 = vand.u32 %v446, 4294901760
        %1501 = vmatpush.msra.mxu0 %v1500
        %v1502 = vand.u32 %v430, 4294901760
        %1503 = vmatpush.msra.mxu0 %v1502
        %v1504 = vand.u32 %v414, 4294901760
        %1505 = vmatpush.msra.mxu0 %v1504
        %v1506 = vand.u32 %v398, 4294901760
        %1507 = vmatpush.msra.mxu0 %v1506
        %v1508 = vand.u32 %v382, 4294901760
        %1509 = vmatpush.msra.mxu0 %v1508
        %v1510 = vand.u32 %v366, 4294901760
        %1511 = vmatpush.msra.mxu0 %v1510
        %v1512 = vand.u32 %v350, 4294901760
        %1513 = vmatpush.msra.mxu0 %v1512
        %v1514 = vand.u32 %v334, 4294901760
        %1515 = vmatpush.msra.mxu0 %v1514
        %v1516 = vand.u32 %v318, 4294901760
        %1517 = vmatpush.msra.mxu0 %v1516
        %v1518 = vand.u32 %v302, 4294901760
        %1519 = vmatpush.msra.mxu0 %v1518
        %v1520 = vand.u32 %v286, 4294901760
        %1521 = vmatpush.msra.mxu0 %v1520
        %v1522 = vand.u32 %v270, 4294901760
        %1523 = vmatpush.msra.mxu0 %v1522
        %v1524 = vand.u32 %v254, 4294901760
        %1525 = vmatpush.msra.mxu0 %v1524
        %v1526 = vand.u32 %v238, 4294901760
        %1527 = vmatpush.msra.mxu0 %v1526
        %v1528 = vand.u32 %v222, 4294901760
        %1529 = vmatpush.msra.mxu0 %v1528
        %v1530 = vand.u32 %v219, 4294901760
        %1531 = vmatmul.f32.gmra.mxu0 %v1530
        %v1532 = vpop.f32.mrf.mxu0
        %v1533 = vadd.f32 %v1496, %v1532
        %1534 = vdwg.mxu0
        %v1535 = vand.u32 %v463, 4294901760
        %1536 = vmatpush.msra.mxu0 %v1535
        %v1537 = vand.u32 %v447, 4294901760
        %1538 = vmatpush.msra.mxu0 %v1537
        %v1539 = vand.u32 %v431, 4294901760
        %1540 = vmatpush.msra.mxu0 %v1539
        %v1541 = vand.u32 %v415, 4294901760
        %1542 = vmatpush.msra.mxu0 %v1541
        %v1543 = vand.u32 %v399, 4294901760
        %1544 = vmatpush.msra.mxu0 %v1543
        %v1545 = vand.u32 %v383, 4294901760
        %1546 = vmatpush.msra.mxu0 %v1545
        %v1547 = vand.u32 %v367, 4294901760
        %1548 = vmatpush.msra.mxu0 %v1547
        %v1549 = vand.u32 %v351, 4294901760
        %1550 = vmatpush.msra.mxu0 %v1549
        %v1551 = vand.u32 %v335, 4294901760
        %1552 = vmatpush.msra.mxu0 %v1551
        %v1553 = vand.u32 %v319, 4294901760
        %1554 = vmatpush.msra.mxu0 %v1553
        %v1555 = vand.u32 %v303, 4294901760
        %1556 = vmatpush.msra.mxu0 %v1555
        %v1557 = vand.u32 %v287, 4294901760
        %1558 = vmatpush.msra.mxu0 %v1557
        %v1559 = vand.u32 %v271, 4294901760
        %1560 = vmatpush.msra.mxu0 %v1559
        %v1561 = vand.u32 %v255, 4294901760
        %1562 = vmatpush.msra.mxu0 %v1561
        %v1563 = vand.u32 %v239, 4294901760
        %1564 = vmatpush.msra.mxu0 %v1563
        %v1565 = vand.u32 %v223, 4294901760
        %1566 = vmatpush.msra.mxu0 %v1565
        %v1567 = vand.u32 %v219, 4294901760
        %v1568 = vsub.f32 %v219, %v1567
        %v1569 = vand.u32 %v1568, 4294901760
        %v1570 = vsub.f32 %v1568, %v1569
        %v1571 = vand.u32 %v1570, 4294901760
        %1572 = vmatmul.f32.gmra.mxu0 %v1571
        %v1573 = vpop.f32.mrf.mxu0
        %v1574 = vadd.f32 %v483, %v1573
        %1575 = vdwg.mxu0
        %v1576 = vand.u32 %v463, 4294901760
        %v1577 = vsub.f32 %v463, %v1576
        %v1578 = vand.u32 %v1577, 4294901760
        %v1579 = vsub.f32 %v1577, %v1578
        %v1580 = vand.u32 %v1579, 4294901760
        %1581 = vmatpush.msra.mxu0 %v1580
        %v1582 = vand.u32 %v447, 4294901760
        %v1583 = vsub.f32 %v447, %v1582
        %v1584 = vand.u32 %v1583, 4294901760
        %v1585 = vsub.f32 %v1583, %v1584
        %v1586 = vand.u32 %v1585, 4294901760
        %1587 = vmatpush.msra.mxu0 %v1586
        %v1588 = vand.u32 %v431, 4294901760
        %v1589 = vsub.f32 %v431, %v1588
        %v1590 = vand.u32 %v1589, 4294901760
        %v1591 = vsub.f32 %v1589, %v1590
        %v1592 = vand.u32 %v1591, 4294901760
        %1593 = vmatpush.msra.mxu0 %v1592
        %v1594 = vand.u32 %v415, 4294901760
        %v1595 = vsub.f32 %v415, %v1594
        %v1596 = vand.u32 %v1595, 4294901760
        %v1597 = vsub.f32 %v1595, %v1596
        %v1598 = vand.u32 %v1597, 4294901760
        %1599 = vmatpush.msra.mxu0 %v1598
        %v1600 = vand.u32 %v399, 4294901760
        %v1601 = vsub.f32 %v399, %v1600
        %v1602 = vand.u32 %v1601, 4294901760
        %v1603 = vsub.f32 %v1601, %v1602
        %v1604 = vand.u32 %v1603, 4294901760
        %1605 = vmatpush.msra.mxu0 %v1604
        %v1606 = vand.u32 %v383, 4294901760
        %v1607 = vsub.f32 %v383, %v1606
        %v1608 = vand.u32 %v1607, 4294901760
        %v1609 = vsub.f32 %v1607, %v1608
        %v1610 = vand.u32 %v1609, 4294901760
        %1611 = vmatpush.msra.mxu0 %v1610
        %v1612 = vand.u32 %v367, 4294901760
        %v1613 = vsub.f32 %v367, %v1612
        %v1614 = vand.u32 %v1613, 4294901760
        %v1615 = vsub.f32 %v1613, %v1614
        %v1616 = vand.u32 %v1615, 4294901760
        %1617 = vmatpush.msra.mxu0 %v1616
        %v1618 = vand.u32 %v351, 4294901760
        %v1619 = vsub.f32 %v351, %v1618
        %v1620 = vand.u32 %v1619, 4294901760
        %v1621 = vsub.f32 %v1619, %v1620
        %v1622 = vand.u32 %v1621, 4294901760
        %1623 = vmatpush.msra.mxu0 %v1622
        %v1624 = vand.u32 %v335, 4294901760
        %v1625 = vsub.f32 %v335, %v1624
        %v1626 = vand.u32 %v1625, 4294901760
        %v1627 = vsub.f32 %v1625, %v1626
        %v1628 = vand.u32 %v1627, 4294901760
        %1629 = vmatpush.msra.mxu0 %v1628
        %v1630 = vand.u32 %v319, 4294901760
        %v1631 = vsub.f32 %v319, %v1630
        %v1632 = vand.u32 %v1631, 4294901760
        %v1633 = vsub.f32 %v1631, %v1632
        %v1634 = vand.u32 %v1633, 4294901760
        %1635 = vmatpush.msra.mxu0 %v1634
        %v1636 = vand.u32 %v303, 4294901760
        %v1637 = vsub.f32 %v303, %v1636
        %v1638 = vand.u32 %v1637, 4294901760
        %v1639 = vsub.f32 %v1637, %v1638
        %v1640 = vand.u32 %v1639, 4294901760
        %1641 = vmatpush.msra.mxu0 %v1640
        %v1642 = vand.u32 %v287, 4294901760
        %v1643 = vsub.f32 %v287, %v1642
        %v1644 = vand.u32 %v1643, 4294901760
        %v1645 = vsub.f32 %v1643, %v1644
        %v1646 = vand.u32 %v1645, 4294901760
        %1647 = vmatpush.msra.mxu0 %v1646
        %v1648 = vand.u32 %v271, 4294901760
        %v1649 = vsub.f32 %v271, %v1648
        %v1650 = vand.u32 %v1649, 4294901760
        %v1651 = vsub.f32 %v1649, %v1650
        %v1652 = vand.u32 %v1651, 4294901760
        %1653 = vmatpush.msra.mxu0 %v1652
        %v1654 = vand.u32 %v255, 4294901760
        %v1655 = vsub.f32 %v255, %v1654
        %v1656 = vand.u32 %v1655, 4294901760
        %v1657 = vsub.f32 %v1655, %v1656
        %v1658 = vand.u32 %v1657, 4294901760
        %1659 = vmatpush.msra.mxu0 %v1658
        %v1660 = vand.u32 %v239, 4294901760
        %v1661 = vsub.f32 %v239, %v1660
        %v1662 = vand.u32 %v1661, 4294901760
        %v1663 = vsub.f32 %v1661, %v1662
        %v1664 = vand.u32 %v1663, 4294901760
        %1665 = vmatpush.msra.mxu0 %v1664
        %v1666 = vand.u32 %v223, 4294901760
        %v1667 = vsub.f32 %v223, %v1666
        %v1668 = vand.u32 %v1667, 4294901760
        %v1669 = vsub.f32 %v1667, %v1668
        %v1670 = vand.u32 %v1669, 4294901760
        %1671 = vmatpush.msra.mxu0 %v1670
        %v1672 = vand.u32 %v219, 4294901760
        %1673 = vmatmul.f32.gmra.mxu0 %v1672
        %v1674 = vpop.f32.mrf.mxu0
        %v1675 = vadd.f32 %v1574, %v1674
        %1676 = vdwg.mxu0
        %v1677 = vand.u32 %v463, 4294901760
        %v1678 = vsub.f32 %v463, %v1677
        %1679 = vmatpush.msra.mxu0 %v1678
        %v1680 = vand.u32 %v447, 4294901760
        %v1681 = vsub.f32 %v447, %v1680
        %1682 = vmatpush.msra.mxu0 %v1681
        %v1683 = vand.u32 %v431, 4294901760
        %v1684 = vsub.f32 %v431, %v1683
        %1685 = vmatpush.msra.mxu0 %v1684
        %v1686 = vand.u32 %v415, 4294901760
        %v1687 = vsub.f32 %v415, %v1686
        %1688 = vmatpush.msra.mxu0 %v1687
        %v1689 = vand.u32 %v399, 4294901760
        %v1690 = vsub.f32 %v399, %v1689
        %1691 = vmatpush.msra.mxu0 %v1690
        %v1692 = vand.u32 %v383, 4294901760
        %v1693 = vsub.f32 %v383, %v1692
        %1694 = vmatpush.msra.mxu0 %v1693
        %v1695 = vand.u32 %v367, 4294901760
        %v1696 = vsub.f32 %v367, %v1695
        %1697 = vmatpush.msra.mxu0 %v1696
        %v1698 = vand.u32 %v351, 4294901760
        %v1699 = vsub.f32 %v351, %v1698
        %1700 = vmatpush.msra.mxu0 %v1699
        %v1701 = vand.u32 %v335, 4294901760
        %v1702 = vsub.f32 %v335, %v1701
        %1703 = vmatpush.msra.mxu0 %v1702
        %v1704 = vand.u32 %v319, 4294901760
        %v1705 = vsub.f32 %v319, %v1704
        %1706 = vmatpush.msra.mxu0 %v1705
        %v1707 = vand.u32 %v303, 4294901760
        %v1708 = vsub.f32 %v303, %v1707
        %1709 = vmatpush.msra.mxu0 %v1708
        %v1710 = vand.u32 %v287, 4294901760
        %v1711 = vsub.f32 %v287, %v1710
        %1712 = vmatpush.msra.mxu0 %v1711
        %v1713 = vand.u32 %v271, 4294901760
        %v1714 = vsub.f32 %v271, %v1713
        %1715 = vmatpush.msra.mxu0 %v1714
        %v1716 = vand.u32 %v255, 4294901760
        %v1717 = vsub.f32 %v255, %v1716
        %1718 = vmatpush.msra.mxu0 %v1717
        %v1719 = vand.u32 %v239, 4294901760
        %v1720 = vsub.f32 %v239, %v1719
        %1721 = vmatpush.msra.mxu0 %v1720
        %v1722 = vand.u32 %v223, 4294901760
        %v1723 = vsub.f32 %v223, %v1722
        %1724 = vmatpush.msra.mxu0 %v1723
        %v1725 = vand.u32 %v219, 4294901760
        %v1726 = vsub.f32 %v219, %v1725
        %1727 = vmatmul.f32.gmra.mxu0 %v1726
        %v1728 = vpop.f32.mrf.mxu0
        %v1729 = vadd.f32 %v1675, %v1728
        %1730 = vdwg.mxu0
        %v1731 = vand.u32 %v463, 4294901760
        %1732 = vmatpush.msra.mxu0 %v1731
        %v1733 = vand.u32 %v447, 4294901760
        %1734 = vmatpush.msra.mxu0 %v1733
        %v1735 = vand.u32 %v431, 4294901760
        %1736 = vmatpush.msra.mxu0 %v1735
        %v1737 = vand.u32 %v415, 4294901760
        %1738 = vmatpush.msra.mxu0 %v1737
        %v1739 = vand.u32 %v399, 4294901760
        %1740 = vmatpush.msra.mxu0 %v1739
        %v1741 = vand.u32 %v383, 4294901760
        %1742 = vmatpush.msra.mxu0 %v1741
        %v1743 = vand.u32 %v367, 4294901760
        %1744 = vmatpush.msra.mxu0 %v1743
        %v1745 = vand.u32 %v351, 4294901760
        %1746 = vmatpush.msra.mxu0 %v1745
        %v1747 = vand.u32 %v335, 4294901760
        %1748 = vmatpush.msra.mxu0 %v1747
        %v1749 = vand.u32 %v319, 4294901760
        %1750 = vmatpush.msra.mxu0 %v1749
        %v1751 = vand.u32 %v303, 4294901760
        %1752 = vmatpush.msra.mxu0 %v1751
        %v1753 = vand.u32 %v287, 4294901760
        %1754 = vmatpush.msra.mxu0 %v1753
        %v1755 = vand.u32 %v271, 4294901760
        %1756 = vmatpush.msra.mxu0 %v1755
        %v1757 = vand.u32 %v255, 4294901760
        %1758 = vmatpush.msra.mxu0 %v1757
        %v1759 = vand.u32 %v239, 4294901760
        %1760 = vmatpush.msra.mxu0 %v1759
        %v1761 = vand.u32 %v223, 4294901760
        %1762 = vmatpush.msra.mxu0 %v1761
        %v1763 = vand.u32 %v219, 4294901760
        %v1764 = vsub.f32 %v219, %v1763
        %v1765 = vand.u32 %v1764, 4294901760
        %1766 = vmatmul.f32.gmra.mxu0 %v1765
        %v1767 = vpop.f32.mrf.mxu0
        %v1768 = vadd.f32 %v1729, %v1767
        %1769 = vdwg.mxu0
        %v1770 = vand.u32 %v463, 4294901760
        %v1771 = vsub.f32 %v463, %v1770
        %v1772 = vand.u32 %v1771, 4294901760
        %1773 = vmatpush.msra.mxu0 %v1772
        %v1774 = vand.u32 %v447, 4294901760
        %v1775 = vsub.f32 %v447, %v1774
        %v1776 = vand.u32 %v1775, 4294901760
        %1777 = vmatpush.msra.mxu0 %v1776
        %v1778 = vand.u32 %v431, 4294901760
        %v1779 = vsub.f32 %v431, %v1778
        %v1780 = vand.u32 %v1779, 4294901760
        %1781 = vmatpush.msra.mxu0 %v1780
        %v1782 = vand.u32 %v415, 4294901760
        %v1783 = vsub.f32 %v415, %v1782
        %v1784 = vand.u32 %v1783, 4294901760
        %1785 = vmatpush.msra.mxu0 %v1784
        %v1786 = vand.u32 %v399, 4294901760
        %v1787 = vsub.f32 %v399, %v1786
        %v1788 = vand.u32 %v1787, 4294901760
        %1789 = vmatpush.msra.mxu0 %v1788
        %v1790 = vand.u32 %v383, 4294901760
        %v1791 = vsub.f32 %v383, %v1790
        %v1792 = vand.u32 %v1791, 4294901760
        %1793 = vmatpush.msra.mxu0 %v1792
        %v1794 = vand.u32 %v367, 4294901760
        %v1795 = vsub.f32 %v367, %v1794
        %v1796 = vand.u32 %v1795, 4294901760
        %1797 = vmatpush.msra.mxu0 %v1796
        %v1798 = vand.u32 %v351, 4294901760
        %v1799 = vsub.f32 %v351, %v1798
        %v1800 = vand.u32 %v1799, 4294901760
        %1801 = vmatpush.msra.mxu0 %v1800
        %v1802 = vand.u32 %v335, 4294901760
        %v1803 = vsub.f32 %v335, %v1802
        %v1804 = vand.u32 %v1803, 4294901760
        %1805 = vmatpush.msra.mxu0 %v1804
        %v1806 = vand.u32 %v319, 4294901760
        %v1807 = vsub.f32 %v319, %v1806
        %v1808 = vand.u32 %v1807, 4294901760
        %1809 = vmatpush.msra.mxu0 %v1808
        %v1810 = vand.u32 %v303, 4294901760
        %v1811 = vsub.f32 %v303, %v1810
        %v1812 = vand.u32 %v1811, 4294901760
        %1813 = vmatpush.msra.mxu0 %v1812
        %v1814 = vand.u32 %v287, 4294901760
        %v1815 = vsub.f32 %v287, %v1814
        %v1816 = vand.u32 %v1815, 4294901760
        %1817 = vmatpush.msra.mxu0 %v1816
        %v1818 = vand.u32 %v271, 4294901760
        %v1819 = vsub.f32 %v271, %v1818
        %v1820 = vand.u32 %v1819, 4294901760
        %1821 = vmatpush.msra.mxu0 %v1820
        %v1822 = vand.u32 %v255, 4294901760
        %v1823 = vsub.f32 %v255, %v1822
        %v1824 = vand.u32 %v1823, 4294901760
        %1825 = vmatpush.msra.mxu0 %v1824
        %v1826 = vand.u32 %v239, 4294901760
        %v1827 = vsub.f32 %v239, %v1826
        %v1828 = vand.u32 %v1827, 4294901760
        %1829 = vmatpush.msra.mxu0 %v1828
        %v1830 = vand.u32 %v223, 4294901760
        %v1831 = vsub.f32 %v223, %v1830
        %v1832 = vand.u32 %v1831, 4294901760
        %1833 = vmatpush.msra.mxu0 %v1832
        %v1834 = vand.u32 %v219, 4294901760
        %1835 = vmatmul.f32.gmra.mxu0 %v1834
        %v1836 = vpop.f32.mrf.mxu0
        %v1837 = vadd.f32 %v1768, %v1836
        %1838 = vdwg.mxu0
        %v1839 = vand.u32 %v463, 4294901760
        %1840 = vmatpush.msra.mxu0 %v1839
        %v1841 = vand.u32 %v447, 4294901760
        %1842 = vmatpush.msra.mxu0 %v1841
        %v1843 = vand.u32 %v431, 4294901760
        %1844 = vmatpush.msra.mxu0 %v1843
        %v1845 = vand.u32 %v415, 4294901760
        %1846 = vmatpush.msra.mxu0 %v1845
        %v1847 = vand.u32 %v399, 4294901760
        %1848 = vmatpush.msra.mxu0 %v1847
        %v1849 = vand.u32 %v383, 4294901760
        %1850 = vmatpush.msra.mxu0 %v1849
        %v1851 = vand.u32 %v367, 4294901760
        %1852 = vmatpush.msra.mxu0 %v1851
        %v1853 = vand.u32 %v351, 4294901760
        %1854 = vmatpush.msra.mxu0 %v1853
        %v1855 = vand.u32 %v335, 4294901760
        %1856 = vmatpush.msra.mxu0 %v1855
        %v1857 = vand.u32 %v319, 4294901760
        %1858 = vmatpush.msra.mxu0 %v1857
        %v1859 = vand.u32 %v303, 4294901760
        %1860 = vmatpush.msra.mxu0 %v1859
        %v1861 = vand.u32 %v287, 4294901760
        %1862 = vmatpush.msra.mxu0 %v1861
        %v1863 = vand.u32 %v271, 4294901760
        %1864 = vmatpush.msra.mxu0 %v1863
        %v1865 = vand.u32 %v255, 4294901760
        %1866 = vmatpush.msra.mxu0 %v1865
        %v1867 = vand.u32 %v239, 4294901760
        %1868 = vmatpush.msra.mxu0 %v1867
        %v1869 = vand.u32 %v223, 4294901760
        %1870 = vmatpush.msra.mxu0 %v1869
        %v1871 = vand.u32 %v219, 4294901760
        %1872 = vmatmul.f32.gmra.mxu0 %v1871
        %v1873 = vpop.f32.mrf.mxu0
        %v1874 = vadd.f32 %v1837, %v1873
        %1875 = vdwg.mxu0
        %v1876 = vand.u32 %v464, 4294901760
        %1877 = vmatpush.msra.mxu0 %v1876
        %v1878 = vand.u32 %v448, 4294901760
        %1879 = vmatpush.msra.mxu0 %v1878
        %v1880 = vand.u32 %v432, 4294901760
        %1881 = vmatpush.msra.mxu0 %v1880
        %v1882 = vand.u32 %v416, 4294901760
        %1883 = vmatpush.msra.mxu0 %v1882
        %v1884 = vand.u32 %v400, 4294901760
        %1885 = vmatpush.msra.mxu0 %v1884
        %v1886 = vand.u32 %v384, 4294901760
        %1887 = vmatpush.msra.mxu0 %v1886
        %v1888 = vand.u32 %v368, 4294901760
        %1889 = vmatpush.msra.mxu0 %v1888
        %v1890 = vand.u32 %v352, 4294901760
        %1891 = vmatpush.msra.mxu0 %v1890
        %v1892 = vand.u32 %v336, 4294901760
        %1893 = vmatpush.msra.mxu0 %v1892
        %v1894 = vand.u32 %v320, 4294901760
        %1895 = vmatpush.msra.mxu0 %v1894
        %v1896 = vand.u32 %v304, 4294901760
        %1897 = vmatpush.msra.mxu0 %v1896
        %v1898 = vand.u32 %v288, 4294901760
        %1899 = vmatpush.msra.mxu0 %v1898
        %v1900 = vand.u32 %v272, 4294901760
        %1901 = vmatpush.msra.mxu0 %v1900
        %v1902 = vand.u32 %v256, 4294901760
        %1903 = vmatpush.msra.mxu0 %v1902
        %v1904 = vand.u32 %v240, 4294901760
        %1905 = vmatpush.msra.mxu0 %v1904
        %v1906 = vand.u32 %v224, 4294901760
        %1907 = vmatpush.msra.mxu0 %v1906
        %v1908 = vand.u32 %v219, 4294901760
        %v1909 = vsub.f32 %v219, %v1908
        %v1910 = vand.u32 %v1909, 4294901760
        %v1911 = vsub.f32 %v1909, %v1910
        %v1912 = vand.u32 %v1911, 4294901760
        %1913 = vmatmul.f32.gmra.mxu0 %v1912
        %v1914 = vpop.f32.mrf.mxu0
        %v1915 = vadd.f32 %v484, %v1914
        %1916 = vdwg.mxu0
        %v1917 = vand.u32 %v464, 4294901760
        %v1918 = vsub.f32 %v464, %v1917
        %v1919 = vand.u32 %v1918, 4294901760
        %v1920 = vsub.f32 %v1918, %v1919
        %v1921 = vand.u32 %v1920, 4294901760
        %1922 = vmatpush.msra.mxu0 %v1921
        %v1923 = vand.u32 %v448, 4294901760
        %v1924 = vsub.f32 %v448, %v1923
        %v1925 = vand.u32 %v1924, 4294901760
        %v1926 = vsub.f32 %v1924, %v1925
        %v1927 = vand.u32 %v1926, 4294901760
        %1928 = vmatpush.msra.mxu0 %v1927
        %v1929 = vand.u32 %v432, 4294901760
        %v1930 = vsub.f32 %v432, %v1929
        %v1931 = vand.u32 %v1930, 4294901760
        %v1932 = vsub.f32 %v1930, %v1931
        %v1933 = vand.u32 %v1932, 4294901760
        %1934 = vmatpush.msra.mxu0 %v1933
        %v1935 = vand.u32 %v416, 4294901760
        %v1936 = vsub.f32 %v416, %v1935
        %v1937 = vand.u32 %v1936, 4294901760
        %v1938 = vsub.f32 %v1936, %v1937
        %v1939 = vand.u32 %v1938, 4294901760
        %1940 = vmatpush.msra.mxu0 %v1939
        %v1941 = vand.u32 %v400, 4294901760
        %v1942 = vsub.f32 %v400, %v1941
        %v1943 = vand.u32 %v1942, 4294901760
        %v1944 = vsub.f32 %v1942, %v1943
        %v1945 = vand.u32 %v1944, 4294901760
        %1946 = vmatpush.msra.mxu0 %v1945
        %v1947 = vand.u32 %v384, 4294901760
        %v1948 = vsub.f32 %v384, %v1947
        %v1949 = vand.u32 %v1948, 4294901760
        %v1950 = vsub.f32 %v1948, %v1949
        %v1951 = vand.u32 %v1950, 4294901760
        %1952 = vmatpush.msra.mxu0 %v1951
        %v1953 = vand.u32 %v368, 4294901760
        %v1954 = vsub.f32 %v368, %v1953
        %v1955 = vand.u32 %v1954, 4294901760
        %v1956 = vsub.f32 %v1954, %v1955
        %v1957 = vand.u32 %v1956, 4294901760
        %1958 = vmatpush.msra.mxu0 %v1957
        %v1959 = vand.u32 %v352, 4294901760
        %v1960 = vsub.f32 %v352, %v1959
        %v1961 = vand.u32 %v1960, 4294901760
        %v1962 = vsub.f32 %v1960, %v1961
        %v1963 = vand.u32 %v1962, 4294901760
        %1964 = vmatpush.msra.mxu0 %v1963
        %v1965 = vand.u32 %v336, 4294901760
        %v1966 = vsub.f32 %v336, %v1965
        %v1967 = vand.u32 %v1966, 4294901760
        %v1968 = vsub.f32 %v1966, %v1967
        %v1969 = vand.u32 %v1968, 4294901760
        %1970 = vmatpush.msra.mxu0 %v1969
        %v1971 = vand.u32 %v320, 4294901760
        %v1972 = vsub.f32 %v320, %v1971
        %v1973 = vand.u32 %v1972, 4294901760
        %v1974 = vsub.f32 %v1972, %v1973
        %v1975 = vand.u32 %v1974, 4294901760
        %1976 = vmatpush.msra.mxu0 %v1975
        %v1977 = vand.u32 %v304, 4294901760
        %v1978 = vsub.f32 %v304, %v1977
        %v1979 = vand.u32 %v1978, 4294901760
        %v1980 = vsub.f32 %v1978, %v1979
        %v1981 = vand.u32 %v1980, 4294901760
        %1982 = vmatpush.msra.mxu0 %v1981
        %v1983 = vand.u32 %v288, 4294901760
        %v1984 = vsub.f32 %v288, %v1983
        %v1985 = vand.u32 %v1984, 4294901760
        %v1986 = vsub.f32 %v1984, %v1985
        %v1987 = vand.u32 %v1986, 4294901760
        %1988 = vmatpush.msra.mxu0 %v1987
        %v1989 = vand.u32 %v272, 4294901760
        %v1990 = vsub.f32 %v272, %v1989
        %v1991 = vand.u32 %v1990, 4294901760
        %v1992 = vsub.f32 %v1990, %v1991
        %v1993 = vand.u32 %v1992, 4294901760
        %1994 = vmatpush.msra.mxu0 %v1993
        %v1995 = vand.u32 %v256, 4294901760
        %v1996 = vsub.f32 %v256, %v1995
        %v1997 = vand.u32 %v1996, 4294901760
        %v1998 = vsub.f32 %v1996, %v1997
        %v1999 = vand.u32 %v1998, 4294901760
        %2000 = vmatpush.msra.mxu0 %v1999
        %v2001 = vand.u32 %v240, 4294901760
        %v2002 = vsub.f32 %v240, %v2001
        %v2003 = vand.u32 %v2002, 4294901760
        %v2004 = vsub.f32 %v2002, %v2003
        %v2005 = vand.u32 %v2004, 4294901760
        %2006 = vmatpush.msra.mxu0 %v2005
        %v2007 = vand.u32 %v224, 4294901760
        %v2008 = vsub.f32 %v224, %v2007
        %v2009 = vand.u32 %v2008, 4294901760
        %v2010 = vsub.f32 %v2008, %v2009
        %v2011 = vand.u32 %v2010, 4294901760
        %2012 = vmatpush.msra.mxu0 %v2011
        %v2013 = vand.u32 %v219, 4294901760
        %2014 = vmatmul.f32.gmra.mxu0 %v2013
        %v2015 = vpop.f32.mrf.mxu0
        %v2016 = vadd.f32 %v1915, %v2015
        %2017 = vdwg.mxu0
        %v2018 = vand.u32 %v464, 4294901760
        %v2019 = vsub.f32 %v464, %v2018
        %2020 = vmatpush.msra.mxu0 %v2019
        %v2021 = vand.u32 %v448, 4294901760
        %v2022 = vsub.f32 %v448, %v2021
        %2023 = vmatpush.msra.mxu0 %v2022
        %v2024 = vand.u32 %v432, 4294901760
        %v2025 = vsub.f32 %v432, %v2024
        %2026 = vmatpush.msra.mxu0 %v2025
        %v2027 = vand.u32 %v416, 4294901760
        %v2028 = vsub.f32 %v416, %v2027
        %2029 = vmatpush.msra.mxu0 %v2028
        %v2030 = vand.u32 %v400, 4294901760
        %v2031 = vsub.f32 %v400, %v2030
        %2032 = vmatpush.msra.mxu0 %v2031
        %v2033 = vand.u32 %v384, 4294901760
        %v2034 = vsub.f32 %v384, %v2033
        %2035 = vmatpush.msra.mxu0 %v2034
        %v2036 = vand.u32 %v368, 4294901760
        %v2037 = vsub.f32 %v368, %v2036
        %2038 = vmatpush.msra.mxu0 %v2037
        %v2039 = vand.u32 %v352, 4294901760
        %v2040 = vsub.f32 %v352, %v2039
        %2041 = vmatpush.msra.mxu0 %v2040
        %v2042 = vand.u32 %v336, 4294901760
        %v2043 = vsub.f32 %v336, %v2042
        %2044 = vmatpush.msra.mxu0 %v2043
        %v2045 = vand.u32 %v320, 4294901760
        %v2046 = vsub.f32 %v320, %v2045
        %2047 = vmatpush.msra.mxu0 %v2046
        %v2048 = vand.u32 %v304, 4294901760
        %v2049 = vsub.f32 %v304, %v2048
        %2050 = vmatpush.msra.mxu0 %v2049
        %v2051 = vand.u32 %v288, 4294901760
        %v2052 = vsub.f32 %v288, %v2051
        %2053 = vmatpush.msra.mxu0 %v2052
        %v2054 = vand.u32 %v272, 4294901760
        %v2055 = vsub.f32 %v272, %v2054
        %2056 = vmatpush.msra.mxu0 %v2055
        %v2057 = vand.u32 %v256, 4294901760
        %v2058 = vsub.f32 %v256, %v2057
        %2059 = vmatpush.msra.mxu0 %v2058
        %v2060 = vand.u32 %v240, 4294901760
        %v2061 = vsub.f32 %v240, %v2060
        %2062 = vmatpush.msra.mxu0 %v2061
        %v2063 = vand.u32 %v224, 4294901760
        %v2064 = vsub.f32 %v224, %v2063
        %2065 = vmatpush.msra.mxu0 %v2064
        %v2066 = vand.u32 %v219, 4294901760
        %v2067 = vsub.f32 %v219, %v2066
        %2068 = vmatmul.f32.gmra.mxu0 %v2067
        %v2069 = vpop.f32.mrf.mxu0
        %v2070 = vadd.f32 %v2016, %v2069
        %2071 = vdwg.mxu0
        %v2072 = vand.u32 %v464, 4294901760
        %2073 = vmatpush.msra.mxu0 %v2072
        %v2074 = vand.u32 %v448, 4294901760
        %2075 = vmatpush.msra.mxu0 %v2074
        %v2076 = vand.u32 %v432, 4294901760
        %2077 = vmatpush.msra.mxu0 %v2076
        %v2078 = vand.u32 %v416, 4294901760
        %2079 = vmatpush.msra.mxu0 %v2078
        %v2080 = vand.u32 %v400, 4294901760
        %2081 = vmatpush.msra.mxu0 %v2080
        %v2082 = vand.u32 %v384, 4294901760
        %2083 = vmatpush.msra.mxu0 %v2082
        %v2084 = vand.u32 %v368, 4294901760
        %2085 = vmatpush.msra.mxu0 %v2084
        %v2086 = vand.u32 %v352, 4294901760
        %2087 = vmatpush.msra.mxu0 %v2086
        %v2088 = vand.u32 %v336, 4294901760
        %2089 = vmatpush.msra.mxu0 %v2088
        %v2090 = vand.u32 %v320, 4294901760
        %2091 = vmatpush.msra.mxu0 %v2090
        %v2092 = vand.u32 %v304, 4294901760
        %2093 = vmatpush.msra.mxu0 %v2092
        %v2094 = vand.u32 %v288, 4294901760
        %2095 = vmatpush.msra.mxu0 %v2094
        %v2096 = vand.u32 %v272, 4294901760
        %2097 = vmatpush.msra.mxu0 %v2096
        %v2098 = vand.u32 %v256, 4294901760
        %2099 = vmatpush.msra.mxu0 %v2098
        %v2100 = vand.u32 %v240, 4294901760
        %2101 = vmatpush.msra.mxu0 %v2100
        %v2102 = vand.u32 %v224, 4294901760
        %2103 = vmatpush.msra.mxu0 %v2102
        %v2104 = vand.u32 %v219, 4294901760
        %v2105 = vsub.f32 %v219, %v2104
        %v2106 = vand.u32 %v2105, 4294901760
        %2107 = vmatmul.f32.gmra.mxu0 %v2106
        %v2108 = vpop.f32.mrf.mxu0
        %v2109 = vadd.f32 %v2070, %v2108
        %2110 = vdwg.mxu0
        %v2111 = vand.u32 %v464, 4294901760
        %v2112 = vsub.f32 %v464, %v2111
        %v2113 = vand.u32 %v2112, 4294901760
        %2114 = vmatpush.msra.mxu0 %v2113
        %v2115 = vand.u32 %v448, 4294901760
        %v2116 = vsub.f32 %v448, %v2115
        %v2117 = vand.u32 %v2116, 4294901760
        %2118 = vmatpush.msra.mxu0 %v2117
        %v2119 = vand.u32 %v432, 4294901760
        %v2120 = vsub.f32 %v432, %v2119
        %v2121 = vand.u32 %v2120, 4294901760
        %2122 = vmatpush.msra.mxu0 %v2121
        %v2123 = vand.u32 %v416, 4294901760
        %v2124 = vsub.f32 %v416, %v2123
        %v2125 = vand.u32 %v2124, 4294901760
        %2126 = vmatpush.msra.mxu0 %v2125
        %v2127 = vand.u32 %v400, 4294901760
        %v2128 = vsub.f32 %v400, %v2127
        %v2129 = vand.u32 %v2128, 4294901760
        %2130 = vmatpush.msra.mxu0 %v2129
        %v2131 = vand.u32 %v384, 4294901760
        %v2132 = vsub.f32 %v384, %v2131
        %v2133 = vand.u32 %v2132, 4294901760
        %2134 = vmatpush.msra.mxu0 %v2133
        %v2135 = vand.u32 %v368, 4294901760
        %v2136 = vsub.f32 %v368, %v2135
        %v2137 = vand.u32 %v2136, 4294901760
        %2138 = vmatpush.msra.mxu0 %v2137
        %v2139 = vand.u32 %v352, 4294901760
        %v2140 = vsub.f32 %v352, %v2139
        %v2141 = vand.u32 %v2140, 4294901760
        %2142 = vmatpush.msra.mxu0 %v2141
        %v2143 = vand.u32 %v336, 4294901760
        %v2144 = vsub.f32 %v336, %v2143
        %v2145 = vand.u32 %v2144, 4294901760
        %2146 = vmatpush.msra.mxu0 %v2145
        %v2147 = vand.u32 %v320, 4294901760
        %v2148 = vsub.f32 %v320, %v2147
        %v2149 = vand.u32 %v2148, 4294901760
        %2150 = vmatpush.msra.mxu0 %v2149
        %v2151 = vand.u32 %v304, 4294901760
        %v2152 = vsub.f32 %v304, %v2151
        %v2153 = vand.u32 %v2152, 4294901760
        %2154 = vmatpush.msra.mxu0 %v2153
        %v2155 = vand.u32 %v288, 4294901760
        %v2156 = vsub.f32 %v288, %v2155
        %v2157 = vand.u32 %v2156, 4294901760
        %2158 = vmatpush.msra.mxu0 %v2157
        %v2159 = vand.u32 %v272, 4294901760
        %v2160 = vsub.f32 %v272, %v2159
        %v2161 = vand.u32 %v2160, 4294901760
        %2162 = vmatpush.msra.mxu0 %v2161
        %v2163 = vand.u32 %v256, 4294901760
        %v2164 = vsub.f32 %v256, %v2163
        %v2165 = vand.u32 %v2164, 4294901760
        %2166 = vmatpush.msra.mxu0 %v2165
        %v2167 = vand.u32 %v240, 4294901760
        %v2168 = vsub.f32 %v240, %v2167
        %v2169 = vand.u32 %v2168, 4294901760
        %2170 = vmatpush.msra.mxu0 %v2169
        %v2171 = vand.u32 %v224, 4294901760
        %v2172 = vsub.f32 %v224, %v2171
        %v2173 = vand.u32 %v2172, 4294901760
        %2174 = vmatpush.msra.mxu0 %v2173
        %v2175 = vand.u32 %v219, 4294901760
        %2176 = vmatmul.f32.gmra.mxu0 %v2175
        %v2177 = vpop.f32.mrf.mxu0
        %v2178 = vadd.f32 %v2109, %v2177
        %2179 = vdwg.mxu0
        %v2180 = vand.u32 %v464, 4294901760
        %2181 = vmatpush.msra.mxu0 %v2180
        %v2182 = vand.u32 %v448, 4294901760
        %2183 = vmatpush.msra.mxu0 %v2182
        %v2184 = vand.u32 %v432, 4294901760
        %2185 = vmatpush.msra.mxu0 %v2184
        %v2186 = vand.u32 %v416, 4294901760
        %2187 = vmatpush.msra.mxu0 %v2186
        %v2188 = vand.u32 %v400, 4294901760
        %2189 = vmatpush.msra.mxu0 %v2188
        %v2190 = vand.u32 %v384, 4294901760
        %2191 = vmatpush.msra.mxu0 %v2190
        %v2192 = vand.u32 %v368, 4294901760
        %2193 = vmatpush.msra.mxu0 %v2192
        %v2194 = vand.u32 %v352, 4294901760
        %2195 = vmatpush.msra.mxu0 %v2194
        %v2196 = vand.u32 %v336, 4294901760
        %2197 = vmatpush.msra.mxu0 %v2196
        %v2198 = vand.u32 %v320, 4294901760
        %2199 = vmatpush.msra.mxu0 %v2198
        %v2200 = vand.u32 %v304, 4294901760
        %2201 = vmatpush.msra.mxu0 %v2200
        %v2202 = vand.u32 %v288, 4294901760
        %2203 = vmatpush.msra.mxu0 %v2202
        %v2204 = vand.u32 %v272, 4294901760
        %2205 = vmatpush.msra.mxu0 %v2204
        %v2206 = vand.u32 %v256, 4294901760
        %2207 = vmatpush.msra.mxu0 %v2206
        %v2208 = vand.u32 %v240, 4294901760
        %2209 = vmatpush.msra.mxu0 %v2208
        %v2210 = vand.u32 %v224, 4294901760
        %2211 = vmatpush.msra.mxu0 %v2210
        %v2212 = vand.u32 %v219, 4294901760
        %2213 = vmatmul.f32.gmra.mxu0 %v2212
        %v2214 = vpop.f32.mrf.mxu0
        %v2215 = vadd.f32 %v2178, %v2214
        %2216 = vdwg.mxu0
        %v2217 = vand.u32 %v465, 4294901760
        %2218 = vmatpush.msra.mxu0 %v2217
        %v2219 = vand.u32 %v449, 4294901760
        %2220 = vmatpush.msra.mxu0 %v2219
        %v2221 = vand.u32 %v433, 4294901760
        %2222 = vmatpush.msra.mxu0 %v2221
        %v2223 = vand.u32 %v417, 4294901760
        %2224 = vmatpush.msra.mxu0 %v2223
        %v2225 = vand.u32 %v401, 4294901760
        %2226 = vmatpush.msra.mxu0 %v2225
        %v2227 = vand.u32 %v385, 4294901760
        %2228 = vmatpush.msra.mxu0 %v2227
        %v2229 = vand.u32 %v369, 4294901760
        %2230 = vmatpush.msra.mxu0 %v2229
        %v2231 = vand.u32 %v353, 4294901760
        %2232 = vmatpush.msra.mxu0 %v2231
        %v2233 = vand.u32 %v337, 4294901760
        %2234 = vmatpush.msra.mxu0 %v2233
        %v2235 = vand.u32 %v321, 4294901760
        %2236 = vmatpush.msra.mxu0 %v2235
        %v2237 = vand.u32 %v305, 4294901760
        %2238 = vmatpush.msra.mxu0 %v2237
        %v2239 = vand.u32 %v289, 4294901760
        %2240 = vmatpush.msra.mxu0 %v2239
        %v2241 = vand.u32 %v273, 4294901760
        %2242 = vmatpush.msra.mxu0 %v2241
        %v2243 = vand.u32 %v257, 4294901760
        %2244 = vmatpush.msra.mxu0 %v2243
        %v2245 = vand.u32 %v241, 4294901760
        %2246 = vmatpush.msra.mxu0 %v2245
        %v2247 = vand.u32 %v225, 4294901760
        %2248 = vmatpush.msra.mxu0 %v2247
        %v2249 = vand.u32 %v219, 4294901760
        %v2250 = vsub.f32 %v219, %v2249
        %v2251 = vand.u32 %v2250, 4294901760
        %v2252 = vsub.f32 %v2250, %v2251
        %v2253 = vand.u32 %v2252, 4294901760
        %2254 = vmatmul.f32.gmra.mxu0 %v2253
        %v2255 = vpop.f32.mrf.mxu0
        %v2256 = vadd.f32 %v485, %v2255
        %2257 = vdwg.mxu0
        %v2258 = vand.u32 %v465, 4294901760
        %v2259 = vsub.f32 %v465, %v2258
        %v2260 = vand.u32 %v2259, 4294901760
        %v2261 = vsub.f32 %v2259, %v2260
        %v2262 = vand.u32 %v2261, 4294901760
        %2263 = vmatpush.msra.mxu0 %v2262
        %v2264 = vand.u32 %v449, 4294901760
        %v2265 = vsub.f32 %v449, %v2264
        %v2266 = vand.u32 %v2265, 4294901760
        %v2267 = vsub.f32 %v2265, %v2266
        %v2268 = vand.u32 %v2267, 4294901760
        %2269 = vmatpush.msra.mxu0 %v2268
        %v2270 = vand.u32 %v433, 4294901760
        %v2271 = vsub.f32 %v433, %v2270
        %v2272 = vand.u32 %v2271, 4294901760
        %v2273 = vsub.f32 %v2271, %v2272
        %v2274 = vand.u32 %v2273, 4294901760
        %2275 = vmatpush.msra.mxu0 %v2274
        %v2276 = vand.u32 %v417, 4294901760
        %v2277 = vsub.f32 %v417, %v2276
        %v2278 = vand.u32 %v2277, 4294901760
        %v2279 = vsub.f32 %v2277, %v2278
        %v2280 = vand.u32 %v2279, 4294901760
        %2281 = vmatpush.msra.mxu0 %v2280
        %v2282 = vand.u32 %v401, 4294901760
        %v2283 = vsub.f32 %v401, %v2282
        %v2284 = vand.u32 %v2283, 4294901760
        %v2285 = vsub.f32 %v2283, %v2284
        %v2286 = vand.u32 %v2285, 4294901760
        %2287 = vmatpush.msra.mxu0 %v2286
        %v2288 = vand.u32 %v385, 4294901760
        %v2289 = vsub.f32 %v385, %v2288
        %v2290 = vand.u32 %v2289, 4294901760
        %v2291 = vsub.f32 %v2289, %v2290
        %v2292 = vand.u32 %v2291, 4294901760
        %2293 = vmatpush.msra.mxu0 %v2292
        %v2294 = vand.u32 %v369, 4294901760
        %v2295 = vsub.f32 %v369, %v2294
        %v2296 = vand.u32 %v2295, 4294901760
        %v2297 = vsub.f32 %v2295, %v2296
        %v2298 = vand.u32 %v2297, 4294901760
        %2299 = vmatpush.msra.mxu0 %v2298
        %v2300 = vand.u32 %v353, 4294901760
        %v2301 = vsub.f32 %v353, %v2300
        %v2302 = vand.u32 %v2301, 4294901760
        %v2303 = vsub.f32 %v2301, %v2302
        %v2304 = vand.u32 %v2303, 4294901760
        %2305 = vmatpush.msra.mxu0 %v2304
        %v2306 = vand.u32 %v337, 4294901760
        %v2307 = vsub.f32 %v337, %v2306
        %v2308 = vand.u32 %v2307, 4294901760
        %v2309 = vsub.f32 %v2307, %v2308
        %v2310 = vand.u32 %v2309, 4294901760
        %2311 = vmatpush.msra.mxu0 %v2310
        %v2312 = vand.u32 %v321, 4294901760
        %v2313 = vsub.f32 %v321, %v2312
        %v2314 = vand.u32 %v2313, 4294901760
        %v2315 = vsub.f32 %v2313, %v2314
        %v2316 = vand.u32 %v2315, 4294901760
        %2317 = vmatpush.msra.mxu0 %v2316
        %v2318 = vand.u32 %v305, 4294901760
        %v2319 = vsub.f32 %v305, %v2318
        %v2320 = vand.u32 %v2319, 4294901760
        %v2321 = vsub.f32 %v2319, %v2320
        %v2322 = vand.u32 %v2321, 4294901760
        %2323 = vmatpush.msra.mxu0 %v2322
        %v2324 = vand.u32 %v289, 4294901760
        %v2325 = vsub.f32 %v289, %v2324
        %v2326 = vand.u32 %v2325, 4294901760
        %v2327 = vsub.f32 %v2325, %v2326
        %v2328 = vand.u32 %v2327, 4294901760
        %2329 = vmatpush.msra.mxu0 %v2328
        %v2330 = vand.u32 %v273, 4294901760
        %v2331 = vsub.f32 %v273, %v2330
        %v2332 = vand.u32 %v2331, 4294901760
        %v2333 = vsub.f32 %v2331, %v2332
        %v2334 = vand.u32 %v2333, 4294901760
        %2335 = vmatpush.msra.mxu0 %v2334
        %v2336 = vand.u32 %v257, 4294901760
        %v2337 = vsub.f32 %v257, %v2336
        %v2338 = vand.u32 %v2337, 4294901760
        %v2339 = vsub.f32 %v2337, %v2338
        %v2340 = vand.u32 %v2339, 4294901760
        %2341 = vmatpush.msra.mxu0 %v2340
        %v2342 = vand.u32 %v241, 4294901760
        %v2343 = vsub.f32 %v241, %v2342
        %v2344 = vand.u32 %v2343, 4294901760
        %v2345 = vsub.f32 %v2343, %v2344
        %v2346 = vand.u32 %v2345, 4294901760
        %2347 = vmatpush.msra.mxu0 %v2346
        %v2348 = vand.u32 %v225, 4294901760
        %v2349 = vsub.f32 %v225, %v2348
        %v2350 = vand.u32 %v2349, 4294901760
        %v2351 = vsub.f32 %v2349, %v2350
        %v2352 = vand.u32 %v2351, 4294901760
        %2353 = vmatpush.msra.mxu0 %v2352
        %v2354 = vand.u32 %v219, 4294901760
        %2355 = vmatmul.f32.gmra.mxu0 %v2354
        %v2356 = vpop.f32.mrf.mxu0
        %v2357 = vadd.f32 %v2256, %v2356
        %2358 = vdwg.mxu0
        %v2359 = vand.u32 %v465, 4294901760
        %v2360 = vsub.f32 %v465, %v2359
        %2361 = vmatpush.msra.mxu0 %v2360
        %v2362 = vand.u32 %v449, 4294901760
        %v2363 = vsub.f32 %v449, %v2362
        %2364 = vmatpush.msra.mxu0 %v2363
        %v2365 = vand.u32 %v433, 4294901760
        %v2366 = vsub.f32 %v433, %v2365
        %2367 = vmatpush.msra.mxu0 %v2366
        %v2368 = vand.u32 %v417, 4294901760
        %v2369 = vsub.f32 %v417, %v2368
        %2370 = vmatpush.msra.mxu0 %v2369
        %v2371 = vand.u32 %v401, 4294901760
        %v2372 = vsub.f32 %v401, %v2371
        %2373 = vmatpush.msra.mxu0 %v2372
        %v2374 = vand.u32 %v385, 4294901760
        %v2375 = vsub.f32 %v385, %v2374
        %2376 = vmatpush.msra.mxu0 %v2375
        %v2377 = vand.u32 %v369, 4294901760
        %v2378 = vsub.f32 %v369, %v2377
        %2379 = vmatpush.msra.mxu0 %v2378
        %v2380 = vand.u32 %v353, 4294901760
        %v2381 = vsub.f32 %v353, %v2380
        %2382 = vmatpush.msra.mxu0 %v2381
        %v2383 = vand.u32 %v337, 4294901760
        %v2384 = vsub.f32 %v337, %v2383
        %2385 = vmatpush.msra.mxu0 %v2384
        %v2386 = vand.u32 %v321, 4294901760
        %v2387 = vsub.f32 %v321, %v2386
        %2388 = vmatpush.msra.mxu0 %v2387
        %v2389 = vand.u32 %v305, 4294901760
        %v2390 = vsub.f32 %v305, %v2389
        %2391 = vmatpush.msra.mxu0 %v2390
        %v2392 = vand.u32 %v289, 4294901760
        %v2393 = vsub.f32 %v289, %v2392
        %2394 = vmatpush.msra.mxu0 %v2393
        %v2395 = vand.u32 %v273, 4294901760
        %v2396 = vsub.f32 %v273, %v2395
        %2397 = vmatpush.msra.mxu0 %v2396
        %v2398 = vand.u32 %v257, 4294901760
        %v2399 = vsub.f32 %v257, %v2398
        %2400 = vmatpush.msra.mxu0 %v2399
        %v2401 = vand.u32 %v241, 4294901760
        %v2402 = vsub.f32 %v241, %v2401
        %2403 = vmatpush.msra.mxu0 %v2402
        %v2404 = vand.u32 %v225, 4294901760
        %v2405 = vsub.f32 %v225, %v2404
        %2406 = vmatpush.msra.mxu0 %v2405
        %v2407 = vand.u32 %v219, 4294901760
        %v2408 = vsub.f32 %v219, %v2407
        %2409 = vmatmul.f32.gmra.mxu0 %v2408
        %v2410 = vpop.f32.mrf.mxu0
        %v2411 = vadd.f32 %v2357, %v2410
        %2412 = vdwg.mxu0
        %v2413 = vand.u32 %v465, 4294901760
        %2414 = vmatpush.msra.mxu0 %v2413
        %v2415 = vand.u32 %v449, 4294901760
        %2416 = vmatpush.msra.mxu0 %v2415
        %v2417 = vand.u32 %v433, 4294901760
        %2418 = vmatpush.msra.mxu0 %v2417
        %v2419 = vand.u32 %v417, 4294901760
        %2420 = vmatpush.msra.mxu0 %v2419
        %v2421 = vand.u32 %v401, 4294901760
        %2422 = vmatpush.msra.mxu0 %v2421
        %v2423 = vand.u32 %v385, 4294901760
        %2424 = vmatpush.msra.mxu0 %v2423
        %v2425 = vand.u32 %v369, 4294901760
        %2426 = vmatpush.msra.mxu0 %v2425
        %v2427 = vand.u32 %v353, 4294901760
        %2428 = vmatpush.msra.mxu0 %v2427
        %v2429 = vand.u32 %v337, 4294901760
        %2430 = vmatpush.msra.mxu0 %v2429
        %v2431 = vand.u32 %v321, 4294901760
        %2432 = vmatpush.msra.mxu0 %v2431
        %v2433 = vand.u32 %v305, 4294901760
        %2434 = vmatpush.msra.mxu0 %v2433
        %v2435 = vand.u32 %v289, 4294901760
        %2436 = vmatpush.msra.mxu0 %v2435
        %v2437 = vand.u32 %v273, 4294901760
        %2438 = vmatpush.msra.mxu0 %v2437
        %v2439 = vand.u32 %v257, 4294901760
        %2440 = vmatpush.msra.mxu0 %v2439
        %v2441 = vand.u32 %v241, 4294901760
        %2442 = vmatpush.msra.mxu0 %v2441
        %v2443 = vand.u32 %v225, 4294901760
        %2444 = vmatpush.msra.mxu0 %v2443
        %v2445 = vand.u32 %v219, 4294901760
        %v2446 = vsub.f32 %v219, %v2445
        %v2447 = vand.u32 %v2446, 4294901760
        %2448 = vmatmul.f32.gmra.mxu0 %v2447
        %v2449 = vpop.f32.mrf.mxu0
        %v2450 = vadd.f32 %v2411, %v2449
        %2451 = vdwg.mxu0
        %v2452 = vand.u32 %v465, 4294901760
        %v2453 = vsub.f32 %v465, %v2452
        %v2454 = vand.u32 %v2453, 4294901760
        %2455 = vmatpush.msra.mxu0 %v2454
        %v2456 = vand.u32 %v449, 4294901760
        %v2457 = vsub.f32 %v449, %v2456
        %v2458 = vand.u32 %v2457, 4294901760
        %2459 = vmatpush.msra.mxu0 %v2458
        %v2460 = vand.u32 %v433, 4294901760
        %v2461 = vsub.f32 %v433, %v2460
        %v2462 = vand.u32 %v2461, 4294901760
        %2463 = vmatpush.msra.mxu0 %v2462
        %v2464 = vand.u32 %v417, 4294901760
        %v2465 = vsub.f32 %v417, %v2464
        %v2466 = vand.u32 %v2465, 4294901760
        %2467 = vmatpush.msra.mxu0 %v2466
        %v2468 = vand.u32 %v401, 4294901760
        %v2469 = vsub.f32 %v401, %v2468
        %v2470 = vand.u32 %v2469, 4294901760
        %2471 = vmatpush.msra.mxu0 %v2470
        %v2472 = vand.u32 %v385, 4294901760
        %v2473 = vsub.f32 %v385, %v2472
        %v2474 = vand.u32 %v2473, 4294901760
        %2475 = vmatpush.msra.mxu0 %v2474
        %v2476 = vand.u32 %v369, 4294901760
        %v2477 = vsub.f32 %v369, %v2476
        %v2478 = vand.u32 %v2477, 4294901760
        %2479 = vmatpush.msra.mxu0 %v2478
        %v2480 = vand.u32 %v353, 4294901760
        %v2481 = vsub.f32 %v353, %v2480
        %v2482 = vand.u32 %v2481, 4294901760
        %2483 = vmatpush.msra.mxu0 %v2482
        %v2484 = vand.u32 %v337, 4294901760
        %v2485 = vsub.f32 %v337, %v2484
        %v2486 = vand.u32 %v2485, 4294901760
        %2487 = vmatpush.msra.mxu0 %v2486
        %v2488 = vand.u32 %v321, 4294901760
        %v2489 = vsub.f32 %v321, %v2488
        %v2490 = vand.u32 %v2489, 4294901760
        %2491 = vmatpush.msra.mxu0 %v2490
        %v2492 = vand.u32 %v305, 4294901760
        %v2493 = vsub.f32 %v305, %v2492
        %v2494 = vand.u32 %v2493, 4294901760
        %2495 = vmatpush.msra.mxu0 %v2494
        %v2496 = vand.u32 %v289, 4294901760
        %v2497 = vsub.f32 %v289, %v2496
        %v2498 = vand.u32 %v2497, 4294901760
        %2499 = vmatpush.msra.mxu0 %v2498
        %v2500 = vand.u32 %v273, 4294901760
        %v2501 = vsub.f32 %v273, %v2500
        %v2502 = vand.u32 %v2501, 4294901760
        %2503 = vmatpush.msra.mxu0 %v2502
        %v2504 = vand.u32 %v257, 4294901760
        %v2505 = vsub.f32 %v257, %v2504
        %v2506 = vand.u32 %v2505, 4294901760
        %2507 = vmatpush.msra.mxu0 %v2506
        %v2508 = vand.u32 %v241, 4294901760
        %v2509 = vsub.f32 %v241, %v2508
        %v2510 = vand.u32 %v2509, 4294901760
        %2511 = vmatpush.msra.mxu0 %v2510
        %v2512 = vand.u32 %v225, 4294901760
        %v2513 = vsub.f32 %v225, %v2512
        %v2514 = vand.u32 %v2513, 4294901760
        %2515 = vmatpush.msra.mxu0 %v2514
        %v2516 = vand.u32 %v219, 4294901760
        %2517 = vmatmul.f32.gmra.mxu0 %v2516
        %v2518 = vpop.f32.mrf.mxu0
        %v2519 = vadd.f32 %v2450, %v2518
        %2520 = vdwg.mxu0
        %v2521 = vand.u32 %v465, 4294901760
        %2522 = vmatpush.msra.mxu0 %v2521
        %v2523 = vand.u32 %v449, 4294901760
        %2524 = vmatpush.msra.mxu0 %v2523
        %v2525 = vand.u32 %v433, 4294901760
        %2526 = vmatpush.msra.mxu0 %v2525
        %v2527 = vand.u32 %v417, 4294901760
        %2528 = vmatpush.msra.mxu0 %v2527
        %v2529 = vand.u32 %v401, 4294901760
        %2530 = vmatpush.msra.mxu0 %v2529
        %v2531 = vand.u32 %v385, 4294901760
        %2532 = vmatpush.msra.mxu0 %v2531
        %v2533 = vand.u32 %v369, 4294901760
        %2534 = vmatpush.msra.mxu0 %v2533
        %v2535 = vand.u32 %v353, 4294901760
        %2536 = vmatpush.msra.mxu0 %v2535
        %v2537 = vand.u32 %v337, 4294901760
        %2538 = vmatpush.msra.mxu0 %v2537
        %v2539 = vand.u32 %v321, 4294901760
        %2540 = vmatpush.msra.mxu0 %v2539
        %v2541 = vand.u32 %v305, 4294901760
        %2542 = vmatpush.msra.mxu0 %v2541
        %v2543 = vand.u32 %v289, 4294901760
        %2544 = vmatpush.msra.mxu0 %v2543
        %v2545 = vand.u32 %v273, 4294901760
        %2546 = vmatpush.msra.mxu0 %v2545
        %v2547 = vand.u32 %v257, 4294901760
        %2548 = vmatpush.msra.mxu0 %v2547
        %v2549 = vand.u32 %v241, 4294901760
        %2550 = vmatpush.msra.mxu0 %v2549
        %v2551 = vand.u32 %v225, 4294901760
        %2552 = vmatpush.msra.mxu0 %v2551
        %v2553 = vand.u32 %v219, 4294901760
        %2554 = vmatmul.f32.gmra.mxu0 %v2553
        %v2555 = vpop.f32.mrf.mxu0
        %v2556 = vadd.f32 %v2519, %v2555
        %2557 = vdwg.mxu0
        %v2558 = vand.u32 %v466, 4294901760
        %2559 = vmatpush.msra.mxu0 %v2558
        %v2560 = vand.u32 %v450, 4294901760
        %2561 = vmatpush.msra.mxu0 %v2560
        %v2562 = vand.u32 %v434, 4294901760
        %2563 = vmatpush.msra.mxu0 %v2562
        %v2564 = vand.u32 %v418, 4294901760
        %2565 = vmatpush.msra.mxu0 %v2564
        %v2566 = vand.u32 %v402, 4294901760
        %2567 = vmatpush.msra.mxu0 %v2566
        %v2568 = vand.u32 %v386, 4294901760
        %2569 = vmatpush.msra.mxu0 %v2568
        %v2570 = vand.u32 %v370, 4294901760
        %2571 = vmatpush.msra.mxu0 %v2570
        %v2572 = vand.u32 %v354, 4294901760
        %2573 = vmatpush.msra.mxu0 %v2572
        %v2574 = vand.u32 %v338, 4294901760
        %2575 = vmatpush.msra.mxu0 %v2574
        %v2576 = vand.u32 %v322, 4294901760
        %2577 = vmatpush.msra.mxu0 %v2576
        %v2578 = vand.u32 %v306, 4294901760
        %2579 = vmatpush.msra.mxu0 %v2578
        %v2580 = vand.u32 %v290, 4294901760
        %2581 = vmatpush.msra.mxu0 %v2580
        %v2582 = vand.u32 %v274, 4294901760
        %2583 = vmatpush.msra.mxu0 %v2582
        %v2584 = vand.u32 %v258, 4294901760
        %2585 = vmatpush.msra.mxu0 %v2584
        %v2586 = vand.u32 %v242, 4294901760
        %2587 = vmatpush.msra.mxu0 %v2586
        %v2588 = vand.u32 %v226, 4294901760
        %2589 = vmatpush.msra.mxu0 %v2588
        %v2590 = vand.u32 %v219, 4294901760
        %v2591 = vsub.f32 %v219, %v2590
        %v2592 = vand.u32 %v2591, 4294901760
        %v2593 = vsub.f32 %v2591, %v2592
        %v2594 = vand.u32 %v2593, 4294901760
        %2595 = vmatmul.f32.gmra.mxu0 %v2594
        %v2596 = vpop.f32.mrf.mxu0
        %v2597 = vadd.f32 %v486, %v2596
        %2598 = vdwg.mxu0
        %v2599 = vand.u32 %v466, 4294901760
        %v2600 = vsub.f32 %v466, %v2599
        %v2601 = vand.u32 %v2600, 4294901760
        %v2602 = vsub.f32 %v2600, %v2601
        %v2603 = vand.u32 %v2602, 4294901760
        %2604 = vmatpush.msra.mxu0 %v2603
        %v2605 = vand.u32 %v450, 4294901760
        %v2606 = vsub.f32 %v450, %v2605
        %v2607 = vand.u32 %v2606, 4294901760
        %v2608 = vsub.f32 %v2606, %v2607
        %v2609 = vand.u32 %v2608, 4294901760
        %2610 = vmatpush.msra.mxu0 %v2609
        %v2611 = vand.u32 %v434, 4294901760
        %v2612 = vsub.f32 %v434, %v2611
        %v2613 = vand.u32 %v2612, 4294901760
        %v2614 = vsub.f32 %v2612, %v2613
        %v2615 = vand.u32 %v2614, 4294901760
        %2616 = vmatpush.msra.mxu0 %v2615
        %v2617 = vand.u32 %v418, 4294901760
        %v2618 = vsub.f32 %v418, %v2617
        %v2619 = vand.u32 %v2618, 4294901760
        %v2620 = vsub.f32 %v2618, %v2619
        %v2621 = vand.u32 %v2620, 4294901760
        %2622 = vmatpush.msra.mxu0 %v2621
        %v2623 = vand.u32 %v402, 4294901760
        %v2624 = vsub.f32 %v402, %v2623
        %v2625 = vand.u32 %v2624, 4294901760
        %v2626 = vsub.f32 %v2624, %v2625
        %v2627 = vand.u32 %v2626, 4294901760
        %2628 = vmatpush.msra.mxu0 %v2627
        %v2629 = vand.u32 %v386, 4294901760
        %v2630 = vsub.f32 %v386, %v2629
        %v2631 = vand.u32 %v2630, 4294901760
        %v2632 = vsub.f32 %v2630, %v2631
        %v2633 = vand.u32 %v2632, 4294901760
        %2634 = vmatpush.msra.mxu0 %v2633
        %v2635 = vand.u32 %v370, 4294901760
        %v2636 = vsub.f32 %v370, %v2635
        %v2637 = vand.u32 %v2636, 4294901760
        %v2638 = vsub.f32 %v2636, %v2637
        %v2639 = vand.u32 %v2638, 4294901760
        %2640 = vmatpush.msra.mxu0 %v2639
        %v2641 = vand.u32 %v354, 4294901760
        %v2642 = vsub.f32 %v354, %v2641
        %v2643 = vand.u32 %v2642, 4294901760
        %v2644 = vsub.f32 %v2642, %v2643
        %v2645 = vand.u32 %v2644, 4294901760
        %2646 = vmatpush.msra.mxu0 %v2645
        %v2647 = vand.u32 %v338, 4294901760
        %v2648 = vsub.f32 %v338, %v2647
        %v2649 = vand.u32 %v2648, 4294901760
        %v2650 = vsub.f32 %v2648, %v2649
        %v2651 = vand.u32 %v2650, 4294901760
        %2652 = vmatpush.msra.mxu0 %v2651
        %v2653 = vand.u32 %v322, 4294901760
        %v2654 = vsub.f32 %v322, %v2653
        %v2655 = vand.u32 %v2654, 4294901760
        %v2656 = vsub.f32 %v2654, %v2655
        %v2657 = vand.u32 %v2656, 4294901760
        %2658 = vmatpush.msra.mxu0 %v2657
        %v2659 = vand.u32 %v306, 4294901760
        %v2660 = vsub.f32 %v306, %v2659
        %v2661 = vand.u32 %v2660, 4294901760
        %v2662 = vsub.f32 %v2660, %v2661
        %v2663 = vand.u32 %v2662, 4294901760
        %2664 = vmatpush.msra.mxu0 %v2663
        %v2665 = vand.u32 %v290, 4294901760
        %v2666 = vsub.f32 %v290, %v2665
        %v2667 = vand.u32 %v2666, 4294901760
        %v2668 = vsub.f32 %v2666, %v2667
        %v2669 = vand.u32 %v2668, 4294901760
        %2670 = vmatpush.msra.mxu0 %v2669
        %v2671 = vand.u32 %v274, 4294901760
        %v2672 = vsub.f32 %v274, %v2671
        %v2673 = vand.u32 %v2672, 4294901760
        %v2674 = vsub.f32 %v2672, %v2673
        %v2675 = vand.u32 %v2674, 4294901760
        %2676 = vmatpush.msra.mxu0 %v2675
        %v2677 = vand.u32 %v258, 4294901760
        %v2678 = vsub.f32 %v258, %v2677
        %v2679 = vand.u32 %v2678, 4294901760
        %v2680 = vsub.f32 %v2678, %v2679
        %v2681 = vand.u32 %v2680, 4294901760
        %2682 = vmatpush.msra.mxu0 %v2681
        %v2683 = vand.u32 %v242, 4294901760
        %v2684 = vsub.f32 %v242, %v2683
        %v2685 = vand.u32 %v2684, 4294901760
        %v2686 = vsub.f32 %v2684, %v2685
        %v2687 = vand.u32 %v2686, 4294901760
        %2688 = vmatpush.msra.mxu0 %v2687
        %v2689 = vand.u32 %v226, 4294901760
        %v2690 = vsub.f32 %v226, %v2689
        %v2691 = vand.u32 %v2690, 4294901760
        %v2692 = vsub.f32 %v2690, %v2691
        %v2693 = vand.u32 %v2692, 4294901760
        %2694 = vmatpush.msra.mxu0 %v2693
        %v2695 = vand.u32 %v219, 4294901760
        %2696 = vmatmul.f32.gmra.mxu0 %v2695
        %v2697 = vpop.f32.mrf.mxu0
        %v2698 = vadd.f32 %v2597, %v2697
        %2699 = vdwg.mxu0
        %v2700 = vand.u32 %v466, 4294901760
        %v2701 = vsub.f32 %v466, %v2700
        %2702 = vmatpush.msra.mxu0 %v2701
        %v2703 = vand.u32 %v450, 4294901760
        %v2704 = vsub.f32 %v450, %v2703
        %2705 = vmatpush.msra.mxu0 %v2704
        %v2706 = vand.u32 %v434, 4294901760
        %v2707 = vsub.f32 %v434, %v2706
        %2708 = vmatpush.msra.mxu0 %v2707
        %v2709 = vand.u32 %v418, 4294901760
        %v2710 = vsub.f32 %v418, %v2709
        %2711 = vmatpush.msra.mxu0 %v2710
        %v2712 = vand.u32 %v402, 4294901760
        %v2713 = vsub.f32 %v402, %v2712
        %2714 = vmatpush.msra.mxu0 %v2713
        %v2715 = vand.u32 %v386, 4294901760
        %v2716 = vsub.f32 %v386, %v2715
        %2717 = vmatpush.msra.mxu0 %v2716
        %v2718 = vand.u32 %v370, 4294901760
        %v2719 = vsub.f32 %v370, %v2718
        %2720 = vmatpush.msra.mxu0 %v2719
        %v2721 = vand.u32 %v354, 4294901760
        %v2722 = vsub.f32 %v354, %v2721
        %2723 = vmatpush.msra.mxu0 %v2722
        %v2724 = vand.u32 %v338, 4294901760
        %v2725 = vsub.f32 %v338, %v2724
        %2726 = vmatpush.msra.mxu0 %v2725
        %v2727 = vand.u32 %v322, 4294901760
        %v2728 = vsub.f32 %v322, %v2727
        %2729 = vmatpush.msra.mxu0 %v2728
        %v2730 = vand.u32 %v306, 4294901760
        %v2731 = vsub.f32 %v306, %v2730
        %2732 = vmatpush.msra.mxu0 %v2731
        %v2733 = vand.u32 %v290, 4294901760
        %v2734 = vsub.f32 %v290, %v2733
        %2735 = vmatpush.msra.mxu0 %v2734
        %v2736 = vand.u32 %v274, 4294901760
        %v2737 = vsub.f32 %v274, %v2736
        %2738 = vmatpush.msra.mxu0 %v2737
        %v2739 = vand.u32 %v258, 4294901760
        %v2740 = vsub.f32 %v258, %v2739
        %2741 = vmatpush.msra.mxu0 %v2740
        %v2742 = vand.u32 %v242, 4294901760
        %v2743 = vsub.f32 %v242, %v2742
        %2744 = vmatpush.msra.mxu0 %v2743
        %v2745 = vand.u32 %v226, 4294901760
        %v2746 = vsub.f32 %v226, %v2745
        %2747 = vmatpush.msra.mxu0 %v2746
        %v2748 = vand.u32 %v219, 4294901760
        %v2749 = vsub.f32 %v219, %v2748
        %2750 = vmatmul.f32.gmra.mxu0 %v2749
        %v2751 = vpop.f32.mrf.mxu0
        %v2752 = vadd.f32 %v2698, %v2751
        %2753 = vdwg.mxu0
        %v2754 = vand.u32 %v466, 4294901760
        %2755 = vmatpush.msra.mxu0 %v2754
        %v2756 = vand.u32 %v450, 4294901760
        %2757 = vmatpush.msra.mxu0 %v2756
        %v2758 = vand.u32 %v434, 4294901760
        %2759 = vmatpush.msra.mxu0 %v2758
        %v2760 = vand.u32 %v418, 4294901760
        %2761 = vmatpush.msra.mxu0 %v2760
        %v2762 = vand.u32 %v402, 4294901760
        %2763 = vmatpush.msra.mxu0 %v2762
        %v2764 = vand.u32 %v386, 4294901760
        %2765 = vmatpush.msra.mxu0 %v2764
        %v2766 = vand.u32 %v370, 4294901760
        %2767 = vmatpush.msra.mxu0 %v2766
        %v2768 = vand.u32 %v354, 4294901760
        %2769 = vmatpush.msra.mxu0 %v2768
        %v2770 = vand.u32 %v338, 4294901760
        %2771 = vmatpush.msra.mxu0 %v2770
        %v2772 = vand.u32 %v322, 4294901760
        %2773 = vmatpush.msra.mxu0 %v2772
        %v2774 = vand.u32 %v306, 4294901760
        %2775 = vmatpush.msra.mxu0 %v2774
        %v2776 = vand.u32 %v290, 4294901760
        %2777 = vmatpush.msra.mxu0 %v2776
        %v2778 = vand.u32 %v274, 4294901760
        %2779 = vmatpush.msra.mxu0 %v2778
        %v2780 = vand.u32 %v258, 4294901760
        %2781 = vmatpush.msra.mxu0 %v2780
        %v2782 = vand.u32 %v242, 4294901760
        %2783 = vmatpush.msra.mxu0 %v2782
        %v2784 = vand.u32 %v226, 4294901760
        %2785 = vmatpush.msra.mxu0 %v2784
        %v2786 = vand.u32 %v219, 4294901760
        %v2787 = vsub.f32 %v219, %v2786
        %v2788 = vand.u32 %v2787, 4294901760
        %2789 = vmatmul.f32.gmra.mxu0 %v2788
        %v2790 = vpop.f32.mrf.mxu0
        %v2791 = vadd.f32 %v2752, %v2790
        %2792 = vdwg.mxu0
        %v2793 = vand.u32 %v466, 4294901760
        %v2794 = vsub.f32 %v466, %v2793
        %v2795 = vand.u32 %v2794, 4294901760
        %2796 = vmatpush.msra.mxu0 %v2795
        %v2797 = vand.u32 %v450, 4294901760
        %v2798 = vsub.f32 %v450, %v2797
        %v2799 = vand.u32 %v2798, 4294901760
        %2800 = vmatpush.msra.mxu0 %v2799
        %v2801 = vand.u32 %v434, 4294901760
        %v2802 = vsub.f32 %v434, %v2801
        %v2803 = vand.u32 %v2802, 4294901760
        %2804 = vmatpush.msra.mxu0 %v2803
        %v2805 = vand.u32 %v418, 4294901760
        %v2806 = vsub.f32 %v418, %v2805
        %v2807 = vand.u32 %v2806, 4294901760
        %2808 = vmatpush.msra.mxu0 %v2807
        %v2809 = vand.u32 %v402, 4294901760
        %v2810 = vsub.f32 %v402, %v2809
        %v2811 = vand.u32 %v2810, 4294901760
        %2812 = vmatpush.msra.mxu0 %v2811
        %v2813 = vand.u32 %v386, 4294901760
        %v2814 = vsub.f32 %v386, %v2813
        %v2815 = vand.u32 %v2814, 4294901760
        %2816 = vmatpush.msra.mxu0 %v2815
        %v2817 = vand.u32 %v370, 4294901760
        %v2818 = vsub.f32 %v370, %v2817
        %v2819 = vand.u32 %v2818, 4294901760
        %2820 = vmatpush.msra.mxu0 %v2819
        %v2821 = vand.u32 %v354, 4294901760
        %v2822 = vsub.f32 %v354, %v2821
        %v2823 = vand.u32 %v2822, 4294901760
        %2824 = vmatpush.msra.mxu0 %v2823
        %v2825 = vand.u32 %v338, 4294901760
        %v2826 = vsub.f32 %v338, %v2825
        %v2827 = vand.u32 %v2826, 4294901760
        %2828 = vmatpush.msra.mxu0 %v2827
        %v2829 = vand.u32 %v322, 4294901760
        %v2830 = vsub.f32 %v322, %v2829
        %v2831 = vand.u32 %v2830, 4294901760
        %2832 = vmatpush.msra.mxu0 %v2831
        %v2833 = vand.u32 %v306, 4294901760
        %v2834 = vsub.f32 %v306, %v2833
        %v2835 = vand.u32 %v2834, 4294901760
        %2836 = vmatpush.msra.mxu0 %v2835
        %v2837 = vand.u32 %v290, 4294901760
        %v2838 = vsub.f32 %v290, %v2837
        %v2839 = vand.u32 %v2838, 4294901760
        %2840 = vmatpush.msra.mxu0 %v2839
        %v2841 = vand.u32 %v274, 4294901760
        %v2842 = vsub.f32 %v274, %v2841
        %v2843 = vand.u32 %v2842, 4294901760
        %2844 = vmatpush.msra.mxu0 %v2843
        %v2845 = vand.u32 %v258, 4294901760
        %v2846 = vsub.f32 %v258, %v2845
        %v2847 = vand.u32 %v2846, 4294901760
        %2848 = vmatpush.msra.mxu0 %v2847
        %v2849 = vand.u32 %v242, 4294901760
        %v2850 = vsub.f32 %v242, %v2849
        %v2851 = vand.u32 %v2850, 4294901760
        %2852 = vmatpush.msra.mxu0 %v2851
        %v2853 = vand.u32 %v226, 4294901760
        %v2854 = vsub.f32 %v226, %v2853
        %v2855 = vand.u32 %v2854, 4294901760
        %2856 = vmatpush.msra.mxu0 %v2855
        %v2857 = vand.u32 %v219, 4294901760
        %2858 = vmatmul.f32.gmra.mxu0 %v2857
        %v2859 = vpop.f32.mrf.mxu0
        %v2860 = vadd.f32 %v2791, %v2859
        %2861 = vdwg.mxu0
        %v2862 = vand.u32 %v466, 4294901760
        %2863 = vmatpush.msra.mxu0 %v2862
        %v2864 = vand.u32 %v450, 4294901760
        %2865 = vmatpush.msra.mxu0 %v2864
        %v2866 = vand.u32 %v434, 4294901760
        %2867 = vmatpush.msra.mxu0 %v2866
        %v2868 = vand.u32 %v418, 4294901760
        %2869 = vmatpush.msra.mxu0 %v2868
        %v2870 = vand.u32 %v402, 4294901760
        %2871 = vmatpush.msra.mxu0 %v2870
        %v2872 = vand.u32 %v386, 4294901760
        %2873 = vmatpush.msra.mxu0 %v2872
        %v2874 = vand.u32 %v370, 4294901760
        %2875 = vmatpush.msra.mxu0 %v2874
        %v2876 = vand.u32 %v354, 4294901760
        %2877 = vmatpush.msra.mxu0 %v2876
        %v2878 = vand.u32 %v338, 4294901760
        %2879 = vmatpush.msra.mxu0 %v2878
        %v2880 = vand.u32 %v322, 4294901760
        %2881 = vmatpush.msra.mxu0 %v2880
        %v2882 = vand.u32 %v306, 4294901760
        %2883 = vmatpush.msra.mxu0 %v2882
        %v2884 = vand.u32 %v290, 4294901760
        %2885 = vmatpush.msra.mxu0 %v2884
        %v2886 = vand.u32 %v274, 4294901760
        %2887 = vmatpush.msra.mxu0 %v2886
        %v2888 = vand.u32 %v258, 4294901760
        %2889 = vmatpush.msra.mxu0 %v2888
        %v2890 = vand.u32 %v242, 4294901760
        %2891 = vmatpush.msra.mxu0 %v2890
        %v2892 = vand.u32 %v226, 4294901760
        %2893 = vmatpush.msra.mxu0 %v2892
        %v2894 = vand.u32 %v219, 4294901760
        %2895 = vmatmul.f32.gmra.mxu0 %v2894
        %v2896 = vpop.f32.mrf.mxu0
        %v2897 = vadd.f32 %v2860, %v2896
        %2898 = vdwg.mxu0
        %v2899 = vand.u32 %v467, 4294901760
        %2900 = vmatpush.msra.mxu0 %v2899
        %v2901 = vand.u32 %v451, 4294901760
        %2902 = vmatpush.msra.mxu0 %v2901
        %v2903 = vand.u32 %v435, 4294901760
        %2904 = vmatpush.msra.mxu0 %v2903
        %v2905 = vand.u32 %v419, 4294901760
        %2906 = vmatpush.msra.mxu0 %v2905
        %v2907 = vand.u32 %v403, 4294901760
        %2908 = vmatpush.msra.mxu0 %v2907
        %v2909 = vand.u32 %v387, 4294901760
        %2910 = vmatpush.msra.mxu0 %v2909
        %v2911 = vand.u32 %v371, 4294901760
        %2912 = vmatpush.msra.mxu0 %v2911
        %v2913 = vand.u32 %v355, 4294901760
        %2914 = vmatpush.msra.mxu0 %v2913
        %v2915 = vand.u32 %v339, 4294901760
        %2916 = vmatpush.msra.mxu0 %v2915
        %v2917 = vand.u32 %v323, 4294901760
        %2918 = vmatpush.msra.mxu0 %v2917
        %v2919 = vand.u32 %v307, 4294901760
        %2920 = vmatpush.msra.mxu0 %v2919
        %v2921 = vand.u32 %v291, 4294901760
        %2922 = vmatpush.msra.mxu0 %v2921
        %v2923 = vand.u32 %v275, 4294901760
        %2924 = vmatpush.msra.mxu0 %v2923
        %v2925 = vand.u32 %v259, 4294901760
        %2926 = vmatpush.msra.mxu0 %v2925
        %v2927 = vand.u32 %v243, 4294901760
        %2928 = vmatpush.msra.mxu0 %v2927
        %v2929 = vand.u32 %v227, 4294901760
        %2930 = vmatpush.msra.mxu0 %v2929
        %v2931 = vand.u32 %v219, 4294901760
        %v2932 = vsub.f32 %v219, %v2931
        %v2933 = vand.u32 %v2932, 4294901760
        %v2934 = vsub.f32 %v2932, %v2933
        %v2935 = vand.u32 %v2934, 4294901760
        %2936 = vmatmul.f32.gmra.mxu0 %v2935
        %v2937 = vpop.f32.mrf.mxu0
        %v2938 = vadd.f32 %v487, %v2937
        %2939 = vdwg.mxu0
        %v2940 = vand.u32 %v467, 4294901760
        %v2941 = vsub.f32 %v467, %v2940
        %v2942 = vand.u32 %v2941, 4294901760
        %v2943 = vsub.f32 %v2941, %v2942
        %v2944 = vand.u32 %v2943, 4294901760
        %2945 = vmatpush.msra.mxu0 %v2944
        %v2946 = vand.u32 %v451, 4294901760
        %v2947 = vsub.f32 %v451, %v2946
        %v2948 = vand.u32 %v2947, 4294901760
        %v2949 = vsub.f32 %v2947, %v2948
        %v2950 = vand.u32 %v2949, 4294901760
        %2951 = vmatpush.msra.mxu0 %v2950
        %v2952 = vand.u32 %v435, 4294901760
        %v2953 = vsub.f32 %v435, %v2952
        %v2954 = vand.u32 %v2953, 4294901760
        %v2955 = vsub.f32 %v2953, %v2954
        %v2956 = vand.u32 %v2955, 4294901760
        %2957 = vmatpush.msra.mxu0 %v2956
        %v2958 = vand.u32 %v419, 4294901760
        %v2959 = vsub.f32 %v419, %v2958
        %v2960 = vand.u32 %v2959, 4294901760
        %v2961 = vsub.f32 %v2959, %v2960
        %v2962 = vand.u32 %v2961, 4294901760
        %2963 = vmatpush.msra.mxu0 %v2962
        %v2964 = vand.u32 %v403, 4294901760
        %v2965 = vsub.f32 %v403, %v2964
        %v2966 = vand.u32 %v2965, 4294901760
        %v2967 = vsub.f32 %v2965, %v2966
        %v2968 = vand.u32 %v2967, 4294901760
        %2969 = vmatpush.msra.mxu0 %v2968
        %v2970 = vand.u32 %v387, 4294901760
        %v2971 = vsub.f32 %v387, %v2970
        %v2972 = vand.u32 %v2971, 4294901760
        %v2973 = vsub.f32 %v2971, %v2972
        %v2974 = vand.u32 %v2973, 4294901760
        %2975 = vmatpush.msra.mxu0 %v2974
        %v2976 = vand.u32 %v371, 4294901760
        %v2977 = vsub.f32 %v371, %v2976
        %v2978 = vand.u32 %v2977, 4294901760
        %v2979 = vsub.f32 %v2977, %v2978
        %v2980 = vand.u32 %v2979, 4294901760
        %2981 = vmatpush.msra.mxu0 %v2980
        %v2982 = vand.u32 %v355, 4294901760
        %v2983 = vsub.f32 %v355, %v2982
        %v2984 = vand.u32 %v2983, 4294901760
        %v2985 = vsub.f32 %v2983, %v2984
        %v2986 = vand.u32 %v2985, 4294901760
        %2987 = vmatpush.msra.mxu0 %v2986
        %v2988 = vand.u32 %v339, 4294901760
        %v2989 = vsub.f32 %v339, %v2988
        %v2990 = vand.u32 %v2989, 4294901760
        %v2991 = vsub.f32 %v2989, %v2990
        %v2992 = vand.u32 %v2991, 4294901760
        %2993 = vmatpush.msra.mxu0 %v2992
        %v2994 = vand.u32 %v323, 4294901760
        %v2995 = vsub.f32 %v323, %v2994
        %v2996 = vand.u32 %v2995, 4294901760
        %v2997 = vsub.f32 %v2995, %v2996
        %v2998 = vand.u32 %v2997, 4294901760
        %2999 = vmatpush.msra.mxu0 %v2998
        %v3000 = vand.u32 %v307, 4294901760
        %v3001 = vsub.f32 %v307, %v3000
        %v3002 = vand.u32 %v3001, 4294901760
        %v3003 = vsub.f32 %v3001, %v3002
        %v3004 = vand.u32 %v3003, 4294901760
        %3005 = vmatpush.msra.mxu0 %v3004
        %v3006 = vand.u32 %v291, 4294901760
        %v3007 = vsub.f32 %v291, %v3006
        %v3008 = vand.u32 %v3007, 4294901760
        %v3009 = vsub.f32 %v3007, %v3008
        %v3010 = vand.u32 %v3009, 4294901760
        %3011 = vmatpush.msra.mxu0 %v3010
        %v3012 = vand.u32 %v275, 4294901760
        %v3013 = vsub.f32 %v275, %v3012
        %v3014 = vand.u32 %v3013, 4294901760
        %v3015 = vsub.f32 %v3013, %v3014
        %v3016 = vand.u32 %v3015, 4294901760
        %3017 = vmatpush.msra.mxu0 %v3016
        %v3018 = vand.u32 %v259, 4294901760
        %v3019 = vsub.f32 %v259, %v3018
        %v3020 = vand.u32 %v3019, 4294901760
        %v3021 = vsub.f32 %v3019, %v3020
        %v3022 = vand.u32 %v3021, 4294901760
        %3023 = vmatpush.msra.mxu0 %v3022
        %v3024 = vand.u32 %v243, 4294901760
        %v3025 = vsub.f32 %v243, %v3024
        %v3026 = vand.u32 %v3025, 4294901760
        %v3027 = vsub.f32 %v3025, %v3026
        %v3028 = vand.u32 %v3027, 4294901760
        %3029 = vmatpush.msra.mxu0 %v3028
        %v3030 = vand.u32 %v227, 4294901760
        %v3031 = vsub.f32 %v227, %v3030
        %v3032 = vand.u32 %v3031, 4294901760
        %v3033 = vsub.f32 %v3031, %v3032
        %v3034 = vand.u32 %v3033, 4294901760
        %3035 = vmatpush.msra.mxu0 %v3034
        %v3036 = vand.u32 %v219, 4294901760
        %3037 = vmatmul.f32.gmra.mxu0 %v3036
        %v3038 = vpop.f32.mrf.mxu0
        %v3039 = vadd.f32 %v2938, %v3038
        %3040 = vdwg.mxu0
        %v3041 = vand.u32 %v467, 4294901760
        %v3042 = vsub.f32 %v467, %v3041
        %3043 = vmatpush.msra.mxu0 %v3042
        %v3044 = vand.u32 %v451, 4294901760
        %v3045 = vsub.f32 %v451, %v3044
        %3046 = vmatpush.msra.mxu0 %v3045
        %v3047 = vand.u32 %v435, 4294901760
        %v3048 = vsub.f32 %v435, %v3047
        %3049 = vmatpush.msra.mxu0 %v3048
        %v3050 = vand.u32 %v419, 4294901760
        %v3051 = vsub.f32 %v419, %v3050
        %3052 = vmatpush.msra.mxu0 %v3051
        %v3053 = vand.u32 %v403, 4294901760
        %v3054 = vsub.f32 %v403, %v3053
        %3055 = vmatpush.msra.mxu0 %v3054
        %v3056 = vand.u32 %v387, 4294901760
        %v3057 = vsub.f32 %v387, %v3056
        %3058 = vmatpush.msra.mxu0 %v3057
        %v3059 = vand.u32 %v371, 4294901760
        %v3060 = vsub.f32 %v371, %v3059
        %3061 = vmatpush.msra.mxu0 %v3060
        %v3062 = vand.u32 %v355, 4294901760
        %v3063 = vsub.f32 %v355, %v3062
        %3064 = vmatpush.msra.mxu0 %v3063
        %v3065 = vand.u32 %v339, 4294901760
        %v3066 = vsub.f32 %v339, %v3065
        %3067 = vmatpush.msra.mxu0 %v3066
        %v3068 = vand.u32 %v323, 4294901760
        %v3069 = vsub.f32 %v323, %v3068
        %3070 = vmatpush.msra.mxu0 %v3069
        %v3071 = vand.u32 %v307, 4294901760
        %v3072 = vsub.f32 %v307, %v3071
        %3073 = vmatpush.msra.mxu0 %v3072
        %v3074 = vand.u32 %v291, 4294901760
        %v3075 = vsub.f32 %v291, %v3074
        %3076 = vmatpush.msra.mxu0 %v3075
        %v3077 = vand.u32 %v275, 4294901760
        %v3078 = vsub.f32 %v275, %v3077
        %3079 = vmatpush.msra.mxu0 %v3078
        %v3080 = vand.u32 %v259, 4294901760
        %v3081 = vsub.f32 %v259, %v3080
        %3082 = vmatpush.msra.mxu0 %v3081
        %v3083 = vand.u32 %v243, 4294901760
        %v3084 = vsub.f32 %v243, %v3083
        %3085 = vmatpush.msra.mxu0 %v3084
        %v3086 = vand.u32 %v227, 4294901760
        %v3087 = vsub.f32 %v227, %v3086
        %3088 = vmatpush.msra.mxu0 %v3087
        %v3089 = vand.u32 %v219, 4294901760
        %v3090 = vsub.f32 %v219, %v3089
        %3091 = vmatmul.f32.gmra.mxu0 %v3090
        %v3092 = vpop.f32.mrf.mxu0
        %v3093 = vadd.f32 %v3039, %v3092
        %3094 = vdwg.mxu0
        %v3095 = vand.u32 %v467, 4294901760
        %3096 = vmatpush.msra.mxu0 %v3095
        %v3097 = vand.u32 %v451, 4294901760
        %3098 = vmatpush.msra.mxu0 %v3097
        %v3099 = vand.u32 %v435, 4294901760
        %3100 = vmatpush.msra.mxu0 %v3099
        %v3101 = vand.u32 %v419, 4294901760
        %3102 = vmatpush.msra.mxu0 %v3101
        %v3103 = vand.u32 %v403, 4294901760
        %3104 = vmatpush.msra.mxu0 %v3103
        %v3105 = vand.u32 %v387, 4294901760
        %3106 = vmatpush.msra.mxu0 %v3105
        %v3107 = vand.u32 %v371, 4294901760
        %3108 = vmatpush.msra.mxu0 %v3107
        %v3109 = vand.u32 %v355, 4294901760
        %3110 = vmatpush.msra.mxu0 %v3109
        %v3111 = vand.u32 %v339, 4294901760
        %3112 = vmatpush.msra.mxu0 %v3111
        %v3113 = vand.u32 %v323, 4294901760
        %3114 = vmatpush.msra.mxu0 %v3113
        %v3115 = vand.u32 %v307, 4294901760
        %3116 = vmatpush.msra.mxu0 %v3115
        %v3117 = vand.u32 %v291, 4294901760
        %3118 = vmatpush.msra.mxu0 %v3117
        %v3119 = vand.u32 %v275, 4294901760
        %3120 = vmatpush.msra.mxu0 %v3119
        %v3121 = vand.u32 %v259, 4294901760
        %3122 = vmatpush.msra.mxu0 %v3121
        %v3123 = vand.u32 %v243, 4294901760
        %3124 = vmatpush.msra.mxu0 %v3123
        %v3125 = vand.u32 %v227, 4294901760
        %3126 = vmatpush.msra.mxu0 %v3125
        %v3127 = vand.u32 %v219, 4294901760
        %v3128 = vsub.f32 %v219, %v3127
        %v3129 = vand.u32 %v3128, 4294901760
        %3130 = vmatmul.f32.gmra.mxu0 %v3129
        %v3131 = vpop.f32.mrf.mxu0
        %v3132 = vadd.f32 %v3093, %v3131
        %3133 = vdwg.mxu0
        %v3134 = vand.u32 %v467, 4294901760
        %v3135 = vsub.f32 %v467, %v3134
        %v3136 = vand.u32 %v3135, 4294901760
        %3137 = vmatpush.msra.mxu0 %v3136
        %v3138 = vand.u32 %v451, 4294901760
        %v3139 = vsub.f32 %v451, %v3138
        %v3140 = vand.u32 %v3139, 4294901760
        %3141 = vmatpush.msra.mxu0 %v3140
        %v3142 = vand.u32 %v435, 4294901760
        %v3143 = vsub.f32 %v435, %v3142
        %v3144 = vand.u32 %v3143, 4294901760
        %3145 = vmatpush.msra.mxu0 %v3144
        %v3146 = vand.u32 %v419, 4294901760
        %v3147 = vsub.f32 %v419, %v3146
        %v3148 = vand.u32 %v3147, 4294901760
        %3149 = vmatpush.msra.mxu0 %v3148
        %v3150 = vand.u32 %v403, 4294901760
        %v3151 = vsub.f32 %v403, %v3150
        %v3152 = vand.u32 %v3151, 4294901760
        %3153 = vmatpush.msra.mxu0 %v3152
        %v3154 = vand.u32 %v387, 4294901760
        %v3155 = vsub.f32 %v387, %v3154
        %v3156 = vand.u32 %v3155, 4294901760
        %3157 = vmatpush.msra.mxu0 %v3156
        %v3158 = vand.u32 %v371, 4294901760
        %v3159 = vsub.f32 %v371, %v3158
        %v3160 = vand.u32 %v3159, 4294901760
        %3161 = vmatpush.msra.mxu0 %v3160
        %v3162 = vand.u32 %v355, 4294901760
        %v3163 = vsub.f32 %v355, %v3162
        %v3164 = vand.u32 %v3163, 4294901760
        %3165 = vmatpush.msra.mxu0 %v3164
        %v3166 = vand.u32 %v339, 4294901760
        %v3167 = vsub.f32 %v339, %v3166
        %v3168 = vand.u32 %v3167, 4294901760
        %3169 = vmatpush.msra.mxu0 %v3168
        %v3170 = vand.u32 %v323, 4294901760
        %v3171 = vsub.f32 %v323, %v3170
        %v3172 = vand.u32 %v3171, 4294901760
        %3173 = vmatpush.msra.mxu0 %v3172
        %v3174 = vand.u32 %v307, 4294901760
        %v3175 = vsub.f32 %v307, %v3174
        %v3176 = vand.u32 %v3175, 4294901760
        %3177 = vmatpush.msra.mxu0 %v3176
        %v3178 = vand.u32 %v291, 4294901760
        %v3179 = vsub.f32 %v291, %v3178
        %v3180 = vand.u32 %v3179, 4294901760
        %3181 = vmatpush.msra.mxu0 %v3180
        %v3182 = vand.u32 %v275, 4294901760
        %v3183 = vsub.f32 %v275, %v3182
        %v3184 = vand.u32 %v3183, 4294901760
        %3185 = vmatpush.msra.mxu0 %v3184
        %v3186 = vand.u32 %v259, 4294901760
        %v3187 = vsub.f32 %v259, %v3186
        %v3188 = vand.u32 %v3187, 4294901760
        %3189 = vmatpush.msra.mxu0 %v3188
        %v3190 = vand.u32 %v243, 4294901760
        %v3191 = vsub.f32 %v243, %v3190
        %v3192 = vand.u32 %v3191, 4294901760
        %3193 = vmatpush.msra.mxu0 %v3192
        %v3194 = vand.u32 %v227, 4294901760
        %v3195 = vsub.f32 %v227, %v3194
        %v3196 = vand.u32 %v3195, 4294901760
        %3197 = vmatpush.msra.mxu0 %v3196
        %v3198 = vand.u32 %v219, 4294901760
        %3199 = vmatmul.f32.gmra.mxu0 %v3198
        %v3200 = vpop.f32.mrf.mxu0
        %v3201 = vadd.f32 %v3132, %v3200
        %3202 = vdwg.mxu0
        %v3203 = vand.u32 %v467, 4294901760
        %3204 = vmatpush.msra.mxu0 %v3203
        %v3205 = vand.u32 %v451, 4294901760
        %3206 = vmatpush.msra.mxu0 %v3205
        %v3207 = vand.u32 %v435, 4294901760
        %3208 = vmatpush.msra.mxu0 %v3207
        %v3209 = vand.u32 %v419, 4294901760
        %3210 = vmatpush.msra.mxu0 %v3209
        %v3211 = vand.u32 %v403, 4294901760
        %3212 = vmatpush.msra.mxu0 %v3211
        %v3213 = vand.u32 %v387, 4294901760
        %3214 = vmatpush.msra.mxu0 %v3213
        %v3215 = vand.u32 %v371, 4294901760
        %3216 = vmatpush.msra.mxu0 %v3215
        %v3217 = vand.u32 %v355, 4294901760
        %3218 = vmatpush.msra.mxu0 %v3217
        %v3219 = vand.u32 %v339, 4294901760
        %3220 = vmatpush.msra.mxu0 %v3219
        %v3221 = vand.u32 %v323, 4294901760
        %3222 = vmatpush.msra.mxu0 %v3221
        %v3223 = vand.u32 %v307, 4294901760
        %3224 = vmatpush.msra.mxu0 %v3223
        %v3225 = vand.u32 %v291, 4294901760
        %3226 = vmatpush.msra.mxu0 %v3225
        %v3227 = vand.u32 %v275, 4294901760
        %3228 = vmatpush.msra.mxu0 %v3227
        %v3229 = vand.u32 %v259, 4294901760
        %3230 = vmatpush.msra.mxu0 %v3229
        %v3231 = vand.u32 %v243, 4294901760
        %3232 = vmatpush.msra.mxu0 %v3231
        %v3233 = vand.u32 %v227, 4294901760
        %3234 = vmatpush.msra.mxu0 %v3233
        %v3235 = vand.u32 %v219, 4294901760
        %3236 = vmatmul.f32.gmra.mxu0 %v3235
        %v3237 = vpop.f32.mrf.mxu0
        %v3238 = vadd.f32 %v3201, %v3237
        %3239 = vdwg.mxu0
        %v3240 = vand.u32 %v468, 4294901760
        %3241 = vmatpush.msra.mxu0 %v3240
        %v3242 = vand.u32 %v452, 4294901760
        %3243 = vmatpush.msra.mxu0 %v3242
        %v3244 = vand.u32 %v436, 4294901760
        %3245 = vmatpush.msra.mxu0 %v3244
        %v3246 = vand.u32 %v420, 4294901760
        %3247 = vmatpush.msra.mxu0 %v3246
        %v3248 = vand.u32 %v404, 4294901760
        %3249 = vmatpush.msra.mxu0 %v3248
        %v3250 = vand.u32 %v388, 4294901760
        %3251 = vmatpush.msra.mxu0 %v3250
        %v3252 = vand.u32 %v372, 4294901760
        %3253 = vmatpush.msra.mxu0 %v3252
        %v3254 = vand.u32 %v356, 4294901760
        %3255 = vmatpush.msra.mxu0 %v3254
        %v3256 = vand.u32 %v340, 4294901760
        %3257 = vmatpush.msra.mxu0 %v3256
        %v3258 = vand.u32 %v324, 4294901760
        %3259 = vmatpush.msra.mxu0 %v3258
        %v3260 = vand.u32 %v308, 4294901760
        %3261 = vmatpush.msra.mxu0 %v3260
        %v3262 = vand.u32 %v292, 4294901760
        %3263 = vmatpush.msra.mxu0 %v3262
        %v3264 = vand.u32 %v276, 4294901760
        %3265 = vmatpush.msra.mxu0 %v3264
        %v3266 = vand.u32 %v260, 4294901760
        %3267 = vmatpush.msra.mxu0 %v3266
        %v3268 = vand.u32 %v244, 4294901760
        %3269 = vmatpush.msra.mxu0 %v3268
        %v3270 = vand.u32 %v228, 4294901760
        %3271 = vmatpush.msra.mxu0 %v3270
        %v3272 = vand.u32 %v219, 4294901760
        %v3273 = vsub.f32 %v219, %v3272
        %v3274 = vand.u32 %v3273, 4294901760
        %v3275 = vsub.f32 %v3273, %v3274
        %v3276 = vand.u32 %v3275, 4294901760
        %3277 = vmatmul.f32.gmra.mxu0 %v3276
        %v3278 = vpop.f32.mrf.mxu0
        %v3279 = vadd.f32 %v488, %v3278
        %3280 = vdwg.mxu0
        %v3281 = vand.u32 %v468, 4294901760
        %v3282 = vsub.f32 %v468, %v3281
        %v3283 = vand.u32 %v3282, 4294901760
        %v3284 = vsub.f32 %v3282, %v3283
        %v3285 = vand.u32 %v3284, 4294901760
        %3286 = vmatpush.msra.mxu0 %v3285
        %v3287 = vand.u32 %v452, 4294901760
        %v3288 = vsub.f32 %v452, %v3287
        %v3289 = vand.u32 %v3288, 4294901760
        %v3290 = vsub.f32 %v3288, %v3289
        %v3291 = vand.u32 %v3290, 4294901760
        %3292 = vmatpush.msra.mxu0 %v3291
        %v3293 = vand.u32 %v436, 4294901760
        %v3294 = vsub.f32 %v436, %v3293
        %v3295 = vand.u32 %v3294, 4294901760
        %v3296 = vsub.f32 %v3294, %v3295
        %v3297 = vand.u32 %v3296, 4294901760
        %3298 = vmatpush.msra.mxu0 %v3297
        %v3299 = vand.u32 %v420, 4294901760
        %v3300 = vsub.f32 %v420, %v3299
        %v3301 = vand.u32 %v3300, 4294901760
        %v3302 = vsub.f32 %v3300, %v3301
        %v3303 = vand.u32 %v3302, 4294901760
        %3304 = vmatpush.msra.mxu0 %v3303
        %v3305 = vand.u32 %v404, 4294901760
        %v3306 = vsub.f32 %v404, %v3305
        %v3307 = vand.u32 %v3306, 4294901760
        %v3308 = vsub.f32 %v3306, %v3307
        %v3309 = vand.u32 %v3308, 4294901760
        %3310 = vmatpush.msra.mxu0 %v3309
        %v3311 = vand.u32 %v388, 4294901760
        %v3312 = vsub.f32 %v388, %v3311
        %v3313 = vand.u32 %v3312, 4294901760
        %v3314 = vsub.f32 %v3312, %v3313
        %v3315 = vand.u32 %v3314, 4294901760
        %3316 = vmatpush.msra.mxu0 %v3315
        %v3317 = vand.u32 %v372, 4294901760
        %v3318 = vsub.f32 %v372, %v3317
        %v3319 = vand.u32 %v3318, 4294901760
        %v3320 = vsub.f32 %v3318, %v3319
        %v3321 = vand.u32 %v3320, 4294901760
        %3322 = vmatpush.msra.mxu0 %v3321
        %v3323 = vand.u32 %v356, 4294901760
        %v3324 = vsub.f32 %v356, %v3323
        %v3325 = vand.u32 %v3324, 4294901760
        %v3326 = vsub.f32 %v3324, %v3325
        %v3327 = vand.u32 %v3326, 4294901760
        %3328 = vmatpush.msra.mxu0 %v3327
        %v3329 = vand.u32 %v340, 4294901760
        %v3330 = vsub.f32 %v340, %v3329
        %v3331 = vand.u32 %v3330, 4294901760
        %v3332 = vsub.f32 %v3330, %v3331
        %v3333 = vand.u32 %v3332, 4294901760
        %3334 = vmatpush.msra.mxu0 %v3333
        %v3335 = vand.u32 %v324, 4294901760
        %v3336 = vsub.f32 %v324, %v3335
        %v3337 = vand.u32 %v3336, 4294901760
        %v3338 = vsub.f32 %v3336, %v3337
        %v3339 = vand.u32 %v3338, 4294901760
        %3340 = vmatpush.msra.mxu0 %v3339
        %v3341 = vand.u32 %v308, 4294901760
        %v3342 = vsub.f32 %v308, %v3341
        %v3343 = vand.u32 %v3342, 4294901760
        %v3344 = vsub.f32 %v3342, %v3343
        %v3345 = vand.u32 %v3344, 4294901760
        %3346 = vmatpush.msra.mxu0 %v3345
        %v3347 = vand.u32 %v292, 4294901760
        %v3348 = vsub.f32 %v292, %v3347
        %v3349 = vand.u32 %v3348, 4294901760
        %v3350 = vsub.f32 %v3348, %v3349
        %v3351 = vand.u32 %v3350, 4294901760
        %3352 = vmatpush.msra.mxu0 %v3351
        %v3353 = vand.u32 %v276, 4294901760
        %v3354 = vsub.f32 %v276, %v3353
        %v3355 = vand.u32 %v3354, 4294901760
        %v3356 = vsub.f32 %v3354, %v3355
        %v3357 = vand.u32 %v3356, 4294901760
        %3358 = vmatpush.msra.mxu0 %v3357
        %v3359 = vand.u32 %v260, 4294901760
        %v3360 = vsub.f32 %v260, %v3359
        %v3361 = vand.u32 %v3360, 4294901760
        %v3362 = vsub.f32 %v3360, %v3361
        %v3363 = vand.u32 %v3362, 4294901760
        %3364 = vmatpush.msra.mxu0 %v3363
        %v3365 = vand.u32 %v244, 4294901760
        %v3366 = vsub.f32 %v244, %v3365
        %v3367 = vand.u32 %v3366, 4294901760
        %v3368 = vsub.f32 %v3366, %v3367
        %v3369 = vand.u32 %v3368, 4294901760
        %3370 = vmatpush.msra.mxu0 %v3369
        %v3371 = vand.u32 %v228, 4294901760
        %v3372 = vsub.f32 %v228, %v3371
        %v3373 = vand.u32 %v3372, 4294901760
        %v3374 = vsub.f32 %v3372, %v3373
        %v3375 = vand.u32 %v3374, 4294901760
        %3376 = vmatpush.msra.mxu0 %v3375
        %v3377 = vand.u32 %v219, 4294901760
        %3378 = vmatmul.f32.gmra.mxu0 %v3377
        %v3379 = vpop.f32.mrf.mxu0
        %v3380 = vadd.f32 %v3279, %v3379
        %3381 = vdwg.mxu0
        %v3382 = vand.u32 %v468, 4294901760
        %v3383 = vsub.f32 %v468, %v3382
        %3384 = vmatpush.msra.mxu0 %v3383
        %v3385 = vand.u32 %v452, 4294901760
        %v3386 = vsub.f32 %v452, %v3385
        %3387 = vmatpush.msra.mxu0 %v3386
        %v3388 = vand.u32 %v436, 4294901760
        %v3389 = vsub.f32 %v436, %v3388
        %3390 = vmatpush.msra.mxu0 %v3389
        %v3391 = vand.u32 %v420, 4294901760
        %v3392 = vsub.f32 %v420, %v3391
        %3393 = vmatpush.msra.mxu0 %v3392
        %v3394 = vand.u32 %v404, 4294901760
        %v3395 = vsub.f32 %v404, %v3394
        %3396 = vmatpush.msra.mxu0 %v3395
        %v3397 = vand.u32 %v388, 4294901760
        %v3398 = vsub.f32 %v388, %v3397
        %3399 = vmatpush.msra.mxu0 %v3398
        %v3400 = vand.u32 %v372, 4294901760
        %v3401 = vsub.f32 %v372, %v3400
        %3402 = vmatpush.msra.mxu0 %v3401
        %v3403 = vand.u32 %v356, 4294901760
        %v3404 = vsub.f32 %v356, %v3403
        %3405 = vmatpush.msra.mxu0 %v3404
        %v3406 = vand.u32 %v340, 4294901760
        %v3407 = vsub.f32 %v340, %v3406
        %3408 = vmatpush.msra.mxu0 %v3407
        %v3409 = vand.u32 %v324, 4294901760
        %v3410 = vsub.f32 %v324, %v3409
        %3411 = vmatpush.msra.mxu0 %v3410
        %v3412 = vand.u32 %v308, 4294901760
        %v3413 = vsub.f32 %v308, %v3412
        %3414 = vmatpush.msra.mxu0 %v3413
        %v3415 = vand.u32 %v292, 4294901760
        %v3416 = vsub.f32 %v292, %v3415
        %3417 = vmatpush.msra.mxu0 %v3416
        %v3418 = vand.u32 %v276, 4294901760
        %v3419 = vsub.f32 %v276, %v3418
        %3420 = vmatpush.msra.mxu0 %v3419
        %v3421 = vand.u32 %v260, 4294901760
        %v3422 = vsub.f32 %v260, %v3421
        %3423 = vmatpush.msra.mxu0 %v3422
        %v3424 = vand.u32 %v244, 4294901760
        %v3425 = vsub.f32 %v244, %v3424
        %3426 = vmatpush.msra.mxu0 %v3425
        %v3427 = vand.u32 %v228, 4294901760
        %v3428 = vsub.f32 %v228, %v3427
        %3429 = vmatpush.msra.mxu0 %v3428
        %v3430 = vand.u32 %v219, 4294901760
        %v3431 = vsub.f32 %v219, %v3430
        %3432 = vmatmul.f32.gmra.mxu0 %v3431
        %v3433 = vpop.f32.mrf.mxu0
        %v3434 = vadd.f32 %v3380, %v3433
        %3435 = vdwg.mxu0
        %v3436 = vand.u32 %v468, 4294901760
        %3437 = vmatpush.msra.mxu0 %v3436
        %v3438 = vand.u32 %v452, 4294901760
        %3439 = vmatpush.msra.mxu0 %v3438
        %v3440 = vand.u32 %v436, 4294901760
        %3441 = vmatpush.msra.mxu0 %v3440
        %v3442 = vand.u32 %v420, 4294901760
        %3443 = vmatpush.msra.mxu0 %v3442
        %v3444 = vand.u32 %v404, 4294901760
        %3445 = vmatpush.msra.mxu0 %v3444
        %v3446 = vand.u32 %v388, 4294901760
        %3447 = vmatpush.msra.mxu0 %v3446
        %v3448 = vand.u32 %v372, 4294901760
        %3449 = vmatpush.msra.mxu0 %v3448
        %v3450 = vand.u32 %v356, 4294901760
        %3451 = vmatpush.msra.mxu0 %v3450
        %v3452 = vand.u32 %v340, 4294901760
        %3453 = vmatpush.msra.mxu0 %v3452
        %v3454 = vand.u32 %v324, 4294901760
        %3455 = vmatpush.msra.mxu0 %v3454
        %v3456 = vand.u32 %v308, 4294901760
        %3457 = vmatpush.msra.mxu0 %v3456
        %v3458 = vand.u32 %v292, 4294901760
        %3459 = vmatpush.msra.mxu0 %v3458
        %v3460 = vand.u32 %v276, 4294901760
        %3461 = vmatpush.msra.mxu0 %v3460
        %v3462 = vand.u32 %v260, 4294901760
        %3463 = vmatpush.msra.mxu0 %v3462
        %v3464 = vand.u32 %v244, 4294901760
        %3465 = vmatpush.msra.mxu0 %v3464
        %v3466 = vand.u32 %v228, 4294901760
        %3467 = vmatpush.msra.mxu0 %v3466
        %v3468 = vand.u32 %v219, 4294901760
        %v3469 = vsub.f32 %v219, %v3468
        %v3470 = vand.u32 %v3469, 4294901760
        %3471 = vmatmul.f32.gmra.mxu0 %v3470
        %v3472 = vpop.f32.mrf.mxu0
        %v3473 = vadd.f32 %v3434, %v3472
        %3474 = vdwg.mxu0
        %v3475 = vand.u32 %v468, 4294901760
        %v3476 = vsub.f32 %v468, %v3475
        %v3477 = vand.u32 %v3476, 4294901760
        %3478 = vmatpush.msra.mxu0 %v3477
        %v3479 = vand.u32 %v452, 4294901760
        %v3480 = vsub.f32 %v452, %v3479
        %v3481 = vand.u32 %v3480, 4294901760
        %3482 = vmatpush.msra.mxu0 %v3481
        %v3483 = vand.u32 %v436, 4294901760
        %v3484 = vsub.f32 %v436, %v3483
        %v3485 = vand.u32 %v3484, 4294901760
        %3486 = vmatpush.msra.mxu0 %v3485
        %v3487 = vand.u32 %v420, 4294901760
        %v3488 = vsub.f32 %v420, %v3487
        %v3489 = vand.u32 %v3488, 4294901760
        %3490 = vmatpush.msra.mxu0 %v3489
        %v3491 = vand.u32 %v404, 4294901760
        %v3492 = vsub.f32 %v404, %v3491
        %v3493 = vand.u32 %v3492, 4294901760
        %3494 = vmatpush.msra.mxu0 %v3493
        %v3495 = vand.u32 %v388, 4294901760
        %v3496 = vsub.f32 %v388, %v3495
        %v3497 = vand.u32 %v3496, 4294901760
        %3498 = vmatpush.msra.mxu0 %v3497
        %v3499 = vand.u32 %v372, 4294901760
        %v3500 = vsub.f32 %v372, %v3499
        %v3501 = vand.u32 %v3500, 4294901760
        %3502 = vmatpush.msra.mxu0 %v3501
        %v3503 = vand.u32 %v356, 4294901760
        %v3504 = vsub.f32 %v356, %v3503
        %v3505 = vand.u32 %v3504, 4294901760
        %3506 = vmatpush.msra.mxu0 %v3505
        %v3507 = vand.u32 %v340, 4294901760
        %v3508 = vsub.f32 %v340, %v3507
        %v3509 = vand.u32 %v3508, 4294901760
        %3510 = vmatpush.msra.mxu0 %v3509
        %v3511 = vand.u32 %v324, 4294901760
        %v3512 = vsub.f32 %v324, %v3511
        %v3513 = vand.u32 %v3512, 4294901760
        %3514 = vmatpush.msra.mxu0 %v3513
        %v3515 = vand.u32 %v308, 4294901760
        %v3516 = vsub.f32 %v308, %v3515
        %v3517 = vand.u32 %v3516, 4294901760
        %3518 = vmatpush.msra.mxu0 %v3517
        %v3519 = vand.u32 %v292, 4294901760
        %v3520 = vsub.f32 %v292, %v3519
        %v3521 = vand.u32 %v3520, 4294901760
        %3522 = vmatpush.msra.mxu0 %v3521
        %v3523 = vand.u32 %v276, 4294901760
        %v3524 = vsub.f32 %v276, %v3523
        %v3525 = vand.u32 %v3524, 4294901760
        %3526 = vmatpush.msra.mxu0 %v3525
        %v3527 = vand.u32 %v260, 4294901760
        %v3528 = vsub.f32 %v260, %v3527
        %v3529 = vand.u32 %v3528, 4294901760
        %3530 = vmatpush.msra.mxu0 %v3529
        %v3531 = vand.u32 %v244, 4294901760
        %v3532 = vsub.f32 %v244, %v3531
        %v3533 = vand.u32 %v3532, 4294901760
        %3534 = vmatpush.msra.mxu0 %v3533
        %v3535 = vand.u32 %v228, 4294901760
        %v3536 = vsub.f32 %v228, %v3535
        %v3537 = vand.u32 %v3536, 4294901760
        %3538 = vmatpush.msra.mxu0 %v3537
        %v3539 = vand.u32 %v219, 4294901760
        %3540 = vmatmul.f32.gmra.mxu0 %v3539
        %v3541 = vpop.f32.mrf.mxu0
        %v3542 = vadd.f32 %v3473, %v3541
        %3543 = vdwg.mxu0
        %v3544 = vand.u32 %v468, 4294901760
        %3545 = vmatpush.msra.mxu0 %v3544
        %v3546 = vand.u32 %v452, 4294901760
        %3547 = vmatpush.msra.mxu0 %v3546
        %v3548 = vand.u32 %v436, 4294901760
        %3549 = vmatpush.msra.mxu0 %v3548
        %v3550 = vand.u32 %v420, 4294901760
        %3551 = vmatpush.msra.mxu0 %v3550
        %v3552 = vand.u32 %v404, 4294901760
        %3553 = vmatpush.msra.mxu0 %v3552
        %v3554 = vand.u32 %v388, 4294901760
        %3555 = vmatpush.msra.mxu0 %v3554
        %v3556 = vand.u32 %v372, 4294901760
        %3557 = vmatpush.msra.mxu0 %v3556
        %v3558 = vand.u32 %v356, 4294901760
        %3559 = vmatpush.msra.mxu0 %v3558
        %v3560 = vand.u32 %v340, 4294901760
        %3561 = vmatpush.msra.mxu0 %v3560
        %v3562 = vand.u32 %v324, 4294901760
        %3563 = vmatpush.msra.mxu0 %v3562
        %v3564 = vand.u32 %v308, 4294901760
        %3565 = vmatpush.msra.mxu0 %v3564
        %v3566 = vand.u32 %v292, 4294901760
        %3567 = vmatpush.msra.mxu0 %v3566
        %v3568 = vand.u32 %v276, 4294901760
        %3569 = vmatpush.msra.mxu0 %v3568
        %v3570 = vand.u32 %v260, 4294901760
        %3571 = vmatpush.msra.mxu0 %v3570
        %v3572 = vand.u32 %v244, 4294901760
        %3573 = vmatpush.msra.mxu0 %v3572
        %v3574 = vand.u32 %v228, 4294901760
        %3575 = vmatpush.msra.mxu0 %v3574
        %v3576 = vand.u32 %v219, 4294901760
        %3577 = vmatmul.f32.gmra.mxu0 %v3576
        %v3578 = vpop.f32.mrf.mxu0
        %v3579 = vadd.f32 %v3542, %v3578
        %3580 = vdwg.mxu0
        %v3581 = vand.u32 %v469, 4294901760
        %3582 = vmatpush.msra.mxu0 %v3581
        %v3583 = vand.u32 %v453, 4294901760
        %3584 = vmatpush.msra.mxu0 %v3583
        %v3585 = vand.u32 %v437, 4294901760
        %3586 = vmatpush.msra.mxu0 %v3585
        %v3587 = vand.u32 %v421, 4294901760
        %3588 = vmatpush.msra.mxu0 %v3587
        %v3589 = vand.u32 %v405, 4294901760
        %3590 = vmatpush.msra.mxu0 %v3589
        %v3591 = vand.u32 %v389, 4294901760
        %3592 = vmatpush.msra.mxu0 %v3591
        %v3593 = vand.u32 %v373, 4294901760
        %3594 = vmatpush.msra.mxu0 %v3593
        %v3595 = vand.u32 %v357, 4294901760
        %3596 = vmatpush.msra.mxu0 %v3595
        %v3597 = vand.u32 %v341, 4294901760
        %3598 = vmatpush.msra.mxu0 %v3597
        %v3599 = vand.u32 %v325, 4294901760
        %3600 = vmatpush.msra.mxu0 %v3599
        %v3601 = vand.u32 %v309, 4294901760
        %3602 = vmatpush.msra.mxu0 %v3601
        %v3603 = vand.u32 %v293, 4294901760
        %3604 = vmatpush.msra.mxu0 %v3603
        %v3605 = vand.u32 %v277, 4294901760
        %3606 = vmatpush.msra.mxu0 %v3605
        %v3607 = vand.u32 %v261, 4294901760
        %3608 = vmatpush.msra.mxu0 %v3607
        %v3609 = vand.u32 %v245, 4294901760
        %3610 = vmatpush.msra.mxu0 %v3609
        %v3611 = vand.u32 %v229, 4294901760
        %3612 = vmatpush.msra.mxu0 %v3611
        %v3613 = vand.u32 %v219, 4294901760
        %v3614 = vsub.f32 %v219, %v3613
        %v3615 = vand.u32 %v3614, 4294901760
        %v3616 = vsub.f32 %v3614, %v3615
        %v3617 = vand.u32 %v3616, 4294901760
        %3618 = vmatmul.f32.gmra.mxu0 %v3617
        %v3619 = vpop.f32.mrf.mxu0
        %v3620 = vadd.f32 %v489, %v3619
        %3621 = vdwg.mxu0
        %v3622 = vand.u32 %v469, 4294901760
        %v3623 = vsub.f32 %v469, %v3622
        %v3624 = vand.u32 %v3623, 4294901760
        %v3625 = vsub.f32 %v3623, %v3624
        %v3626 = vand.u32 %v3625, 4294901760
        %3627 = vmatpush.msra.mxu0 %v3626
        %v3628 = vand.u32 %v453, 4294901760
        %v3629 = vsub.f32 %v453, %v3628
        %v3630 = vand.u32 %v3629, 4294901760
        %v3631 = vsub.f32 %v3629, %v3630
        %v3632 = vand.u32 %v3631, 4294901760
        %3633 = vmatpush.msra.mxu0 %v3632
        %v3634 = vand.u32 %v437, 4294901760
        %v3635 = vsub.f32 %v437, %v3634
        %v3636 = vand.u32 %v3635, 4294901760
        %v3637 = vsub.f32 %v3635, %v3636
        %v3638 = vand.u32 %v3637, 4294901760
        %3639 = vmatpush.msra.mxu0 %v3638
        %v3640 = vand.u32 %v421, 4294901760
        %v3641 = vsub.f32 %v421, %v3640
        %v3642 = vand.u32 %v3641, 4294901760
        %v3643 = vsub.f32 %v3641, %v3642
        %v3644 = vand.u32 %v3643, 4294901760
        %3645 = vmatpush.msra.mxu0 %v3644
        %v3646 = vand.u32 %v405, 4294901760
        %v3647 = vsub.f32 %v405, %v3646
        %v3648 = vand.u32 %v3647, 4294901760
        %v3649 = vsub.f32 %v3647, %v3648
        %v3650 = vand.u32 %v3649, 4294901760
        %3651 = vmatpush.msra.mxu0 %v3650
        %v3652 = vand.u32 %v389, 4294901760
        %v3653 = vsub.f32 %v389, %v3652
        %v3654 = vand.u32 %v3653, 4294901760
        %v3655 = vsub.f32 %v3653, %v3654
        %v3656 = vand.u32 %v3655, 4294901760
        %3657 = vmatpush.msra.mxu0 %v3656
        %v3658 = vand.u32 %v373, 4294901760
        %v3659 = vsub.f32 %v373, %v3658
        %v3660 = vand.u32 %v3659, 4294901760
        %v3661 = vsub.f32 %v3659, %v3660
        %v3662 = vand.u32 %v3661, 4294901760
        %3663 = vmatpush.msra.mxu0 %v3662
        %v3664 = vand.u32 %v357, 4294901760
        %v3665 = vsub.f32 %v357, %v3664
        %v3666 = vand.u32 %v3665, 4294901760
        %v3667 = vsub.f32 %v3665, %v3666
        %v3668 = vand.u32 %v3667, 4294901760
        %3669 = vmatpush.msra.mxu0 %v3668
        %v3670 = vand.u32 %v341, 4294901760
        %v3671 = vsub.f32 %v341, %v3670
        %v3672 = vand.u32 %v3671, 4294901760
        %v3673 = vsub.f32 %v3671, %v3672
        %v3674 = vand.u32 %v3673, 4294901760
        %3675 = vmatpush.msra.mxu0 %v3674
        %v3676 = vand.u32 %v325, 4294901760
        %v3677 = vsub.f32 %v325, %v3676
        %v3678 = vand.u32 %v3677, 4294901760
        %v3679 = vsub.f32 %v3677, %v3678
        %v3680 = vand.u32 %v3679, 4294901760
        %3681 = vmatpush.msra.mxu0 %v3680
        %v3682 = vand.u32 %v309, 4294901760
        %v3683 = vsub.f32 %v309, %v3682
        %v3684 = vand.u32 %v3683, 4294901760
        %v3685 = vsub.f32 %v3683, %v3684
        %v3686 = vand.u32 %v3685, 4294901760
        %3687 = vmatpush.msra.mxu0 %v3686
        %v3688 = vand.u32 %v293, 4294901760
        %v3689 = vsub.f32 %v293, %v3688
        %v3690 = vand.u32 %v3689, 4294901760
        %v3691 = vsub.f32 %v3689, %v3690
        %v3692 = vand.u32 %v3691, 4294901760
        %3693 = vmatpush.msra.mxu0 %v3692
        %v3694 = vand.u32 %v277, 4294901760
        %v3695 = vsub.f32 %v277, %v3694
        %v3696 = vand.u32 %v3695, 4294901760
        %v3697 = vsub.f32 %v3695, %v3696
        %v3698 = vand.u32 %v3697, 4294901760
        %3699 = vmatpush.msra.mxu0 %v3698
        %v3700 = vand.u32 %v261, 4294901760
        %v3701 = vsub.f32 %v261, %v3700
        %v3702 = vand.u32 %v3701, 4294901760
        %v3703 = vsub.f32 %v3701, %v3702
        %v3704 = vand.u32 %v3703, 4294901760
        %3705 = vmatpush.msra.mxu0 %v3704
        %v3706 = vand.u32 %v245, 4294901760
        %v3707 = vsub.f32 %v245, %v3706
        %v3708 = vand.u32 %v3707, 4294901760
        %v3709 = vsub.f32 %v3707, %v3708
        %v3710 = vand.u32 %v3709, 4294901760
        %3711 = vmatpush.msra.mxu0 %v3710
        %v3712 = vand.u32 %v229, 4294901760
        %v3713 = vsub.f32 %v229, %v3712
        %v3714 = vand.u32 %v3713, 4294901760
        %v3715 = vsub.f32 %v3713, %v3714
        %v3716 = vand.u32 %v3715, 4294901760
        %3717 = vmatpush.msra.mxu0 %v3716
        %v3718 = vand.u32 %v219, 4294901760
        %3719 = vmatmul.f32.gmra.mxu0 %v3718
        %v3720 = vpop.f32.mrf.mxu0
        %v3721 = vadd.f32 %v3620, %v3720
        %3722 = vdwg.mxu0
        %v3723 = vand.u32 %v469, 4294901760
        %v3724 = vsub.f32 %v469, %v3723
        %3725 = vmatpush.msra.mxu0 %v3724
        %v3726 = vand.u32 %v453, 4294901760
        %v3727 = vsub.f32 %v453, %v3726
        %3728 = vmatpush.msra.mxu0 %v3727
        %v3729 = vand.u32 %v437, 4294901760
        %v3730 = vsub.f32 %v437, %v3729
        %3731 = vmatpush.msra.mxu0 %v3730
        %v3732 = vand.u32 %v421, 4294901760
        %v3733 = vsub.f32 %v421, %v3732
        %3734 = vmatpush.msra.mxu0 %v3733
        %v3735 = vand.u32 %v405, 4294901760
        %v3736 = vsub.f32 %v405, %v3735
        %3737 = vmatpush.msra.mxu0 %v3736
        %v3738 = vand.u32 %v389, 4294901760
        %v3739 = vsub.f32 %v389, %v3738
        %3740 = vmatpush.msra.mxu0 %v3739
        %v3741 = vand.u32 %v373, 4294901760
        %v3742 = vsub.f32 %v373, %v3741
        %3743 = vmatpush.msra.mxu0 %v3742
        %v3744 = vand.u32 %v357, 4294901760
        %v3745 = vsub.f32 %v357, %v3744
        %3746 = vmatpush.msra.mxu0 %v3745
        %v3747 = vand.u32 %v341, 4294901760
        %v3748 = vsub.f32 %v341, %v3747
        %3749 = vmatpush.msra.mxu0 %v3748
        %v3750 = vand.u32 %v325, 4294901760
        %v3751 = vsub.f32 %v325, %v3750
        %3752 = vmatpush.msra.mxu0 %v3751
        %v3753 = vand.u32 %v309, 4294901760
        %v3754 = vsub.f32 %v309, %v3753
        %3755 = vmatpush.msra.mxu0 %v3754
        %v3756 = vand.u32 %v293, 4294901760
        %v3757 = vsub.f32 %v293, %v3756
        %3758 = vmatpush.msra.mxu0 %v3757
        %v3759 = vand.u32 %v277, 4294901760
        %v3760 = vsub.f32 %v277, %v3759
        %3761 = vmatpush.msra.mxu0 %v3760
        %v3762 = vand.u32 %v261, 4294901760
        %v3763 = vsub.f32 %v261, %v3762
        %3764 = vmatpush.msra.mxu0 %v3763
        %v3765 = vand.u32 %v245, 4294901760
        %v3766 = vsub.f32 %v245, %v3765
        %3767 = vmatpush.msra.mxu0 %v3766
        %v3768 = vand.u32 %v229, 4294901760
        %v3769 = vsub.f32 %v229, %v3768
        %3770 = vmatpush.msra.mxu0 %v3769
        %v3771 = vand.u32 %v219, 4294901760
        %v3772 = vsub.f32 %v219, %v3771
        %3773 = vmatmul.f32.gmra.mxu0 %v3772
        %v3774 = vpop.f32.mrf.mxu0
        %v3775 = vadd.f32 %v3721, %v3774
        %3776 = vdwg.mxu0
        %v3777 = vand.u32 %v469, 4294901760
        %3778 = vmatpush.msra.mxu0 %v3777
        %v3779 = vand.u32 %v453, 4294901760
        %3780 = vmatpush.msra.mxu0 %v3779
        %v3781 = vand.u32 %v437, 4294901760
        %3782 = vmatpush.msra.mxu0 %v3781
        %v3783 = vand.u32 %v421, 4294901760
        %3784 = vmatpush.msra.mxu0 %v3783
        %v3785 = vand.u32 %v405, 4294901760
        %3786 = vmatpush.msra.mxu0 %v3785
        %v3787 = vand.u32 %v389, 4294901760
        %3788 = vmatpush.msra.mxu0 %v3787
        %v3789 = vand.u32 %v373, 4294901760
        %3790 = vmatpush.msra.mxu0 %v3789
        %v3791 = vand.u32 %v357, 4294901760
        %3792 = vmatpush.msra.mxu0 %v3791
        %v3793 = vand.u32 %v341, 4294901760
        %3794 = vmatpush.msra.mxu0 %v3793
        %v3795 = vand.u32 %v325, 4294901760
        %3796 = vmatpush.msra.mxu0 %v3795
        %v3797 = vand.u32 %v309, 4294901760
        %3798 = vmatpush.msra.mxu0 %v3797
        %v3799 = vand.u32 %v293, 4294901760
        %3800 = vmatpush.msra.mxu0 %v3799
        %v3801 = vand.u32 %v277, 4294901760
        %3802 = vmatpush.msra.mxu0 %v3801
        %v3803 = vand.u32 %v261, 4294901760
        %3804 = vmatpush.msra.mxu0 %v3803
        %v3805 = vand.u32 %v245, 4294901760
        %3806 = vmatpush.msra.mxu0 %v3805
        %v3807 = vand.u32 %v229, 4294901760
        %3808 = vmatpush.msra.mxu0 %v3807
        %v3809 = vand.u32 %v219, 4294901760
        %v3810 = vsub.f32 %v219, %v3809
        %v3811 = vand.u32 %v3810, 4294901760
        %3812 = vmatmul.f32.gmra.mxu0 %v3811
        %v3813 = vpop.f32.mrf.mxu0
        %v3814 = vadd.f32 %v3775, %v3813
        %3815 = vdwg.mxu0
        %v3816 = vand.u32 %v469, 4294901760
        %v3817 = vsub.f32 %v469, %v3816
        %v3818 = vand.u32 %v3817, 4294901760
        %3819 = vmatpush.msra.mxu0 %v3818
        %v3820 = vand.u32 %v453, 4294901760
        %v3821 = vsub.f32 %v453, %v3820
        %v3822 = vand.u32 %v3821, 4294901760
        %3823 = vmatpush.msra.mxu0 %v3822
        %v3824 = vand.u32 %v437, 4294901760
        %v3825 = vsub.f32 %v437, %v3824
        %v3826 = vand.u32 %v3825, 4294901760
        %3827 = vmatpush.msra.mxu0 %v3826
        %v3828 = vand.u32 %v421, 4294901760
        %v3829 = vsub.f32 %v421, %v3828
        %v3830 = vand.u32 %v3829, 4294901760
        %3831 = vmatpush.msra.mxu0 %v3830
        %v3832 = vand.u32 %v405, 4294901760
        %v3833 = vsub.f32 %v405, %v3832
        %v3834 = vand.u32 %v3833, 4294901760
        %3835 = vmatpush.msra.mxu0 %v3834
        %v3836 = vand.u32 %v389, 4294901760
        %v3837 = vsub.f32 %v389, %v3836
        %v3838 = vand.u32 %v3837, 4294901760
        %3839 = vmatpush.msra.mxu0 %v3838
        %v3840 = vand.u32 %v373, 4294901760
        %v3841 = vsub.f32 %v373, %v3840
        %v3842 = vand.u32 %v3841, 4294901760
        %3843 = vmatpush.msra.mxu0 %v3842
        %v3844 = vand.u32 %v357, 4294901760
        %v3845 = vsub.f32 %v357, %v3844
        %v3846 = vand.u32 %v3845, 4294901760
        %3847 = vmatpush.msra.mxu0 %v3846
        %v3848 = vand.u32 %v341, 4294901760
        %v3849 = vsub.f32 %v341, %v3848
        %v3850 = vand.u32 %v3849, 4294901760
        %3851 = vmatpush.msra.mxu0 %v3850
        %v3852 = vand.u32 %v325, 4294901760
        %v3853 = vsub.f32 %v325, %v3852
        %v3854 = vand.u32 %v3853, 4294901760
        %3855 = vmatpush.msra.mxu0 %v3854
        %v3856 = vand.u32 %v309, 4294901760
        %v3857 = vsub.f32 %v309, %v3856
        %v3858 = vand.u32 %v3857, 4294901760
        %3859 = vmatpush.msra.mxu0 %v3858
        %v3860 = vand.u32 %v293, 4294901760
        %v3861 = vsub.f32 %v293, %v3860
        %v3862 = vand.u32 %v3861, 4294901760
        %3863 = vmatpush.msra.mxu0 %v3862
        %v3864 = vand.u32 %v277, 4294901760
        %v3865 = vsub.f32 %v277, %v3864
        %v3866 = vand.u32 %v3865, 4294901760
        %3867 = vmatpush.msra.mxu0 %v3866
        %v3868 = vand.u32 %v261, 4294901760
        %v3869 = vsub.f32 %v261, %v3868
        %v3870 = vand.u32 %v3869, 4294901760
        %3871 = vmatpush.msra.mxu0 %v3870
        %v3872 = vand.u32 %v245, 4294901760
        %v3873 = vsub.f32 %v245, %v3872
        %v3874 = vand.u32 %v3873, 4294901760
        %3875 = vmatpush.msra.mxu0 %v3874
        %v3876 = vand.u32 %v229, 4294901760
        %v3877 = vsub.f32 %v229, %v3876
        %v3878 = vand.u32 %v3877, 4294901760
        %3879 = vmatpush.msra.mxu0 %v3878
        %v3880 = vand.u32 %v219, 4294901760
        %3881 = vmatmul.f32.gmra.mxu0 %v3880
        %v3882 = vpop.f32.mrf.mxu0
        %v3883 = vadd.f32 %v3814, %v3882
        %3884 = vdwg.mxu0
        %v3885 = vand.u32 %v469, 4294901760
        %3886 = vmatpush.msra.mxu0 %v3885
        %v3887 = vand.u32 %v453, 4294901760
        %3888 = vmatpush.msra.mxu0 %v3887
        %v3889 = vand.u32 %v437, 4294901760
        %3890 = vmatpush.msra.mxu0 %v3889
        %v3891 = vand.u32 %v421, 4294901760
        %3892 = vmatpush.msra.mxu0 %v3891
        %v3893 = vand.u32 %v405, 4294901760
        %3894 = vmatpush.msra.mxu0 %v3893
        %v3895 = vand.u32 %v389, 4294901760
        %3896 = vmatpush.msra.mxu0 %v3895
        %v3897 = vand.u32 %v373, 4294901760
        %3898 = vmatpush.msra.mxu0 %v3897
        %v3899 = vand.u32 %v357, 4294901760
        %3900 = vmatpush.msra.mxu0 %v3899
        %v3901 = vand.u32 %v341, 4294901760
        %3902 = vmatpush.msra.mxu0 %v3901
        %v3903 = vand.u32 %v325, 4294901760
        %3904 = vmatpush.msra.mxu0 %v3903
        %v3905 = vand.u32 %v309, 4294901760
        %3906 = vmatpush.msra.mxu0 %v3905
        %v3907 = vand.u32 %v293, 4294901760
        %3908 = vmatpush.msra.mxu0 %v3907
        %v3909 = vand.u32 %v277, 4294901760
        %3910 = vmatpush.msra.mxu0 %v3909
        %v3911 = vand.u32 %v261, 4294901760
        %3912 = vmatpush.msra.mxu0 %v3911
        %v3913 = vand.u32 %v245, 4294901760
        %3914 = vmatpush.msra.mxu0 %v3913
        %v3915 = vand.u32 %v229, 4294901760
        %3916 = vmatpush.msra.mxu0 %v3915
        %v3917 = vand.u32 %v219, 4294901760
        %3918 = vmatmul.f32.gmra.mxu0 %v3917
        %v3919 = vpop.f32.mrf.mxu0
        %v3920 = vadd.f32 %v3883, %v3919
        %3921 = vdwg.mxu0
        %v3922 = vand.u32 %v470, 4294901760
        %3923 = vmatpush.msra.mxu0 %v3922
        %v3924 = vand.u32 %v454, 4294901760
        %3925 = vmatpush.msra.mxu0 %v3924
        %v3926 = vand.u32 %v438, 4294901760
        %3927 = vmatpush.msra.mxu0 %v3926
        %v3928 = vand.u32 %v422, 4294901760
        %3929 = vmatpush.msra.mxu0 %v3928
        %v3930 = vand.u32 %v406, 4294901760
        %3931 = vmatpush.msra.mxu0 %v3930
        %v3932 = vand.u32 %v390, 4294901760
        %3933 = vmatpush.msra.mxu0 %v3932
        %v3934 = vand.u32 %v374, 4294901760
        %3935 = vmatpush.msra.mxu0 %v3934
        %v3936 = vand.u32 %v358, 4294901760
        %3937 = vmatpush.msra.mxu0 %v3936
        %v3938 = vand.u32 %v342, 4294901760
        %3939 = vmatpush.msra.mxu0 %v3938
        %v3940 = vand.u32 %v326, 4294901760
        %3941 = vmatpush.msra.mxu0 %v3940
        %v3942 = vand.u32 %v310, 4294901760
        %3943 = vmatpush.msra.mxu0 %v3942
        %v3944 = vand.u32 %v294, 4294901760
        %3945 = vmatpush.msra.mxu0 %v3944
        %v3946 = vand.u32 %v278, 4294901760
        %3947 = vmatpush.msra.mxu0 %v3946
        %v3948 = vand.u32 %v262, 4294901760
        %3949 = vmatpush.msra.mxu0 %v3948
        %v3950 = vand.u32 %v246, 4294901760
        %3951 = vmatpush.msra.mxu0 %v3950
        %v3952 = vand.u32 %v230, 4294901760
        %3953 = vmatpush.msra.mxu0 %v3952
        %v3954 = vand.u32 %v219, 4294901760
        %v3955 = vsub.f32 %v219, %v3954
        %v3956 = vand.u32 %v3955, 4294901760
        %v3957 = vsub.f32 %v3955, %v3956
        %v3958 = vand.u32 %v3957, 4294901760
        %3959 = vmatmul.f32.gmra.mxu0 %v3958
        %v3960 = vpop.f32.mrf.mxu0
        %v3961 = vadd.f32 %v490, %v3960
        %3962 = vdwg.mxu0
        %v3963 = vand.u32 %v470, 4294901760
        %v3964 = vsub.f32 %v470, %v3963
        %v3965 = vand.u32 %v3964, 4294901760
        %v3966 = vsub.f32 %v3964, %v3965
        %v3967 = vand.u32 %v3966, 4294901760
        %3968 = vmatpush.msra.mxu0 %v3967
        %v3969 = vand.u32 %v454, 4294901760
        %v3970 = vsub.f32 %v454, %v3969
        %v3971 = vand.u32 %v3970, 4294901760
        %v3972 = vsub.f32 %v3970, %v3971
        %v3973 = vand.u32 %v3972, 4294901760
        %3974 = vmatpush.msra.mxu0 %v3973
        %v3975 = vand.u32 %v438, 4294901760
        %v3976 = vsub.f32 %v438, %v3975
        %v3977 = vand.u32 %v3976, 4294901760
        %v3978 = vsub.f32 %v3976, %v3977
        %v3979 = vand.u32 %v3978, 4294901760
        %3980 = vmatpush.msra.mxu0 %v3979
        %v3981 = vand.u32 %v422, 4294901760
        %v3982 = vsub.f32 %v422, %v3981
        %v3983 = vand.u32 %v3982, 4294901760
        %v3984 = vsub.f32 %v3982, %v3983
        %v3985 = vand.u32 %v3984, 4294901760
        %3986 = vmatpush.msra.mxu0 %v3985
        %v3987 = vand.u32 %v406, 4294901760
        %v3988 = vsub.f32 %v406, %v3987
        %v3989 = vand.u32 %v3988, 4294901760
        %v3990 = vsub.f32 %v3988, %v3989
        %v3991 = vand.u32 %v3990, 4294901760
        %3992 = vmatpush.msra.mxu0 %v3991
        %v3993 = vand.u32 %v390, 4294901760
        %v3994 = vsub.f32 %v390, %v3993
        %v3995 = vand.u32 %v3994, 4294901760
        %v3996 = vsub.f32 %v3994, %v3995
        %v3997 = vand.u32 %v3996, 4294901760
        %3998 = vmatpush.msra.mxu0 %v3997
        %v3999 = vand.u32 %v374, 4294901760
        %v4000 = vsub.f32 %v374, %v3999
        %v4001 = vand.u32 %v4000, 4294901760
        %v4002 = vsub.f32 %v4000, %v4001
        %v4003 = vand.u32 %v4002, 4294901760
        %4004 = vmatpush.msra.mxu0 %v4003
        %v4005 = vand.u32 %v358, 4294901760
        %v4006 = vsub.f32 %v358, %v4005
        %v4007 = vand.u32 %v4006, 4294901760
        %v4008 = vsub.f32 %v4006, %v4007
        %v4009 = vand.u32 %v4008, 4294901760
        %4010 = vmatpush.msra.mxu0 %v4009
        %v4011 = vand.u32 %v342, 4294901760
        %v4012 = vsub.f32 %v342, %v4011
        %v4013 = vand.u32 %v4012, 4294901760
        %v4014 = vsub.f32 %v4012, %v4013
        %v4015 = vand.u32 %v4014, 4294901760
        %4016 = vmatpush.msra.mxu0 %v4015
        %v4017 = vand.u32 %v326, 4294901760
        %v4018 = vsub.f32 %v326, %v4017
        %v4019 = vand.u32 %v4018, 4294901760
        %v4020 = vsub.f32 %v4018, %v4019
        %v4021 = vand.u32 %v4020, 4294901760
        %4022 = vmatpush.msra.mxu0 %v4021
        %v4023 = vand.u32 %v310, 4294901760
        %v4024 = vsub.f32 %v310, %v4023
        %v4025 = vand.u32 %v4024, 4294901760
        %v4026 = vsub.f32 %v4024, %v4025
        %v4027 = vand.u32 %v4026, 4294901760
        %4028 = vmatpush.msra.mxu0 %v4027
        %v4029 = vand.u32 %v294, 4294901760
        %v4030 = vsub.f32 %v294, %v4029
        %v4031 = vand.u32 %v4030, 4294901760
        %v4032 = vsub.f32 %v4030, %v4031
        %v4033 = vand.u32 %v4032, 4294901760
        %4034 = vmatpush.msra.mxu0 %v4033
        %v4035 = vand.u32 %v278, 4294901760
        %v4036 = vsub.f32 %v278, %v4035
        %v4037 = vand.u32 %v4036, 4294901760
        %v4038 = vsub.f32 %v4036, %v4037
        %v4039 = vand.u32 %v4038, 4294901760
        %4040 = vmatpush.msra.mxu0 %v4039
        %v4041 = vand.u32 %v262, 4294901760
        %v4042 = vsub.f32 %v262, %v4041
        %v4043 = vand.u32 %v4042, 4294901760
        %v4044 = vsub.f32 %v4042, %v4043
        %v4045 = vand.u32 %v4044, 4294901760
        %4046 = vmatpush.msra.mxu0 %v4045
        %v4047 = vand.u32 %v246, 4294901760
        %v4048 = vsub.f32 %v246, %v4047
        %v4049 = vand.u32 %v4048, 4294901760
        %v4050 = vsub.f32 %v4048, %v4049
        %v4051 = vand.u32 %v4050, 4294901760
        %4052 = vmatpush.msra.mxu0 %v4051
        %v4053 = vand.u32 %v230, 4294901760
        %v4054 = vsub.f32 %v230, %v4053
        %v4055 = vand.u32 %v4054, 4294901760
        %v4056 = vsub.f32 %v4054, %v4055
        %v4057 = vand.u32 %v4056, 4294901760
        %4058 = vmatpush.msra.mxu0 %v4057
        %v4059 = vand.u32 %v219, 4294901760
        %4060 = vmatmul.f32.gmra.mxu0 %v4059
        %v4061 = vpop.f32.mrf.mxu0
        %v4062 = vadd.f32 %v3961, %v4061
        %4063 = vdwg.mxu0
        %v4064 = vand.u32 %v470, 4294901760
        %v4065 = vsub.f32 %v470, %v4064
        %4066 = vmatpush.msra.mxu0 %v4065
        %v4067 = vand.u32 %v454, 4294901760
        %v4068 = vsub.f32 %v454, %v4067
        %4069 = vmatpush.msra.mxu0 %v4068
        %v4070 = vand.u32 %v438, 4294901760
        %v4071 = vsub.f32 %v438, %v4070
        %4072 = vmatpush.msra.mxu0 %v4071
        %v4073 = vand.u32 %v422, 4294901760
        %v4074 = vsub.f32 %v422, %v4073
        %4075 = vmatpush.msra.mxu0 %v4074
        %v4076 = vand.u32 %v406, 4294901760
        %v4077 = vsub.f32 %v406, %v4076
        %4078 = vmatpush.msra.mxu0 %v4077
        %v4079 = vand.u32 %v390, 4294901760
        %v4080 = vsub.f32 %v390, %v4079
        %4081 = vmatpush.msra.mxu0 %v4080
        %v4082 = vand.u32 %v374, 4294901760
        %v4083 = vsub.f32 %v374, %v4082
        %4084 = vmatpush.msra.mxu0 %v4083
        %v4085 = vand.u32 %v358, 4294901760
        %v4086 = vsub.f32 %v358, %v4085
        %4087 = vmatpush.msra.mxu0 %v4086
        %v4088 = vand.u32 %v342, 4294901760
        %v4089 = vsub.f32 %v342, %v4088
        %4090 = vmatpush.msra.mxu0 %v4089
        %v4091 = vand.u32 %v326, 4294901760
        %v4092 = vsub.f32 %v326, %v4091
        %4093 = vmatpush.msra.mxu0 %v4092
        %v4094 = vand.u32 %v310, 4294901760
        %v4095 = vsub.f32 %v310, %v4094
        %4096 = vmatpush.msra.mxu0 %v4095
        %v4097 = vand.u32 %v294, 4294901760
        %v4098 = vsub.f32 %v294, %v4097
        %4099 = vmatpush.msra.mxu0 %v4098
        %v4100 = vand.u32 %v278, 4294901760
        %v4101 = vsub.f32 %v278, %v4100
        %4102 = vmatpush.msra.mxu0 %v4101
        %v4103 = vand.u32 %v262, 4294901760
        %v4104 = vsub.f32 %v262, %v4103
        %4105 = vmatpush.msra.mxu0 %v4104
        %v4106 = vand.u32 %v246, 4294901760
        %v4107 = vsub.f32 %v246, %v4106
        %4108 = vmatpush.msra.mxu0 %v4107
        %v4109 = vand.u32 %v230, 4294901760
        %v4110 = vsub.f32 %v230, %v4109
        %4111 = vmatpush.msra.mxu0 %v4110
        %v4112 = vand.u32 %v219, 4294901760
        %v4113 = vsub.f32 %v219, %v4112
        %4114 = vmatmul.f32.gmra.mxu0 %v4113
        %v4115 = vpop.f32.mrf.mxu0
        %v4116 = vadd.f32 %v4062, %v4115
        %4117 = vdwg.mxu0
        %v4118 = vand.u32 %v470, 4294901760
        %4119 = vmatpush.msra.mxu0 %v4118
        %v4120 = vand.u32 %v454, 4294901760
        %4121 = vmatpush.msra.mxu0 %v4120
        %v4122 = vand.u32 %v438, 4294901760
        %4123 = vmatpush.msra.mxu0 %v4122
        %v4124 = vand.u32 %v422, 4294901760
        %4125 = vmatpush.msra.mxu0 %v4124
        %v4126 = vand.u32 %v406, 4294901760
        %4127 = vmatpush.msra.mxu0 %v4126
        %v4128 = vand.u32 %v390, 4294901760
        %4129 = vmatpush.msra.mxu0 %v4128
        %v4130 = vand.u32 %v374, 4294901760
        %4131 = vmatpush.msra.mxu0 %v4130
        %v4132 = vand.u32 %v358, 4294901760
        %4133 = vmatpush.msra.mxu0 %v4132
        %v4134 = vand.u32 %v342, 4294901760
        %4135 = vmatpush.msra.mxu0 %v4134
        %v4136 = vand.u32 %v326, 4294901760
        %4137 = vmatpush.msra.mxu0 %v4136
        %v4138 = vand.u32 %v310, 4294901760
        %4139 = vmatpush.msra.mxu0 %v4138
        %v4140 = vand.u32 %v294, 4294901760
        %4141 = vmatpush.msra.mxu0 %v4140
        %v4142 = vand.u32 %v278, 4294901760
        %4143 = vmatpush.msra.mxu0 %v4142
        %v4144 = vand.u32 %v262, 4294901760
        %4145 = vmatpush.msra.mxu0 %v4144
        %v4146 = vand.u32 %v246, 4294901760
        %4147 = vmatpush.msra.mxu0 %v4146
        %v4148 = vand.u32 %v230, 4294901760
        %4149 = vmatpush.msra.mxu0 %v4148
        %v4150 = vand.u32 %v219, 4294901760
        %v4151 = vsub.f32 %v219, %v4150
        %v4152 = vand.u32 %v4151, 4294901760
        %4153 = vmatmul.f32.gmra.mxu0 %v4152
        %v4154 = vpop.f32.mrf.mxu0
        %v4155 = vadd.f32 %v4116, %v4154
        %4156 = vdwg.mxu0
        %v4157 = vand.u32 %v470, 4294901760
        %v4158 = vsub.f32 %v470, %v4157
        %v4159 = vand.u32 %v4158, 4294901760
        %4160 = vmatpush.msra.mxu0 %v4159
        %v4161 = vand.u32 %v454, 4294901760
        %v4162 = vsub.f32 %v454, %v4161
        %v4163 = vand.u32 %v4162, 4294901760
        %4164 = vmatpush.msra.mxu0 %v4163
        %v4165 = vand.u32 %v438, 4294901760
        %v4166 = vsub.f32 %v438, %v4165
        %v4167 = vand.u32 %v4166, 4294901760
        %4168 = vmatpush.msra.mxu0 %v4167
        %v4169 = vand.u32 %v422, 4294901760
        %v4170 = vsub.f32 %v422, %v4169
        %v4171 = vand.u32 %v4170, 4294901760
        %4172 = vmatpush.msra.mxu0 %v4171
        %v4173 = vand.u32 %v406, 4294901760
        %v4174 = vsub.f32 %v406, %v4173
        %v4175 = vand.u32 %v4174, 4294901760
        %4176 = vmatpush.msra.mxu0 %v4175
        %v4177 = vand.u32 %v390, 4294901760
        %v4178 = vsub.f32 %v390, %v4177
        %v4179 = vand.u32 %v4178, 4294901760
        %4180 = vmatpush.msra.mxu0 %v4179
        %v4181 = vand.u32 %v374, 4294901760
        %v4182 = vsub.f32 %v374, %v4181
        %v4183 = vand.u32 %v4182, 4294901760
        %4184 = vmatpush.msra.mxu0 %v4183
        %v4185 = vand.u32 %v358, 4294901760
        %v4186 = vsub.f32 %v358, %v4185
        %v4187 = vand.u32 %v4186, 4294901760
        %4188 = vmatpush.msra.mxu0 %v4187
        %v4189 = vand.u32 %v342, 4294901760
        %v4190 = vsub.f32 %v342, %v4189
        %v4191 = vand.u32 %v4190, 4294901760
        %4192 = vmatpush.msra.mxu0 %v4191
        %v4193 = vand.u32 %v326, 4294901760
        %v4194 = vsub.f32 %v326, %v4193
        %v4195 = vand.u32 %v4194, 4294901760
        %4196 = vmatpush.msra.mxu0 %v4195
        %v4197 = vand.u32 %v310, 4294901760
        %v4198 = vsub.f32 %v310, %v4197
        %v4199 = vand.u32 %v4198, 4294901760
        %4200 = vmatpush.msra.mxu0 %v4199
        %v4201 = vand.u32 %v294, 4294901760
        %v4202 = vsub.f32 %v294, %v4201
        %v4203 = vand.u32 %v4202, 4294901760
        %4204 = vmatpush.msra.mxu0 %v4203
        %v4205 = vand.u32 %v278, 4294901760
        %v4206 = vsub.f32 %v278, %v4205
        %v4207 = vand.u32 %v4206, 4294901760
        %4208 = vmatpush.msra.mxu0 %v4207
        %v4209 = vand.u32 %v262, 4294901760
        %v4210 = vsub.f32 %v262, %v4209
        %v4211 = vand.u32 %v4210, 4294901760
        %4212 = vmatpush.msra.mxu0 %v4211
        %v4213 = vand.u32 %v246, 4294901760
        %v4214 = vsub.f32 %v246, %v4213
        %v4215 = vand.u32 %v4214, 4294901760
        %4216 = vmatpush.msra.mxu0 %v4215
        %v4217 = vand.u32 %v230, 4294901760
        %v4218 = vsub.f32 %v230, %v4217
        %v4219 = vand.u32 %v4218, 4294901760
        %4220 = vmatpush.msra.mxu0 %v4219
        %v4221 = vand.u32 %v219, 4294901760
        %4222 = vmatmul.f32.gmra.mxu0 %v4221
        %v4223 = vpop.f32.mrf.mxu0
        %v4224 = vadd.f32 %v4155, %v4223
        %4225 = vdwg.mxu0
        %v4226 = vand.u32 %v470, 4294901760
        %4227 = vmatpush.msra.mxu0 %v4226
        %v4228 = vand.u32 %v454, 4294901760
        %4229 = vmatpush.msra.mxu0 %v4228
        %v4230 = vand.u32 %v438, 4294901760
        %4231 = vmatpush.msra.mxu0 %v4230
        %v4232 = vand.u32 %v422, 4294901760
        %4233 = vmatpush.msra.mxu0 %v4232
        %v4234 = vand.u32 %v406, 4294901760
        %4235 = vmatpush.msra.mxu0 %v4234
        %v4236 = vand.u32 %v390, 4294901760
        %4237 = vmatpush.msra.mxu0 %v4236
        %v4238 = vand.u32 %v374, 4294901760
        %4239 = vmatpush.msra.mxu0 %v4238
        %v4240 = vand.u32 %v358, 4294901760
        %4241 = vmatpush.msra.mxu0 %v4240
        %v4242 = vand.u32 %v342, 4294901760
        %4243 = vmatpush.msra.mxu0 %v4242
        %v4244 = vand.u32 %v326, 4294901760
        %4245 = vmatpush.msra.mxu0 %v4244
        %v4246 = vand.u32 %v310, 4294901760
        %4247 = vmatpush.msra.mxu0 %v4246
        %v4248 = vand.u32 %v294, 4294901760
        %4249 = vmatpush.msra.mxu0 %v4248
        %v4250 = vand.u32 %v278, 4294901760
        %4251 = vmatpush.msra.mxu0 %v4250
        %v4252 = vand.u32 %v262, 4294901760
        %4253 = vmatpush.msra.mxu0 %v4252
        %v4254 = vand.u32 %v246, 4294901760
        %4255 = vmatpush.msra.mxu0 %v4254
        %v4256 = vand.u32 %v230, 4294901760
        %4257 = vmatpush.msra.mxu0 %v4256
        %v4258 = vand.u32 %v219, 4294901760
        %4259 = vmatmul.f32.gmra.mxu0 %v4258
        %v4260 = vpop.f32.mrf.mxu0
        %v4261 = vadd.f32 %v4224, %v4260
        %4262 = vdwg.mxu0
        %v4263 = vand.u32 %v471, 4294901760
        %4264 = vmatpush.msra.mxu0 %v4263
        %v4265 = vand.u32 %v455, 4294901760
        %4266 = vmatpush.msra.mxu0 %v4265
        %v4267 = vand.u32 %v439, 4294901760
        %4268 = vmatpush.msra.mxu0 %v4267
        %v4269 = vand.u32 %v423, 4294901760
        %4270 = vmatpush.msra.mxu0 %v4269
        %v4271 = vand.u32 %v407, 4294901760
        %4272 = vmatpush.msra.mxu0 %v4271
        %v4273 = vand.u32 %v391, 4294901760
        %4274 = vmatpush.msra.mxu0 %v4273
        %v4275 = vand.u32 %v375, 4294901760
        %4276 = vmatpush.msra.mxu0 %v4275
        %v4277 = vand.u32 %v359, 4294901760
        %4278 = vmatpush.msra.mxu0 %v4277
        %v4279 = vand.u32 %v343, 4294901760
        %4280 = vmatpush.msra.mxu0 %v4279
        %v4281 = vand.u32 %v327, 4294901760
        %4282 = vmatpush.msra.mxu0 %v4281
        %v4283 = vand.u32 %v311, 4294901760
        %4284 = vmatpush.msra.mxu0 %v4283
        %v4285 = vand.u32 %v295, 4294901760
        %4286 = vmatpush.msra.mxu0 %v4285
        %v4287 = vand.u32 %v279, 4294901760
        %4288 = vmatpush.msra.mxu0 %v4287
        %v4289 = vand.u32 %v263, 4294901760
        %4290 = vmatpush.msra.mxu0 %v4289
        %v4291 = vand.u32 %v247, 4294901760
        %4292 = vmatpush.msra.mxu0 %v4291
        %v4293 = vand.u32 %v231, 4294901760
        %4294 = vmatpush.msra.mxu0 %v4293
        %v4295 = vand.u32 %v219, 4294901760
        %v4296 = vsub.f32 %v219, %v4295
        %v4297 = vand.u32 %v4296, 4294901760
        %v4298 = vsub.f32 %v4296, %v4297
        %v4299 = vand.u32 %v4298, 4294901760
        %4300 = vmatmul.f32.gmra.mxu0 %v4299
        %v4301 = vpop.f32.mrf.mxu0
        %v4302 = vadd.f32 %v491, %v4301
        %4303 = vdwg.mxu0
        %v4304 = vand.u32 %v471, 4294901760
        %v4305 = vsub.f32 %v471, %v4304
        %v4306 = vand.u32 %v4305, 4294901760
        %v4307 = vsub.f32 %v4305, %v4306
        %v4308 = vand.u32 %v4307, 4294901760
        %4309 = vmatpush.msra.mxu0 %v4308
        %v4310 = vand.u32 %v455, 4294901760
        %v4311 = vsub.f32 %v455, %v4310
        %v4312 = vand.u32 %v4311, 4294901760
        %v4313 = vsub.f32 %v4311, %v4312
        %v4314 = vand.u32 %v4313, 4294901760
        %4315 = vmatpush.msra.mxu0 %v4314
        %v4316 = vand.u32 %v439, 4294901760
        %v4317 = vsub.f32 %v439, %v4316
        %v4318 = vand.u32 %v4317, 4294901760
        %v4319 = vsub.f32 %v4317, %v4318
        %v4320 = vand.u32 %v4319, 4294901760
        %4321 = vmatpush.msra.mxu0 %v4320
        %v4322 = vand.u32 %v423, 4294901760
        %v4323 = vsub.f32 %v423, %v4322
        %v4324 = vand.u32 %v4323, 4294901760
        %v4325 = vsub.f32 %v4323, %v4324
        %v4326 = vand.u32 %v4325, 4294901760
        %4327 = vmatpush.msra.mxu0 %v4326
        %v4328 = vand.u32 %v407, 4294901760
        %v4329 = vsub.f32 %v407, %v4328
        %v4330 = vand.u32 %v4329, 4294901760
        %v4331 = vsub.f32 %v4329, %v4330
        %v4332 = vand.u32 %v4331, 4294901760
        %4333 = vmatpush.msra.mxu0 %v4332
        %v4334 = vand.u32 %v391, 4294901760
        %v4335 = vsub.f32 %v391, %v4334
        %v4336 = vand.u32 %v4335, 4294901760
        %v4337 = vsub.f32 %v4335, %v4336
        %v4338 = vand.u32 %v4337, 4294901760
        %4339 = vmatpush.msra.mxu0 %v4338
        %v4340 = vand.u32 %v375, 4294901760
        %v4341 = vsub.f32 %v375, %v4340
        %v4342 = vand.u32 %v4341, 4294901760
        %v4343 = vsub.f32 %v4341, %v4342
        %v4344 = vand.u32 %v4343, 4294901760
        %4345 = vmatpush.msra.mxu0 %v4344
        %v4346 = vand.u32 %v359, 4294901760
        %v4347 = vsub.f32 %v359, %v4346
        %v4348 = vand.u32 %v4347, 4294901760
        %v4349 = vsub.f32 %v4347, %v4348
        %v4350 = vand.u32 %v4349, 4294901760
        %4351 = vmatpush.msra.mxu0 %v4350
        %v4352 = vand.u32 %v343, 4294901760
        %v4353 = vsub.f32 %v343, %v4352
        %v4354 = vand.u32 %v4353, 4294901760
        %v4355 = vsub.f32 %v4353, %v4354
        %v4356 = vand.u32 %v4355, 4294901760
        %4357 = vmatpush.msra.mxu0 %v4356
        %v4358 = vand.u32 %v327, 4294901760
        %v4359 = vsub.f32 %v327, %v4358
        %v4360 = vand.u32 %v4359, 4294901760
        %v4361 = vsub.f32 %v4359, %v4360
        %v4362 = vand.u32 %v4361, 4294901760
        %4363 = vmatpush.msra.mxu0 %v4362
        %v4364 = vand.u32 %v311, 4294901760
        %v4365 = vsub.f32 %v311, %v4364
        %v4366 = vand.u32 %v4365, 4294901760
        %v4367 = vsub.f32 %v4365, %v4366
        %v4368 = vand.u32 %v4367, 4294901760
        %4369 = vmatpush.msra.mxu0 %v4368
        %v4370 = vand.u32 %v295, 4294901760
        %v4371 = vsub.f32 %v295, %v4370
        %v4372 = vand.u32 %v4371, 4294901760
        %v4373 = vsub.f32 %v4371, %v4372
        %v4374 = vand.u32 %v4373, 4294901760
        %4375 = vmatpush.msra.mxu0 %v4374
        %v4376 = vand.u32 %v279, 4294901760
        %v4377 = vsub.f32 %v279, %v4376
        %v4378 = vand.u32 %v4377, 4294901760
        %v4379 = vsub.f32 %v4377, %v4378
        %v4380 = vand.u32 %v4379, 4294901760
        %4381 = vmatpush.msra.mxu0 %v4380
        %v4382 = vand.u32 %v263, 4294901760
        %v4383 = vsub.f32 %v263, %v4382
        %v4384 = vand.u32 %v4383, 4294901760
        %v4385 = vsub.f32 %v4383, %v4384
        %v4386 = vand.u32 %v4385, 4294901760
        %4387 = vmatpush.msra.mxu0 %v4386
        %v4388 = vand.u32 %v247, 4294901760
        %v4389 = vsub.f32 %v247, %v4388
        %v4390 = vand.u32 %v4389, 4294901760
        %v4391 = vsub.f32 %v4389, %v4390
        %v4392 = vand.u32 %v4391, 4294901760
        %4393 = vmatpush.msra.mxu0 %v4392
        %v4394 = vand.u32 %v231, 4294901760
        %v4395 = vsub.f32 %v231, %v4394
        %v4396 = vand.u32 %v4395, 4294901760
        %v4397 = vsub.f32 %v4395, %v4396
        %v4398 = vand.u32 %v4397, 4294901760
        %4399 = vmatpush.msra.mxu0 %v4398
        %v4400 = vand.u32 %v219, 4294901760
        %4401 = vmatmul.f32.gmra.mxu0 %v4400
        %v4402 = vpop.f32.mrf.mxu0
        %v4403 = vadd.f32 %v4302, %v4402
        %4404 = vdwg.mxu0
        %v4405 = vand.u32 %v471, 4294901760
        %v4406 = vsub.f32 %v471, %v4405
        %4407 = vmatpush.msra.mxu0 %v4406
        %v4408 = vand.u32 %v455, 4294901760
        %v4409 = vsub.f32 %v455, %v4408
        %4410 = vmatpush.msra.mxu0 %v4409
        %v4411 = vand.u32 %v439, 4294901760
        %v4412 = vsub.f32 %v439, %v4411
        %4413 = vmatpush.msra.mxu0 %v4412
        %v4414 = vand.u32 %v423, 4294901760
        %v4415 = vsub.f32 %v423, %v4414
        %4416 = vmatpush.msra.mxu0 %v4415
        %v4417 = vand.u32 %v407, 4294901760
        %v4418 = vsub.f32 %v407, %v4417
        %4419 = vmatpush.msra.mxu0 %v4418
        %v4420 = vand.u32 %v391, 4294901760
        %v4421 = vsub.f32 %v391, %v4420
        %4422 = vmatpush.msra.mxu0 %v4421
        %v4423 = vand.u32 %v375, 4294901760
        %v4424 = vsub.f32 %v375, %v4423
        %4425 = vmatpush.msra.mxu0 %v4424
        %v4426 = vand.u32 %v359, 4294901760
        %v4427 = vsub.f32 %v359, %v4426
        %4428 = vmatpush.msra.mxu0 %v4427
        %v4429 = vand.u32 %v343, 4294901760
        %v4430 = vsub.f32 %v343, %v4429
        %4431 = vmatpush.msra.mxu0 %v4430
        %v4432 = vand.u32 %v327, 4294901760
        %v4433 = vsub.f32 %v327, %v4432
        %4434 = vmatpush.msra.mxu0 %v4433
        %v4435 = vand.u32 %v311, 4294901760
        %v4436 = vsub.f32 %v311, %v4435
        %4437 = vmatpush.msra.mxu0 %v4436
        %v4438 = vand.u32 %v295, 4294901760
        %v4439 = vsub.f32 %v295, %v4438
        %4440 = vmatpush.msra.mxu0 %v4439
        %v4441 = vand.u32 %v279, 4294901760
        %v4442 = vsub.f32 %v279, %v4441
        %4443 = vmatpush.msra.mxu0 %v4442
        %v4444 = vand.u32 %v263, 4294901760
        %v4445 = vsub.f32 %v263, %v4444
        %4446 = vmatpush.msra.mxu0 %v4445
        %v4447 = vand.u32 %v247, 4294901760
        %v4448 = vsub.f32 %v247, %v4447
        %4449 = vmatpush.msra.mxu0 %v4448
        %v4450 = vand.u32 %v231, 4294901760
        %v4451 = vsub.f32 %v231, %v4450
        %4452 = vmatpush.msra.mxu0 %v4451
        %v4453 = vand.u32 %v219, 4294901760
        %v4454 = vsub.f32 %v219, %v4453
        %4455 = vmatmul.f32.gmra.mxu0 %v4454
        %v4456 = vpop.f32.mrf.mxu0
        %v4457 = vadd.f32 %v4403, %v4456
        %4458 = vdwg.mxu0
        %v4459 = vand.u32 %v471, 4294901760
        %4460 = vmatpush.msra.mxu0 %v4459
        %v4461 = vand.u32 %v455, 4294901760
        %4462 = vmatpush.msra.mxu0 %v4461
        %v4463 = vand.u32 %v439, 4294901760
        %4464 = vmatpush.msra.mxu0 %v4463
        %v4465 = vand.u32 %v423, 4294901760
        %4466 = vmatpush.msra.mxu0 %v4465
        %v4467 = vand.u32 %v407, 4294901760
        %4468 = vmatpush.msra.mxu0 %v4467
        %v4469 = vand.u32 %v391, 4294901760
        %4470 = vmatpush.msra.mxu0 %v4469
        %v4471 = vand.u32 %v375, 4294901760
        %4472 = vmatpush.msra.mxu0 %v4471
        %v4473 = vand.u32 %v359, 4294901760
        %4474 = vmatpush.msra.mxu0 %v4473
        %v4475 = vand.u32 %v343, 4294901760
        %4476 = vmatpush.msra.mxu0 %v4475
        %v4477 = vand.u32 %v327, 4294901760
        %4478 = vmatpush.msra.mxu0 %v4477
        %v4479 = vand.u32 %v311, 4294901760
        %4480 = vmatpush.msra.mxu0 %v4479
        %v4481 = vand.u32 %v295, 4294901760
        %4482 = vmatpush.msra.mxu0 %v4481
        %v4483 = vand.u32 %v279, 4294901760
        %4484 = vmatpush.msra.mxu0 %v4483
        %v4485 = vand.u32 %v263, 4294901760
        %4486 = vmatpush.msra.mxu0 %v4485
        %v4487 = vand.u32 %v247, 4294901760
        %4488 = vmatpush.msra.mxu0 %v4487
        %v4489 = vand.u32 %v231, 4294901760
        %4490 = vmatpush.msra.mxu0 %v4489
        %v4491 = vand.u32 %v219, 4294901760
        %v4492 = vsub.f32 %v219, %v4491
        %v4493 = vand.u32 %v4492, 4294901760
        %4494 = vmatmul.f32.gmra.mxu0 %v4493
        %v4495 = vpop.f32.mrf.mxu0
        %v4496 = vadd.f32 %v4457, %v4495
        %4497 = vdwg.mxu0
        %v4498 = vand.u32 %v471, 4294901760
        %v4499 = vsub.f32 %v471, %v4498
        %v4500 = vand.u32 %v4499, 4294901760
        %4501 = vmatpush.msra.mxu0 %v4500
        %v4502 = vand.u32 %v455, 4294901760
        %v4503 = vsub.f32 %v455, %v4502
        %v4504 = vand.u32 %v4503, 4294901760
        %4505 = vmatpush.msra.mxu0 %v4504
        %v4506 = vand.u32 %v439, 4294901760
        %v4507 = vsub.f32 %v439, %v4506
        %v4508 = vand.u32 %v4507, 4294901760
        %4509 = vmatpush.msra.mxu0 %v4508
        %v4510 = vand.u32 %v423, 4294901760
        %v4511 = vsub.f32 %v423, %v4510
        %v4512 = vand.u32 %v4511, 4294901760
        %4513 = vmatpush.msra.mxu0 %v4512
        %v4514 = vand.u32 %v407, 4294901760
        %v4515 = vsub.f32 %v407, %v4514
        %v4516 = vand.u32 %v4515, 4294901760
        %4517 = vmatpush.msra.mxu0 %v4516
        %v4518 = vand.u32 %v391, 4294901760
        %v4519 = vsub.f32 %v391, %v4518
        %v4520 = vand.u32 %v4519, 4294901760
        %4521 = vmatpush.msra.mxu0 %v4520
        %v4522 = vand.u32 %v375, 4294901760
        %v4523 = vsub.f32 %v375, %v4522
        %v4524 = vand.u32 %v4523, 4294901760
        %4525 = vmatpush.msra.mxu0 %v4524
        %v4526 = vand.u32 %v359, 4294901760
        %v4527 = vsub.f32 %v359, %v4526
        %v4528 = vand.u32 %v4527, 4294901760
        %4529 = vmatpush.msra.mxu0 %v4528
        %v4530 = vand.u32 %v343, 4294901760
        %v4531 = vsub.f32 %v343, %v4530
        %v4532 = vand.u32 %v4531, 4294901760
        %4533 = vmatpush.msra.mxu0 %v4532
        %v4534 = vand.u32 %v327, 4294901760
        %v4535 = vsub.f32 %v327, %v4534
        %v4536 = vand.u32 %v4535, 4294901760
        %4537 = vmatpush.msra.mxu0 %v4536
        %v4538 = vand.u32 %v311, 4294901760
        %v4539 = vsub.f32 %v311, %v4538
        %v4540 = vand.u32 %v4539, 4294901760
        %4541 = vmatpush.msra.mxu0 %v4540
        %v4542 = vand.u32 %v295, 4294901760
        %v4543 = vsub.f32 %v295, %v4542
        %v4544 = vand.u32 %v4543, 4294901760
        %4545 = vmatpush.msra.mxu0 %v4544
        %v4546 = vand.u32 %v279, 4294901760
        %v4547 = vsub.f32 %v279, %v4546
        %v4548 = vand.u32 %v4547, 4294901760
        %4549 = vmatpush.msra.mxu0 %v4548
        %v4550 = vand.u32 %v263, 4294901760
        %v4551 = vsub.f32 %v263, %v4550
        %v4552 = vand.u32 %v4551, 4294901760
        %4553 = vmatpush.msra.mxu0 %v4552
        %v4554 = vand.u32 %v247, 4294901760
        %v4555 = vsub.f32 %v247, %v4554
        %v4556 = vand.u32 %v4555, 4294901760
        %4557 = vmatpush.msra.mxu0 %v4556
        %v4558 = vand.u32 %v231, 4294901760
        %v4559 = vsub.f32 %v231, %v4558
        %v4560 = vand.u32 %v4559, 4294901760
        %4561 = vmatpush.msra.mxu0 %v4560
        %v4562 = vand.u32 %v219, 4294901760
        %4563 = vmatmul.f32.gmra.mxu0 %v4562
        %v4564 = vpop.f32.mrf.mxu0
        %v4565 = vadd.f32 %v4496, %v4564
        %4566 = vdwg.mxu0
        %v4567 = vand.u32 %v471, 4294901760
        %4568 = vmatpush.msra.mxu0 %v4567
        %v4569 = vand.u32 %v455, 4294901760
        %4570 = vmatpush.msra.mxu0 %v4569
        %v4571 = vand.u32 %v439, 4294901760
        %4572 = vmatpush.msra.mxu0 %v4571
        %v4573 = vand.u32 %v423, 4294901760
        %4574 = vmatpush.msra.mxu0 %v4573
        %v4575 = vand.u32 %v407, 4294901760
        %4576 = vmatpush.msra.mxu0 %v4575
        %v4577 = vand.u32 %v391, 4294901760
        %4578 = vmatpush.msra.mxu0 %v4577
        %v4579 = vand.u32 %v375, 4294901760
        %4580 = vmatpush.msra.mxu0 %v4579
        %v4581 = vand.u32 %v359, 4294901760
        %4582 = vmatpush.msra.mxu0 %v4581
        %v4583 = vand.u32 %v343, 4294901760
        %4584 = vmatpush.msra.mxu0 %v4583
        %v4585 = vand.u32 %v327, 4294901760
        %4586 = vmatpush.msra.mxu0 %v4585
        %v4587 = vand.u32 %v311, 4294901760
        %4588 = vmatpush.msra.mxu0 %v4587
        %v4589 = vand.u32 %v295, 4294901760
        %4590 = vmatpush.msra.mxu0 %v4589
        %v4591 = vand.u32 %v279, 4294901760
        %4592 = vmatpush.msra.mxu0 %v4591
        %v4593 = vand.u32 %v263, 4294901760
        %4594 = vmatpush.msra.mxu0 %v4593
        %v4595 = vand.u32 %v247, 4294901760
        %4596 = vmatpush.msra.mxu0 %v4595
        %v4597 = vand.u32 %v231, 4294901760
        %4598 = vmatpush.msra.mxu0 %v4597
        %v4599 = vand.u32 %v219, 4294901760
        %4600 = vmatmul.f32.gmra.mxu0 %v4599
        %v4601 = vpop.f32.mrf.mxu0
        %v4602 = vadd.f32 %v4565, %v4601
        %4603 = vdwg.mxu0
        %v4604 = vand.u32 %v472, 4294901760
        %4605 = vmatpush.msra.mxu0 %v4604
        %v4606 = vand.u32 %v456, 4294901760
        %4607 = vmatpush.msra.mxu0 %v4606
        %v4608 = vand.u32 %v440, 4294901760
        %4609 = vmatpush.msra.mxu0 %v4608
        %v4610 = vand.u32 %v424, 4294901760
        %4611 = vmatpush.msra.mxu0 %v4610
        %v4612 = vand.u32 %v408, 4294901760
        %4613 = vmatpush.msra.mxu0 %v4612
        %v4614 = vand.u32 %v392, 4294901760
        %4615 = vmatpush.msra.mxu0 %v4614
        %v4616 = vand.u32 %v376, 4294901760
        %4617 = vmatpush.msra.mxu0 %v4616
        %v4618 = vand.u32 %v360, 4294901760
        %4619 = vmatpush.msra.mxu0 %v4618
        %v4620 = vand.u32 %v344, 4294901760
        %4621 = vmatpush.msra.mxu0 %v4620
        %v4622 = vand.u32 %v328, 4294901760
        %4623 = vmatpush.msra.mxu0 %v4622
        %v4624 = vand.u32 %v312, 4294901760
        %4625 = vmatpush.msra.mxu0 %v4624
        %v4626 = vand.u32 %v296, 4294901760
        %4627 = vmatpush.msra.mxu0 %v4626
        %v4628 = vand.u32 %v280, 4294901760
        %4629 = vmatpush.msra.mxu0 %v4628
        %v4630 = vand.u32 %v264, 4294901760
        %4631 = vmatpush.msra.mxu0 %v4630
        %v4632 = vand.u32 %v248, 4294901760
        %4633 = vmatpush.msra.mxu0 %v4632
        %v4634 = vand.u32 %v232, 4294901760
        %4635 = vmatpush.msra.mxu0 %v4634
        %v4636 = vand.u32 %v219, 4294901760
        %v4637 = vsub.f32 %v219, %v4636
        %v4638 = vand.u32 %v4637, 4294901760
        %v4639 = vsub.f32 %v4637, %v4638
        %v4640 = vand.u32 %v4639, 4294901760
        %4641 = vmatmul.f32.gmra.mxu0 %v4640
        %v4642 = vpop.f32.mrf.mxu0
        %v4643 = vadd.f32 %v492, %v4642
        %4644 = vdwg.mxu0
        %v4645 = vand.u32 %v472, 4294901760
        %v4646 = vsub.f32 %v472, %v4645
        %v4647 = vand.u32 %v4646, 4294901760
        %v4648 = vsub.f32 %v4646, %v4647
        %v4649 = vand.u32 %v4648, 4294901760
        %4650 = vmatpush.msra.mxu0 %v4649
        %v4651 = vand.u32 %v456, 4294901760
        %v4652 = vsub.f32 %v456, %v4651
        %v4653 = vand.u32 %v4652, 4294901760
        %v4654 = vsub.f32 %v4652, %v4653
        %v4655 = vand.u32 %v4654, 4294901760
        %4656 = vmatpush.msra.mxu0 %v4655
        %v4657 = vand.u32 %v440, 4294901760
        %v4658 = vsub.f32 %v440, %v4657
        %v4659 = vand.u32 %v4658, 4294901760
        %v4660 = vsub.f32 %v4658, %v4659
        %v4661 = vand.u32 %v4660, 4294901760
        %4662 = vmatpush.msra.mxu0 %v4661
        %v4663 = vand.u32 %v424, 4294901760
        %v4664 = vsub.f32 %v424, %v4663
        %v4665 = vand.u32 %v4664, 4294901760
        %v4666 = vsub.f32 %v4664, %v4665
        %v4667 = vand.u32 %v4666, 4294901760
        %4668 = vmatpush.msra.mxu0 %v4667
        %v4669 = vand.u32 %v408, 4294901760
        %v4670 = vsub.f32 %v408, %v4669
        %v4671 = vand.u32 %v4670, 4294901760
        %v4672 = vsub.f32 %v4670, %v4671
        %v4673 = vand.u32 %v4672, 4294901760
        %4674 = vmatpush.msra.mxu0 %v4673
        %v4675 = vand.u32 %v392, 4294901760
        %v4676 = vsub.f32 %v392, %v4675
        %v4677 = vand.u32 %v4676, 4294901760
        %v4678 = vsub.f32 %v4676, %v4677
        %v4679 = vand.u32 %v4678, 4294901760
        %4680 = vmatpush.msra.mxu0 %v4679
        %v4681 = vand.u32 %v376, 4294901760
        %v4682 = vsub.f32 %v376, %v4681
        %v4683 = vand.u32 %v4682, 4294901760
        %v4684 = vsub.f32 %v4682, %v4683
        %v4685 = vand.u32 %v4684, 4294901760
        %4686 = vmatpush.msra.mxu0 %v4685
        %v4687 = vand.u32 %v360, 4294901760
        %v4688 = vsub.f32 %v360, %v4687
        %v4689 = vand.u32 %v4688, 4294901760
        %v4690 = vsub.f32 %v4688, %v4689
        %v4691 = vand.u32 %v4690, 4294901760
        %4692 = vmatpush.msra.mxu0 %v4691
        %v4693 = vand.u32 %v344, 4294901760
        %v4694 = vsub.f32 %v344, %v4693
        %v4695 = vand.u32 %v4694, 4294901760
        %v4696 = vsub.f32 %v4694, %v4695
        %v4697 = vand.u32 %v4696, 4294901760
        %4698 = vmatpush.msra.mxu0 %v4697
        %v4699 = vand.u32 %v328, 4294901760
        %v4700 = vsub.f32 %v328, %v4699
        %v4701 = vand.u32 %v4700, 4294901760
        %v4702 = vsub.f32 %v4700, %v4701
        %v4703 = vand.u32 %v4702, 4294901760
        %4704 = vmatpush.msra.mxu0 %v4703
        %v4705 = vand.u32 %v312, 4294901760
        %v4706 = vsub.f32 %v312, %v4705
        %v4707 = vand.u32 %v4706, 4294901760
        %v4708 = vsub.f32 %v4706, %v4707
        %v4709 = vand.u32 %v4708, 4294901760
        %4710 = vmatpush.msra.mxu0 %v4709
        %v4711 = vand.u32 %v296, 4294901760
        %v4712 = vsub.f32 %v296, %v4711
        %v4713 = vand.u32 %v4712, 4294901760
        %v4714 = vsub.f32 %v4712, %v4713
        %v4715 = vand.u32 %v4714, 4294901760
        %4716 = vmatpush.msra.mxu0 %v4715
        %v4717 = vand.u32 %v280, 4294901760
        %v4718 = vsub.f32 %v280, %v4717
        %v4719 = vand.u32 %v4718, 4294901760
        %v4720 = vsub.f32 %v4718, %v4719
        %v4721 = vand.u32 %v4720, 4294901760
        %4722 = vmatpush.msra.mxu0 %v4721
        %v4723 = vand.u32 %v264, 4294901760
        %v4724 = vsub.f32 %v264, %v4723
        %v4725 = vand.u32 %v4724, 4294901760
        %v4726 = vsub.f32 %v4724, %v4725
        %v4727 = vand.u32 %v4726, 4294901760
        %4728 = vmatpush.msra.mxu0 %v4727
        %v4729 = vand.u32 %v248, 4294901760
        %v4730 = vsub.f32 %v248, %v4729
        %v4731 = vand.u32 %v4730, 4294901760
        %v4732 = vsub.f32 %v4730, %v4731
        %v4733 = vand.u32 %v4732, 4294901760
        %4734 = vmatpush.msra.mxu0 %v4733
        %v4735 = vand.u32 %v232, 4294901760
        %v4736 = vsub.f32 %v232, %v4735
        %v4737 = vand.u32 %v4736, 4294901760
        %v4738 = vsub.f32 %v4736, %v4737
        %v4739 = vand.u32 %v4738, 4294901760
        %4740 = vmatpush.msra.mxu0 %v4739
        %v4741 = vand.u32 %v219, 4294901760
        %4742 = vmatmul.f32.gmra.mxu0 %v4741
        %v4743 = vpop.f32.mrf.mxu0
        %v4744 = vadd.f32 %v4643, %v4743
        %4745 = vdwg.mxu0
        %v4746 = vand.u32 %v472, 4294901760
        %v4747 = vsub.f32 %v472, %v4746
        %4748 = vmatpush.msra.mxu0 %v4747
        %v4749 = vand.u32 %v456, 4294901760
        %v4750 = vsub.f32 %v456, %v4749
        %4751 = vmatpush.msra.mxu0 %v4750
        %v4752 = vand.u32 %v440, 4294901760
        %v4753 = vsub.f32 %v440, %v4752
        %4754 = vmatpush.msra.mxu0 %v4753
        %v4755 = vand.u32 %v424, 4294901760
        %v4756 = vsub.f32 %v424, %v4755
        %4757 = vmatpush.msra.mxu0 %v4756
        %v4758 = vand.u32 %v408, 4294901760
        %v4759 = vsub.f32 %v408, %v4758
        %4760 = vmatpush.msra.mxu0 %v4759
        %v4761 = vand.u32 %v392, 4294901760
        %v4762 = vsub.f32 %v392, %v4761
        %4763 = vmatpush.msra.mxu0 %v4762
        %v4764 = vand.u32 %v376, 4294901760
        %v4765 = vsub.f32 %v376, %v4764
        %4766 = vmatpush.msra.mxu0 %v4765
        %v4767 = vand.u32 %v360, 4294901760
        %v4768 = vsub.f32 %v360, %v4767
        %4769 = vmatpush.msra.mxu0 %v4768
        %v4770 = vand.u32 %v344, 4294901760
        %v4771 = vsub.f32 %v344, %v4770
        %4772 = vmatpush.msra.mxu0 %v4771
        %v4773 = vand.u32 %v328, 4294901760
        %v4774 = vsub.f32 %v328, %v4773
        %4775 = vmatpush.msra.mxu0 %v4774
        %v4776 = vand.u32 %v312, 4294901760
        %v4777 = vsub.f32 %v312, %v4776
        %4778 = vmatpush.msra.mxu0 %v4777
        %v4779 = vand.u32 %v296, 4294901760
        %v4780 = vsub.f32 %v296, %v4779
        %4781 = vmatpush.msra.mxu0 %v4780
        %v4782 = vand.u32 %v280, 4294901760
        %v4783 = vsub.f32 %v280, %v4782
        %4784 = vmatpush.msra.mxu0 %v4783
        %v4785 = vand.u32 %v264, 4294901760
        %v4786 = vsub.f32 %v264, %v4785
        %4787 = vmatpush.msra.mxu0 %v4786
        %v4788 = vand.u32 %v248, 4294901760
        %v4789 = vsub.f32 %v248, %v4788
        %4790 = vmatpush.msra.mxu0 %v4789
        %v4791 = vand.u32 %v232, 4294901760
        %v4792 = vsub.f32 %v232, %v4791
        %4793 = vmatpush.msra.mxu0 %v4792
        %v4794 = vand.u32 %v219, 4294901760
        %v4795 = vsub.f32 %v219, %v4794
        %4796 = vmatmul.f32.gmra.mxu0 %v4795
        %v4797 = vpop.f32.mrf.mxu0
        %v4798 = vadd.f32 %v4744, %v4797
        %4799 = vdwg.mxu0
        %v4800 = vand.u32 %v472, 4294901760
        %4801 = vmatpush.msra.mxu0 %v4800
        %v4802 = vand.u32 %v456, 4294901760
        %4803 = vmatpush.msra.mxu0 %v4802
        %v4804 = vand.u32 %v440, 4294901760
        %4805 = vmatpush.msra.mxu0 %v4804
        %v4806 = vand.u32 %v424, 4294901760
        %4807 = vmatpush.msra.mxu0 %v4806
        %v4808 = vand.u32 %v408, 4294901760
        %4809 = vmatpush.msra.mxu0 %v4808
        %v4810 = vand.u32 %v392, 4294901760
        %4811 = vmatpush.msra.mxu0 %v4810
        %v4812 = vand.u32 %v376, 4294901760
        %4813 = vmatpush.msra.mxu0 %v4812
        %v4814 = vand.u32 %v360, 4294901760
        %4815 = vmatpush.msra.mxu0 %v4814
        %v4816 = vand.u32 %v344, 4294901760
        %4817 = vmatpush.msra.mxu0 %v4816
        %v4818 = vand.u32 %v328, 4294901760
        %4819 = vmatpush.msra.mxu0 %v4818
        %v4820 = vand.u32 %v312, 4294901760
        %4821 = vmatpush.msra.mxu0 %v4820
        %v4822 = vand.u32 %v296, 4294901760
        %4823 = vmatpush.msra.mxu0 %v4822
        %v4824 = vand.u32 %v280, 4294901760
        %4825 = vmatpush.msra.mxu0 %v4824
        %v4826 = vand.u32 %v264, 4294901760
        %4827 = vmatpush.msra.mxu0 %v4826
        %v4828 = vand.u32 %v248, 4294901760
        %4829 = vmatpush.msra.mxu0 %v4828
        %v4830 = vand.u32 %v232, 4294901760
        %4831 = vmatpush.msra.mxu0 %v4830
        %v4832 = vand.u32 %v219, 4294901760
        %v4833 = vsub.f32 %v219, %v4832
        %v4834 = vand.u32 %v4833, 4294901760
        %4835 = vmatmul.f32.gmra.mxu0 %v4834
        %v4836 = vpop.f32.mrf.mxu0
        %v4837 = vadd.f32 %v4798, %v4836
        %4838 = vdwg.mxu0
        %v4839 = vand.u32 %v472, 4294901760
        %v4840 = vsub.f32 %v472, %v4839
        %v4841 = vand.u32 %v4840, 4294901760
        %4842 = vmatpush.msra.mxu0 %v4841
        %v4843 = vand.u32 %v456, 4294901760
        %v4844 = vsub.f32 %v456, %v4843
        %v4845 = vand.u32 %v4844, 4294901760
        %4846 = vmatpush.msra.mxu0 %v4845
        %v4847 = vand.u32 %v440, 4294901760
        %v4848 = vsub.f32 %v440, %v4847
        %v4849 = vand.u32 %v4848, 4294901760
        %4850 = vmatpush.msra.mxu0 %v4849
        %v4851 = vand.u32 %v424, 4294901760
        %v4852 = vsub.f32 %v424, %v4851
        %v4853 = vand.u32 %v4852, 4294901760
        %4854 = vmatpush.msra.mxu0 %v4853
        %v4855 = vand.u32 %v408, 4294901760
        %v4856 = vsub.f32 %v408, %v4855
        %v4857 = vand.u32 %v4856, 4294901760
        %4858 = vmatpush.msra.mxu0 %v4857
        %v4859 = vand.u32 %v392, 4294901760
        %v4860 = vsub.f32 %v392, %v4859
        %v4861 = vand.u32 %v4860, 4294901760
        %4862 = vmatpush.msra.mxu0 %v4861
        %v4863 = vand.u32 %v376, 4294901760
        %v4864 = vsub.f32 %v376, %v4863
        %v4865 = vand.u32 %v4864, 4294901760
        %4866 = vmatpush.msra.mxu0 %v4865
        %v4867 = vand.u32 %v360, 4294901760
        %v4868 = vsub.f32 %v360, %v4867
        %v4869 = vand.u32 %v4868, 4294901760
        %4870 = vmatpush.msra.mxu0 %v4869
        %v4871 = vand.u32 %v344, 4294901760
        %v4872 = vsub.f32 %v344, %v4871
        %v4873 = vand.u32 %v4872, 4294901760
        %4874 = vmatpush.msra.mxu0 %v4873
        %v4875 = vand.u32 %v328, 4294901760
        %v4876 = vsub.f32 %v328, %v4875
        %v4877 = vand.u32 %v4876, 4294901760
        %4878 = vmatpush.msra.mxu0 %v4877
        %v4879 = vand.u32 %v312, 4294901760
        %v4880 = vsub.f32 %v312, %v4879
        %v4881 = vand.u32 %v4880, 4294901760
        %4882 = vmatpush.msra.mxu0 %v4881
        %v4883 = vand.u32 %v296, 4294901760
        %v4884 = vsub.f32 %v296, %v4883
        %v4885 = vand.u32 %v4884, 4294901760
        %4886 = vmatpush.msra.mxu0 %v4885
        %v4887 = vand.u32 %v280, 4294901760
        %v4888 = vsub.f32 %v280, %v4887
        %v4889 = vand.u32 %v4888, 4294901760
        %4890 = vmatpush.msra.mxu0 %v4889
        %v4891 = vand.u32 %v264, 4294901760
        %v4892 = vsub.f32 %v264, %v4891
        %v4893 = vand.u32 %v4892, 4294901760
        %4894 = vmatpush.msra.mxu0 %v4893
        %v4895 = vand.u32 %v248, 4294901760
        %v4896 = vsub.f32 %v248, %v4895
        %v4897 = vand.u32 %v4896, 4294901760
        %4898 = vmatpush.msra.mxu0 %v4897
        %v4899 = vand.u32 %v232, 4294901760
        %v4900 = vsub.f32 %v232, %v4899
        %v4901 = vand.u32 %v4900, 4294901760
        %4902 = vmatpush.msra.mxu0 %v4901
        %v4903 = vand.u32 %v219, 4294901760
        %4904 = vmatmul.f32.gmra.mxu0 %v4903
        %v4905 = vpop.f32.mrf.mxu0
        %v4906 = vadd.f32 %v4837, %v4905
        %4907 = vdwg.mxu0
        %v4908 = vand.u32 %v472, 4294901760
        %4909 = vmatpush.msra.mxu0 %v4908
        %v4910 = vand.u32 %v456, 4294901760
        %4911 = vmatpush.msra.mxu0 %v4910
        %v4912 = vand.u32 %v440, 4294901760
        %4913 = vmatpush.msra.mxu0 %v4912
        %v4914 = vand.u32 %v424, 4294901760
        %4915 = vmatpush.msra.mxu0 %v4914
        %v4916 = vand.u32 %v408, 4294901760
        %4917 = vmatpush.msra.mxu0 %v4916
        %v4918 = vand.u32 %v392, 4294901760
        %4919 = vmatpush.msra.mxu0 %v4918
        %v4920 = vand.u32 %v376, 4294901760
        %4921 = vmatpush.msra.mxu0 %v4920
        %v4922 = vand.u32 %v360, 4294901760
        %4923 = vmatpush.msra.mxu0 %v4922
        %v4924 = vand.u32 %v344, 4294901760
        %4925 = vmatpush.msra.mxu0 %v4924
        %v4926 = vand.u32 %v328, 4294901760
        %4927 = vmatpush.msra.mxu0 %v4926
        %v4928 = vand.u32 %v312, 4294901760
        %4929 = vmatpush.msra.mxu0 %v4928
        %v4930 = vand.u32 %v296, 4294901760
        %4931 = vmatpush.msra.mxu0 %v4930
        %v4932 = vand.u32 %v280, 4294901760
        %4933 = vmatpush.msra.mxu0 %v4932
        %v4934 = vand.u32 %v264, 4294901760
        %4935 = vmatpush.msra.mxu0 %v4934
        %v4936 = vand.u32 %v248, 4294901760
        %4937 = vmatpush.msra.mxu0 %v4936
        %v4938 = vand.u32 %v232, 4294901760
        %4939 = vmatpush.msra.mxu0 %v4938
        %v4940 = vand.u32 %v219, 4294901760
        %4941 = vmatmul.f32.gmra.mxu0 %v4940
        %v4942 = vpop.f32.mrf.mxu0
        %v4943 = vadd.f32 %v4906, %v4942
        %4944 = vdwg.mxu0
        %v4945 = vand.u32 %v473, 4294901760
        %4946 = vmatpush.msra.mxu0 %v4945
        %v4947 = vand.u32 %v457, 4294901760
        %4948 = vmatpush.msra.mxu0 %v4947
        %v4949 = vand.u32 %v441, 4294901760
        %4950 = vmatpush.msra.mxu0 %v4949
        %v4951 = vand.u32 %v425, 4294901760
        %4952 = vmatpush.msra.mxu0 %v4951
        %v4953 = vand.u32 %v409, 4294901760
        %4954 = vmatpush.msra.mxu0 %v4953
        %v4955 = vand.u32 %v393, 4294901760
        %4956 = vmatpush.msra.mxu0 %v4955
        %v4957 = vand.u32 %v377, 4294901760
        %4958 = vmatpush.msra.mxu0 %v4957
        %v4959 = vand.u32 %v361, 4294901760
        %4960 = vmatpush.msra.mxu0 %v4959
        %v4961 = vand.u32 %v345, 4294901760
        %4962 = vmatpush.msra.mxu0 %v4961
        %v4963 = vand.u32 %v329, 4294901760
        %4964 = vmatpush.msra.mxu0 %v4963
        %v4965 = vand.u32 %v313, 4294901760
        %4966 = vmatpush.msra.mxu0 %v4965
        %v4967 = vand.u32 %v297, 4294901760
        %4968 = vmatpush.msra.mxu0 %v4967
        %v4969 = vand.u32 %v281, 4294901760
        %4970 = vmatpush.msra.mxu0 %v4969
        %v4971 = vand.u32 %v265, 4294901760
        %4972 = vmatpush.msra.mxu0 %v4971
        %v4973 = vand.u32 %v249, 4294901760
        %4974 = vmatpush.msra.mxu0 %v4973
        %v4975 = vand.u32 %v233, 4294901760
        %4976 = vmatpush.msra.mxu0 %v4975
        %v4977 = vand.u32 %v219, 4294901760
        %v4978 = vsub.f32 %v219, %v4977
        %v4979 = vand.u32 %v4978, 4294901760
        %v4980 = vsub.f32 %v4978, %v4979
        %v4981 = vand.u32 %v4980, 4294901760
        %4982 = vmatmul.f32.gmra.mxu0 %v4981
        %v4983 = vpop.f32.mrf.mxu0
        %v4984 = vadd.f32 %v493, %v4983
        %4985 = vdwg.mxu0
        %v4986 = vand.u32 %v473, 4294901760
        %v4987 = vsub.f32 %v473, %v4986
        %v4988 = vand.u32 %v4987, 4294901760
        %v4989 = vsub.f32 %v4987, %v4988
        %v4990 = vand.u32 %v4989, 4294901760
        %4991 = vmatpush.msra.mxu0 %v4990
        %v4992 = vand.u32 %v457, 4294901760
        %v4993 = vsub.f32 %v457, %v4992
        %v4994 = vand.u32 %v4993, 4294901760
        %v4995 = vsub.f32 %v4993, %v4994
        %v4996 = vand.u32 %v4995, 4294901760
        %4997 = vmatpush.msra.mxu0 %v4996
        %v4998 = vand.u32 %v441, 4294901760
        %v4999 = vsub.f32 %v441, %v4998
        %v5000 = vand.u32 %v4999, 4294901760
        %v5001 = vsub.f32 %v4999, %v5000
        %v5002 = vand.u32 %v5001, 4294901760
        %5003 = vmatpush.msra.mxu0 %v5002
        %v5004 = vand.u32 %v425, 4294901760
        %v5005 = vsub.f32 %v425, %v5004
        %v5006 = vand.u32 %v5005, 4294901760
        %v5007 = vsub.f32 %v5005, %v5006
        %v5008 = vand.u32 %v5007, 4294901760
        %5009 = vmatpush.msra.mxu0 %v5008
        %v5010 = vand.u32 %v409, 4294901760
        %v5011 = vsub.f32 %v409, %v5010
        %v5012 = vand.u32 %v5011, 4294901760
        %v5013 = vsub.f32 %v5011, %v5012
        %v5014 = vand.u32 %v5013, 4294901760
        %5015 = vmatpush.msra.mxu0 %v5014
        %v5016 = vand.u32 %v393, 4294901760
        %v5017 = vsub.f32 %v393, %v5016
        %v5018 = vand.u32 %v5017, 4294901760
        %v5019 = vsub.f32 %v5017, %v5018
        %v5020 = vand.u32 %v5019, 4294901760
        %5021 = vmatpush.msra.mxu0 %v5020
        %v5022 = vand.u32 %v377, 4294901760
        %v5023 = vsub.f32 %v377, %v5022
        %v5024 = vand.u32 %v5023, 4294901760
        %v5025 = vsub.f32 %v5023, %v5024
        %v5026 = vand.u32 %v5025, 4294901760
        %5027 = vmatpush.msra.mxu0 %v5026
        %v5028 = vand.u32 %v361, 4294901760
        %v5029 = vsub.f32 %v361, %v5028
        %v5030 = vand.u32 %v5029, 4294901760
        %v5031 = vsub.f32 %v5029, %v5030
        %v5032 = vand.u32 %v5031, 4294901760
        %5033 = vmatpush.msra.mxu0 %v5032
        %v5034 = vand.u32 %v345, 4294901760
        %v5035 = vsub.f32 %v345, %v5034
        %v5036 = vand.u32 %v5035, 4294901760
        %v5037 = vsub.f32 %v5035, %v5036
        %v5038 = vand.u32 %v5037, 4294901760
        %5039 = vmatpush.msra.mxu0 %v5038
        %v5040 = vand.u32 %v329, 4294901760
        %v5041 = vsub.f32 %v329, %v5040
        %v5042 = vand.u32 %v5041, 4294901760
        %v5043 = vsub.f32 %v5041, %v5042
        %v5044 = vand.u32 %v5043, 4294901760
        %5045 = vmatpush.msra.mxu0 %v5044
        %v5046 = vand.u32 %v313, 4294901760
        %v5047 = vsub.f32 %v313, %v5046
        %v5048 = vand.u32 %v5047, 4294901760
        %v5049 = vsub.f32 %v5047, %v5048
        %v5050 = vand.u32 %v5049, 4294901760
        %5051 = vmatpush.msra.mxu0 %v5050
        %v5052 = vand.u32 %v297, 4294901760
        %v5053 = vsub.f32 %v297, %v5052
        %v5054 = vand.u32 %v5053, 4294901760
        %v5055 = vsub.f32 %v5053, %v5054
        %v5056 = vand.u32 %v5055, 4294901760
        %5057 = vmatpush.msra.mxu0 %v5056
        %v5058 = vand.u32 %v281, 4294901760
        %v5059 = vsub.f32 %v281, %v5058
        %v5060 = vand.u32 %v5059, 4294901760
        %v5061 = vsub.f32 %v5059, %v5060
        %v5062 = vand.u32 %v5061, 4294901760
        %5063 = vmatpush.msra.mxu0 %v5062
        %v5064 = vand.u32 %v265, 4294901760
        %v5065 = vsub.f32 %v265, %v5064
        %v5066 = vand.u32 %v5065, 4294901760
        %v5067 = vsub.f32 %v5065, %v5066
        %v5068 = vand.u32 %v5067, 4294901760
        %5069 = vmatpush.msra.mxu0 %v5068
        %v5070 = vand.u32 %v249, 4294901760
        %v5071 = vsub.f32 %v249, %v5070
        %v5072 = vand.u32 %v5071, 4294901760
        %v5073 = vsub.f32 %v5071, %v5072
        %v5074 = vand.u32 %v5073, 4294901760
        %5075 = vmatpush.msra.mxu0 %v5074
        %v5076 = vand.u32 %v233, 4294901760
        %v5077 = vsub.f32 %v233, %v5076
        %v5078 = vand.u32 %v5077, 4294901760
        %v5079 = vsub.f32 %v5077, %v5078
        %v5080 = vand.u32 %v5079, 4294901760
        %5081 = vmatpush.msra.mxu0 %v5080
        %v5082 = vand.u32 %v219, 4294901760
        %5083 = vmatmul.f32.gmra.mxu0 %v5082
        %v5084 = vpop.f32.mrf.mxu0
        %v5085 = vadd.f32 %v4984, %v5084
        %5086 = vdwg.mxu0
        %v5087 = vand.u32 %v473, 4294901760
        %v5088 = vsub.f32 %v473, %v5087
        %5089 = vmatpush.msra.mxu0 %v5088
        %v5090 = vand.u32 %v457, 4294901760
        %v5091 = vsub.f32 %v457, %v5090
        %5092 = vmatpush.msra.mxu0 %v5091
        %v5093 = vand.u32 %v441, 4294901760
        %v5094 = vsub.f32 %v441, %v5093
        %5095 = vmatpush.msra.mxu0 %v5094
        %v5096 = vand.u32 %v425, 4294901760
        %v5097 = vsub.f32 %v425, %v5096
        %5098 = vmatpush.msra.mxu0 %v5097
        %v5099 = vand.u32 %v409, 4294901760
        %v5100 = vsub.f32 %v409, %v5099
        %5101 = vmatpush.msra.mxu0 %v5100
        %v5102 = vand.u32 %v393, 4294901760
        %v5103 = vsub.f32 %v393, %v5102
        %5104 = vmatpush.msra.mxu0 %v5103
        %v5105 = vand.u32 %v377, 4294901760
        %v5106 = vsub.f32 %v377, %v5105
        %5107 = vmatpush.msra.mxu0 %v5106
        %v5108 = vand.u32 %v361, 4294901760
        %v5109 = vsub.f32 %v361, %v5108
        %5110 = vmatpush.msra.mxu0 %v5109
        %v5111 = vand.u32 %v345, 4294901760
        %v5112 = vsub.f32 %v345, %v5111
        %5113 = vmatpush.msra.mxu0 %v5112
        %v5114 = vand.u32 %v329, 4294901760
        %v5115 = vsub.f32 %v329, %v5114
        %5116 = vmatpush.msra.mxu0 %v5115
        %v5117 = vand.u32 %v313, 4294901760
        %v5118 = vsub.f32 %v313, %v5117
        %5119 = vmatpush.msra.mxu0 %v5118
        %v5120 = vand.u32 %v297, 4294901760
        %v5121 = vsub.f32 %v297, %v5120
        %5122 = vmatpush.msra.mxu0 %v5121
        %v5123 = vand.u32 %v281, 4294901760
        %v5124 = vsub.f32 %v281, %v5123
        %5125 = vmatpush.msra.mxu0 %v5124
        %v5126 = vand.u32 %v265, 4294901760
        %v5127 = vsub.f32 %v265, %v5126
        %5128 = vmatpush.msra.mxu0 %v5127
        %v5129 = vand.u32 %v249, 4294901760
        %v5130 = vsub.f32 %v249, %v5129
        %5131 = vmatpush.msra.mxu0 %v5130
        %v5132 = vand.u32 %v233, 4294901760
        %v5133 = vsub.f32 %v233, %v5132
        %5134 = vmatpush.msra.mxu0 %v5133
        %v5135 = vand.u32 %v219, 4294901760
        %v5136 = vsub.f32 %v219, %v5135
        %5137 = vmatmul.f32.gmra.mxu0 %v5136
        %v5138 = vpop.f32.mrf.mxu0
        %v5139 = vadd.f32 %v5085, %v5138
        %5140 = vdwg.mxu0
        %v5141 = vand.u32 %v473, 4294901760
        %5142 = vmatpush.msra.mxu0 %v5141
        %v5143 = vand.u32 %v457, 4294901760
        %5144 = vmatpush.msra.mxu0 %v5143
        %v5145 = vand.u32 %v441, 4294901760
        %5146 = vmatpush.msra.mxu0 %v5145
        %v5147 = vand.u32 %v425, 4294901760
        %5148 = vmatpush.msra.mxu0 %v5147
        %v5149 = vand.u32 %v409, 4294901760
        %5150 = vmatpush.msra.mxu0 %v5149
        %v5151 = vand.u32 %v393, 4294901760
        %5152 = vmatpush.msra.mxu0 %v5151
        %v5153 = vand.u32 %v377, 4294901760
        %5154 = vmatpush.msra.mxu0 %v5153
        %v5155 = vand.u32 %v361, 4294901760
        %5156 = vmatpush.msra.mxu0 %v5155
        %v5157 = vand.u32 %v345, 4294901760
        %5158 = vmatpush.msra.mxu0 %v5157
        %v5159 = vand.u32 %v329, 4294901760
        %5160 = vmatpush.msra.mxu0 %v5159
        %v5161 = vand.u32 %v313, 4294901760
        %5162 = vmatpush.msra.mxu0 %v5161
        %v5163 = vand.u32 %v297, 4294901760
        %5164 = vmatpush.msra.mxu0 %v5163
        %v5165 = vand.u32 %v281, 4294901760
        %5166 = vmatpush.msra.mxu0 %v5165
        %v5167 = vand.u32 %v265, 4294901760
        %5168 = vmatpush.msra.mxu0 %v5167
        %v5169 = vand.u32 %v249, 4294901760
        %5170 = vmatpush.msra.mxu0 %v5169
        %v5171 = vand.u32 %v233, 4294901760
        %5172 = vmatpush.msra.mxu0 %v5171
        %v5173 = vand.u32 %v219, 4294901760
        %v5174 = vsub.f32 %v219, %v5173
        %v5175 = vand.u32 %v5174, 4294901760
        %5176 = vmatmul.f32.gmra.mxu0 %v5175
        %v5177 = vpop.f32.mrf.mxu0
        %v5178 = vadd.f32 %v5139, %v5177
        %5179 = vdwg.mxu0
        %v5180 = vand.u32 %v473, 4294901760
        %v5181 = vsub.f32 %v473, %v5180
        %v5182 = vand.u32 %v5181, 4294901760
        %5183 = vmatpush.msra.mxu0 %v5182
        %v5184 = vand.u32 %v457, 4294901760
        %v5185 = vsub.f32 %v457, %v5184
        %v5186 = vand.u32 %v5185, 4294901760
        %5187 = vmatpush.msra.mxu0 %v5186
        %v5188 = vand.u32 %v441, 4294901760
        %v5189 = vsub.f32 %v441, %v5188
        %v5190 = vand.u32 %v5189, 4294901760
        %5191 = vmatpush.msra.mxu0 %v5190
        %v5192 = vand.u32 %v425, 4294901760
        %v5193 = vsub.f32 %v425, %v5192
        %v5194 = vand.u32 %v5193, 4294901760
        %5195 = vmatpush.msra.mxu0 %v5194
        %v5196 = vand.u32 %v409, 4294901760
        %v5197 = vsub.f32 %v409, %v5196
        %v5198 = vand.u32 %v5197, 4294901760
        %5199 = vmatpush.msra.mxu0 %v5198
        %v5200 = vand.u32 %v393, 4294901760
        %v5201 = vsub.f32 %v393, %v5200
        %v5202 = vand.u32 %v5201, 4294901760
        %5203 = vmatpush.msra.mxu0 %v5202
        %v5204 = vand.u32 %v377, 4294901760
        %v5205 = vsub.f32 %v377, %v5204
        %v5206 = vand.u32 %v5205, 4294901760
        %5207 = vmatpush.msra.mxu0 %v5206
        %v5208 = vand.u32 %v361, 4294901760
        %v5209 = vsub.f32 %v361, %v5208
        %v5210 = vand.u32 %v5209, 4294901760
        %5211 = vmatpush.msra.mxu0 %v5210
        %v5212 = vand.u32 %v345, 4294901760
        %v5213 = vsub.f32 %v345, %v5212
        %v5214 = vand.u32 %v5213, 4294901760
        %5215 = vmatpush.msra.mxu0 %v5214
        %v5216 = vand.u32 %v329, 4294901760
        %v5217 = vsub.f32 %v329, %v5216
        %v5218 = vand.u32 %v5217, 4294901760
        %5219 = vmatpush.msra.mxu0 %v5218
        %v5220 = vand.u32 %v313, 4294901760
        %v5221 = vsub.f32 %v313, %v5220
        %v5222 = vand.u32 %v5221, 4294901760
        %5223 = vmatpush.msra.mxu0 %v5222
        %v5224 = vand.u32 %v297, 4294901760
        %v5225 = vsub.f32 %v297, %v5224
        %v5226 = vand.u32 %v5225, 4294901760
        %5227 = vmatpush.msra.mxu0 %v5226
        %v5228 = vand.u32 %v281, 4294901760
        %v5229 = vsub.f32 %v281, %v5228
        %v5230 = vand.u32 %v5229, 4294901760
        %5231 = vmatpush.msra.mxu0 %v5230
        %v5232 = vand.u32 %v265, 4294901760
        %v5233 = vsub.f32 %v265, %v5232
        %v5234 = vand.u32 %v5233, 4294901760
        %5235 = vmatpush.msra.mxu0 %v5234
        %v5236 = vand.u32 %v249, 4294901760
        %v5237 = vsub.f32 %v249, %v5236
        %v5238 = vand.u32 %v5237, 4294901760
        %5239 = vmatpush.msra.mxu0 %v5238
        %v5240 = vand.u32 %v233, 4294901760
        %v5241 = vsub.f32 %v233, %v5240
        %v5242 = vand.u32 %v5241, 4294901760
        %5243 = vmatpush.msra.mxu0 %v5242
        %v5244 = vand.u32 %v219, 4294901760
        %5245 = vmatmul.f32.gmra.mxu0 %v5244
        %v5246 = vpop.f32.mrf.mxu0
        %v5247 = vadd.f32 %v5178, %v5246
        %5248 = vdwg.mxu0
        %v5249 = vand.u32 %v473, 4294901760
        %5250 = vmatpush.msra.mxu0 %v5249
        %v5251 = vand.u32 %v457, 4294901760
        %5252 = vmatpush.msra.mxu0 %v5251
        %v5253 = vand.u32 %v441, 4294901760
        %5254 = vmatpush.msra.mxu0 %v5253
        %v5255 = vand.u32 %v425, 4294901760
        %5256 = vmatpush.msra.mxu0 %v5255
        %v5257 = vand.u32 %v409, 4294901760
        %5258 = vmatpush.msra.mxu0 %v5257
        %v5259 = vand.u32 %v393, 4294901760
        %5260 = vmatpush.msra.mxu0 %v5259
        %v5261 = vand.u32 %v377, 4294901760
        %5262 = vmatpush.msra.mxu0 %v5261
        %v5263 = vand.u32 %v361, 4294901760
        %5264 = vmatpush.msra.mxu0 %v5263
        %v5265 = vand.u32 %v345, 4294901760
        %5266 = vmatpush.msra.mxu0 %v5265
        %v5267 = vand.u32 %v329, 4294901760
        %5268 = vmatpush.msra.mxu0 %v5267
        %v5269 = vand.u32 %v313, 4294901760
        %5270 = vmatpush.msra.mxu0 %v5269
        %v5271 = vand.u32 %v297, 4294901760
        %5272 = vmatpush.msra.mxu0 %v5271
        %v5273 = vand.u32 %v281, 4294901760
        %5274 = vmatpush.msra.mxu0 %v5273
        %v5275 = vand.u32 %v265, 4294901760
        %5276 = vmatpush.msra.mxu0 %v5275
        %v5277 = vand.u32 %v249, 4294901760
        %5278 = vmatpush.msra.mxu0 %v5277
        %v5279 = vand.u32 %v233, 4294901760
        %5280 = vmatpush.msra.mxu0 %v5279
        %v5281 = vand.u32 %v219, 4294901760
        %5282 = vmatmul.f32.gmra.mxu0 %v5281
        %v5283 = vpop.f32.mrf.mxu0
        %v5284 = vadd.f32 %v5247, %v5283
        %5285 = vdwg.mxu0
        %v5286 = vand.u32 %v474, 4294901760
        %5287 = vmatpush.msra.mxu0 %v5286
        %v5288 = vand.u32 %v458, 4294901760
        %5289 = vmatpush.msra.mxu0 %v5288
        %v5290 = vand.u32 %v442, 4294901760
        %5291 = vmatpush.msra.mxu0 %v5290
        %v5292 = vand.u32 %v426, 4294901760
        %5293 = vmatpush.msra.mxu0 %v5292
        %v5294 = vand.u32 %v410, 4294901760
        %5295 = vmatpush.msra.mxu0 %v5294
        %v5296 = vand.u32 %v394, 4294901760
        %5297 = vmatpush.msra.mxu0 %v5296
        %v5298 = vand.u32 %v378, 4294901760
        %5299 = vmatpush.msra.mxu0 %v5298
        %v5300 = vand.u32 %v362, 4294901760
        %5301 = vmatpush.msra.mxu0 %v5300
        %v5302 = vand.u32 %v346, 4294901760
        %5303 = vmatpush.msra.mxu0 %v5302
        %v5304 = vand.u32 %v330, 4294901760
        %5305 = vmatpush.msra.mxu0 %v5304
        %v5306 = vand.u32 %v314, 4294901760
        %5307 = vmatpush.msra.mxu0 %v5306
        %v5308 = vand.u32 %v298, 4294901760
        %5309 = vmatpush.msra.mxu0 %v5308
        %v5310 = vand.u32 %v282, 4294901760
        %5311 = vmatpush.msra.mxu0 %v5310
        %v5312 = vand.u32 %v266, 4294901760
        %5313 = vmatpush.msra.mxu0 %v5312
        %v5314 = vand.u32 %v250, 4294901760
        %5315 = vmatpush.msra.mxu0 %v5314
        %v5316 = vand.u32 %v234, 4294901760
        %5317 = vmatpush.msra.mxu0 %v5316
        %v5318 = vand.u32 %v219, 4294901760
        %v5319 = vsub.f32 %v219, %v5318
        %v5320 = vand.u32 %v5319, 4294901760
        %v5321 = vsub.f32 %v5319, %v5320
        %v5322 = vand.u32 %v5321, 4294901760
        %5323 = vmatmul.f32.gmra.mxu0 %v5322
        %v5324 = vpop.f32.mrf.mxu0
        %v5325 = vadd.f32 %v494, %v5324
        %5326 = vdwg.mxu0
        %v5327 = vand.u32 %v474, 4294901760
        %v5328 = vsub.f32 %v474, %v5327
        %v5329 = vand.u32 %v5328, 4294901760
        %v5330 = vsub.f32 %v5328, %v5329
        %v5331 = vand.u32 %v5330, 4294901760
        %5332 = vmatpush.msra.mxu0 %v5331
        %v5333 = vand.u32 %v458, 4294901760
        %v5334 = vsub.f32 %v458, %v5333
        %v5335 = vand.u32 %v5334, 4294901760
        %v5336 = vsub.f32 %v5334, %v5335
        %v5337 = vand.u32 %v5336, 4294901760
        %5338 = vmatpush.msra.mxu0 %v5337
        %v5339 = vand.u32 %v442, 4294901760
        %v5340 = vsub.f32 %v442, %v5339
        %v5341 = vand.u32 %v5340, 4294901760
        %v5342 = vsub.f32 %v5340, %v5341
        %v5343 = vand.u32 %v5342, 4294901760
        %5344 = vmatpush.msra.mxu0 %v5343
        %v5345 = vand.u32 %v426, 4294901760
        %v5346 = vsub.f32 %v426, %v5345
        %v5347 = vand.u32 %v5346, 4294901760
        %v5348 = vsub.f32 %v5346, %v5347
        %v5349 = vand.u32 %v5348, 4294901760
        %5350 = vmatpush.msra.mxu0 %v5349
        %v5351 = vand.u32 %v410, 4294901760
        %v5352 = vsub.f32 %v410, %v5351
        %v5353 = vand.u32 %v5352, 4294901760
        %v5354 = vsub.f32 %v5352, %v5353
        %v5355 = vand.u32 %v5354, 4294901760
        %5356 = vmatpush.msra.mxu0 %v5355
        %v5357 = vand.u32 %v394, 4294901760
        %v5358 = vsub.f32 %v394, %v5357
        %v5359 = vand.u32 %v5358, 4294901760
        %v5360 = vsub.f32 %v5358, %v5359
        %v5361 = vand.u32 %v5360, 4294901760
        %5362 = vmatpush.msra.mxu0 %v5361
        %v5363 = vand.u32 %v378, 4294901760
        %v5364 = vsub.f32 %v378, %v5363
        %v5365 = vand.u32 %v5364, 4294901760
        %v5366 = vsub.f32 %v5364, %v5365
        %v5367 = vand.u32 %v5366, 4294901760
        %5368 = vmatpush.msra.mxu0 %v5367
        %v5369 = vand.u32 %v362, 4294901760
        %v5370 = vsub.f32 %v362, %v5369
        %v5371 = vand.u32 %v5370, 4294901760
        %v5372 = vsub.f32 %v5370, %v5371
        %v5373 = vand.u32 %v5372, 4294901760
        %5374 = vmatpush.msra.mxu0 %v5373
        %v5375 = vand.u32 %v346, 4294901760
        %v5376 = vsub.f32 %v346, %v5375
        %v5377 = vand.u32 %v5376, 4294901760
        %v5378 = vsub.f32 %v5376, %v5377
        %v5379 = vand.u32 %v5378, 4294901760
        %5380 = vmatpush.msra.mxu0 %v5379
        %v5381 = vand.u32 %v330, 4294901760
        %v5382 = vsub.f32 %v330, %v5381
        %v5383 = vand.u32 %v5382, 4294901760
        %v5384 = vsub.f32 %v5382, %v5383
        %v5385 = vand.u32 %v5384, 4294901760
        %5386 = vmatpush.msra.mxu0 %v5385
        %v5387 = vand.u32 %v314, 4294901760
        %v5388 = vsub.f32 %v314, %v5387
        %v5389 = vand.u32 %v5388, 4294901760
        %v5390 = vsub.f32 %v5388, %v5389
        %v5391 = vand.u32 %v5390, 4294901760
        %5392 = vmatpush.msra.mxu0 %v5391
        %v5393 = vand.u32 %v298, 4294901760
        %v5394 = vsub.f32 %v298, %v5393
        %v5395 = vand.u32 %v5394, 4294901760
        %v5396 = vsub.f32 %v5394, %v5395
        %v5397 = vand.u32 %v5396, 4294901760
        %5398 = vmatpush.msra.mxu0 %v5397
        %v5399 = vand.u32 %v282, 4294901760
        %v5400 = vsub.f32 %v282, %v5399
        %v5401 = vand.u32 %v5400, 4294901760
        %v5402 = vsub.f32 %v5400, %v5401
        %v5403 = vand.u32 %v5402, 4294901760
        %5404 = vmatpush.msra.mxu0 %v5403
        %v5405 = vand.u32 %v266, 4294901760
        %v5406 = vsub.f32 %v266, %v5405
        %v5407 = vand.u32 %v5406, 4294901760
        %v5408 = vsub.f32 %v5406, %v5407
        %v5409 = vand.u32 %v5408, 4294901760
        %5410 = vmatpush.msra.mxu0 %v5409
        %v5411 = vand.u32 %v250, 4294901760
        %v5412 = vsub.f32 %v250, %v5411
        %v5413 = vand.u32 %v5412, 4294901760
        %v5414 = vsub.f32 %v5412, %v5413
        %v5415 = vand.u32 %v5414, 4294901760
        %5416 = vmatpush.msra.mxu0 %v5415
        %v5417 = vand.u32 %v234, 4294901760
        %v5418 = vsub.f32 %v234, %v5417
        %v5419 = vand.u32 %v5418, 4294901760
        %v5420 = vsub.f32 %v5418, %v5419
        %v5421 = vand.u32 %v5420, 4294901760
        %5422 = vmatpush.msra.mxu0 %v5421
        %v5423 = vand.u32 %v219, 4294901760
        %5424 = vmatmul.f32.gmra.mxu0 %v5423
        %v5425 = vpop.f32.mrf.mxu0
        %v5426 = vadd.f32 %v5325, %v5425
        %5427 = vdwg.mxu0
        %v5428 = vand.u32 %v474, 4294901760
        %v5429 = vsub.f32 %v474, %v5428
        %5430 = vmatpush.msra.mxu0 %v5429
        %v5431 = vand.u32 %v458, 4294901760
        %v5432 = vsub.f32 %v458, %v5431
        %5433 = vmatpush.msra.mxu0 %v5432
        %v5434 = vand.u32 %v442, 4294901760
        %v5435 = vsub.f32 %v442, %v5434
        %5436 = vmatpush.msra.mxu0 %v5435
        %v5437 = vand.u32 %v426, 4294901760
        %v5438 = vsub.f32 %v426, %v5437
        %5439 = vmatpush.msra.mxu0 %v5438
        %v5440 = vand.u32 %v410, 4294901760
        %v5441 = vsub.f32 %v410, %v5440
        %5442 = vmatpush.msra.mxu0 %v5441
        %v5443 = vand.u32 %v394, 4294901760
        %v5444 = vsub.f32 %v394, %v5443
        %5445 = vmatpush.msra.mxu0 %v5444
        %v5446 = vand.u32 %v378, 4294901760
        %v5447 = vsub.f32 %v378, %v5446
        %5448 = vmatpush.msra.mxu0 %v5447
        %v5449 = vand.u32 %v362, 4294901760
        %v5450 = vsub.f32 %v362, %v5449
        %5451 = vmatpush.msra.mxu0 %v5450
        %v5452 = vand.u32 %v346, 4294901760
        %v5453 = vsub.f32 %v346, %v5452
        %5454 = vmatpush.msra.mxu0 %v5453
        %v5455 = vand.u32 %v330, 4294901760
        %v5456 = vsub.f32 %v330, %v5455
        %5457 = vmatpush.msra.mxu0 %v5456
        %v5458 = vand.u32 %v314, 4294901760
        %v5459 = vsub.f32 %v314, %v5458
        %5460 = vmatpush.msra.mxu0 %v5459
        %v5461 = vand.u32 %v298, 4294901760
        %v5462 = vsub.f32 %v298, %v5461
        %5463 = vmatpush.msra.mxu0 %v5462
        %v5464 = vand.u32 %v282, 4294901760
        %v5465 = vsub.f32 %v282, %v5464
        %5466 = vmatpush.msra.mxu0 %v5465
        %v5467 = vand.u32 %v266, 4294901760
        %v5468 = vsub.f32 %v266, %v5467
        %5469 = vmatpush.msra.mxu0 %v5468
        %v5470 = vand.u32 %v250, 4294901760
        %v5471 = vsub.f32 %v250, %v5470
        %5472 = vmatpush.msra.mxu0 %v5471
        %v5473 = vand.u32 %v234, 4294901760
        %v5474 = vsub.f32 %v234, %v5473
        %5475 = vmatpush.msra.mxu0 %v5474
        %v5476 = vand.u32 %v219, 4294901760
        %v5477 = vsub.f32 %v219, %v5476
        %5478 = vmatmul.f32.gmra.mxu0 %v5477
        %v5479 = vpop.f32.mrf.mxu0
        %v5480 = vadd.f32 %v5426, %v5479
        %5481 = vdwg.mxu0
        %v5482 = vand.u32 %v474, 4294901760
        %5483 = vmatpush.msra.mxu0 %v5482
        %v5484 = vand.u32 %v458, 4294901760
        %5485 = vmatpush.msra.mxu0 %v5484
        %v5486 = vand.u32 %v442, 4294901760
        %5487 = vmatpush.msra.mxu0 %v5486
        %v5488 = vand.u32 %v426, 4294901760
        %5489 = vmatpush.msra.mxu0 %v5488
        %v5490 = vand.u32 %v410, 4294901760
        %5491 = vmatpush.msra.mxu0 %v5490
        %v5492 = vand.u32 %v394, 4294901760
        %5493 = vmatpush.msra.mxu0 %v5492
        %v5494 = vand.u32 %v378, 4294901760
        %5495 = vmatpush.msra.mxu0 %v5494
        %v5496 = vand.u32 %v362, 4294901760
        %5497 = vmatpush.msra.mxu0 %v5496
        %v5498 = vand.u32 %v346, 4294901760
        %5499 = vmatpush.msra.mxu0 %v5498
        %v5500 = vand.u32 %v330, 4294901760
        %5501 = vmatpush.msra.mxu0 %v5500
        %v5502 = vand.u32 %v314, 4294901760
        %5503 = vmatpush.msra.mxu0 %v5502
        %v5504 = vand.u32 %v298, 4294901760
        %5505 = vmatpush.msra.mxu0 %v5504
        %v5506 = vand.u32 %v282, 4294901760
        %5507 = vmatpush.msra.mxu0 %v5506
        %v5508 = vand.u32 %v266, 4294901760
        %5509 = vmatpush.msra.mxu0 %v5508
        %v5510 = vand.u32 %v250, 4294901760
        %5511 = vmatpush.msra.mxu0 %v5510
        %v5512 = vand.u32 %v234, 4294901760
        %5513 = vmatpush.msra.mxu0 %v5512
        %v5514 = vand.u32 %v219, 4294901760
        %v5515 = vsub.f32 %v219, %v5514
        %v5516 = vand.u32 %v5515, 4294901760
        %5517 = vmatmul.f32.gmra.mxu0 %v5516
        %v5518 = vpop.f32.mrf.mxu0
        %v5519 = vadd.f32 %v5480, %v5518
        %5520 = vdwg.mxu0
        %v5521 = vand.u32 %v474, 4294901760
        %v5522 = vsub.f32 %v474, %v5521
        %v5523 = vand.u32 %v5522, 4294901760
        %5524 = vmatpush.msra.mxu0 %v5523
        %v5525 = vand.u32 %v458, 4294901760
        %v5526 = vsub.f32 %v458, %v5525
        %v5527 = vand.u32 %v5526, 4294901760
        %5528 = vmatpush.msra.mxu0 %v5527
        %v5529 = vand.u32 %v442, 4294901760
        %v5530 = vsub.f32 %v442, %v5529
        %v5531 = vand.u32 %v5530, 4294901760
        %5532 = vmatpush.msra.mxu0 %v5531
        %v5533 = vand.u32 %v426, 4294901760
        %v5534 = vsub.f32 %v426, %v5533
        %v5535 = vand.u32 %v5534, 4294901760
        %5536 = vmatpush.msra.mxu0 %v5535
        %v5537 = vand.u32 %v410, 4294901760
        %v5538 = vsub.f32 %v410, %v5537
        %v5539 = vand.u32 %v5538, 4294901760
        %5540 = vmatpush.msra.mxu0 %v5539
        %v5541 = vand.u32 %v394, 4294901760
        %v5542 = vsub.f32 %v394, %v5541
        %v5543 = vand.u32 %v5542, 4294901760
        %5544 = vmatpush.msra.mxu0 %v5543
        %v5545 = vand.u32 %v378, 4294901760
        %v5546 = vsub.f32 %v378, %v5545
        %v5547 = vand.u32 %v5546, 4294901760
        %5548 = vmatpush.msra.mxu0 %v5547
        %v5549 = vand.u32 %v362, 4294901760
        %v5550 = vsub.f32 %v362, %v5549
        %v5551 = vand.u32 %v5550, 4294901760
        %5552 = vmatpush.msra.mxu0 %v5551
        %v5553 = vand.u32 %v346, 4294901760
        %v5554 = vsub.f32 %v346, %v5553
        %v5555 = vand.u32 %v5554, 4294901760
        %5556 = vmatpush.msra.mxu0 %v5555
        %v5557 = vand.u32 %v330, 4294901760
        %v5558 = vsub.f32 %v330, %v5557
        %v5559 = vand.u32 %v5558, 4294901760
        %5560 = vmatpush.msra.mxu0 %v5559
        %v5561 = vand.u32 %v314, 4294901760
        %v5562 = vsub.f32 %v314, %v5561
        %v5563 = vand.u32 %v5562, 4294901760
        %5564 = vmatpush.msra.mxu0 %v5563
        %v5565 = vand.u32 %v298, 4294901760
        %v5566 = vsub.f32 %v298, %v5565
        %v5567 = vand.u32 %v5566, 4294901760
        %5568 = vmatpush.msra.mxu0 %v5567
        %v5569 = vand.u32 %v282, 4294901760
        %v5570 = vsub.f32 %v282, %v5569
        %v5571 = vand.u32 %v5570, 4294901760
        %5572 = vmatpush.msra.mxu0 %v5571
        %v5573 = vand.u32 %v266, 4294901760
        %v5574 = vsub.f32 %v266, %v5573
        %v5575 = vand.u32 %v5574, 4294901760
        %5576 = vmatpush.msra.mxu0 %v5575
        %v5577 = vand.u32 %v250, 4294901760
        %v5578 = vsub.f32 %v250, %v5577
        %v5579 = vand.u32 %v5578, 4294901760
        %5580 = vmatpush.msra.mxu0 %v5579
        %v5581 = vand.u32 %v234, 4294901760
        %v5582 = vsub.f32 %v234, %v5581
        %v5583 = vand.u32 %v5582, 4294901760
        %5584 = vmatpush.msra.mxu0 %v5583
        %v5585 = vand.u32 %v219, 4294901760
        %5586 = vmatmul.f32.gmra.mxu0 %v5585
        %v5587 = vpop.f32.mrf.mxu0
        %v5588 = vadd.f32 %v5519, %v5587
        %5589 = vdwg.mxu0
        %v5590 = vand.u32 %v474, 4294901760
        %5591 = vmatpush.msra.mxu0 %v5590
        %v5592 = vand.u32 %v458, 4294901760
        %5593 = vmatpush.msra.mxu0 %v5592
        %v5594 = vand.u32 %v442, 4294901760
        %5595 = vmatpush.msra.mxu0 %v5594
        %v5596 = vand.u32 %v426, 4294901760
        %5597 = vmatpush.msra.mxu0 %v5596
        %v5598 = vand.u32 %v410, 4294901760
        %5599 = vmatpush.msra.mxu0 %v5598
        %v5600 = vand.u32 %v394, 4294901760
        %5601 = vmatpush.msra.mxu0 %v5600
        %v5602 = vand.u32 %v378, 4294901760
        %5603 = vmatpush.msra.mxu0 %v5602
        %v5604 = vand.u32 %v362, 4294901760
        %5605 = vmatpush.msra.mxu0 %v5604
        %v5606 = vand.u32 %v346, 4294901760
        %5607 = vmatpush.msra.mxu0 %v5606
        %v5608 = vand.u32 %v330, 4294901760
        %5609 = vmatpush.msra.mxu0 %v5608
        %v5610 = vand.u32 %v314, 4294901760
        %5611 = vmatpush.msra.mxu0 %v5610
        %v5612 = vand.u32 %v298, 4294901760
        %5613 = vmatpush.msra.mxu0 %v5612
        %v5614 = vand.u32 %v282, 4294901760
        %5615 = vmatpush.msra.mxu0 %v5614
        %v5616 = vand.u32 %v266, 4294901760
        %5617 = vmatpush.msra.mxu0 %v5616
        %v5618 = vand.u32 %v250, 4294901760
        %5619 = vmatpush.msra.mxu0 %v5618
        %v5620 = vand.u32 %v234, 4294901760
        %5621 = vmatpush.msra.mxu0 %v5620
        %v5622 = vand.u32 %v219, 4294901760
        %5623 = vmatmul.f32.gmra.mxu0 %v5622
        %v5624 = vpop.f32.mrf.mxu0
        %v5625 = vadd.f32 %v5588, %v5624
        %5626 = vdwg.mxu0
        %v5627 = vand.u32 %v475, 4294901760
        %5628 = vmatpush.msra.mxu0 %v5627
        %v5629 = vand.u32 %v459, 4294901760
        %5630 = vmatpush.msra.mxu0 %v5629
        %v5631 = vand.u32 %v443, 4294901760
        %5632 = vmatpush.msra.mxu0 %v5631
        %v5633 = vand.u32 %v427, 4294901760
        %5634 = vmatpush.msra.mxu0 %v5633
        %v5635 = vand.u32 %v411, 4294901760
        %5636 = vmatpush.msra.mxu0 %v5635
        %v5637 = vand.u32 %v395, 4294901760
        %5638 = vmatpush.msra.mxu0 %v5637
        %v5639 = vand.u32 %v379, 4294901760
        %5640 = vmatpush.msra.mxu0 %v5639
        %v5641 = vand.u32 %v363, 4294901760
        %5642 = vmatpush.msra.mxu0 %v5641
        %v5643 = vand.u32 %v347, 4294901760
        %5644 = vmatpush.msra.mxu0 %v5643
        %v5645 = vand.u32 %v331, 4294901760
        %5646 = vmatpush.msra.mxu0 %v5645
        %v5647 = vand.u32 %v315, 4294901760
        %5648 = vmatpush.msra.mxu0 %v5647
        %v5649 = vand.u32 %v299, 4294901760
        %5650 = vmatpush.msra.mxu0 %v5649
        %v5651 = vand.u32 %v283, 4294901760
        %5652 = vmatpush.msra.mxu0 %v5651
        %v5653 = vand.u32 %v267, 4294901760
        %5654 = vmatpush.msra.mxu0 %v5653
        %v5655 = vand.u32 %v251, 4294901760
        %5656 = vmatpush.msra.mxu0 %v5655
        %v5657 = vand.u32 %v235, 4294901760
        %5658 = vmatpush.msra.mxu0 %v5657
        %v5659 = vand.u32 %v219, 4294901760
        %v5660 = vsub.f32 %v219, %v5659
        %v5661 = vand.u32 %v5660, 4294901760
        %v5662 = vsub.f32 %v5660, %v5661
        %v5663 = vand.u32 %v5662, 4294901760
        %5664 = vmatmul.f32.gmra.mxu0 %v5663
        %v5665 = vpop.f32.mrf.mxu0
        %v5666 = vadd.f32 %v495, %v5665
        %5667 = vdwg.mxu0
        %v5668 = vand.u32 %v475, 4294901760
        %v5669 = vsub.f32 %v475, %v5668
        %v5670 = vand.u32 %v5669, 4294901760
        %v5671 = vsub.f32 %v5669, %v5670
        %v5672 = vand.u32 %v5671, 4294901760
        %5673 = vmatpush.msra.mxu0 %v5672
        %v5674 = vand.u32 %v459, 4294901760
        %v5675 = vsub.f32 %v459, %v5674
        %v5676 = vand.u32 %v5675, 4294901760
        %v5677 = vsub.f32 %v5675, %v5676
        %v5678 = vand.u32 %v5677, 4294901760
        %5679 = vmatpush.msra.mxu0 %v5678
        %v5680 = vand.u32 %v443, 4294901760
        %v5681 = vsub.f32 %v443, %v5680
        %v5682 = vand.u32 %v5681, 4294901760
        %v5683 = vsub.f32 %v5681, %v5682
        %v5684 = vand.u32 %v5683, 4294901760
        %5685 = vmatpush.msra.mxu0 %v5684
        %v5686 = vand.u32 %v427, 4294901760
        %v5687 = vsub.f32 %v427, %v5686
        %v5688 = vand.u32 %v5687, 4294901760
        %v5689 = vsub.f32 %v5687, %v5688
        %v5690 = vand.u32 %v5689, 4294901760
        %5691 = vmatpush.msra.mxu0 %v5690
        %v5692 = vand.u32 %v411, 4294901760
        %v5693 = vsub.f32 %v411, %v5692
        %v5694 = vand.u32 %v5693, 4294901760
        %v5695 = vsub.f32 %v5693, %v5694
        %v5696 = vand.u32 %v5695, 4294901760
        %5697 = vmatpush.msra.mxu0 %v5696
        %v5698 = vand.u32 %v395, 4294901760
        %v5699 = vsub.f32 %v395, %v5698
        %v5700 = vand.u32 %v5699, 4294901760
        %v5701 = vsub.f32 %v5699, %v5700
        %v5702 = vand.u32 %v5701, 4294901760
        %5703 = vmatpush.msra.mxu0 %v5702
        %v5704 = vand.u32 %v379, 4294901760
        %v5705 = vsub.f32 %v379, %v5704
        %v5706 = vand.u32 %v5705, 4294901760
        %v5707 = vsub.f32 %v5705, %v5706
        %v5708 = vand.u32 %v5707, 4294901760
        %5709 = vmatpush.msra.mxu0 %v5708
        %v5710 = vand.u32 %v363, 4294901760
        %v5711 = vsub.f32 %v363, %v5710
        %v5712 = vand.u32 %v5711, 4294901760
        %v5713 = vsub.f32 %v5711, %v5712
        %v5714 = vand.u32 %v5713, 4294901760
        %5715 = vmatpush.msra.mxu0 %v5714
        %v5716 = vand.u32 %v347, 4294901760
        %v5717 = vsub.f32 %v347, %v5716
        %v5718 = vand.u32 %v5717, 4294901760
        %v5719 = vsub.f32 %v5717, %v5718
        %v5720 = vand.u32 %v5719, 4294901760
        %5721 = vmatpush.msra.mxu0 %v5720
        %v5722 = vand.u32 %v331, 4294901760
        %v5723 = vsub.f32 %v331, %v5722
        %v5724 = vand.u32 %v5723, 4294901760
        %v5725 = vsub.f32 %v5723, %v5724
        %v5726 = vand.u32 %v5725, 4294901760
        %5727 = vmatpush.msra.mxu0 %v5726
        %v5728 = vand.u32 %v315, 4294901760
        %v5729 = vsub.f32 %v315, %v5728
        %v5730 = vand.u32 %v5729, 4294901760
        %v5731 = vsub.f32 %v5729, %v5730
        %v5732 = vand.u32 %v5731, 4294901760
        %5733 = vmatpush.msra.mxu0 %v5732
        %v5734 = vand.u32 %v299, 4294901760
        %v5735 = vsub.f32 %v299, %v5734
        %v5736 = vand.u32 %v5735, 4294901760
        %v5737 = vsub.f32 %v5735, %v5736
        %v5738 = vand.u32 %v5737, 4294901760
        %5739 = vmatpush.msra.mxu0 %v5738
        %v5740 = vand.u32 %v283, 4294901760
        %v5741 = vsub.f32 %v283, %v5740
        %v5742 = vand.u32 %v5741, 4294901760
        %v5743 = vsub.f32 %v5741, %v5742
        %v5744 = vand.u32 %v5743, 4294901760
        %5745 = vmatpush.msra.mxu0 %v5744
        %v5746 = vand.u32 %v267, 4294901760
        %v5747 = vsub.f32 %v267, %v5746
        %v5748 = vand.u32 %v5747, 4294901760
        %v5749 = vsub.f32 %v5747, %v5748
        %v5750 = vand.u32 %v5749, 4294901760
        %5751 = vmatpush.msra.mxu0 %v5750
        %v5752 = vand.u32 %v251, 4294901760
        %v5753 = vsub.f32 %v251, %v5752
        %v5754 = vand.u32 %v5753, 4294901760
        %v5755 = vsub.f32 %v5753, %v5754
        %v5756 = vand.u32 %v5755, 4294901760
        %5757 = vmatpush.msra.mxu0 %v5756
        %v5758 = vand.u32 %v235, 4294901760
        %v5759 = vsub.f32 %v235, %v5758
        %v5760 = vand.u32 %v5759, 4294901760
        %v5761 = vsub.f32 %v5759, %v5760
        %v5762 = vand.u32 %v5761, 4294901760
        %5763 = vmatpush.msra.mxu0 %v5762
        %v5764 = vand.u32 %v219, 4294901760
        %5765 = vmatmul.f32.gmra.mxu0 %v5764
        %v5766 = vpop.f32.mrf.mxu0
        %v5767 = vadd.f32 %v5666, %v5766
        %5768 = vdwg.mxu0
        %v5769 = vand.u32 %v475, 4294901760
        %v5770 = vsub.f32 %v475, %v5769
        %5771 = vmatpush.msra.mxu0 %v5770
        %v5772 = vand.u32 %v459, 4294901760
        %v5773 = vsub.f32 %v459, %v5772
        %5774 = vmatpush.msra.mxu0 %v5773
        %v5775 = vand.u32 %v443, 4294901760
        %v5776 = vsub.f32 %v443, %v5775
        %5777 = vmatpush.msra.mxu0 %v5776
        %v5778 = vand.u32 %v427, 4294901760
        %v5779 = vsub.f32 %v427, %v5778
        %5780 = vmatpush.msra.mxu0 %v5779
        %v5781 = vand.u32 %v411, 4294901760
        %v5782 = vsub.f32 %v411, %v5781
        %5783 = vmatpush.msra.mxu0 %v5782
        %v5784 = vand.u32 %v395, 4294901760
        %v5785 = vsub.f32 %v395, %v5784
        %5786 = vmatpush.msra.mxu0 %v5785
        %v5787 = vand.u32 %v379, 4294901760
        %v5788 = vsub.f32 %v379, %v5787
        %5789 = vmatpush.msra.mxu0 %v5788
        %v5790 = vand.u32 %v363, 4294901760
        %v5791 = vsub.f32 %v363, %v5790
        %5792 = vmatpush.msra.mxu0 %v5791
        %v5793 = vand.u32 %v347, 4294901760
        %v5794 = vsub.f32 %v347, %v5793
        %5795 = vmatpush.msra.mxu0 %v5794
        %v5796 = vand.u32 %v331, 4294901760
        %v5797 = vsub.f32 %v331, %v5796
        %5798 = vmatpush.msra.mxu0 %v5797
        %v5799 = vand.u32 %v315, 4294901760
        %v5800 = vsub.f32 %v315, %v5799
        %5801 = vmatpush.msra.mxu0 %v5800
        %v5802 = vand.u32 %v299, 4294901760
        %v5803 = vsub.f32 %v299, %v5802
        %5804 = vmatpush.msra.mxu0 %v5803
        %v5805 = vand.u32 %v283, 4294901760
        %v5806 = vsub.f32 %v283, %v5805
        %5807 = vmatpush.msra.mxu0 %v5806
        %v5808 = vand.u32 %v267, 4294901760
        %v5809 = vsub.f32 %v267, %v5808
        %5810 = vmatpush.msra.mxu0 %v5809
        %v5811 = vand.u32 %v251, 4294901760
        %v5812 = vsub.f32 %v251, %v5811
        %5813 = vmatpush.msra.mxu0 %v5812
        %v5814 = vand.u32 %v235, 4294901760
        %v5815 = vsub.f32 %v235, %v5814
        %5816 = vmatpush.msra.mxu0 %v5815
        %v5817 = vand.u32 %v219, 4294901760
        %v5818 = vsub.f32 %v219, %v5817
        %5819 = vmatmul.f32.gmra.mxu0 %v5818
        %v5820 = vpop.f32.mrf.mxu0
        %v5821 = vadd.f32 %v5767, %v5820
        %5822 = vdwg.mxu0
        %v5823 = vand.u32 %v475, 4294901760
        %5824 = vmatpush.msra.mxu0 %v5823
        %v5825 = vand.u32 %v459, 4294901760
        %5826 = vmatpush.msra.mxu0 %v5825
        %v5827 = vand.u32 %v443, 4294901760
        %5828 = vmatpush.msra.mxu0 %v5827
        %v5829 = vand.u32 %v427, 4294901760
        %5830 = vmatpush.msra.mxu0 %v5829
        %v5831 = vand.u32 %v411, 4294901760
        %5832 = vmatpush.msra.mxu0 %v5831
        %v5833 = vand.u32 %v395, 4294901760
        %5834 = vmatpush.msra.mxu0 %v5833
        %v5835 = vand.u32 %v379, 4294901760
        %5836 = vmatpush.msra.mxu0 %v5835
        %v5837 = vand.u32 %v363, 4294901760
        %5838 = vmatpush.msra.mxu0 %v5837
        %v5839 = vand.u32 %v347, 4294901760
        %5840 = vmatpush.msra.mxu0 %v5839
        %v5841 = vand.u32 %v331, 4294901760
        %5842 = vmatpush.msra.mxu0 %v5841
        %v5843 = vand.u32 %v315, 4294901760
        %5844 = vmatpush.msra.mxu0 %v5843
        %v5845 = vand.u32 %v299, 4294901760
        %5846 = vmatpush.msra.mxu0 %v5845
        %v5847 = vand.u32 %v283, 4294901760
        %5848 = vmatpush.msra.mxu0 %v5847
        %v5849 = vand.u32 %v267, 4294901760
        %5850 = vmatpush.msra.mxu0 %v5849
        %v5851 = vand.u32 %v251, 4294901760
        %5852 = vmatpush.msra.mxu0 %v5851
        %v5853 = vand.u32 %v235, 4294901760
        %5854 = vmatpush.msra.mxu0 %v5853
        %v5855 = vand.u32 %v219, 4294901760
        %v5856 = vsub.f32 %v219, %v5855
        %v5857 = vand.u32 %v5856, 4294901760
        %5858 = vmatmul.f32.gmra.mxu0 %v5857
        %v5859 = vpop.f32.mrf.mxu0
        %v5860 = vadd.f32 %v5821, %v5859
        %5861 = vdwg.mxu0
        %v5862 = vand.u32 %v475, 4294901760
        %v5863 = vsub.f32 %v475, %v5862
        %v5864 = vand.u32 %v5863, 4294901760
        %5865 = vmatpush.msra.mxu0 %v5864
        %v5866 = vand.u32 %v459, 4294901760
        %v5867 = vsub.f32 %v459, %v5866
        %v5868 = vand.u32 %v5867, 4294901760
        %5869 = vmatpush.msra.mxu0 %v5868
        %v5870 = vand.u32 %v443, 4294901760
        %v5871 = vsub.f32 %v443, %v5870
        %v5872 = vand.u32 %v5871, 4294901760
        %5873 = vmatpush.msra.mxu0 %v5872
        %v5874 = vand.u32 %v427, 4294901760
        %v5875 = vsub.f32 %v427, %v5874
        %v5876 = vand.u32 %v5875, 4294901760
        %5877 = vmatpush.msra.mxu0 %v5876
        %v5878 = vand.u32 %v411, 4294901760
        %v5879 = vsub.f32 %v411, %v5878
        %v5880 = vand.u32 %v5879, 4294901760
        %5881 = vmatpush.msra.mxu0 %v5880
        %v5882 = vand.u32 %v395, 4294901760
        %v5883 = vsub.f32 %v395, %v5882
        %v5884 = vand.u32 %v5883, 4294901760
        %5885 = vmatpush.msra.mxu0 %v5884
        %v5886 = vand.u32 %v379, 4294901760
        %v5887 = vsub.f32 %v379, %v5886
        %v5888 = vand.u32 %v5887, 4294901760
        %5889 = vmatpush.msra.mxu0 %v5888
        %v5890 = vand.u32 %v363, 4294901760
        %v5891 = vsub.f32 %v363, %v5890
        %v5892 = vand.u32 %v5891, 4294901760
        %5893 = vmatpush.msra.mxu0 %v5892
        %v5894 = vand.u32 %v347, 4294901760
        %v5895 = vsub.f32 %v347, %v5894
        %v5896 = vand.u32 %v5895, 4294901760
        %5897 = vmatpush.msra.mxu0 %v5896
        %v5898 = vand.u32 %v331, 4294901760
        %v5899 = vsub.f32 %v331, %v5898
        %v5900 = vand.u32 %v5899, 4294901760
        %5901 = vmatpush.msra.mxu0 %v5900
        %v5902 = vand.u32 %v315, 4294901760
        %v5903 = vsub.f32 %v315, %v5902
        %v5904 = vand.u32 %v5903, 4294901760
        %5905 = vmatpush.msra.mxu0 %v5904
        %v5906 = vand.u32 %v299, 4294901760
        %v5907 = vsub.f32 %v299, %v5906
        %v5908 = vand.u32 %v5907, 4294901760
        %5909 = vmatpush.msra.mxu0 %v5908
        %v5910 = vand.u32 %v283, 4294901760
        %v5911 = vsub.f32 %v283, %v5910
        %v5912 = vand.u32 %v5911, 4294901760
        %5913 = vmatpush.msra.mxu0 %v5912
        %v5914 = vand.u32 %v267, 4294901760
        %v5915 = vsub.f32 %v267, %v5914
        %v5916 = vand.u32 %v5915, 4294901760
        %5917 = vmatpush.msra.mxu0 %v5916
        %v5918 = vand.u32 %v251, 4294901760
        %v5919 = vsub.f32 %v251, %v5918
        %v5920 = vand.u32 %v5919, 4294901760
        %5921 = vmatpush.msra.mxu0 %v5920
        %v5922 = vand.u32 %v235, 4294901760
        %v5923 = vsub.f32 %v235, %v5922
        %v5924 = vand.u32 %v5923, 4294901760
        %5925 = vmatpush.msra.mxu0 %v5924
        %v5926 = vand.u32 %v219, 4294901760
        %5927 = vmatmul.f32.gmra.mxu0 %v5926
        %v5928 = vpop.f32.mrf.mxu0
        %v5929 = vadd.f32 %v5860, %v5928
        %5930 = vdwg.mxu0
        %v5931 = vand.u32 %v475, 4294901760
        %5932 = vmatpush.msra.mxu0 %v5931
        %v5933 = vand.u32 %v459, 4294901760
        %5934 = vmatpush.msra.mxu0 %v5933
        %v5935 = vand.u32 %v443, 4294901760
        %5936 = vmatpush.msra.mxu0 %v5935
        %v5937 = vand.u32 %v427, 4294901760
        %5938 = vmatpush.msra.mxu0 %v5937
        %v5939 = vand.u32 %v411, 4294901760
        %5940 = vmatpush.msra.mxu0 %v5939
        %v5941 = vand.u32 %v395, 4294901760
        %5942 = vmatpush.msra.mxu0 %v5941
        %v5943 = vand.u32 %v379, 4294901760
        %5944 = vmatpush.msra.mxu0 %v5943
        %v5945 = vand.u32 %v363, 4294901760
        %5946 = vmatpush.msra.mxu0 %v5945
        %v5947 = vand.u32 %v347, 4294901760
        %5948 = vmatpush.msra.mxu0 %v5947
        %v5949 = vand.u32 %v331, 4294901760
        %5950 = vmatpush.msra.mxu0 %v5949
        %v5951 = vand.u32 %v315, 4294901760
        %5952 = vmatpush.msra.mxu0 %v5951
        %v5953 = vand.u32 %v299, 4294901760
        %5954 = vmatpush.msra.mxu0 %v5953
        %v5955 = vand.u32 %v283, 4294901760
        %5956 = vmatpush.msra.mxu0 %v5955
        %v5957 = vand.u32 %v267, 4294901760
        %5958 = vmatpush.msra.mxu0 %v5957
        %v5959 = vand.u32 %v251, 4294901760
        %5960 = vmatpush.msra.mxu0 %v5959
        %v5961 = vand.u32 %v235, 4294901760
        %5962 = vmatpush.msra.mxu0 %v5961
        %v5963 = vand.u32 %v219, 4294901760
        %5964 = vmatmul.f32.gmra.mxu0 %v5963
        %v5965 = vpop.f32.mrf.mxu0
        %v5966 = vadd.f32 %v5929, %v5965
        %5967 = vdwg.mxu0
        %v5968 = vand.u32 2147483647, %v851
        %vm5969 = vcmp.le.f32.partialorder %v5968, 0.7853982
        %vm5970 = vcmp.lt.s32.totalorder %v851, 0
        %v5971 = vand.u32 %v851, 2139095040
        %v5972 = vshrl.u32 %v5971, 23
        %v5973 = vsub.s32 %v5972, 127
        %v5974 = vand.u32 2147483647, %v851
        %v5975 = vand.u32 %v5974, 8388607
        %v5976 = vor.u32 %v5975, 8388608
        %v5977 = vsub.s32 0, %v5976
        %v5978 = vadd.s32 %v5973, 1
        %vm5979 = vcmp.gt.s32.totalorder %v5978, 0
        %v5980 = vsel %vm5979, %v5978, 0
        %v5981 = vshrl.u32 %v5980, 5
        %v5982 = vand.u32 %v5980, 31
        %v5983 = vsub.s32 32, %v5982
        %v5984 = vshrl.u32 683565275, %v5983
        %v5985 = vshll.u32 683565275, %v5982
        %v5986 = vshrl.u32 2475754826, %v5983
        %v5987 = vor.u32 %v5985, %v5986
        %v5988 = vshll.u32 2475754826, %v5982
        %v5989 = vshrl.u32 2131351028, %v5983
        %v5990 = vor.u32 %v5988, %v5989
        %v5991 = vshll.u32 2131351028, %v5982
        %v5992 = vshrl.u32 2102212464, %v5983
        %v5993 = vor.u32 %v5991, %v5992
        %v5994 = vshll.u32 2102212464, %v5982
        %v5995 = vshrl.u32 920167782, %v5983
        %v5996 = vor.u32 %v5994, %v5995
        %v5997 = vshll.u32 920167782, %v5982
        %v5998 = vshrl.u32 1326507024, %v5983
        %v5999 = vor.u32 %v5997, %v5998
        %vm6000 = vcmp.lt.s32.totalorder %v5981, 1
        %vm6001 = vcmp.lt.s32.totalorder %v5981, 2
        %vm6002 = vcmp.lt.s32.totalorder %v5981, 3
        %vm6003 = vcmp.lt.s32.totalorder %v5981, 4
        %v6004 = vsel %vm6000, %v5984, %v5987
        %v6005 = vsel %vm6003, %v5993, 2102212464
        %v6006 = vsel %vm6002, %v5990, %v6005
        %v6007 = vsel %vm6001, %v6004, %v6006
        %v6008 = vsel %vm6000, %v5987, %v5990
        %v6009 = vsel %vm6003, %v5996, 920167782
        %v6010 = vsel %vm6002, %v5993, %v6009
        %v6011 = vsel %vm6001, %v6008, %v6010
        %v6012 = vsel %vm6000, %v5990, %v5993
        %v6013 = vsel %vm6003, %v5999, 1326507024
        %v6014 = vsel %vm6002, %v5996, %v6013
        %v6015 = vsel %vm6001, %v6012, %v6014
        %v6016 = vshll.u32 %v5976, 8
        %v6017 = vand.u32 %v6016, 65535
        %v6018 = vshrl.u32 %v6016, 16
        %v6019 = vand.u32 %v6015, 65535
        %v6020 = vshrl.u32 %v6015, 16
        %v6021 = vmul.u32 %v6017, %v6019
        %v6022 = vmul.u32 %v6017, %v6020
        %v6023 = vmul.u32 %v6018, %v6019
        %v6024 = vmul.u32 %v6018, %v6020
        %v6025 = vshll.u32 %v6022, 16
        %v6026 = vshrl.u32 %v6022, 16
        %v6027 = vshll.u32 %v6023, 16
        %v6028 = vshrl.u32 %v6023, 16
        %vm6029 = vc.u32 %v6021, %v6025
        %v6030 = vsel %vm6029, 1, 0
        %v6031 = vadd.s32 %v6021, %v6025
        %v6032 = vadd.s32 %v6024, %v6030
        %vm6033 = vc.u32 %v6031, %v6027
        %v6034 = vsel %vm6033, 1, 0
        %v6035 = vadd.s32 %v6031, %v6027
        %v6036 = vadd.s32 %v6032, %v6034
        %v6037 = vadd.s32 %v6036, %v6026
        %v6038 = vadd.s32 %v6037, %v6028
        %v6039 = vand.u32 %v6016, 65535
        %v6040 = vshrl.u32 %v6016, 16
        %v6041 = vand.u32 %v6011, 65535
        %v6042 = vshrl.u32 %v6011, 16
        %v6043 = vmul.u32 %v6039, %v6041
        %v6044 = vmul.u32 %v6039, %v6042
        %v6045 = vmul.u32 %v6040, %v6041
        %v6046 = vmul.u32 %v6040, %v6042
        %v6047 = vshll.u32 %v6044, 16
        %v6048 = vshrl.u32 %v6044, 16
        %v6049 = vshll.u32 %v6045, 16
        %v6050 = vshrl.u32 %v6045, 16
        %vm6051 = vc.u32 %v6043, %v6047
        %v6052 = vsel %vm6051, 1, 0
        %v6053 = vadd.s32 %v6043, %v6047
        %v6054 = vadd.s32 %v6046, %v6052
        %vm6055 = vc.u32 %v6053, %v6049
        %v6056 = vsel %vm6055, 1, 0
        %v6057 = vadd.s32 %v6053, %v6049
        %v6058 = vadd.s32 %v6054, %v6056
        %v6059 = vadd.s32 %v6058, %v6048
        %v6060 = vadd.s32 %v6059, %v6050
        %v6061 = vmul.u32 %v6016, %v6007
        %v6062 = vadd.s32 %v6038, %v6057
        %vm6063 = vc.u32 %v6038, %v6057
        %v6064 = vadd.s32 %v6060, 1
        %v6065 = vsel %vm6063, %v6064, %v6060
        %v6066 = vadd.s32 %v6061, %v6065
        %v6067 = vadd.s32 %v6066, 536870912
        %v6068 = vshrl.u32 %v6067, 30
        %v6069 = vshll.u32 %v6068, 30
        %v6070 = vsub.s32 %v6066, %v6069
        %vm6071 = vcmp.lt.s32.totalorder %v6070, 0
        %v6072 = vsub.s32 0, %v6070
        %v6073 = vsel %vm6071, %v6072, %v6070
        %v6074 = vclz %v6073
        %v6075 = vsub.s32 %v6074, 2
        %vm6076 = vcmp.gt.s32.totalorder 0, %v6075
        %v6077 = vsel %vm6076, 0, %v6075
        %v6078 = vsub.s32 32, %v6077
        %v6079 = vshll.u32 %v6070, %v6077
        %v6080 = vshrl.u32 %v6062, %v6078
        %v6081 = vor.u32 %v6079, %v6080
        %v6082 = vsub.s32 4294967266, %v6077
        %v6083 = vadd.s32 %v6082, 127
        %v6084 = vshll.u32 %v6083, 23
        %v6085 = vor.u32 4788187, %v6084
        %v6086 = vand.u32 2147483647, %v6085
        %v6088 = vcvt.s32.f32 %v6081
        %v6089 = vmul.f32 %v6088, %v6086
        %v6090 = vxor.u32 %v6089, 2147483648
        %v6091 = vsel %vm5970, %v6090, %v6089
        %v6092 = vsub.s32 4, %v6068
        %v6093 = vsel %vm5970, %v6092, %v6068
        %v6094 = vsel %vm5969, %v851, %v6091
        %v6095 = vsel %vm5969, 0, %v6093
        %v6096 = vmul.f32 %v6094, %v6094
        %v6097 = vmul.f32 %v6096, -0.001358992
        %v6098 = vadd.f32 %v6097, 0.041655596
        %v6099 = vmul.f32 %v6096, %v6098
        %v6100 = vadd.f32 %v6099, -0.4999988
        %v6101 = vmul.f32 %v6096, %v6100
        %v6102 = vadd.f32 1.0, %v6101
        %v6103 = vmul.f32 %v6094, %v6094
        %v6104 = vmul.f32 %v6103, -0.00019511016
        %v6105 = vadd.f32 %v6104, 0.008332121
        %v6106 = vmul.f32 %v6103, %v6105
        %v6107 = vadd.f32 %v6106, -0.16666654
        %v6108 = vmul.f32 %v6103, %v6107
        %v6109 = vadd.f32 %v6108, 1.0
        %v6110 = vmul.f32 %v6109, %v6094
        %vm6111 = vweird.f32 %v851
        %v6112 = vadd.s32 %v6095, 3
        %v6113 = vand.u32 %v6112, 3
        %vm6114 = vcmp.lt.s32.totalorder %v6113, 2
        %vm6115 = vcmp.eq.s32.totalorder %v6113, 0
        %v6116 = vxor.u32 %v6110, 2147483648
        %v6117 = vsel %vm6115, %v6102, %v6116
        %vm6118 = vcmp.eq.s32.totalorder %v6113, 2
        %v6119 = vxor.u32 %v6102, 2147483648
        %v6120 = vsel %vm6118, %v6119, %v6110
        %v6121 = vsel %vm6114, %v6117, %v6120
        %v6122 = vsel %vm6111, nan, %v6121
        %v6123 = vand.u32 2147483647, %v1192
        %vm6124 = vcmp.le.f32.partialorder %v6123, 0.7853982
        %vm6125 = vcmp.lt.s32.totalorder %v1192, 0
        %v6126 = vand.u32 %v1192, 2139095040
        %v6127 = vshrl.u32 %v6126, 23
        %v6128 = vsub.s32 %v6127, 127
        %v6129 = vand.u32 2147483647, %v1192
        %v6130 = vand.u32 %v6129, 8388607
        %v6131 = vor.u32 %v6130, 8388608
        %v6132 = vsub.s32 0, %v6131
        %v6133 = vadd.s32 %v6128, 1
        %vm6134 = vcmp.gt.s32.totalorder %v6133, 0
        %v6135 = vsel %vm6134, %v6133, 0
        %v6136 = vshrl.u32 %v6135, 5
        %v6137 = vand.u32 %v6135, 31
        %v6138 = vsub.s32 32, %v6137
        %v6139 = vshrl.u32 683565275, %v6138
        %v6140 = vshll.u32 683565275, %v6137
        %v6141 = vshrl.u32 2475754826, %v6138
        %v6142 = vor.u32 %v6140, %v6141
        %v6143 = vshll.u32 2475754826, %v6137
        %v6144 = vshrl.u32 2131351028, %v6138
        %v6145 = vor.u32 %v6143, %v6144
        %v6146 = vshll.u32 2131351028, %v6137
        %v6147 = vshrl.u32 2102212464, %v6138
        %v6148 = vor.u32 %v6146, %v6147
        %v6149 = vshll.u32 2102212464, %v6137
        %v6150 = vshrl.u32 920167782, %v6138
        %v6151 = vor.u32 %v6149, %v6150
        %v6152 = vshll.u32 920167782, %v6137
        %v6153 = vshrl.u32 1326507024, %v6138
        %v6154 = vor.u32 %v6152, %v6153
        %vm6155 = vcmp.lt.s32.totalorder %v6136, 1
        %vm6156 = vcmp.lt.s32.totalorder %v6136, 2
        %vm6157 = vcmp.lt.s32.totalorder %v6136, 3
        %vm6158 = vcmp.lt.s32.totalorder %v6136, 4
        %v6159 = vsel %vm6155, %v6139, %v6142
        %v6160 = vsel %vm6158, %v6148, 2102212464
        %v6161 = vsel %vm6157, %v6145, %v6160
        %v6162 = vsel %vm6156, %v6159, %v6161
        %v6163 = vsel %vm6155, %v6142, %v6145
        %v6164 = vsel %vm6158, %v6151, 920167782
        %v6165 = vsel %vm6157, %v6148, %v6164
        %v6166 = vsel %vm6156, %v6163, %v6165
        %v6167 = vsel %vm6155, %v6145, %v6148
        %v6168 = vsel %vm6158, %v6154, 1326507024
        %v6169 = vsel %vm6157, %v6151, %v6168
        %v6170 = vsel %vm6156, %v6167, %v6169
        %v6171 = vshll.u32 %v6131, 8
        %v6172 = vand.u32 %v6171, 65535
        %v6173 = vshrl.u32 %v6171, 16
        %v6174 = vand.u32 %v6170, 65535
        %v6175 = vshrl.u32 %v6170, 16
        %v6176 = vmul.u32 %v6172, %v6174
        %v6177 = vmul.u32 %v6172, %v6175
        %v6178 = vmul.u32 %v6173, %v6174
        %v6179 = vmul.u32 %v6173, %v6175
        %v6180 = vshll.u32 %v6177, 16
        %v6181 = vshrl.u32 %v6177, 16
        %v6182 = vshll.u32 %v6178, 16
        %v6183 = vshrl.u32 %v6178, 16
        %vm6184 = vc.u32 %v6176, %v6180
        %v6185 = vsel %vm6184, 1, 0
        %v6186 = vadd.s32 %v6176, %v6180
        %v6187 = vadd.s32 %v6179, %v6185
        %vm6188 = vc.u32 %v6186, %v6182
        %v6189 = vsel %vm6188, 1, 0
        %v6190 = vadd.s32 %v6186, %v6182
        %v6191 = vadd.s32 %v6187, %v6189
        %v6192 = vadd.s32 %v6191, %v6181
        %v6193 = vadd.s32 %v6192, %v6183
        %v6194 = vand.u32 %v6171, 65535
        %v6195 = vshrl.u32 %v6171, 16
        %v6196 = vand.u32 %v6166, 65535
        %v6197 = vshrl.u32 %v6166, 16
        %v6198 = vmul.u32 %v6194, %v6196
        %v6199 = vmul.u32 %v6194, %v6197
        %v6200 = vmul.u32 %v6195, %v6196
        %v6201 = vmul.u32 %v6195, %v6197
        %v6202 = vshll.u32 %v6199, 16
        %v6203 = vshrl.u32 %v6199, 16
        %v6204 = vshll.u32 %v6200, 16
        %v6205 = vshrl.u32 %v6200, 16
        %vm6206 = vc.u32 %v6198, %v6202
        %v6207 = vsel %vm6206, 1, 0
        %v6208 = vadd.s32 %v6198, %v6202
        %v6209 = vadd.s32 %v6201, %v6207
        %vm6210 = vc.u32 %v6208, %v6204
        %v6211 = vsel %vm6210, 1, 0
        %v6212 = vadd.s32 %v6208, %v6204
        %v6213 = vadd.s32 %v6209, %v6211
        %v6214 = vadd.s32 %v6213, %v6203
        %v6215 = vadd.s32 %v6214, %v6205
        %v6216 = vmul.u32 %v6171, %v6162
        %v6217 = vadd.s32 %v6193, %v6212
        %vm6218 = vc.u32 %v6193, %v6212
        %v6219 = vadd.s32 %v6215, 1
        %v6220 = vsel %vm6218, %v6219, %v6215
        %v6221 = vadd.s32 %v6216, %v6220
        %v6222 = vadd.s32 %v6221, 536870912
        %v6223 = vshrl.u32 %v6222, 30
        %v6224 = vshll.u32 %v6223, 30
        %v6225 = vsub.s32 %v6221, %v6224
        %vm6226 = vcmp.lt.s32.totalorder %v6225, 0
        %v6227 = vsub.s32 0, %v6225
        %v6228 = vsel %vm6226, %v6227, %v6225
        %v6229 = vclz %v6228
        %v6230 = vsub.s32 %v6229, 2
        %vm6231 = vcmp.gt.s32.totalorder 0, %v6230
        %v6232 = vsel %vm6231, 0, %v6230
        %v6233 = vsub.s32 32, %v6232
        %v6234 = vshll.u32 %v6225, %v6232
        %v6235 = vshrl.u32 %v6217, %v6233
        %v6236 = vor.u32 %v6234, %v6235
        %v6237 = vsub.s32 4294967266, %v6232
        %v6238 = vadd.s32 %v6237, 127
        %v6239 = vshll.u32 %v6238, 23
        %v6240 = vor.u32 4788187, %v6239
        %v6241 = vand.u32 2147483647, %v6240
        %v6243 = vcvt.s32.f32 %v6236
        %v6244 = vmul.f32 %v6243, %v6241
        %v6245 = vxor.u32 %v6244, 2147483648
        %v6246 = vsel %vm6125, %v6245, %v6244
        %v6247 = vsub.s32 4, %v6223
        %v6248 = vsel %vm6125, %v6247, %v6223
        %v6249 = vsel %vm6124, %v1192, %v6246
        %v6250 = vsel %vm6124, 0, %v6248
        %v6251 = vmul.f32 %v6249, %v6249
        %v6252 = vmul.f32 %v6251, -0.001358992
        %v6253 = vadd.f32 %v6252, 0.041655596
        %v6254 = vmul.f32 %v6251, %v6253
        %v6255 = vadd.f32 %v6254, -0.4999988
        %v6256 = vmul.f32 %v6251, %v6255
        %v6257 = vadd.f32 1.0, %v6256
        %v6258 = vmul.f32 %v6249, %v6249
        %v6259 = vmul.f32 %v6258, -0.00019511016
        %v6260 = vadd.f32 %v6259, 0.008332121
        %v6261 = vmul.f32 %v6258, %v6260
        %v6262 = vadd.f32 %v6261, -0.16666654
        %v6263 = vmul.f32 %v6258, %v6262
        %v6264 = vadd.f32 %v6263, 1.0
        %v6265 = vmul.f32 %v6264, %v6249
        %vm6266 = vweird.f32 %v1192
        %v6267 = vadd.s32 %v6250, 3
        %v6268 = vand.u32 %v6267, 3
        %vm6269 = vcmp.lt.s32.totalorder %v6268, 2
        %vm6270 = vcmp.eq.s32.totalorder %v6268, 0
        %v6271 = vxor.u32 %v6265, 2147483648
        %v6272 = vsel %vm6270, %v6257, %v6271
        %vm6273 = vcmp.eq.s32.totalorder %v6268, 2
        %v6274 = vxor.u32 %v6257, 2147483648
        %v6275 = vsel %vm6273, %v6274, %v6265
        %v6276 = vsel %vm6269, %v6272, %v6275
        %v6277 = vsel %vm6266, nan, %v6276
        %v6278 = vand.u32 2147483647, %v1533
        %vm6279 = vcmp.le.f32.partialorder %v6278, 0.7853982
        %vm6280 = vcmp.lt.s32.totalorder %v1533, 0
        %v6281 = vand.u32 %v1533, 2139095040
        %v6282 = vshrl.u32 %v6281, 23
        %v6283 = vsub.s32 %v6282, 127
        %v6284 = vand.u32 2147483647, %v1533
        %v6285 = vand.u32 %v6284, 8388607
        %v6286 = vor.u32 %v6285, 8388608
        %v6287 = vsub.s32 0, %v6286
        %v6288 = vadd.s32 %v6283, 1
        %vm6289 = vcmp.gt.s32.totalorder %v6288, 0
        %v6290 = vsel %vm6289, %v6288, 0
        %v6291 = vshrl.u32 %v6290, 5
        %v6292 = vand.u32 %v6290, 31
        %v6293 = vsub.s32 32, %v6292
        %v6294 = vshrl.u32 683565275, %v6293
        %v6295 = vshll.u32 683565275, %v6292
        %v6296 = vshrl.u32 2475754826, %v6293
        %v6297 = vor.u32 %v6295, %v6296
        %v6298 = vshll.u32 2475754826, %v6292
        %v6299 = vshrl.u32 2131351028, %v6293
        %v6300 = vor.u32 %v6298, %v6299
        %v6301 = vshll.u32 2131351028, %v6292
        %v6302 = vshrl.u32 2102212464, %v6293
        %v6303 = vor.u32 %v6301, %v6302
        %v6304 = vshll.u32 2102212464, %v6292
        %v6305 = vshrl.u32 920167782, %v6293
        %v6306 = vor.u32 %v6304, %v6305
        %v6307 = vshll.u32 920167782, %v6292
        %v6308 = vshrl.u32 1326507024, %v6293
        %v6309 = vor.u32 %v6307, %v6308
        %vm6310 = vcmp.lt.s32.totalorder %v6291, 1
        %vm6311 = vcmp.lt.s32.totalorder %v6291, 2
        %vm6312 = vcmp.lt.s32.totalorder %v6291, 3
        %vm6313 = vcmp.lt.s32.totalorder %v6291, 4
        %v6314 = vsel %vm6310, %v6294, %v6297
        %v6315 = vsel %vm6313, %v6303, 2102212464
        %v6316 = vsel %vm6312, %v6300, %v6315
        %v6317 = vsel %vm6311, %v6314, %v6316
        %v6318 = vsel %vm6310, %v6297, %v6300
        %v6319 = vsel %vm6313, %v6306, 920167782
        %v6320 = vsel %vm6312, %v6303, %v6319
        %v6321 = vsel %vm6311, %v6318, %v6320
        %v6322 = vsel %vm6310, %v6300, %v6303
        %v6323 = vsel %vm6313, %v6309, 1326507024
        %v6324 = vsel %vm6312, %v6306, %v6323
        %v6325 = vsel %vm6311, %v6322, %v6324
        %v6326 = vshll.u32 %v6286, 8
        %v6327 = vand.u32 %v6326, 65535
        %v6328 = vshrl.u32 %v6326, 16
        %v6329 = vand.u32 %v6325, 65535
        %v6330 = vshrl.u32 %v6325, 16
        %v6331 = vmul.u32 %v6327, %v6329
        %v6332 = vmul.u32 %v6327, %v6330
        %v6333 = vmul.u32 %v6328, %v6329
        %v6334 = vmul.u32 %v6328, %v6330
        %v6335 = vshll.u32 %v6332, 16
        %v6336 = vshrl.u32 %v6332, 16
        %v6337 = vshll.u32 %v6333, 16
        %v6338 = vshrl.u32 %v6333, 16
        %vm6339 = vc.u32 %v6331, %v6335
        %v6340 = vsel %vm6339, 1, 0
        %v6341 = vadd.s32 %v6331, %v6335
        %v6342 = vadd.s32 %v6334, %v6340
        %vm6343 = vc.u32 %v6341, %v6337
        %v6344 = vsel %vm6343, 1, 0
        %v6345 = vadd.s32 %v6341, %v6337
        %v6346 = vadd.s32 %v6342, %v6344
        %v6347 = vadd.s32 %v6346, %v6336
        %v6348 = vadd.s32 %v6347, %v6338
        %v6349 = vand.u32 %v6326, 65535
        %v6350 = vshrl.u32 %v6326, 16
        %v6351 = vand.u32 %v6321, 65535
        %v6352 = vshrl.u32 %v6321, 16
        %v6353 = vmul.u32 %v6349, %v6351
        %v6354 = vmul.u32 %v6349, %v6352
        %v6355 = vmul.u32 %v6350, %v6351
        %v6356 = vmul.u32 %v6350, %v6352
        %v6357 = vshll.u32 %v6354, 16
        %v6358 = vshrl.u32 %v6354, 16
        %v6359 = vshll.u32 %v6355, 16
        %v6360 = vshrl.u32 %v6355, 16
        %vm6361 = vc.u32 %v6353, %v6357
        %v6362 = vsel %vm6361, 1, 0
        %v6363 = vadd.s32 %v6353, %v6357
        %v6364 = vadd.s32 %v6356, %v6362
        %vm6365 = vc.u32 %v6363, %v6359
        %v6366 = vsel %vm6365, 1, 0
        %v6367 = vadd.s32 %v6363, %v6359
        %v6368 = vadd.s32 %v6364, %v6366
        %v6369 = vadd.s32 %v6368, %v6358
        %v6370 = vadd.s32 %v6369, %v6360
        %v6371 = vmul.u32 %v6326, %v6317
        %v6372 = vadd.s32 %v6348, %v6367
        %vm6373 = vc.u32 %v6348, %v6367
        %v6374 = vadd.s32 %v6370, 1
        %v6375 = vsel %vm6373, %v6374, %v6370
        %v6376 = vadd.s32 %v6371, %v6375
        %v6377 = vadd.s32 %v6376, 536870912
        %v6378 = vshrl.u32 %v6377, 30
        %v6379 = vshll.u32 %v6378, 30
        %v6380 = vsub.s32 %v6376, %v6379
        %vm6381 = vcmp.lt.s32.totalorder %v6380, 0
        %v6382 = vsub.s32 0, %v6380
        %v6383 = vsel %vm6381, %v6382, %v6380
        %v6384 = vclz %v6383
        %v6385 = vsub.s32 %v6384, 2
        %vm6386 = vcmp.gt.s32.totalorder 0, %v6385
        %v6387 = vsel %vm6386, 0, %v6385
        %v6388 = vsub.s32 32, %v6387
        %v6389 = vshll.u32 %v6380, %v6387
        %v6390 = vshrl.u32 %v6372, %v6388
        %v6391 = vor.u32 %v6389, %v6390
        %v6392 = vsub.s32 4294967266, %v6387
        %v6393 = vadd.s32 %v6392, 127
        %v6394 = vshll.u32 %v6393, 23
        %v6395 = vor.u32 4788187, %v6394
        %v6396 = vand.u32 2147483647, %v6395
        %v6398 = vcvt.s32.f32 %v6391
        %v6399 = vmul.f32 %v6398, %v6396
        %v6400 = vxor.u32 %v6399, 2147483648
        %v6401 = vsel %vm6280, %v6400, %v6399
        %v6402 = vsub.s32 4, %v6378
        %v6403 = vsel %vm6280, %v6402, %v6378
        %v6404 = vsel %vm6279, %v1533, %v6401
        %v6405 = vsel %vm6279, 0, %v6403
        %v6406 = vmul.f32 %v6404, %v6404
        %v6407 = vmul.f32 %v6406, -0.001358992
        %v6408 = vadd.f32 %v6407, 0.041655596
        %v6409 = vmul.f32 %v6406, %v6408
        %v6410 = vadd.f32 %v6409, -0.4999988
        %v6411 = vmul.f32 %v6406, %v6410
        %v6412 = vadd.f32 1.0, %v6411
        %v6413 = vmul.f32 %v6404, %v6404
        %v6414 = vmul.f32 %v6413, -0.00019511016
        %v6415 = vadd.f32 %v6414, 0.008332121
        %v6416 = vmul.f32 %v6413, %v6415
        %v6417 = vadd.f32 %v6416, -0.16666654
        %v6418 = vmul.f32 %v6413, %v6417
        %v6419 = vadd.f32 %v6418, 1.0
        %v6420 = vmul.f32 %v6419, %v6404
        %vm6421 = vweird.f32 %v1533
        %v6422 = vadd.s32 %v6405, 3
        %v6423 = vand.u32 %v6422, 3
        %vm6424 = vcmp.lt.s32.totalorder %v6423, 2
        %vm6425 = vcmp.eq.s32.totalorder %v6423, 0
        %v6426 = vxor.u32 %v6420, 2147483648
        %v6427 = vsel %vm6425, %v6412, %v6426
        %vm6428 = vcmp.eq.s32.totalorder %v6423, 2
        %v6429 = vxor.u32 %v6412, 2147483648
        %v6430 = vsel %vm6428, %v6429, %v6420
        %v6431 = vsel %vm6424, %v6427, %v6430
        %v6432 = vsel %vm6421, nan, %v6431
        %v6433 = vand.u32 2147483647, %v1874
        %vm6434 = vcmp.le.f32.partialorder %v6433, 0.7853982
        %vm6435 = vcmp.lt.s32.totalorder %v1874, 0
        %v6436 = vand.u32 %v1874, 2139095040
        %v6437 = vshrl.u32 %v6436, 23
        %v6438 = vsub.s32 %v6437, 127
        %v6439 = vand.u32 2147483647, %v1874
        %v6440 = vand.u32 %v6439, 8388607
        %v6441 = vor.u32 %v6440, 8388608
        %v6442 = vsub.s32 0, %v6441
        %v6443 = vadd.s32 %v6438, 1
        %vm6444 = vcmp.gt.s32.totalorder %v6443, 0
        %v6445 = vsel %vm6444, %v6443, 0
        %v6446 = vshrl.u32 %v6445, 5
        %v6447 = vand.u32 %v6445, 31
        %v6448 = vsub.s32 32, %v6447
        %v6449 = vshrl.u32 683565275, %v6448
        %v6450 = vshll.u32 683565275, %v6447
        %v6451 = vshrl.u32 2475754826, %v6448
        %v6452 = vor.u32 %v6450, %v6451
        %v6453 = vshll.u32 2475754826, %v6447
        %v6454 = vshrl.u32 2131351028, %v6448
        %v6455 = vor.u32 %v6453, %v6454
        %v6456 = vshll.u32 2131351028, %v6447
        %v6457 = vshrl.u32 2102212464, %v6448
        %v6458 = vor.u32 %v6456, %v6457
        %v6459 = vshll.u32 2102212464, %v6447
        %v6460 = vshrl.u32 920167782, %v6448
        %v6461 = vor.u32 %v6459, %v6460
        %v6462 = vshll.u32 920167782, %v6447
        %v6463 = vshrl.u32 1326507024, %v6448
        %v6464 = vor.u32 %v6462, %v6463
        %vm6465 = vcmp.lt.s32.totalorder %v6446, 1
        %vm6466 = vcmp.lt.s32.totalorder %v6446, 2
        %vm6467 = vcmp.lt.s32.totalorder %v6446, 3
        %vm6468 = vcmp.lt.s32.totalorder %v6446, 4
        %v6469 = vsel %vm6465, %v6449, %v6452
        %v6470 = vsel %vm6468, %v6458, 2102212464
        %v6471 = vsel %vm6467, %v6455, %v6470
        %v6472 = vsel %vm6466, %v6469, %v6471
        %v6473 = vsel %vm6465, %v6452, %v6455
        %v6474 = vsel %vm6468, %v6461, 920167782
        %v6475 = vsel %vm6467, %v6458, %v6474
        %v6476 = vsel %vm6466, %v6473, %v6475
        %v6477 = vsel %vm6465, %v6455, %v6458
        %v6478 = vsel %vm6468, %v6464, 1326507024
        %v6479 = vsel %vm6467, %v6461, %v6478
        %v6480 = vsel %vm6466, %v6477, %v6479
        %v6481 = vshll.u32 %v6441, 8
        %v6482 = vand.u32 %v6481, 65535
        %v6483 = vshrl.u32 %v6481, 16
        %v6484 = vand.u32 %v6480, 65535
        %v6485 = vshrl.u32 %v6480, 16
        %v6486 = vmul.u32 %v6482, %v6484
        %v6487 = vmul.u32 %v6482, %v6485
        %v6488 = vmul.u32 %v6483, %v6484
        %v6489 = vmul.u32 %v6483, %v6485
        %v6490 = vshll.u32 %v6487, 16
        %v6491 = vshrl.u32 %v6487, 16
        %v6492 = vshll.u32 %v6488, 16
        %v6493 = vshrl.u32 %v6488, 16
        %vm6494 = vc.u32 %v6486, %v6490
        %v6495 = vsel %vm6494, 1, 0
        %v6496 = vadd.s32 %v6486, %v6490
        %v6497 = vadd.s32 %v6489, %v6495
        %vm6498 = vc.u32 %v6496, %v6492
        %v6499 = vsel %vm6498, 1, 0
        %v6500 = vadd.s32 %v6496, %v6492
        %v6501 = vadd.s32 %v6497, %v6499
        %v6502 = vadd.s32 %v6501, %v6491
        %v6503 = vadd.s32 %v6502, %v6493
        %v6504 = vand.u32 %v6481, 65535
        %v6505 = vshrl.u32 %v6481, 16
        %v6506 = vand.u32 %v6476, 65535
        %v6507 = vshrl.u32 %v6476, 16
        %v6508 = vmul.u32 %v6504, %v6506
        %v6509 = vmul.u32 %v6504, %v6507
        %v6510 = vmul.u32 %v6505, %v6506
        %v6511 = vmul.u32 %v6505, %v6507
        %v6512 = vshll.u32 %v6509, 16
        %v6513 = vshrl.u32 %v6509, 16
        %v6514 = vshll.u32 %v6510, 16
        %v6515 = vshrl.u32 %v6510, 16
        %vm6516 = vc.u32 %v6508, %v6512
        %v6517 = vsel %vm6516, 1, 0
        %v6518 = vadd.s32 %v6508, %v6512
        %v6519 = vadd.s32 %v6511, %v6517
        %vm6520 = vc.u32 %v6518, %v6514
        %v6521 = vsel %vm6520, 1, 0
        %v6522 = vadd.s32 %v6518, %v6514
        %v6523 = vadd.s32 %v6519, %v6521
        %v6524 = vadd.s32 %v6523, %v6513
        %v6525 = vadd.s32 %v6524, %v6515
        %v6526 = vmul.u32 %v6481, %v6472
        %v6527 = vadd.s32 %v6503, %v6522
        %vm6528 = vc.u32 %v6503, %v6522
        %v6529 = vadd.s32 %v6525, 1
        %v6530 = vsel %vm6528, %v6529, %v6525
        %v6531 = vadd.s32 %v6526, %v6530
        %v6532 = vadd.s32 %v6531, 536870912
        %v6533 = vshrl.u32 %v6532, 30
        %v6534 = vshll.u32 %v6533, 30
        %v6535 = vsub.s32 %v6531, %v6534
        %vm6536 = vcmp.lt.s32.totalorder %v6535, 0
        %v6537 = vsub.s32 0, %v6535
        %v6538 = vsel %vm6536, %v6537, %v6535
        %v6539 = vclz %v6538
        %v6540 = vsub.s32 %v6539, 2
        %vm6541 = vcmp.gt.s32.totalorder 0, %v6540
        %v6542 = vsel %vm6541, 0, %v6540
        %v6543 = vsub.s32 32, %v6542
        %v6544 = vshll.u32 %v6535, %v6542
        %v6545 = vshrl.u32 %v6527, %v6543
        %v6546 = vor.u32 %v6544, %v6545
        %v6547 = vsub.s32 4294967266, %v6542
        %v6548 = vadd.s32 %v6547, 127
        %v6549 = vshll.u32 %v6548, 23
        %v6550 = vor.u32 4788187, %v6549
        %v6551 = vand.u32 2147483647, %v6550
        %v6553 = vcvt.s32.f32 %v6546
        %v6554 = vmul.f32 %v6553, %v6551
        %v6555 = vxor.u32 %v6554, 2147483648
        %v6556 = vsel %vm6435, %v6555, %v6554
        %v6557 = vsub.s32 4, %v6533
        %v6558 = vsel %vm6435, %v6557, %v6533
        %v6559 = vsel %vm6434, %v1874, %v6556
        %v6560 = vsel %vm6434, 0, %v6558
        %v6561 = vmul.f32 %v6559, %v6559
        %v6562 = vmul.f32 %v6561, -0.001358992
        %v6563 = vadd.f32 %v6562, 0.041655596
        %v6564 = vmul.f32 %v6561, %v6563
        %v6565 = vadd.f32 %v6564, -0.4999988
        %v6566 = vmul.f32 %v6561, %v6565
        %v6567 = vadd.f32 1.0, %v6566
        %v6568 = vmul.f32 %v6559, %v6559
        %v6569 = vmul.f32 %v6568, -0.00019511016
        %v6570 = vadd.f32 %v6569, 0.008332121
        %v6571 = vmul.f32 %v6568, %v6570
        %v6572 = vadd.f32 %v6571, -0.16666654
        %v6573 = vmul.f32 %v6568, %v6572
        %v6574 = vadd.f32 %v6573, 1.0
        %v6575 = vmul.f32 %v6574, %v6559
        %vm6576 = vweird.f32 %v1874
        %v6577 = vadd.s32 %v6560, 3
        %v6578 = vand.u32 %v6577, 3
        %vm6579 = vcmp.lt.s32.totalorder %v6578, 2
        %vm6580 = vcmp.eq.s32.totalorder %v6578, 0
        %v6581 = vxor.u32 %v6575, 2147483648
        %v6582 = vsel %vm6580, %v6567, %v6581
        %vm6583 = vcmp.eq.s32.totalorder %v6578, 2
        %v6584 = vxor.u32 %v6567, 2147483648
        %v6585 = vsel %vm6583, %v6584, %v6575
        %v6586 = vsel %vm6579, %v6582, %v6585
        %v6587 = vsel %vm6576, nan, %v6586
        %v6588 = vand.u32 2147483647, %v2215
        %vm6589 = vcmp.le.f32.partialorder %v6588, 0.7853982
        %vm6590 = vcmp.lt.s32.totalorder %v2215, 0
        %v6591 = vand.u32 %v2215, 2139095040
        %v6592 = vshrl.u32 %v6591, 23
        %v6593 = vsub.s32 %v6592, 127
        %v6594 = vand.u32 2147483647, %v2215
        %v6595 = vand.u32 %v6594, 8388607
        %v6596 = vor.u32 %v6595, 8388608
        %v6597 = vsub.s32 0, %v6596
        %v6598 = vadd.s32 %v6593, 1
        %vm6599 = vcmp.gt.s32.totalorder %v6598, 0
        %v6600 = vsel %vm6599, %v6598, 0
        %v6601 = vshrl.u32 %v6600, 5
        %v6602 = vand.u32 %v6600, 31
        %v6603 = vsub.s32 32, %v6602
        %v6604 = vshrl.u32 683565275, %v6603
        %v6605 = vshll.u32 683565275, %v6602
        %v6606 = vshrl.u32 2475754826, %v6603
        %v6607 = vor.u32 %v6605, %v6606
        %v6608 = vshll.u32 2475754826, %v6602
        %v6609 = vshrl.u32 2131351028, %v6603
        %v6610 = vor.u32 %v6608, %v6609
        %v6611 = vshll.u32 2131351028, %v6602
        %v6612 = vshrl.u32 2102212464, %v6603
        %v6613 = vor.u32 %v6611, %v6612
        %v6614 = vshll.u32 2102212464, %v6602
        %v6615 = vshrl.u32 920167782, %v6603
        %v6616 = vor.u32 %v6614, %v6615
        %v6617 = vshll.u32 920167782, %v6602
        %v6618 = vshrl.u32 1326507024, %v6603
        %v6619 = vor.u32 %v6617, %v6618
        %vm6620 = vcmp.lt.s32.totalorder %v6601, 1
        %vm6621 = vcmp.lt.s32.totalorder %v6601, 2
        %vm6622 = vcmp.lt.s32.totalorder %v6601, 3
        %vm6623 = vcmp.lt.s32.totalorder %v6601, 4
        %v6624 = vsel %vm6620, %v6604, %v6607
        %v6625 = vsel %vm6623, %v6613, 2102212464
        %v6626 = vsel %vm6622, %v6610, %v6625
        %v6627 = vsel %vm6621, %v6624, %v6626
        %v6628 = vsel %vm6620, %v6607, %v6610
        %v6629 = vsel %vm6623, %v6616, 920167782
        %v6630 = vsel %vm6622, %v6613, %v6629
        %v6631 = vsel %vm6621, %v6628, %v6630
        %v6632 = vsel %vm6620, %v6610, %v6613
        %v6633 = vsel %vm6623, %v6619, 1326507024
        %v6634 = vsel %vm6622, %v6616, %v6633
        %v6635 = vsel %vm6621, %v6632, %v6634
        %v6636 = vshll.u32 %v6596, 8
        %v6637 = vand.u32 %v6636, 65535
        %v6638 = vshrl.u32 %v6636, 16
        %v6639 = vand.u32 %v6635, 65535
        %v6640 = vshrl.u32 %v6635, 16
        %v6641 = vmul.u32 %v6637, %v6639
        %v6642 = vmul.u32 %v6637, %v6640
        %v6643 = vmul.u32 %v6638, %v6639
        %v6644 = vmul.u32 %v6638, %v6640
        %v6645 = vshll.u32 %v6642, 16
        %v6646 = vshrl.u32 %v6642, 16
        %v6647 = vshll.u32 %v6643, 16
        %v6648 = vshrl.u32 %v6643, 16
        %vm6649 = vc.u32 %v6641, %v6645
        %v6650 = vsel %vm6649, 1, 0
        %v6651 = vadd.s32 %v6641, %v6645
        %v6652 = vadd.s32 %v6644, %v6650
        %vm6653 = vc.u32 %v6651, %v6647
        %v6654 = vsel %vm6653, 1, 0
        %v6655 = vadd.s32 %v6651, %v6647
        %v6656 = vadd.s32 %v6652, %v6654
        %v6657 = vadd.s32 %v6656, %v6646
        %v6658 = vadd.s32 %v6657, %v6648
        %v6659 = vand.u32 %v6636, 65535
        %v6660 = vshrl.u32 %v6636, 16
        %v6661 = vand.u32 %v6631, 65535
        %v6662 = vshrl.u32 %v6631, 16
        %v6663 = vmul.u32 %v6659, %v6661
        %v6664 = vmul.u32 %v6659, %v6662
        %v6665 = vmul.u32 %v6660, %v6661
        %v6666 = vmul.u32 %v6660, %v6662
        %v6667 = vshll.u32 %v6664, 16
        %v6668 = vshrl.u32 %v6664, 16
        %v6669 = vshll.u32 %v6665, 16
        %v6670 = vshrl.u32 %v6665, 16
        %vm6671 = vc.u32 %v6663, %v6667
        %v6672 = vsel %vm6671, 1, 0
        %v6673 = vadd.s32 %v6663, %v6667
        %v6674 = vadd.s32 %v6666, %v6672
        %vm6675 = vc.u32 %v6673, %v6669
        %v6676 = vsel %vm6675, 1, 0
        %v6677 = vadd.s32 %v6673, %v6669
        %v6678 = vadd.s32 %v6674, %v6676
        %v6679 = vadd.s32 %v6678, %v6668
        %v6680 = vadd.s32 %v6679, %v6670
        %v6681 = vmul.u32 %v6636, %v6627
        %v6682 = vadd.s32 %v6658, %v6677
        %vm6683 = vc.u32 %v6658, %v6677
        %v6684 = vadd.s32 %v6680, 1
        %v6685 = vsel %vm6683, %v6684, %v6680
        %v6686 = vadd.s32 %v6681, %v6685
        %v6687 = vadd.s32 %v6686, 536870912
        %v6688 = vshrl.u32 %v6687, 30
        %v6689 = vshll.u32 %v6688, 30
        %v6690 = vsub.s32 %v6686, %v6689
        %vm6691 = vcmp.lt.s32.totalorder %v6690, 0
        %v6692 = vsub.s32 0, %v6690
        %v6693 = vsel %vm6691, %v6692, %v6690
        %v6694 = vclz %v6693
        %v6695 = vsub.s32 %v6694, 2
        %vm6696 = vcmp.gt.s32.totalorder 0, %v6695
        %v6697 = vsel %vm6696, 0, %v6695
        %v6698 = vsub.s32 32, %v6697
        %v6699 = vshll.u32 %v6690, %v6697
        %v6700 = vshrl.u32 %v6682, %v6698
        %v6701 = vor.u32 %v6699, %v6700
        %v6702 = vsub.s32 4294967266, %v6697
        %v6703 = vadd.s32 %v6702, 127
        %v6704 = vshll.u32 %v6703, 23
        %v6705 = vor.u32 4788187, %v6704
        %v6706 = vand.u32 2147483647, %v6705
        %v6708 = vcvt.s32.f32 %v6701
        %v6709 = vmul.f32 %v6708, %v6706
        %v6710 = vxor.u32 %v6709, 2147483648
        %v6711 = vsel %vm6590, %v6710, %v6709
        %v6712 = vsub.s32 4, %v6688
        %v6713 = vsel %vm6590, %v6712, %v6688
        %v6714 = vsel %vm6589, %v2215, %v6711
        %v6715 = vsel %vm6589, 0, %v6713
        %v6716 = vmul.f32 %v6714, %v6714
        %v6717 = vmul.f32 %v6716, -0.001358992
        %v6718 = vadd.f32 %v6717, 0.041655596
        %v6719 = vmul.f32 %v6716, %v6718
        %v6720 = vadd.f32 %v6719, -0.4999988
        %v6721 = vmul.f32 %v6716, %v6720
        %v6722 = vadd.f32 1.0, %v6721
        %v6723 = vmul.f32 %v6714, %v6714
        %v6724 = vmul.f32 %v6723, -0.00019511016
        %v6725 = vadd.f32 %v6724, 0.008332121
        %v6726 = vmul.f32 %v6723, %v6725
        %v6727 = vadd.f32 %v6726, -0.16666654
        %v6728 = vmul.f32 %v6723, %v6727
        %v6729 = vadd.f32 %v6728, 1.0
        %v6730 = vmul.f32 %v6729, %v6714
        %vm6731 = vweird.f32 %v2215
        %v6732 = vadd.s32 %v6715, 3
        %v6733 = vand.u32 %v6732, 3
        %vm6734 = vcmp.lt.s32.totalorder %v6733, 2
        %vm6735 = vcmp.eq.s32.totalorder %v6733, 0
        %v6736 = vxor.u32 %v6730, 2147483648
        %v6737 = vsel %vm6735, %v6722, %v6736
        %vm6738 = vcmp.eq.s32.totalorder %v6733, 2
        %v6739 = vxor.u32 %v6722, 2147483648
        %v6740 = vsel %vm6738, %v6739, %v6730
        %v6741 = vsel %vm6734, %v6737, %v6740
        %v6742 = vsel %vm6731, nan, %v6741
        %v6743 = vand.u32 2147483647, %v2556
        %vm6744 = vcmp.le.f32.partialorder %v6743, 0.7853982
        %vm6745 = vcmp.lt.s32.totalorder %v2556, 0
        %v6746 = vand.u32 %v2556, 2139095040
        %v6747 = vshrl.u32 %v6746, 23
        %v6748 = vsub.s32 %v6747, 127
        %v6749 = vand.u32 2147483647, %v2556
        %v6750 = vand.u32 %v6749, 8388607
        %v6751 = vor.u32 %v6750, 8388608
        %v6752 = vsub.s32 0, %v6751
        %v6753 = vadd.s32 %v6748, 1
        %vm6754 = vcmp.gt.s32.totalorder %v6753, 0
        %v6755 = vsel %vm6754, %v6753, 0
        %v6756 = vshrl.u32 %v6755, 5
        %v6757 = vand.u32 %v6755, 31
        %v6758 = vsub.s32 32, %v6757
        %v6759 = vshrl.u32 683565275, %v6758
        %v6760 = vshll.u32 683565275, %v6757
        %v6761 = vshrl.u32 2475754826, %v6758
        %v6762 = vor.u32 %v6760, %v6761
        %v6763 = vshll.u32 2475754826, %v6757
        %v6764 = vshrl.u32 2131351028, %v6758
        %v6765 = vor.u32 %v6763, %v6764
        %v6766 = vshll.u32 2131351028, %v6757
        %v6767 = vshrl.u32 2102212464, %v6758
        %v6768 = vor.u32 %v6766, %v6767
        %v6769 = vshll.u32 2102212464, %v6757
        %v6770 = vshrl.u32 920167782, %v6758
        %v6771 = vor.u32 %v6769, %v6770
        %v6772 = vshll.u32 920167782, %v6757
        %v6773 = vshrl.u32 1326507024, %v6758
        %v6774 = vor.u32 %v6772, %v6773
        %vm6775 = vcmp.lt.s32.totalorder %v6756, 1
        %vm6776 = vcmp.lt.s32.totalorder %v6756, 2
        %vm6777 = vcmp.lt.s32.totalorder %v6756, 3
        %vm6778 = vcmp.lt.s32.totalorder %v6756, 4
        %v6779 = vsel %vm6775, %v6759, %v6762
        %v6780 = vsel %vm6778, %v6768, 2102212464
        %v6781 = vsel %vm6777, %v6765, %v6780
        %v6782 = vsel %vm6776, %v6779, %v6781
        %v6783 = vsel %vm6775, %v6762, %v6765
        %v6784 = vsel %vm6778, %v6771, 920167782
        %v6785 = vsel %vm6777, %v6768, %v6784
        %v6786 = vsel %vm6776, %v6783, %v6785
        %v6787 = vsel %vm6775, %v6765, %v6768
        %v6788 = vsel %vm6778, %v6774, 1326507024
        %v6789 = vsel %vm6777, %v6771, %v6788
        %v6790 = vsel %vm6776, %v6787, %v6789
        %v6791 = vshll.u32 %v6751, 8
        %v6792 = vand.u32 %v6791, 65535
        %v6793 = vshrl.u32 %v6791, 16
        %v6794 = vand.u32 %v6790, 65535
        %v6795 = vshrl.u32 %v6790, 16
        %v6796 = vmul.u32 %v6792, %v6794
        %v6797 = vmul.u32 %v6792, %v6795
        %v6798 = vmul.u32 %v6793, %v6794
        %v6799 = vmul.u32 %v6793, %v6795
        %v6800 = vshll.u32 %v6797, 16
        %v6801 = vshrl.u32 %v6797, 16
        %v6802 = vshll.u32 %v6798, 16
        %v6803 = vshrl.u32 %v6798, 16
        %vm6804 = vc.u32 %v6796, %v6800
        %v6805 = vsel %vm6804, 1, 0
        %v6806 = vadd.s32 %v6796, %v6800
        %v6807 = vadd.s32 %v6799, %v6805
        %vm6808 = vc.u32 %v6806, %v6802
        %v6809 = vsel %vm6808, 1, 0
        %v6810 = vadd.s32 %v6806, %v6802
        %v6811 = vadd.s32 %v6807, %v6809
        %v6812 = vadd.s32 %v6811, %v6801
        %v6813 = vadd.s32 %v6812, %v6803
        %v6814 = vand.u32 %v6791, 65535
        %v6815 = vshrl.u32 %v6791, 16
        %v6816 = vand.u32 %v6786, 65535
        %v6817 = vshrl.u32 %v6786, 16
        %v6818 = vmul.u32 %v6814, %v6816
        %v6819 = vmul.u32 %v6814, %v6817
        %v6820 = vmul.u32 %v6815, %v6816
        %v6821 = vmul.u32 %v6815, %v6817
        %v6822 = vshll.u32 %v6819, 16
        %v6823 = vshrl.u32 %v6819, 16
        %v6824 = vshll.u32 %v6820, 16
        %v6825 = vshrl.u32 %v6820, 16
        %vm6826 = vc.u32 %v6818, %v6822
        %v6827 = vsel %vm6826, 1, 0
        %v6828 = vadd.s32 %v6818, %v6822
        %v6829 = vadd.s32 %v6821, %v6827
        %vm6830 = vc.u32 %v6828, %v6824
        %v6831 = vsel %vm6830, 1, 0
        %v6832 = vadd.s32 %v6828, %v6824
        %v6833 = vadd.s32 %v6829, %v6831
        %v6834 = vadd.s32 %v6833, %v6823
        %v6835 = vadd.s32 %v6834, %v6825
        %v6836 = vmul.u32 %v6791, %v6782
        %v6837 = vadd.s32 %v6813, %v6832
        %vm6838 = vc.u32 %v6813, %v6832
        %v6839 = vadd.s32 %v6835, 1
        %v6840 = vsel %vm6838, %v6839, %v6835
        %v6841 = vadd.s32 %v6836, %v6840
        %v6842 = vadd.s32 %v6841, 536870912
        %v6843 = vshrl.u32 %v6842, 30
        %v6844 = vshll.u32 %v6843, 30
        %v6845 = vsub.s32 %v6841, %v6844
        %vm6846 = vcmp.lt.s32.totalorder %v6845, 0
        %v6847 = vsub.s32 0, %v6845
        %v6848 = vsel %vm6846, %v6847, %v6845
        %v6849 = vclz %v6848
        %v6850 = vsub.s32 %v6849, 2
        %vm6851 = vcmp.gt.s32.totalorder 0, %v6850
        %v6852 = vsel %vm6851, 0, %v6850
        %v6853 = vsub.s32 32, %v6852
        %v6854 = vshll.u32 %v6845, %v6852
        %v6855 = vshrl.u32 %v6837, %v6853
        %v6856 = vor.u32 %v6854, %v6855
        %v6857 = vsub.s32 4294967266, %v6852
        %v6858 = vadd.s32 %v6857, 127
        %v6859 = vshll.u32 %v6858, 23
        %v6860 = vor.u32 4788187, %v6859
        %v6861 = vand.u32 2147483647, %v6860
        %v6863 = vcvt.s32.f32 %v6856
        %v6864 = vmul.f32 %v6863, %v6861
        %v6865 = vxor.u32 %v6864, 2147483648
        %v6866 = vsel %vm6745, %v6865, %v6864
        %v6867 = vsub.s32 4, %v6843
        %v6868 = vsel %vm6745, %v6867, %v6843
        %v6869 = vsel %vm6744, %v2556, %v6866
        %v6870 = vsel %vm6744, 0, %v6868
        %v6871 = vmul.f32 %v6869, %v6869
        %v6872 = vmul.f32 %v6871, -0.001358992
        %v6873 = vadd.f32 %v6872, 0.041655596
        %v6874 = vmul.f32 %v6871, %v6873
        %v6875 = vadd.f32 %v6874, -0.4999988
        %v6876 = vmul.f32 %v6871, %v6875
        %v6877 = vadd.f32 1.0, %v6876
        %v6878 = vmul.f32 %v6869, %v6869
        %v6879 = vmul.f32 %v6878, -0.00019511016
        %v6880 = vadd.f32 %v6879, 0.008332121
        %v6881 = vmul.f32 %v6878, %v6880
        %v6882 = vadd.f32 %v6881, -0.16666654
        %v6883 = vmul.f32 %v6878, %v6882
        %v6884 = vadd.f32 %v6883, 1.0
        %v6885 = vmul.f32 %v6884, %v6869
        %vm6886 = vweird.f32 %v2556
        %v6887 = vadd.s32 %v6870, 3
        %v6888 = vand.u32 %v6887, 3
        %vm6889 = vcmp.lt.s32.totalorder %v6888, 2
        %vm6890 = vcmp.eq.s32.totalorder %v6888, 0
        %v6891 = vxor.u32 %v6885, 2147483648
        %v6892 = vsel %vm6890, %v6877, %v6891
        %vm6893 = vcmp.eq.s32.totalorder %v6888, 2
        %v6894 = vxor.u32 %v6877, 2147483648
        %v6895 = vsel %vm6893, %v6894, %v6885
        %v6896 = vsel %vm6889, %v6892, %v6895
        %v6897 = vsel %vm6886, nan, %v6896
        %v6898 = vand.u32 2147483647, %v2897
        %vm6899 = vcmp.le.f32.partialorder %v6898, 0.7853982
        %vm6900 = vcmp.lt.s32.totalorder %v2897, 0
        %v6901 = vand.u32 %v2897, 2139095040
        %v6902 = vshrl.u32 %v6901, 23
        %v6903 = vsub.s32 %v6902, 127
        %v6904 = vand.u32 2147483647, %v2897
        %v6905 = vand.u32 %v6904, 8388607
        %v6906 = vor.u32 %v6905, 8388608
        %v6907 = vsub.s32 0, %v6906
        %v6908 = vadd.s32 %v6903, 1
        %vm6909 = vcmp.gt.s32.totalorder %v6908, 0
        %v6910 = vsel %vm6909, %v6908, 0
        %v6911 = vshrl.u32 %v6910, 5
        %v6912 = vand.u32 %v6910, 31
        %v6913 = vsub.s32 32, %v6912
        %v6914 = vshrl.u32 683565275, %v6913
        %v6915 = vshll.u32 683565275, %v6912
        %v6916 = vshrl.u32 2475754826, %v6913
        %v6917 = vor.u32 %v6915, %v6916
        %v6918 = vshll.u32 2475754826, %v6912
        %v6919 = vshrl.u32 2131351028, %v6913
        %v6920 = vor.u32 %v6918, %v6919
        %v6921 = vshll.u32 2131351028, %v6912
        %v6922 = vshrl.u32 2102212464, %v6913
        %v6923 = vor.u32 %v6921, %v6922
        %v6924 = vshll.u32 2102212464, %v6912
        %v6925 = vshrl.u32 920167782, %v6913
        %v6926 = vor.u32 %v6924, %v6925
        %v6927 = vshll.u32 920167782, %v6912
        %v6928 = vshrl.u32 1326507024, %v6913
        %v6929 = vor.u32 %v6927, %v6928
        %vm6930 = vcmp.lt.s32.totalorder %v6911, 1
        %vm6931 = vcmp.lt.s32.totalorder %v6911, 2
        %vm6932 = vcmp.lt.s32.totalorder %v6911, 3
        %vm6933 = vcmp.lt.s32.totalorder %v6911, 4
        %v6934 = vsel %vm6930, %v6914, %v6917
        %v6935 = vsel %vm6933, %v6923, 2102212464
        %v6936 = vsel %vm6932, %v6920, %v6935
        %v6937 = vsel %vm6931, %v6934, %v6936
        %v6938 = vsel %vm6930, %v6917, %v6920
        %v6939 = vsel %vm6933, %v6926, 920167782
        %v6940 = vsel %vm6932, %v6923, %v6939
        %v6941 = vsel %vm6931, %v6938, %v6940
        %v6942 = vsel %vm6930, %v6920, %v6923
        %v6943 = vsel %vm6933, %v6929, 1326507024
        %v6944 = vsel %vm6932, %v6926, %v6943
        %v6945 = vsel %vm6931, %v6942, %v6944
        %v6946 = vshll.u32 %v6906, 8
        %v6947 = vand.u32 %v6946, 65535
        %v6948 = vshrl.u32 %v6946, 16
        %v6949 = vand.u32 %v6945, 65535
        %v6950 = vshrl.u32 %v6945, 16
        %v6951 = vmul.u32 %v6947, %v6949
        %v6952 = vmul.u32 %v6947, %v6950
        %v6953 = vmul.u32 %v6948, %v6949
        %v6954 = vmul.u32 %v6948, %v6950
        %v6955 = vshll.u32 %v6952, 16
        %v6956 = vshrl.u32 %v6952, 16
        %v6957 = vshll.u32 %v6953, 16
        %v6958 = vshrl.u32 %v6953, 16
        %vm6959 = vc.u32 %v6951, %v6955
        %v6960 = vsel %vm6959, 1, 0
        %v6961 = vadd.s32 %v6951, %v6955
        %v6962 = vadd.s32 %v6954, %v6960
        %vm6963 = vc.u32 %v6961, %v6957
        %v6964 = vsel %vm6963, 1, 0
        %v6965 = vadd.s32 %v6961, %v6957
        %v6966 = vadd.s32 %v6962, %v6964
        %v6967 = vadd.s32 %v6966, %v6956
        %v6968 = vadd.s32 %v6967, %v6958
        %v6969 = vand.u32 %v6946, 65535
        %v6970 = vshrl.u32 %v6946, 16
        %v6971 = vand.u32 %v6941, 65535
        %v6972 = vshrl.u32 %v6941, 16
        %v6973 = vmul.u32 %v6969, %v6971
        %v6974 = vmul.u32 %v6969, %v6972
        %v6975 = vmul.u32 %v6970, %v6971
        %v6976 = vmul.u32 %v6970, %v6972
        %v6977 = vshll.u32 %v6974, 16
        %v6978 = vshrl.u32 %v6974, 16
        %v6979 = vshll.u32 %v6975, 16
        %v6980 = vshrl.u32 %v6975, 16
        %vm6981 = vc.u32 %v6973, %v6977
        %v6982 = vsel %vm6981, 1, 0
        %v6983 = vadd.s32 %v6973, %v6977
        %v6984 = vadd.s32 %v6976, %v6982
        %vm6985 = vc.u32 %v6983, %v6979
        %v6986 = vsel %vm6985, 1, 0
        %v6987 = vadd.s32 %v6983, %v6979
        %v6988 = vadd.s32 %v6984, %v6986
        %v6989 = vadd.s32 %v6988, %v6978
        %v6990 = vadd.s32 %v6989, %v6980
        %v6991 = vmul.u32 %v6946, %v6937
        %v6992 = vadd.s32 %v6968, %v6987
        %vm6993 = vc.u32 %v6968, %v6987
        %v6994 = vadd.s32 %v6990, 1
        %v6995 = vsel %vm6993, %v6994, %v6990
        %v6996 = vadd.s32 %v6991, %v6995
        %v6997 = vadd.s32 %v6996, 536870912
        %v6998 = vshrl.u32 %v6997, 30
        %v6999 = vshll.u32 %v6998, 30
        %v7000 = vsub.s32 %v6996, %v6999
        %vm7001 = vcmp.lt.s32.totalorder %v7000, 0
        %v7002 = vsub.s32 0, %v7000
        %v7003 = vsel %vm7001, %v7002, %v7000
        %v7004 = vclz %v7003
        %v7005 = vsub.s32 %v7004, 2
        %vm7006 = vcmp.gt.s32.totalorder 0, %v7005
        %v7007 = vsel %vm7006, 0, %v7005
        %v7008 = vsub.s32 32, %v7007
        %v7009 = vshll.u32 %v7000, %v7007
        %v7010 = vshrl.u32 %v6992, %v7008
        %v7011 = vor.u32 %v7009, %v7010
        %v7012 = vsub.s32 4294967266, %v7007
        %v7013 = vadd.s32 %v7012, 127
        %v7014 = vshll.u32 %v7013, 23
        %v7015 = vor.u32 4788187, %v7014
        %v7016 = vand.u32 2147483647, %v7015
        %v7018 = vcvt.s32.f32 %v7011
        %v7019 = vmul.f32 %v7018, %v7016
        %v7020 = vxor.u32 %v7019, 2147483648
        %v7021 = vsel %vm6900, %v7020, %v7019
        %v7022 = vsub.s32 4, %v6998
        %v7023 = vsel %vm6900, %v7022, %v6998
        %v7024 = vsel %vm6899, %v2897, %v7021
        %v7025 = vsel %vm6899, 0, %v7023
        %v7026 = vmul.f32 %v7024, %v7024
        %v7027 = vmul.f32 %v7026, -0.001358992
        %v7028 = vadd.f32 %v7027, 0.041655596
        %v7029 = vmul.f32 %v7026, %v7028
        %v7030 = vadd.f32 %v7029, -0.4999988
        %v7031 = vmul.f32 %v7026, %v7030
        %v7032 = vadd.f32 1.0, %v7031
        %v7033 = vmul.f32 %v7024, %v7024
        %v7034 = vmul.f32 %v7033, -0.00019511016
        %v7035 = vadd.f32 %v7034, 0.008332121
        %v7036 = vmul.f32 %v7033, %v7035
        %v7037 = vadd.f32 %v7036, -0.16666654
        %v7038 = vmul.f32 %v7033, %v7037
        %v7039 = vadd.f32 %v7038, 1.0
        %v7040 = vmul.f32 %v7039, %v7024
        %vm7041 = vweird.f32 %v2897
        %v7042 = vadd.s32 %v7025, 3
        %v7043 = vand.u32 %v7042, 3
        %vm7044 = vcmp.lt.s32.totalorder %v7043, 2
        %vm7045 = vcmp.eq.s32.totalorder %v7043, 0
        %v7046 = vxor.u32 %v7040, 2147483648
        %v7047 = vsel %vm7045, %v7032, %v7046
        %vm7048 = vcmp.eq.s32.totalorder %v7043, 2
        %v7049 = vxor.u32 %v7032, 2147483648
        %v7050 = vsel %vm7048, %v7049, %v7040
        %v7051 = vsel %vm7044, %v7047, %v7050
        %v7052 = vsel %vm7041, nan, %v7051
        %v7053 = vand.u32 2147483647, %v3238
        %vm7054 = vcmp.le.f32.partialorder %v7053, 0.7853982
        %vm7055 = vcmp.lt.s32.totalorder %v3238, 0
        %v7056 = vand.u32 %v3238, 2139095040
        %v7057 = vshrl.u32 %v7056, 23
        %v7058 = vsub.s32 %v7057, 127
        %v7059 = vand.u32 2147483647, %v3238
        %v7060 = vand.u32 %v7059, 8388607
        %v7061 = vor.u32 %v7060, 8388608
        %v7062 = vsub.s32 0, %v7061
        %v7063 = vadd.s32 %v7058, 1
        %vm7064 = vcmp.gt.s32.totalorder %v7063, 0
        %v7065 = vsel %vm7064, %v7063, 0
        %v7066 = vshrl.u32 %v7065, 5
        %v7067 = vand.u32 %v7065, 31
        %v7068 = vsub.s32 32, %v7067
        %v7069 = vshrl.u32 683565275, %v7068
        %v7070 = vshll.u32 683565275, %v7067
        %v7071 = vshrl.u32 2475754826, %v7068
        %v7072 = vor.u32 %v7070, %v7071
        %v7073 = vshll.u32 2475754826, %v7067
        %v7074 = vshrl.u32 2131351028, %v7068
        %v7075 = vor.u32 %v7073, %v7074
        %v7076 = vshll.u32 2131351028, %v7067
        %v7077 = vshrl.u32 2102212464, %v7068
        %v7078 = vor.u32 %v7076, %v7077
        %v7079 = vshll.u32 2102212464, %v7067
        %v7080 = vshrl.u32 920167782, %v7068
        %v7081 = vor.u32 %v7079, %v7080
        %v7082 = vshll.u32 920167782, %v7067
        %v7083 = vshrl.u32 1326507024, %v7068
        %v7084 = vor.u32 %v7082, %v7083
        %vm7085 = vcmp.lt.s32.totalorder %v7066, 1
        %vm7086 = vcmp.lt.s32.totalorder %v7066, 2
        %vm7087 = vcmp.lt.s32.totalorder %v7066, 3
        %vm7088 = vcmp.lt.s32.totalorder %v7066, 4
        %v7089 = vsel %vm7085, %v7069, %v7072
        %v7090 = vsel %vm7088, %v7078, 2102212464
        %v7091 = vsel %vm7087, %v7075, %v7090
        %v7092 = vsel %vm7086, %v7089, %v7091
        %v7093 = vsel %vm7085, %v7072, %v7075
        %v7094 = vsel %vm7088, %v7081, 920167782
        %v7095 = vsel %vm7087, %v7078, %v7094
        %v7096 = vsel %vm7086, %v7093, %v7095
        %v7097 = vsel %vm7085, %v7075, %v7078
        %v7098 = vsel %vm7088, %v7084, 1326507024
        %v7099 = vsel %vm7087, %v7081, %v7098
        %v7100 = vsel %vm7086, %v7097, %v7099
        %v7101 = vshll.u32 %v7061, 8
        %v7102 = vand.u32 %v7101, 65535
        %v7103 = vshrl.u32 %v7101, 16
        %v7104 = vand.u32 %v7100, 65535
        %v7105 = vshrl.u32 %v7100, 16
        %v7106 = vmul.u32 %v7102, %v7104
        %v7107 = vmul.u32 %v7102, %v7105
        %v7108 = vmul.u32 %v7103, %v7104
        %v7109 = vmul.u32 %v7103, %v7105
        %v7110 = vshll.u32 %v7107, 16
        %v7111 = vshrl.u32 %v7107, 16
        %v7112 = vshll.u32 %v7108, 16
        %v7113 = vshrl.u32 %v7108, 16
        %vm7114 = vc.u32 %v7106, %v7110
        %v7115 = vsel %vm7114, 1, 0
        %v7116 = vadd.s32 %v7106, %v7110
        %v7117 = vadd.s32 %v7109, %v7115
        %vm7118 = vc.u32 %v7116, %v7112
        %v7119 = vsel %vm7118, 1, 0
        %v7120 = vadd.s32 %v7116, %v7112
        %v7121 = vadd.s32 %v7117, %v7119
        %v7122 = vadd.s32 %v7121, %v7111
        %v7123 = vadd.s32 %v7122, %v7113
        %v7124 = vand.u32 %v7101, 65535
        %v7125 = vshrl.u32 %v7101, 16
        %v7126 = vand.u32 %v7096, 65535
        %v7127 = vshrl.u32 %v7096, 16
        %v7128 = vmul.u32 %v7124, %v7126
        %v7129 = vmul.u32 %v7124, %v7127
        %v7130 = vmul.u32 %v7125, %v7126
        %v7131 = vmul.u32 %v7125, %v7127
        %v7132 = vshll.u32 %v7129, 16
        %v7133 = vshrl.u32 %v7129, 16
        %v7134 = vshll.u32 %v7130, 16
        %v7135 = vshrl.u32 %v7130, 16
        %vm7136 = vc.u32 %v7128, %v7132
        %v7137 = vsel %vm7136, 1, 0
        %v7138 = vadd.s32 %v7128, %v7132
        %v7139 = vadd.s32 %v7131, %v7137
        %vm7140 = vc.u32 %v7138, %v7134
        %v7141 = vsel %vm7140, 1, 0
        %v7142 = vadd.s32 %v7138, %v7134
        %v7143 = vadd.s32 %v7139, %v7141
        %v7144 = vadd.s32 %v7143, %v7133
        %v7145 = vadd.s32 %v7144, %v7135
        %v7146 = vmul.u32 %v7101, %v7092
        %v7147 = vadd.s32 %v7123, %v7142
        %vm7148 = vc.u32 %v7123, %v7142
        %v7149 = vadd.s32 %v7145, 1
        %v7150 = vsel %vm7148, %v7149, %v7145
        %v7151 = vadd.s32 %v7146, %v7150
        %v7152 = vadd.s32 %v7151, 536870912
        %v7153 = vshrl.u32 %v7152, 30
        %v7154 = vshll.u32 %v7153, 30
        %v7155 = vsub.s32 %v7151, %v7154
        %vm7156 = vcmp.lt.s32.totalorder %v7155, 0
        %v7157 = vsub.s32 0, %v7155
        %v7158 = vsel %vm7156, %v7157, %v7155
        %v7159 = vclz %v7158
        %v7160 = vsub.s32 %v7159, 2
        %vm7161 = vcmp.gt.s32.totalorder 0, %v7160
        %v7162 = vsel %vm7161, 0, %v7160
        %v7163 = vsub.s32 32, %v7162
        %v7164 = vshll.u32 %v7155, %v7162
        %v7165 = vshrl.u32 %v7147, %v7163
        %v7166 = vor.u32 %v7164, %v7165
        %v7167 = vsub.s32 4294967266, %v7162
        %v7168 = vadd.s32 %v7167, 127
        %v7169 = vshll.u32 %v7168, 23
        %v7170 = vor.u32 4788187, %v7169
        %v7171 = vand.u32 2147483647, %v7170
        %v7173 = vcvt.s32.f32 %v7166
        %v7174 = vmul.f32 %v7173, %v7171
        %v7175 = vxor.u32 %v7174, 2147483648
        %v7176 = vsel %vm7055, %v7175, %v7174
        %v7177 = vsub.s32 4, %v7153
        %v7178 = vsel %vm7055, %v7177, %v7153
        %v7179 = vsel %vm7054, %v3238, %v7176
        %v7180 = vsel %vm7054, 0, %v7178
        %v7181 = vmul.f32 %v7179, %v7179
        %v7182 = vmul.f32 %v7181, -0.001358992
        %v7183 = vadd.f32 %v7182, 0.041655596
        %v7184 = vmul.f32 %v7181, %v7183
        %v7185 = vadd.f32 %v7184, -0.4999988
        %v7186 = vmul.f32 %v7181, %v7185
        %v7187 = vadd.f32 1.0, %v7186
        %v7188 = vmul.f32 %v7179, %v7179
        %v7189 = vmul.f32 %v7188, -0.00019511016
        %v7190 = vadd.f32 %v7189, 0.008332121
        %v7191 = vmul.f32 %v7188, %v7190
        %v7192 = vadd.f32 %v7191, -0.16666654
        %v7193 = vmul.f32 %v7188, %v7192
        %v7194 = vadd.f32 %v7193, 1.0
        %v7195 = vmul.f32 %v7194, %v7179
        %vm7196 = vweird.f32 %v3238
        %v7197 = vadd.s32 %v7180, 3
        %v7198 = vand.u32 %v7197, 3
        %vm7199 = vcmp.lt.s32.totalorder %v7198, 2
        %vm7200 = vcmp.eq.s32.totalorder %v7198, 0
        %v7201 = vxor.u32 %v7195, 2147483648
        %v7202 = vsel %vm7200, %v7187, %v7201
        %vm7203 = vcmp.eq.s32.totalorder %v7198, 2
        %v7204 = vxor.u32 %v7187, 2147483648
        %v7205 = vsel %vm7203, %v7204, %v7195
        %v7206 = vsel %vm7199, %v7202, %v7205
        %v7207 = vsel %vm7196, nan, %v7206
        %v7208 = vand.u32 2147483647, %v3579
        %vm7209 = vcmp.le.f32.partialorder %v7208, 0.7853982
        %vm7210 = vcmp.lt.s32.totalorder %v3579, 0
        %v7211 = vand.u32 %v3579, 2139095040
        %v7212 = vshrl.u32 %v7211, 23
        %v7213 = vsub.s32 %v7212, 127
        %v7214 = vand.u32 2147483647, %v3579
        %v7215 = vand.u32 %v7214, 8388607
        %v7216 = vor.u32 %v7215, 8388608
        %v7217 = vsub.s32 0, %v7216
        %v7218 = vadd.s32 %v7213, 1
        %vm7219 = vcmp.gt.s32.totalorder %v7218, 0
        %v7220 = vsel %vm7219, %v7218, 0
        %v7221 = vshrl.u32 %v7220, 5
        %v7222 = vand.u32 %v7220, 31
        %v7223 = vsub.s32 32, %v7222
        %v7224 = vshrl.u32 683565275, %v7223
        %v7225 = vshll.u32 683565275, %v7222
        %v7226 = vshrl.u32 2475754826, %v7223
        %v7227 = vor.u32 %v7225, %v7226
        %v7228 = vshll.u32 2475754826, %v7222
        %v7229 = vshrl.u32 2131351028, %v7223
        %v7230 = vor.u32 %v7228, %v7229
        %v7231 = vshll.u32 2131351028, %v7222
        %v7232 = vshrl.u32 2102212464, %v7223
        %v7233 = vor.u32 %v7231, %v7232
        %v7234 = vshll.u32 2102212464, %v7222
        %v7235 = vshrl.u32 920167782, %v7223
        %v7236 = vor.u32 %v7234, %v7235
        %v7237 = vshll.u32 920167782, %v7222
        %v7238 = vshrl.u32 1326507024, %v7223
        %v7239 = vor.u32 %v7237, %v7238
        %vm7240 = vcmp.lt.s32.totalorder %v7221, 1
        %vm7241 = vcmp.lt.s32.totalorder %v7221, 2
        %vm7242 = vcmp.lt.s32.totalorder %v7221, 3
        %vm7243 = vcmp.lt.s32.totalorder %v7221, 4
        %v7244 = vsel %vm7240, %v7224, %v7227
        %v7245 = vsel %vm7243, %v7233, 2102212464
        %v7246 = vsel %vm7242, %v7230, %v7245
        %v7247 = vsel %vm7241, %v7244, %v7246
        %v7248 = vsel %vm7240, %v7227, %v7230
        %v7249 = vsel %vm7243, %v7236, 920167782
        %v7250 = vsel %vm7242, %v7233, %v7249
        %v7251 = vsel %vm7241, %v7248, %v7250
        %v7252 = vsel %vm7240, %v7230, %v7233
        %v7253 = vsel %vm7243, %v7239, 1326507024
        %v7254 = vsel %vm7242, %v7236, %v7253
        %v7255 = vsel %vm7241, %v7252, %v7254
        %v7256 = vshll.u32 %v7216, 8
        %v7257 = vand.u32 %v7256, 65535
        %v7258 = vshrl.u32 %v7256, 16
        %v7259 = vand.u32 %v7255, 65535
        %v7260 = vshrl.u32 %v7255, 16
        %v7261 = vmul.u32 %v7257, %v7259
        %v7262 = vmul.u32 %v7257, %v7260
        %v7263 = vmul.u32 %v7258, %v7259
        %v7264 = vmul.u32 %v7258, %v7260
        %v7265 = vshll.u32 %v7262, 16
        %v7266 = vshrl.u32 %v7262, 16
        %v7267 = vshll.u32 %v7263, 16
        %v7268 = vshrl.u32 %v7263, 16
        %vm7269 = vc.u32 %v7261, %v7265
        %v7270 = vsel %vm7269, 1, 0
        %v7271 = vadd.s32 %v7261, %v7265
        %v7272 = vadd.s32 %v7264, %v7270
        %vm7273 = vc.u32 %v7271, %v7267
        %v7274 = vsel %vm7273, 1, 0
        %v7275 = vadd.s32 %v7271, %v7267
        %v7276 = vadd.s32 %v7272, %v7274
        %v7277 = vadd.s32 %v7276, %v7266
        %v7278 = vadd.s32 %v7277, %v7268
        %v7279 = vand.u32 %v7256, 65535
        %v7280 = vshrl.u32 %v7256, 16
        %v7281 = vand.u32 %v7251, 65535
        %v7282 = vshrl.u32 %v7251, 16
        %v7283 = vmul.u32 %v7279, %v7281
        %v7284 = vmul.u32 %v7279, %v7282
        %v7285 = vmul.u32 %v7280, %v7281
        %v7286 = vmul.u32 %v7280, %v7282
        %v7287 = vshll.u32 %v7284, 16
        %v7288 = vshrl.u32 %v7284, 16
        %v7289 = vshll.u32 %v7285, 16
        %v7290 = vshrl.u32 %v7285, 16
        %vm7291 = vc.u32 %v7283, %v7287
        %v7292 = vsel %vm7291, 1, 0
        %v7293 = vadd.s32 %v7283, %v7287
        %v7294 = vadd.s32 %v7286, %v7292
        %vm7295 = vc.u32 %v7293, %v7289
        %v7296 = vsel %vm7295, 1, 0
        %v7297 = vadd.s32 %v7293, %v7289
        %v7298 = vadd.s32 %v7294, %v7296
        %v7299 = vadd.s32 %v7298, %v7288
        %v7300 = vadd.s32 %v7299, %v7290
        %v7301 = vmul.u32 %v7256, %v7247
        %v7302 = vadd.s32 %v7278, %v7297
        %vm7303 = vc.u32 %v7278, %v7297
        %v7304 = vadd.s32 %v7300, 1
        %v7305 = vsel %vm7303, %v7304, %v7300
        %v7306 = vadd.s32 %v7301, %v7305
        %v7307 = vadd.s32 %v7306, 536870912
        %v7308 = vshrl.u32 %v7307, 30
        %v7309 = vshll.u32 %v7308, 30
        %v7310 = vsub.s32 %v7306, %v7309
        %vm7311 = vcmp.lt.s32.totalorder %v7310, 0
        %v7312 = vsub.s32 0, %v7310
        %v7313 = vsel %vm7311, %v7312, %v7310
        %v7314 = vclz %v7313
        %v7315 = vsub.s32 %v7314, 2
        %vm7316 = vcmp.gt.s32.totalorder 0, %v7315
        %v7317 = vsel %vm7316, 0, %v7315
        %v7318 = vsub.s32 32, %v7317
        %v7319 = vshll.u32 %v7310, %v7317
        %v7320 = vshrl.u32 %v7302, %v7318
        %v7321 = vor.u32 %v7319, %v7320
        %v7322 = vsub.s32 4294967266, %v7317
        %v7323 = vadd.s32 %v7322, 127
        %v7324 = vshll.u32 %v7323, 23
        %v7325 = vor.u32 4788187, %v7324
        %v7326 = vand.u32 2147483647, %v7325
        %v7328 = vcvt.s32.f32 %v7321
        %v7329 = vmul.f32 %v7328, %v7326
        %v7330 = vxor.u32 %v7329, 2147483648
        %v7331 = vsel %vm7210, %v7330, %v7329
        %v7332 = vsub.s32 4, %v7308
        %v7333 = vsel %vm7210, %v7332, %v7308
        %v7334 = vsel %vm7209, %v3579, %v7331
        %v7335 = vsel %vm7209, 0, %v7333
        %v7336 = vmul.f32 %v7334, %v7334
        %v7337 = vmul.f32 %v7336, -0.001358992
        %v7338 = vadd.f32 %v7337, 0.041655596
        %v7339 = vmul.f32 %v7336, %v7338
        %v7340 = vadd.f32 %v7339, -0.4999988
        %v7341 = vmul.f32 %v7336, %v7340
        %v7342 = vadd.f32 1.0, %v7341
        %v7343 = vmul.f32 %v7334, %v7334
        %v7344 = vmul.f32 %v7343, -0.00019511016
        %v7345 = vadd.f32 %v7344, 0.008332121
        %v7346 = vmul.f32 %v7343, %v7345
        %v7347 = vadd.f32 %v7346, -0.16666654
        %v7348 = vmul.f32 %v7343, %v7347
        %v7349 = vadd.f32 %v7348, 1.0
        %v7350 = vmul.f32 %v7349, %v7334
        %vm7351 = vweird.f32 %v3579
        %v7352 = vadd.s32 %v7335, 3
        %v7353 = vand.u32 %v7352, 3
        %vm7354 = vcmp.lt.s32.totalorder %v7353, 2
        %vm7355 = vcmp.eq.s32.totalorder %v7353, 0
        %v7356 = vxor.u32 %v7350, 2147483648
        %v7357 = vsel %vm7355, %v7342, %v7356
        %vm7358 = vcmp.eq.s32.totalorder %v7353, 2
        %v7359 = vxor.u32 %v7342, 2147483648
        %v7360 = vsel %vm7358, %v7359, %v7350
        %v7361 = vsel %vm7354, %v7357, %v7360
        %v7362 = vsel %vm7351, nan, %v7361
        %v7363 = vand.u32 2147483647, %v3920
        %vm7364 = vcmp.le.f32.partialorder %v7363, 0.7853982
        %vm7365 = vcmp.lt.s32.totalorder %v3920, 0
        %v7366 = vand.u32 %v3920, 2139095040
        %v7367 = vshrl.u32 %v7366, 23
        %v7368 = vsub.s32 %v7367, 127
        %v7369 = vand.u32 2147483647, %v3920
        %v7370 = vand.u32 %v7369, 8388607
        %v7371 = vor.u32 %v7370, 8388608
        %v7372 = vsub.s32 0, %v7371
        %v7373 = vadd.s32 %v7368, 1
        %vm7374 = vcmp.gt.s32.totalorder %v7373, 0
        %v7375 = vsel %vm7374, %v7373, 0
        %v7376 = vshrl.u32 %v7375, 5
        %v7377 = vand.u32 %v7375, 31
        %v7378 = vsub.s32 32, %v7377
        %v7379 = vshrl.u32 683565275, %v7378
        %v7380 = vshll.u32 683565275, %v7377
        %v7381 = vshrl.u32 2475754826, %v7378
        %v7382 = vor.u32 %v7380, %v7381
        %v7383 = vshll.u32 2475754826, %v7377
        %v7384 = vshrl.u32 2131351028, %v7378
        %v7385 = vor.u32 %v7383, %v7384
        %v7386 = vshll.u32 2131351028, %v7377
        %v7387 = vshrl.u32 2102212464, %v7378
        %v7388 = vor.u32 %v7386, %v7387
        %v7389 = vshll.u32 2102212464, %v7377
        %v7390 = vshrl.u32 920167782, %v7378
        %v7391 = vor.u32 %v7389, %v7390
        %v7392 = vshll.u32 920167782, %v7377
        %v7393 = vshrl.u32 1326507024, %v7378
        %v7394 = vor.u32 %v7392, %v7393
        %vm7395 = vcmp.lt.s32.totalorder %v7376, 1
        %vm7396 = vcmp.lt.s32.totalorder %v7376, 2
        %vm7397 = vcmp.lt.s32.totalorder %v7376, 3
        %vm7398 = vcmp.lt.s32.totalorder %v7376, 4
        %v7399 = vsel %vm7395, %v7379, %v7382
        %v7400 = vsel %vm7398, %v7388, 2102212464
        %v7401 = vsel %vm7397, %v7385, %v7400
        %v7402 = vsel %vm7396, %v7399, %v7401
        %v7403 = vsel %vm7395, %v7382, %v7385
        %v7404 = vsel %vm7398, %v7391, 920167782
        %v7405 = vsel %vm7397, %v7388, %v7404
        %v7406 = vsel %vm7396, %v7403, %v7405
        %v7407 = vsel %vm7395, %v7385, %v7388
        %v7408 = vsel %vm7398, %v7394, 1326507024
        %v7409 = vsel %vm7397, %v7391, %v7408
        %v7410 = vsel %vm7396, %v7407, %v7409
        %v7411 = vshll.u32 %v7371, 8
        %v7412 = vand.u32 %v7411, 65535
        %v7413 = vshrl.u32 %v7411, 16
        %v7414 = vand.u32 %v7410, 65535
        %v7415 = vshrl.u32 %v7410, 16
        %v7416 = vmul.u32 %v7412, %v7414
        %v7417 = vmul.u32 %v7412, %v7415
        %v7418 = vmul.u32 %v7413, %v7414
        %v7419 = vmul.u32 %v7413, %v7415
        %v7420 = vshll.u32 %v7417, 16
        %v7421 = vshrl.u32 %v7417, 16
        %v7422 = vshll.u32 %v7418, 16
        %v7423 = vshrl.u32 %v7418, 16
        %vm7424 = vc.u32 %v7416, %v7420
        %v7425 = vsel %vm7424, 1, 0
        %v7426 = vadd.s32 %v7416, %v7420
        %v7427 = vadd.s32 %v7419, %v7425
        %vm7428 = vc.u32 %v7426, %v7422
        %v7429 = vsel %vm7428, 1, 0
        %v7430 = vadd.s32 %v7426, %v7422
        %v7431 = vadd.s32 %v7427, %v7429
        %v7432 = vadd.s32 %v7431, %v7421
        %v7433 = vadd.s32 %v7432, %v7423
        %v7434 = vand.u32 %v7411, 65535
        %v7435 = vshrl.u32 %v7411, 16
        %v7436 = vand.u32 %v7406, 65535
        %v7437 = vshrl.u32 %v7406, 16
        %v7438 = vmul.u32 %v7434, %v7436
        %v7439 = vmul.u32 %v7434, %v7437
        %v7440 = vmul.u32 %v7435, %v7436
        %v7441 = vmul.u32 %v7435, %v7437
        %v7442 = vshll.u32 %v7439, 16
        %v7443 = vshrl.u32 %v7439, 16
        %v7444 = vshll.u32 %v7440, 16
        %v7445 = vshrl.u32 %v7440, 16
        %vm7446 = vc.u32 %v7438, %v7442
        %v7447 = vsel %vm7446, 1, 0
        %v7448 = vadd.s32 %v7438, %v7442
        %v7449 = vadd.s32 %v7441, %v7447
        %vm7450 = vc.u32 %v7448, %v7444
        %v7451 = vsel %vm7450, 1, 0
        %v7452 = vadd.s32 %v7448, %v7444
        %v7453 = vadd.s32 %v7449, %v7451
        %v7454 = vadd.s32 %v7453, %v7443
        %v7455 = vadd.s32 %v7454, %v7445
        %v7456 = vmul.u32 %v7411, %v7402
        %v7457 = vadd.s32 %v7433, %v7452
        %vm7458 = vc.u32 %v7433, %v7452
        %v7459 = vadd.s32 %v7455, 1
        %v7460 = vsel %vm7458, %v7459, %v7455
        %v7461 = vadd.s32 %v7456, %v7460
        %v7462 = vadd.s32 %v7461, 536870912
        %v7463 = vshrl.u32 %v7462, 30
        %v7464 = vshll.u32 %v7463, 30
        %v7465 = vsub.s32 %v7461, %v7464
        %vm7466 = vcmp.lt.s32.totalorder %v7465, 0
        %v7467 = vsub.s32 0, %v7465
        %v7468 = vsel %vm7466, %v7467, %v7465
        %v7469 = vclz %v7468
        %v7470 = vsub.s32 %v7469, 2
        %vm7471 = vcmp.gt.s32.totalorder 0, %v7470
        %v7472 = vsel %vm7471, 0, %v7470
        %v7473 = vsub.s32 32, %v7472
        %v7474 = vshll.u32 %v7465, %v7472
        %v7475 = vshrl.u32 %v7457, %v7473
        %v7476 = vor.u32 %v7474, %v7475
        %v7477 = vsub.s32 4294967266, %v7472
        %v7478 = vadd.s32 %v7477, 127
        %v7479 = vshll.u32 %v7478, 23
        %v7480 = vor.u32 4788187, %v7479
        %v7481 = vand.u32 2147483647, %v7480
        %v7483 = vcvt.s32.f32 %v7476
        %v7484 = vmul.f32 %v7483, %v7481
        %v7485 = vxor.u32 %v7484, 2147483648
        %v7486 = vsel %vm7365, %v7485, %v7484
        %v7487 = vsub.s32 4, %v7463
        %v7488 = vsel %vm7365, %v7487, %v7463
        %v7489 = vsel %vm7364, %v3920, %v7486
        %v7490 = vsel %vm7364, 0, %v7488
        %v7491 = vmul.f32 %v7489, %v7489
        %v7492 = vmul.f32 %v7491, -0.001358992
        %v7493 = vadd.f32 %v7492, 0.041655596
        %v7494 = vmul.f32 %v7491, %v7493
        %v7495 = vadd.f32 %v7494, -0.4999988
        %v7496 = vmul.f32 %v7491, %v7495
        %v7497 = vadd.f32 1.0, %v7496
        %v7498 = vmul.f32 %v7489, %v7489
        %v7499 = vmul.f32 %v7498, -0.00019511016
        %v7500 = vadd.f32 %v7499, 0.008332121
        %v7501 = vmul.f32 %v7498, %v7500
        %v7502 = vadd.f32 %v7501, -0.16666654
        %v7503 = vmul.f32 %v7498, %v7502
        %v7504 = vadd.f32 %v7503, 1.0
        %v7505 = vmul.f32 %v7504, %v7489
        %vm7506 = vweird.f32 %v3920
        %v7507 = vadd.s32 %v7490, 3
        %v7508 = vand.u32 %v7507, 3
        %vm7509 = vcmp.lt.s32.totalorder %v7508, 2
        %vm7510 = vcmp.eq.s32.totalorder %v7508, 0
        %v7511 = vxor.u32 %v7505, 2147483648
        %v7512 = vsel %vm7510, %v7497, %v7511
        %vm7513 = vcmp.eq.s32.totalorder %v7508, 2
        %v7514 = vxor.u32 %v7497, 2147483648
        %v7515 = vsel %vm7513, %v7514, %v7505
        %v7516 = vsel %vm7509, %v7512, %v7515
        %v7517 = vsel %vm7506, nan, %v7516
        %v7518 = vand.u32 2147483647, %v4261
        %vm7519 = vcmp.le.f32.partialorder %v7518, 0.7853982
        %vm7520 = vcmp.lt.s32.totalorder %v4261, 0
        %v7521 = vand.u32 %v4261, 2139095040
        %v7522 = vshrl.u32 %v7521, 23
        %v7523 = vsub.s32 %v7522, 127
        %v7524 = vand.u32 2147483647, %v4261
        %v7525 = vand.u32 %v7524, 8388607
        %v7526 = vor.u32 %v7525, 8388608
        %v7527 = vsub.s32 0, %v7526
        %v7528 = vadd.s32 %v7523, 1
        %vm7529 = vcmp.gt.s32.totalorder %v7528, 0
        %v7530 = vsel %vm7529, %v7528, 0
        %v7531 = vshrl.u32 %v7530, 5
        %v7532 = vand.u32 %v7530, 31
        %v7533 = vsub.s32 32, %v7532
        %v7534 = vshrl.u32 683565275, %v7533
        %v7535 = vshll.u32 683565275, %v7532
        %v7536 = vshrl.u32 2475754826, %v7533
        %v7537 = vor.u32 %v7535, %v7536
        %v7538 = vshll.u32 2475754826, %v7532
        %v7539 = vshrl.u32 2131351028, %v7533
        %v7540 = vor.u32 %v7538, %v7539
        %v7541 = vshll.u32 2131351028, %v7532
        %v7542 = vshrl.u32 2102212464, %v7533
        %v7543 = vor.u32 %v7541, %v7542
        %v7544 = vshll.u32 2102212464, %v7532
        %v7545 = vshrl.u32 920167782, %v7533
        %v7546 = vor.u32 %v7544, %v7545
        %v7547 = vshll.u32 920167782, %v7532
        %v7548 = vshrl.u32 1326507024, %v7533
        %v7549 = vor.u32 %v7547, %v7548
        %vm7550 = vcmp.lt.s32.totalorder %v7531, 1
        %vm7551 = vcmp.lt.s32.totalorder %v7531, 2
        %vm7552 = vcmp.lt.s32.totalorder %v7531, 3
        %vm7553 = vcmp.lt.s32.totalorder %v7531, 4
        %v7554 = vsel %vm7550, %v7534, %v7537
        %v7555 = vsel %vm7553, %v7543, 2102212464
        %v7556 = vsel %vm7552, %v7540, %v7555
        %v7557 = vsel %vm7551, %v7554, %v7556
        %v7558 = vsel %vm7550, %v7537, %v7540
        %v7559 = vsel %vm7553, %v7546, 920167782
        %v7560 = vsel %vm7552, %v7543, %v7559
        %v7561 = vsel %vm7551, %v7558, %v7560
        %v7562 = vsel %vm7550, %v7540, %v7543
        %v7563 = vsel %vm7553, %v7549, 1326507024
        %v7564 = vsel %vm7552, %v7546, %v7563
        %v7565 = vsel %vm7551, %v7562, %v7564
        %v7566 = vshll.u32 %v7526, 8
        %v7567 = vand.u32 %v7566, 65535
        %v7568 = vshrl.u32 %v7566, 16
        %v7569 = vand.u32 %v7565, 65535
        %v7570 = vshrl.u32 %v7565, 16
        %v7571 = vmul.u32 %v7567, %v7569
        %v7572 = vmul.u32 %v7567, %v7570
        %v7573 = vmul.u32 %v7568, %v7569
        %v7574 = vmul.u32 %v7568, %v7570
        %v7575 = vshll.u32 %v7572, 16
        %v7576 = vshrl.u32 %v7572, 16
        %v7577 = vshll.u32 %v7573, 16
        %v7578 = vshrl.u32 %v7573, 16
        %vm7579 = vc.u32 %v7571, %v7575
        %v7580 = vsel %vm7579, 1, 0
        %v7581 = vadd.s32 %v7571, %v7575
        %v7582 = vadd.s32 %v7574, %v7580
        %vm7583 = vc.u32 %v7581, %v7577
        %v7584 = vsel %vm7583, 1, 0
        %v7585 = vadd.s32 %v7581, %v7577
        %v7586 = vadd.s32 %v7582, %v7584
        %v7587 = vadd.s32 %v7586, %v7576
        %v7588 = vadd.s32 %v7587, %v7578
        %v7589 = vand.u32 %v7566, 65535
        %v7590 = vshrl.u32 %v7566, 16
        %v7591 = vand.u32 %v7561, 65535
        %v7592 = vshrl.u32 %v7561, 16
        %v7593 = vmul.u32 %v7589, %v7591
        %v7594 = vmul.u32 %v7589, %v7592
        %v7595 = vmul.u32 %v7590, %v7591
        %v7596 = vmul.u32 %v7590, %v7592
        %v7597 = vshll.u32 %v7594, 16
        %v7598 = vshrl.u32 %v7594, 16
        %v7599 = vshll.u32 %v7595, 16
        %v7600 = vshrl.u32 %v7595, 16
        %vm7601 = vc.u32 %v7593, %v7597
        %v7602 = vsel %vm7601, 1, 0
        %v7603 = vadd.s32 %v7593, %v7597
        %v7604 = vadd.s32 %v7596, %v7602
        %vm7605 = vc.u32 %v7603, %v7599
        %v7606 = vsel %vm7605, 1, 0
        %v7607 = vadd.s32 %v7603, %v7599
        %v7608 = vadd.s32 %v7604, %v7606
        %v7609 = vadd.s32 %v7608, %v7598
        %v7610 = vadd.s32 %v7609, %v7600
        %v7611 = vmul.u32 %v7566, %v7557
        %v7612 = vadd.s32 %v7588, %v7607
        %vm7613 = vc.u32 %v7588, %v7607
        %v7614 = vadd.s32 %v7610, 1
        %v7615 = vsel %vm7613, %v7614, %v7610
        %v7616 = vadd.s32 %v7611, %v7615
        %v7617 = vadd.s32 %v7616, 536870912
        %v7618 = vshrl.u32 %v7617, 30
        %v7619 = vshll.u32 %v7618, 30
        %v7620 = vsub.s32 %v7616, %v7619
        %vm7621 = vcmp.lt.s32.totalorder %v7620, 0
        %v7622 = vsub.s32 0, %v7620
        %v7623 = vsel %vm7621, %v7622, %v7620
        %v7624 = vclz %v7623
        %v7625 = vsub.s32 %v7624, 2
        %vm7626 = vcmp.gt.s32.totalorder 0, %v7625
        %v7627 = vsel %vm7626, 0, %v7625
        %v7628 = vsub.s32 32, %v7627
        %v7629 = vshll.u32 %v7620, %v7627
        %v7630 = vshrl.u32 %v7612, %v7628
        %v7631 = vor.u32 %v7629, %v7630
        %v7632 = vsub.s32 4294967266, %v7627
        %v7633 = vadd.s32 %v7632, 127
        %v7634 = vshll.u32 %v7633, 23
        %v7635 = vor.u32 4788187, %v7634
        %v7636 = vand.u32 2147483647, %v7635
        %v7638 = vcvt.s32.f32 %v7631
        %v7639 = vmul.f32 %v7638, %v7636
        %v7640 = vxor.u32 %v7639, 2147483648
        %v7641 = vsel %vm7520, %v7640, %v7639
        %v7642 = vsub.s32 4, %v7618
        %v7643 = vsel %vm7520, %v7642, %v7618
        %v7644 = vsel %vm7519, %v4261, %v7641
        %v7645 = vsel %vm7519, 0, %v7643
        %v7646 = vmul.f32 %v7644, %v7644
        %v7647 = vmul.f32 %v7646, -0.001358992
        %v7648 = vadd.f32 %v7647, 0.041655596
        %v7649 = vmul.f32 %v7646, %v7648
        %v7650 = vadd.f32 %v7649, -0.4999988
        %v7651 = vmul.f32 %v7646, %v7650
        %v7652 = vadd.f32 1.0, %v7651
        %v7653 = vmul.f32 %v7644, %v7644
        %v7654 = vmul.f32 %v7653, -0.00019511016
        %v7655 = vadd.f32 %v7654, 0.008332121
        %v7656 = vmul.f32 %v7653, %v7655
        %v7657 = vadd.f32 %v7656, -0.16666654
        %v7658 = vmul.f32 %v7653, %v7657
        %v7659 = vadd.f32 %v7658, 1.0
        %v7660 = vmul.f32 %v7659, %v7644
        %vm7661 = vweird.f32 %v4261
        %v7662 = vadd.s32 %v7645, 3
        %v7663 = vand.u32 %v7662, 3
        %vm7664 = vcmp.lt.s32.totalorder %v7663, 2
        %vm7665 = vcmp.eq.s32.totalorder %v7663, 0
        %v7666 = vxor.u32 %v7660, 2147483648
        %v7667 = vsel %vm7665, %v7652, %v7666
        %vm7668 = vcmp.eq.s32.totalorder %v7663, 2
        %v7669 = vxor.u32 %v7652, 2147483648
        %v7670 = vsel %vm7668, %v7669, %v7660
        %v7671 = vsel %vm7664, %v7667, %v7670
        %v7672 = vsel %vm7661, nan, %v7671
        %v7673 = vand.u32 2147483647, %v4602
        %vm7674 = vcmp.le.f32.partialorder %v7673, 0.7853982
        %vm7675 = vcmp.lt.s32.totalorder %v4602, 0
        %v7676 = vand.u32 %v4602, 2139095040
        %v7677 = vshrl.u32 %v7676, 23
        %v7678 = vsub.s32 %v7677, 127
        %v7679 = vand.u32 2147483647, %v4602
        %v7680 = vand.u32 %v7679, 8388607
        %v7681 = vor.u32 %v7680, 8388608
        %v7682 = vsub.s32 0, %v7681
        %v7683 = vadd.s32 %v7678, 1
        %vm7684 = vcmp.gt.s32.totalorder %v7683, 0
        %v7685 = vsel %vm7684, %v7683, 0
        %v7686 = vshrl.u32 %v7685, 5
        %v7687 = vand.u32 %v7685, 31
        %v7688 = vsub.s32 32, %v7687
        %v7689 = vshrl.u32 683565275, %v7688
        %v7690 = vshll.u32 683565275, %v7687
        %v7691 = vshrl.u32 2475754826, %v7688
        %v7692 = vor.u32 %v7690, %v7691
        %v7693 = vshll.u32 2475754826, %v7687
        %v7694 = vshrl.u32 2131351028, %v7688
        %v7695 = vor.u32 %v7693, %v7694
        %v7696 = vshll.u32 2131351028, %v7687
        %v7697 = vshrl.u32 2102212464, %v7688
        %v7698 = vor.u32 %v7696, %v7697
        %v7699 = vshll.u32 2102212464, %v7687
        %v7700 = vshrl.u32 920167782, %v7688
        %v7701 = vor.u32 %v7699, %v7700
        %v7702 = vshll.u32 920167782, %v7687
        %v7703 = vshrl.u32 1326507024, %v7688
        %v7704 = vor.u32 %v7702, %v7703
        %vm7705 = vcmp.lt.s32.totalorder %v7686, 1
        %vm7706 = vcmp.lt.s32.totalorder %v7686, 2
        %vm7707 = vcmp.lt.s32.totalorder %v7686, 3
        %vm7708 = vcmp.lt.s32.totalorder %v7686, 4
        %v7709 = vsel %vm7705, %v7689, %v7692
        %v7710 = vsel %vm7708, %v7698, 2102212464
        %v7711 = vsel %vm7707, %v7695, %v7710
        %v7712 = vsel %vm7706, %v7709, %v7711
        %v7713 = vsel %vm7705, %v7692, %v7695
        %v7714 = vsel %vm7708, %v7701, 920167782
        %v7715 = vsel %vm7707, %v7698, %v7714
        %v7716 = vsel %vm7706, %v7713, %v7715
        %v7717 = vsel %vm7705, %v7695, %v7698
        %v7718 = vsel %vm7708, %v7704, 1326507024
        %v7719 = vsel %vm7707, %v7701, %v7718
        %v7720 = vsel %vm7706, %v7717, %v7719
        %v7721 = vshll.u32 %v7681, 8
        %v7722 = vand.u32 %v7721, 65535
        %v7723 = vshrl.u32 %v7721, 16
        %v7724 = vand.u32 %v7720, 65535
        %v7725 = vshrl.u32 %v7720, 16
        %v7726 = vmul.u32 %v7722, %v7724
        %v7727 = vmul.u32 %v7722, %v7725
        %v7728 = vmul.u32 %v7723, %v7724
        %v7729 = vmul.u32 %v7723, %v7725
        %v7730 = vshll.u32 %v7727, 16
        %v7731 = vshrl.u32 %v7727, 16
        %v7732 = vshll.u32 %v7728, 16
        %v7733 = vshrl.u32 %v7728, 16
        %vm7734 = vc.u32 %v7726, %v7730
        %v7735 = vsel %vm7734, 1, 0
        %v7736 = vadd.s32 %v7726, %v7730
        %v7737 = vadd.s32 %v7729, %v7735
        %vm7738 = vc.u32 %v7736, %v7732
        %v7739 = vsel %vm7738, 1, 0
        %v7740 = vadd.s32 %v7736, %v7732
        %v7741 = vadd.s32 %v7737, %v7739
        %v7742 = vadd.s32 %v7741, %v7731
        %v7743 = vadd.s32 %v7742, %v7733
        %v7744 = vand.u32 %v7721, 65535
        %v7745 = vshrl.u32 %v7721, 16
        %v7746 = vand.u32 %v7716, 65535
        %v7747 = vshrl.u32 %v7716, 16
        %v7748 = vmul.u32 %v7744, %v7746
        %v7749 = vmul.u32 %v7744, %v7747
        %v7750 = vmul.u32 %v7745, %v7746
        %v7751 = vmul.u32 %v7745, %v7747
        %v7752 = vshll.u32 %v7749, 16
        %v7753 = vshrl.u32 %v7749, 16
        %v7754 = vshll.u32 %v7750, 16
        %v7755 = vshrl.u32 %v7750, 16
        %vm7756 = vc.u32 %v7748, %v7752
        %v7757 = vsel %vm7756, 1, 0
        %v7758 = vadd.s32 %v7748, %v7752
        %v7759 = vadd.s32 %v7751, %v7757
        %vm7760 = vc.u32 %v7758, %v7754
        %v7761 = vsel %vm7760, 1, 0
        %v7762 = vadd.s32 %v7758, %v7754
        %v7763 = vadd.s32 %v7759, %v7761
        %v7764 = vadd.s32 %v7763, %v7753
        %v7765 = vadd.s32 %v7764, %v7755
        %v7766 = vmul.u32 %v7721, %v7712
        %v7767 = vadd.s32 %v7743, %v7762
        %vm7768 = vc.u32 %v7743, %v7762
        %v7769 = vadd.s32 %v7765, 1
        %v7770 = vsel %vm7768, %v7769, %v7765
        %v7771 = vadd.s32 %v7766, %v7770
        %v7772 = vadd.s32 %v7771, 536870912
        %v7773 = vshrl.u32 %v7772, 30
        %v7774 = vshll.u32 %v7773, 30
        %v7775 = vsub.s32 %v7771, %v7774
        %vm7776 = vcmp.lt.s32.totalorder %v7775, 0
        %v7777 = vsub.s32 0, %v7775
        %v7778 = vsel %vm7776, %v7777, %v7775
        %v7779 = vclz %v7778
        %v7780 = vsub.s32 %v7779, 2
        %vm7781 = vcmp.gt.s32.totalorder 0, %v7780
        %v7782 = vsel %vm7781, 0, %v7780
        %v7783 = vsub.s32 32, %v7782
        %v7784 = vshll.u32 %v7775, %v7782
        %v7785 = vshrl.u32 %v7767, %v7783
        %v7786 = vor.u32 %v7784, %v7785
        %v7787 = vsub.s32 4294967266, %v7782
        %v7788 = vadd.s32 %v7787, 127
        %v7789 = vshll.u32 %v7788, 23
        %v7790 = vor.u32 4788187, %v7789
        %v7791 = vand.u32 2147483647, %v7790
        %v7793 = vcvt.s32.f32 %v7786
        %v7794 = vmul.f32 %v7793, %v7791
        %v7795 = vxor.u32 %v7794, 2147483648
        %v7796 = vsel %vm7675, %v7795, %v7794
        %v7797 = vsub.s32 4, %v7773
        %v7798 = vsel %vm7675, %v7797, %v7773
        %v7799 = vsel %vm7674, %v4602, %v7796
        %v7800 = vsel %vm7674, 0, %v7798
        %v7801 = vmul.f32 %v7799, %v7799
        %v7802 = vmul.f32 %v7801, -0.001358992
        %v7803 = vadd.f32 %v7802, 0.041655596
        %v7804 = vmul.f32 %v7801, %v7803
        %v7805 = vadd.f32 %v7804, -0.4999988
        %v7806 = vmul.f32 %v7801, %v7805
        %v7807 = vadd.f32 1.0, %v7806
        %v7808 = vmul.f32 %v7799, %v7799
        %v7809 = vmul.f32 %v7808, -0.00019511016
        %v7810 = vadd.f32 %v7809, 0.008332121
        %v7811 = vmul.f32 %v7808, %v7810
        %v7812 = vadd.f32 %v7811, -0.16666654
        %v7813 = vmul.f32 %v7808, %v7812
        %v7814 = vadd.f32 %v7813, 1.0
        %v7815 = vmul.f32 %v7814, %v7799
        %vm7816 = vweird.f32 %v4602
        %v7817 = vadd.s32 %v7800, 3
        %v7818 = vand.u32 %v7817, 3
        %vm7819 = vcmp.lt.s32.totalorder %v7818, 2
        %vm7820 = vcmp.eq.s32.totalorder %v7818, 0
        %v7821 = vxor.u32 %v7815, 2147483648
        %v7822 = vsel %vm7820, %v7807, %v7821
        %vm7823 = vcmp.eq.s32.totalorder %v7818, 2
        %v7824 = vxor.u32 %v7807, 2147483648
        %v7825 = vsel %vm7823, %v7824, %v7815
        %v7826 = vsel %vm7819, %v7822, %v7825
        %v7827 = vsel %vm7816, nan, %v7826
        %v7828 = vand.u32 2147483647, %v4943
        %vm7829 = vcmp.le.f32.partialorder %v7828, 0.7853982
        %vm7830 = vcmp.lt.s32.totalorder %v4943, 0
        %v7831 = vand.u32 %v4943, 2139095040
        %v7832 = vshrl.u32 %v7831, 23
        %v7833 = vsub.s32 %v7832, 127
        %v7834 = vand.u32 2147483647, %v4943
        %v7835 = vand.u32 %v7834, 8388607
        %v7836 = vor.u32 %v7835, 8388608
        %v7837 = vsub.s32 0, %v7836
        %v7838 = vadd.s32 %v7833, 1
        %vm7839 = vcmp.gt.s32.totalorder %v7838, 0
        %v7840 = vsel %vm7839, %v7838, 0
        %v7841 = vshrl.u32 %v7840, 5
        %v7842 = vand.u32 %v7840, 31
        %v7843 = vsub.s32 32, %v7842
        %v7844 = vshrl.u32 683565275, %v7843
        %v7845 = vshll.u32 683565275, %v7842
        %v7846 = vshrl.u32 2475754826, %v7843
        %v7847 = vor.u32 %v7845, %v7846
        %v7848 = vshll.u32 2475754826, %v7842
        %v7849 = vshrl.u32 2131351028, %v7843
        %v7850 = vor.u32 %v7848, %v7849
        %v7851 = vshll.u32 2131351028, %v7842
        %v7852 = vshrl.u32 2102212464, %v7843
        %v7853 = vor.u32 %v7851, %v7852
        %v7854 = vshll.u32 2102212464, %v7842
        %v7855 = vshrl.u32 920167782, %v7843
        %v7856 = vor.u32 %v7854, %v7855
        %v7857 = vshll.u32 920167782, %v7842
        %v7858 = vshrl.u32 1326507024, %v7843
        %v7859 = vor.u32 %v7857, %v7858
        %vm7860 = vcmp.lt.s32.totalorder %v7841, 1
        %vm7861 = vcmp.lt.s32.totalorder %v7841, 2
        %vm7862 = vcmp.lt.s32.totalorder %v7841, 3
        %vm7863 = vcmp.lt.s32.totalorder %v7841, 4
        %v7864 = vsel %vm7860, %v7844, %v7847
        %v7865 = vsel %vm7863, %v7853, 2102212464
        %v7866 = vsel %vm7862, %v7850, %v7865
        %v7867 = vsel %vm7861, %v7864, %v7866
        %v7868 = vsel %vm7860, %v7847, %v7850
        %v7869 = vsel %vm7863, %v7856, 920167782
        %v7870 = vsel %vm7862, %v7853, %v7869
        %v7871 = vsel %vm7861, %v7868, %v7870
        %v7872 = vsel %vm7860, %v7850, %v7853
        %v7873 = vsel %vm7863, %v7859, 1326507024
        %v7874 = vsel %vm7862, %v7856, %v7873
        %v7875 = vsel %vm7861, %v7872, %v7874
        %v7876 = vshll.u32 %v7836, 8
        %v7877 = vand.u32 %v7876, 65535
        %v7878 = vshrl.u32 %v7876, 16
        %v7879 = vand.u32 %v7875, 65535
        %v7880 = vshrl.u32 %v7875, 16
        %v7881 = vmul.u32 %v7877, %v7879
        %v7882 = vmul.u32 %v7877, %v7880
        %v7883 = vmul.u32 %v7878, %v7879
        %v7884 = vmul.u32 %v7878, %v7880
        %v7885 = vshll.u32 %v7882, 16
        %v7886 = vshrl.u32 %v7882, 16
        %v7887 = vshll.u32 %v7883, 16
        %v7888 = vshrl.u32 %v7883, 16
        %vm7889 = vc.u32 %v7881, %v7885
        %v7890 = vsel %vm7889, 1, 0
        %v7891 = vadd.s32 %v7881, %v7885
        %v7892 = vadd.s32 %v7884, %v7890
        %vm7893 = vc.u32 %v7891, %v7887
        %v7894 = vsel %vm7893, 1, 0
        %v7895 = vadd.s32 %v7891, %v7887
        %v7896 = vadd.s32 %v7892, %v7894
        %v7897 = vadd.s32 %v7896, %v7886
        %v7898 = vadd.s32 %v7897, %v7888
        %v7899 = vand.u32 %v7876, 65535
        %v7900 = vshrl.u32 %v7876, 16
        %v7901 = vand.u32 %v7871, 65535
        %v7902 = vshrl.u32 %v7871, 16
        %v7903 = vmul.u32 %v7899, %v7901
        %v7904 = vmul.u32 %v7899, %v7902
        %v7905 = vmul.u32 %v7900, %v7901
        %v7906 = vmul.u32 %v7900, %v7902
        %v7907 = vshll.u32 %v7904, 16
        %v7908 = vshrl.u32 %v7904, 16
        %v7909 = vshll.u32 %v7905, 16
        %v7910 = vshrl.u32 %v7905, 16
        %vm7911 = vc.u32 %v7903, %v7907
        %v7912 = vsel %vm7911, 1, 0
        %v7913 = vadd.s32 %v7903, %v7907
        %v7914 = vadd.s32 %v7906, %v7912
        %vm7915 = vc.u32 %v7913, %v7909
        %v7916 = vsel %vm7915, 1, 0
        %v7917 = vadd.s32 %v7913, %v7909
        %v7918 = vadd.s32 %v7914, %v7916
        %v7919 = vadd.s32 %v7918, %v7908
        %v7920 = vadd.s32 %v7919, %v7910
        %v7921 = vmul.u32 %v7876, %v7867
        %v7922 = vadd.s32 %v7898, %v7917
        %vm7923 = vc.u32 %v7898, %v7917
        %v7924 = vadd.s32 %v7920, 1
        %v7925 = vsel %vm7923, %v7924, %v7920
        %v7926 = vadd.s32 %v7921, %v7925
        %v7927 = vadd.s32 %v7926, 536870912
        %v7928 = vshrl.u32 %v7927, 30
        %v7929 = vshll.u32 %v7928, 30
        %v7930 = vsub.s32 %v7926, %v7929
        %vm7931 = vcmp.lt.s32.totalorder %v7930, 0
        %v7932 = vsub.s32 0, %v7930
        %v7933 = vsel %vm7931, %v7932, %v7930
        %v7934 = vclz %v7933
        %v7935 = vsub.s32 %v7934, 2
        %vm7936 = vcmp.gt.s32.totalorder 0, %v7935
        %v7937 = vsel %vm7936, 0, %v7935
        %v7938 = vsub.s32 32, %v7937
        %v7939 = vshll.u32 %v7930, %v7937
        %v7940 = vshrl.u32 %v7922, %v7938
        %v7941 = vor.u32 %v7939, %v7940
        %v7942 = vsub.s32 4294967266, %v7937
        %v7943 = vadd.s32 %v7942, 127
        %v7944 = vshll.u32 %v7943, 23
        %v7945 = vor.u32 4788187, %v7944
        %v7946 = vand.u32 2147483647, %v7945
        %v7948 = vcvt.s32.f32 %v7941
        %v7949 = vmul.f32 %v7948, %v7946
        %v7950 = vxor.u32 %v7949, 2147483648
        %v7951 = vsel %vm7830, %v7950, %v7949
        %v7952 = vsub.s32 4, %v7928
        %v7953 = vsel %vm7830, %v7952, %v7928
        %v7954 = vsel %vm7829, %v4943, %v7951
        %v7955 = vsel %vm7829, 0, %v7953
        %v7956 = vmul.f32 %v7954, %v7954
        %v7957 = vmul.f32 %v7956, -0.001358992
        %v7958 = vadd.f32 %v7957, 0.041655596
        %v7959 = vmul.f32 %v7956, %v7958
        %v7960 = vadd.f32 %v7959, -0.4999988
        %v7961 = vmul.f32 %v7956, %v7960
        %v7962 = vadd.f32 1.0, %v7961
        %v7963 = vmul.f32 %v7954, %v7954
        %v7964 = vmul.f32 %v7963, -0.00019511016
        %v7965 = vadd.f32 %v7964, 0.008332121
        %v7966 = vmul.f32 %v7963, %v7965
        %v7967 = vadd.f32 %v7966, -0.16666654
        %v7968 = vmul.f32 %v7963, %v7967
        %v7969 = vadd.f32 %v7968, 1.0
        %v7970 = vmul.f32 %v7969, %v7954
        %vm7971 = vweird.f32 %v4943
        %v7972 = vadd.s32 %v7955, 3
        %v7973 = vand.u32 %v7972, 3
        %vm7974 = vcmp.lt.s32.totalorder %v7973, 2
        %vm7975 = vcmp.eq.s32.totalorder %v7973, 0
        %v7976 = vxor.u32 %v7970, 2147483648
        %v7977 = vsel %vm7975, %v7962, %v7976
        %vm7978 = vcmp.eq.s32.totalorder %v7973, 2
        %v7979 = vxor.u32 %v7962, 2147483648
        %v7980 = vsel %vm7978, %v7979, %v7970
        %v7981 = vsel %vm7974, %v7977, %v7980
        %v7982 = vsel %vm7971, nan, %v7981
        %v7983 = vand.u32 2147483647, %v5284
        %vm7984 = vcmp.le.f32.partialorder %v7983, 0.7853982
        %vm7985 = vcmp.lt.s32.totalorder %v5284, 0
        %v7986 = vand.u32 %v5284, 2139095040
        %v7987 = vshrl.u32 %v7986, 23
        %v7988 = vsub.s32 %v7987, 127
        %v7989 = vand.u32 2147483647, %v5284
        %v7990 = vand.u32 %v7989, 8388607
        %v7991 = vor.u32 %v7990, 8388608
        %v7992 = vsub.s32 0, %v7991
        %v7993 = vadd.s32 %v7988, 1
        %vm7994 = vcmp.gt.s32.totalorder %v7993, 0
        %v7995 = vsel %vm7994, %v7993, 0
        %v7996 = vshrl.u32 %v7995, 5
        %v7997 = vand.u32 %v7995, 31
        %v7998 = vsub.s32 32, %v7997
        %v7999 = vshrl.u32 683565275, %v7998
        %v8000 = vshll.u32 683565275, %v7997
        %v8001 = vshrl.u32 2475754826, %v7998
        %v8002 = vor.u32 %v8000, %v8001
        %v8003 = vshll.u32 2475754826, %v7997
        %v8004 = vshrl.u32 2131351028, %v7998
        %v8005 = vor.u32 %v8003, %v8004
        %v8006 = vshll.u32 2131351028, %v7997
        %v8007 = vshrl.u32 2102212464, %v7998
        %v8008 = vor.u32 %v8006, %v8007
        %v8009 = vshll.u32 2102212464, %v7997
        %v8010 = vshrl.u32 920167782, %v7998
        %v8011 = vor.u32 %v8009, %v8010
        %v8012 = vshll.u32 920167782, %v7997
        %v8013 = vshrl.u32 1326507024, %v7998
        %v8014 = vor.u32 %v8012, %v8013
        %vm8015 = vcmp.lt.s32.totalorder %v7996, 1
        %vm8016 = vcmp.lt.s32.totalorder %v7996, 2
        %vm8017 = vcmp.lt.s32.totalorder %v7996, 3
        %vm8018 = vcmp.lt.s32.totalorder %v7996, 4
        %v8019 = vsel %vm8015, %v7999, %v8002
        %v8020 = vsel %vm8018, %v8008, 2102212464
        %v8021 = vsel %vm8017, %v8005, %v8020
        %v8022 = vsel %vm8016, %v8019, %v8021
        %v8023 = vsel %vm8015, %v8002, %v8005
        %v8024 = vsel %vm8018, %v8011, 920167782
        %v8025 = vsel %vm8017, %v8008, %v8024
        %v8026 = vsel %vm8016, %v8023, %v8025
        %v8027 = vsel %vm8015, %v8005, %v8008
        %v8028 = vsel %vm8018, %v8014, 1326507024
        %v8029 = vsel %vm8017, %v8011, %v8028
        %v8030 = vsel %vm8016, %v8027, %v8029
        %v8031 = vshll.u32 %v7991, 8
        %v8032 = vand.u32 %v8031, 65535
        %v8033 = vshrl.u32 %v8031, 16
        %v8034 = vand.u32 %v8030, 65535
        %v8035 = vshrl.u32 %v8030, 16
        %v8036 = vmul.u32 %v8032, %v8034
        %v8037 = vmul.u32 %v8032, %v8035
        %v8038 = vmul.u32 %v8033, %v8034
        %v8039 = vmul.u32 %v8033, %v8035
        %v8040 = vshll.u32 %v8037, 16
        %v8041 = vshrl.u32 %v8037, 16
        %v8042 = vshll.u32 %v8038, 16
        %v8043 = vshrl.u32 %v8038, 16
        %vm8044 = vc.u32 %v8036, %v8040
        %v8045 = vsel %vm8044, 1, 0
        %v8046 = vadd.s32 %v8036, %v8040
        %v8047 = vadd.s32 %v8039, %v8045
        %vm8048 = vc.u32 %v8046, %v8042
        %v8049 = vsel %vm8048, 1, 0
        %v8050 = vadd.s32 %v8046, %v8042
        %v8051 = vadd.s32 %v8047, %v8049
        %v8052 = vadd.s32 %v8051, %v8041
        %v8053 = vadd.s32 %v8052, %v8043
        %v8054 = vand.u32 %v8031, 65535
        %v8055 = vshrl.u32 %v8031, 16
        %v8056 = vand.u32 %v8026, 65535
        %v8057 = vshrl.u32 %v8026, 16
        %v8058 = vmul.u32 %v8054, %v8056
        %v8059 = vmul.u32 %v8054, %v8057
        %v8060 = vmul.u32 %v8055, %v8056
        %v8061 = vmul.u32 %v8055, %v8057
        %v8062 = vshll.u32 %v8059, 16
        %v8063 = vshrl.u32 %v8059, 16
        %v8064 = vshll.u32 %v8060, 16
        %v8065 = vshrl.u32 %v8060, 16
        %vm8066 = vc.u32 %v8058, %v8062
        %v8067 = vsel %vm8066, 1, 0
        %v8068 = vadd.s32 %v8058, %v8062
        %v8069 = vadd.s32 %v8061, %v8067
        %vm8070 = vc.u32 %v8068, %v8064
        %v8071 = vsel %vm8070, 1, 0
        %v8072 = vadd.s32 %v8068, %v8064
        %v8073 = vadd.s32 %v8069, %v8071
        %v8074 = vadd.s32 %v8073, %v8063
        %v8075 = vadd.s32 %v8074, %v8065
        %v8076 = vmul.u32 %v8031, %v8022
        %v8077 = vadd.s32 %v8053, %v8072
        %vm8078 = vc.u32 %v8053, %v8072
        %v8079 = vadd.s32 %v8075, 1
        %v8080 = vsel %vm8078, %v8079, %v8075
        %v8081 = vadd.s32 %v8076, %v8080
        %v8082 = vadd.s32 %v8081, 536870912
        %v8083 = vshrl.u32 %v8082, 30
        %v8084 = vshll.u32 %v8083, 30
        %v8085 = vsub.s32 %v8081, %v8084
        %vm8086 = vcmp.lt.s32.totalorder %v8085, 0
        %v8087 = vsub.s32 0, %v8085
        %v8088 = vsel %vm8086, %v8087, %v8085
        %v8089 = vclz %v8088
        %v8090 = vsub.s32 %v8089, 2
        %vm8091 = vcmp.gt.s32.totalorder 0, %v8090
        %v8092 = vsel %vm8091, 0, %v8090
        %v8093 = vsub.s32 32, %v8092
        %v8094 = vshll.u32 %v8085, %v8092
        %v8095 = vshrl.u32 %v8077, %v8093
        %v8096 = vor.u32 %v8094, %v8095
        %v8097 = vsub.s32 4294967266, %v8092
        %v8098 = vadd.s32 %v8097, 127
        %v8099 = vshll.u32 %v8098, 23
        %v8100 = vor.u32 4788187, %v8099
        %v8101 = vand.u32 2147483647, %v8100
        %v8103 = vcvt.s32.f32 %v8096
        %v8104 = vmul.f32 %v8103, %v8101
        %v8105 = vxor.u32 %v8104, 2147483648
        %v8106 = vsel %vm7985, %v8105, %v8104
        %v8107 = vsub.s32 4, %v8083
        %v8108 = vsel %vm7985, %v8107, %v8083
        %v8109 = vsel %vm7984, %v5284, %v8106
        %v8110 = vsel %vm7984, 0, %v8108
        %v8111 = vmul.f32 %v8109, %v8109
        %v8112 = vmul.f32 %v8111, -0.001358992
        %v8113 = vadd.f32 %v8112, 0.041655596
        %v8114 = vmul.f32 %v8111, %v8113
        %v8115 = vadd.f32 %v8114, -0.4999988
        %v8116 = vmul.f32 %v8111, %v8115
        %v8117 = vadd.f32 1.0, %v8116
        %v8118 = vmul.f32 %v8109, %v8109
        %v8119 = vmul.f32 %v8118, -0.00019511016
        %v8120 = vadd.f32 %v8119, 0.008332121
        %v8121 = vmul.f32 %v8118, %v8120
        %v8122 = vadd.f32 %v8121, -0.16666654
        %v8123 = vmul.f32 %v8118, %v8122
        %v8124 = vadd.f32 %v8123, 1.0
        %v8125 = vmul.f32 %v8124, %v8109
        %vm8126 = vweird.f32 %v5284
        %v8127 = vadd.s32 %v8110, 3
        %v8128 = vand.u32 %v8127, 3
        %vm8129 = vcmp.lt.s32.totalorder %v8128, 2
        %vm8130 = vcmp.eq.s32.totalorder %v8128, 0
        %v8131 = vxor.u32 %v8125, 2147483648
        %v8132 = vsel %vm8130, %v8117, %v8131
        %vm8133 = vcmp.eq.s32.totalorder %v8128, 2
        %v8134 = vxor.u32 %v8117, 2147483648
        %v8135 = vsel %vm8133, %v8134, %v8125
        %v8136 = vsel %vm8129, %v8132, %v8135
        %v8137 = vsel %vm8126, nan, %v8136
        %v8138 = vand.u32 2147483647, %v5625
        %vm8139 = vcmp.le.f32.partialorder %v8138, 0.7853982
        %vm8140 = vcmp.lt.s32.totalorder %v5625, 0
        %v8141 = vand.u32 %v5625, 2139095040
        %v8142 = vshrl.u32 %v8141, 23
        %v8143 = vsub.s32 %v8142, 127
        %v8144 = vand.u32 2147483647, %v5625
        %v8145 = vand.u32 %v8144, 8388607
        %v8146 = vor.u32 %v8145, 8388608
        %v8147 = vsub.s32 0, %v8146
        %v8148 = vadd.s32 %v8143, 1
        %vm8149 = vcmp.gt.s32.totalorder %v8148, 0
        %v8150 = vsel %vm8149, %v8148, 0
        %v8151 = vshrl.u32 %v8150, 5
        %v8152 = vand.u32 %v8150, 31
        %v8153 = vsub.s32 32, %v8152
        %v8154 = vshrl.u32 683565275, %v8153
        %v8155 = vshll.u32 683565275, %v8152
        %v8156 = vshrl.u32 2475754826, %v8153
        %v8157 = vor.u32 %v8155, %v8156
        %v8158 = vshll.u32 2475754826, %v8152
        %v8159 = vshrl.u32 2131351028, %v8153
        %v8160 = vor.u32 %v8158, %v8159
        %v8161 = vshll.u32 2131351028, %v8152
        %v8162 = vshrl.u32 2102212464, %v8153
        %v8163 = vor.u32 %v8161, %v8162
        %v8164 = vshll.u32 2102212464, %v8152
        %v8165 = vshrl.u32 920167782, %v8153
        %v8166 = vor.u32 %v8164, %v8165
        %v8167 = vshll.u32 920167782, %v8152
        %v8168 = vshrl.u32 1326507024, %v8153
        %v8169 = vor.u32 %v8167, %v8168
        %vm8170 = vcmp.lt.s32.totalorder %v8151, 1
        %vm8171 = vcmp.lt.s32.totalorder %v8151, 2
        %vm8172 = vcmp.lt.s32.totalorder %v8151, 3
        %vm8173 = vcmp.lt.s32.totalorder %v8151, 4
        %v8174 = vsel %vm8170, %v8154, %v8157
        %v8175 = vsel %vm8173, %v8163, 2102212464
        %v8176 = vsel %vm8172, %v8160, %v8175
        %v8177 = vsel %vm8171, %v8174, %v8176
        %v8178 = vsel %vm8170, %v8157, %v8160
        %v8179 = vsel %vm8173, %v8166, 920167782
        %v8180 = vsel %vm8172, %v8163, %v8179
        %v8181 = vsel %vm8171, %v8178, %v8180
        %v8182 = vsel %vm8170, %v8160, %v8163
        %v8183 = vsel %vm8173, %v8169, 1326507024
        %v8184 = vsel %vm8172, %v8166, %v8183
        %v8185 = vsel %vm8171, %v8182, %v8184
        %v8186 = vshll.u32 %v8146, 8
        %v8187 = vand.u32 %v8186, 65535
        %v8188 = vshrl.u32 %v8186, 16
        %v8189 = vand.u32 %v8185, 65535
        %v8190 = vshrl.u32 %v8185, 16
        %v8191 = vmul.u32 %v8187, %v8189
        %v8192 = vmul.u32 %v8187, %v8190
        %v8193 = vmul.u32 %v8188, %v8189
        %v8194 = vmul.u32 %v8188, %v8190
        %v8195 = vshll.u32 %v8192, 16
        %v8196 = vshrl.u32 %v8192, 16
        %v8197 = vshll.u32 %v8193, 16
        %v8198 = vshrl.u32 %v8193, 16
        %vm8199 = vc.u32 %v8191, %v8195
        %v8200 = vsel %vm8199, 1, 0
        %v8201 = vadd.s32 %v8191, %v8195
        %v8202 = vadd.s32 %v8194, %v8200
        %vm8203 = vc.u32 %v8201, %v8197
        %v8204 = vsel %vm8203, 1, 0
        %v8205 = vadd.s32 %v8201, %v8197
        %v8206 = vadd.s32 %v8202, %v8204
        %v8207 = vadd.s32 %v8206, %v8196
        %v8208 = vadd.s32 %v8207, %v8198
        %v8209 = vand.u32 %v8186, 65535
        %v8210 = vshrl.u32 %v8186, 16
        %v8211 = vand.u32 %v8181, 65535
        %v8212 = vshrl.u32 %v8181, 16
        %v8213 = vmul.u32 %v8209, %v8211
        %v8214 = vmul.u32 %v8209, %v8212
        %v8215 = vmul.u32 %v8210, %v8211
        %v8216 = vmul.u32 %v8210, %v8212
        %v8217 = vshll.u32 %v8214, 16
        %v8218 = vshrl.u32 %v8214, 16
        %v8219 = vshll.u32 %v8215, 16
        %v8220 = vshrl.u32 %v8215, 16
        %vm8221 = vc.u32 %v8213, %v8217
        %v8222 = vsel %vm8221, 1, 0
        %v8223 = vadd.s32 %v8213, %v8217
        %v8224 = vadd.s32 %v8216, %v8222
        %vm8225 = vc.u32 %v8223, %v8219
        %v8226 = vsel %vm8225, 1, 0
        %v8227 = vadd.s32 %v8223, %v8219
        %v8228 = vadd.s32 %v8224, %v8226
        %v8229 = vadd.s32 %v8228, %v8218
        %v8230 = vadd.s32 %v8229, %v8220
        %v8231 = vmul.u32 %v8186, %v8177
        %v8232 = vadd.s32 %v8208, %v8227
        %vm8233 = vc.u32 %v8208, %v8227
        %v8234 = vadd.s32 %v8230, 1
        %v8235 = vsel %vm8233, %v8234, %v8230
        %v8236 = vadd.s32 %v8231, %v8235
        %v8237 = vadd.s32 %v8236, 536870912
        %v8238 = vshrl.u32 %v8237, 30
        %v8239 = vshll.u32 %v8238, 30
        %v8240 = vsub.s32 %v8236, %v8239
        %vm8241 = vcmp.lt.s32.totalorder %v8240, 0
        %v8242 = vsub.s32 0, %v8240
        %v8243 = vsel %vm8241, %v8242, %v8240
        %v8244 = vclz %v8243
        %v8245 = vsub.s32 %v8244, 2
        %vm8246 = vcmp.gt.s32.totalorder 0, %v8245
        %v8247 = vsel %vm8246, 0, %v8245
        %v8248 = vsub.s32 32, %v8247
        %v8249 = vshll.u32 %v8240, %v8247
        %v8250 = vshrl.u32 %v8232, %v8248
        %v8251 = vor.u32 %v8249, %v8250
        %v8252 = vsub.s32 4294967266, %v8247
        %v8253 = vadd.s32 %v8252, 127
        %v8254 = vshll.u32 %v8253, 23
        %v8255 = vor.u32 4788187, %v8254
        %v8256 = vand.u32 2147483647, %v8255
        %v8258 = vcvt.s32.f32 %v8251
        %v8259 = vmul.f32 %v8258, %v8256
        %v8260 = vxor.u32 %v8259, 2147483648
        %v8261 = vsel %vm8140, %v8260, %v8259
        %v8262 = vsub.s32 4, %v8238
        %v8263 = vsel %vm8140, %v8262, %v8238
        %v8264 = vsel %vm8139, %v5625, %v8261
        %v8265 = vsel %vm8139, 0, %v8263
        %v8266 = vmul.f32 %v8264, %v8264
        %v8267 = vmul.f32 %v8266, -0.001358992
        %v8268 = vadd.f32 %v8267, 0.041655596
        %v8269 = vmul.f32 %v8266, %v8268
        %v8270 = vadd.f32 %v8269, -0.4999988
        %v8271 = vmul.f32 %v8266, %v8270
        %v8272 = vadd.f32 1.0, %v8271
        %v8273 = vmul.f32 %v8264, %v8264
        %v8274 = vmul.f32 %v8273, -0.00019511016
        %v8275 = vadd.f32 %v8274, 0.008332121
        %v8276 = vmul.f32 %v8273, %v8275
        %v8277 = vadd.f32 %v8276, -0.16666654
        %v8278 = vmul.f32 %v8273, %v8277
        %v8279 = vadd.f32 %v8278, 1.0
        %v8280 = vmul.f32 %v8279, %v8264
        %vm8281 = vweird.f32 %v5625
        %v8282 = vadd.s32 %v8265, 3
        %v8283 = vand.u32 %v8282, 3
        %vm8284 = vcmp.lt.s32.totalorder %v8283, 2
        %vm8285 = vcmp.eq.s32.totalorder %v8283, 0
        %v8286 = vxor.u32 %v8280, 2147483648
        %v8287 = vsel %vm8285, %v8272, %v8286
        %vm8288 = vcmp.eq.s32.totalorder %v8283, 2
        %v8289 = vxor.u32 %v8272, 2147483648
        %v8290 = vsel %vm8288, %v8289, %v8280
        %v8291 = vsel %vm8284, %v8287, %v8290
        %v8292 = vsel %vm8281, nan, %v8291
        %v8293 = vand.u32 2147483647, %v5966
        %vm8294 = vcmp.le.f32.partialorder %v8293, 0.7853982
        %vm8295 = vcmp.lt.s32.totalorder %v5966, 0
        %v8296 = vand.u32 %v5966, 2139095040
        %v8297 = vshrl.u32 %v8296, 23
        %v8298 = vsub.s32 %v8297, 127
        %v8299 = vand.u32 2147483647, %v5966
        %v8300 = vand.u32 %v8299, 8388607
        %v8301 = vor.u32 %v8300, 8388608
        %v8302 = vsub.s32 0, %v8301
        %v8303 = vadd.s32 %v8298, 1
        %vm8304 = vcmp.gt.s32.totalorder %v8303, 0
        %v8305 = vsel %vm8304, %v8303, 0
        %v8306 = vshrl.u32 %v8305, 5
        %v8307 = vand.u32 %v8305, 31
        %v8308 = vsub.s32 32, %v8307
        %v8309 = vshrl.u32 683565275, %v8308
        %v8310 = vshll.u32 683565275, %v8307
        %v8311 = vshrl.u32 2475754826, %v8308
        %v8312 = vor.u32 %v8310, %v8311
        %v8313 = vshll.u32 2475754826, %v8307
        %v8314 = vshrl.u32 2131351028, %v8308
        %v8315 = vor.u32 %v8313, %v8314
        %v8316 = vshll.u32 2131351028, %v8307
        %v8317 = vshrl.u32 2102212464, %v8308
        %v8318 = vor.u32 %v8316, %v8317
        %v8319 = vshll.u32 2102212464, %v8307
        %v8320 = vshrl.u32 920167782, %v8308
        %v8321 = vor.u32 %v8319, %v8320
        %v8322 = vshll.u32 920167782, %v8307
        %v8323 = vshrl.u32 1326507024, %v8308
        %v8324 = vor.u32 %v8322, %v8323
        %vm8325 = vcmp.lt.s32.totalorder %v8306, 1
        %vm8326 = vcmp.lt.s32.totalorder %v8306, 2
        %vm8327 = vcmp.lt.s32.totalorder %v8306, 3
        %vm8328 = vcmp.lt.s32.totalorder %v8306, 4
        %v8329 = vsel %vm8325, %v8309, %v8312
        %v8330 = vsel %vm8328, %v8318, 2102212464
        %v8331 = vsel %vm8327, %v8315, %v8330
        %v8332 = vsel %vm8326, %v8329, %v8331
        %v8333 = vsel %vm8325, %v8312, %v8315
        %v8334 = vsel %vm8328, %v8321, 920167782
        %v8335 = vsel %vm8327, %v8318, %v8334
        %v8336 = vsel %vm8326, %v8333, %v8335
        %v8337 = vsel %vm8325, %v8315, %v8318
        %v8338 = vsel %vm8328, %v8324, 1326507024
        %v8339 = vsel %vm8327, %v8321, %v8338
        %v8340 = vsel %vm8326, %v8337, %v8339
        %v8341 = vshll.u32 %v8301, 8
        %v8342 = vand.u32 %v8341, 65535
        %v8343 = vshrl.u32 %v8341, 16
        %v8344 = vand.u32 %v8340, 65535
        %v8345 = vshrl.u32 %v8340, 16
        %v8346 = vmul.u32 %v8342, %v8344
        %v8347 = vmul.u32 %v8342, %v8345
        %v8348 = vmul.u32 %v8343, %v8344
        %v8349 = vmul.u32 %v8343, %v8345
        %v8350 = vshll.u32 %v8347, 16
        %v8351 = vshrl.u32 %v8347, 16
        %v8352 = vshll.u32 %v8348, 16
        %v8353 = vshrl.u32 %v8348, 16
        %vm8354 = vc.u32 %v8346, %v8350
        %v8355 = vsel %vm8354, 1, 0
        %v8356 = vadd.s32 %v8346, %v8350
        %v8357 = vadd.s32 %v8349, %v8355
        %vm8358 = vc.u32 %v8356, %v8352
        %v8359 = vsel %vm8358, 1, 0
        %v8360 = vadd.s32 %v8356, %v8352
        %v8361 = vadd.s32 %v8357, %v8359
        %v8362 = vadd.s32 %v8361, %v8351
        %v8363 = vadd.s32 %v8362, %v8353
        %v8364 = vand.u32 %v8341, 65535
        %v8365 = vshrl.u32 %v8341, 16
        %v8366 = vand.u32 %v8336, 65535
        %v8367 = vshrl.u32 %v8336, 16
        %v8368 = vmul.u32 %v8364, %v8366
        %v8369 = vmul.u32 %v8364, %v8367
        %v8370 = vmul.u32 %v8365, %v8366
        %v8371 = vmul.u32 %v8365, %v8367
        %v8372 = vshll.u32 %v8369, 16
        %v8373 = vshrl.u32 %v8369, 16
        %v8374 = vshll.u32 %v8370, 16
        %v8375 = vshrl.u32 %v8370, 16
        %vm8376 = vc.u32 %v8368, %v8372
        %v8377 = vsel %vm8376, 1, 0
        %v8378 = vadd.s32 %v8368, %v8372
        %v8379 = vadd.s32 %v8371, %v8377
        %vm8380 = vc.u32 %v8378, %v8374
        %v8381 = vsel %vm8380, 1, 0
        %v8382 = vadd.s32 %v8378, %v8374
        %v8383 = vadd.s32 %v8379, %v8381
        %v8384 = vadd.s32 %v8383, %v8373
        %v8385 = vadd.s32 %v8384, %v8375
        %v8386 = vmul.u32 %v8341, %v8332
        %v8387 = vadd.s32 %v8363, %v8382
        %vm8388 = vc.u32 %v8363, %v8382
        %v8389 = vadd.s32 %v8385, 1
        %v8390 = vsel %vm8388, %v8389, %v8385
        %v8391 = vadd.s32 %v8386, %v8390
        %v8392 = vadd.s32 %v8391, 536870912
        %v8393 = vshrl.u32 %v8392, 30
        %v8394 = vshll.u32 %v8393, 30
        %v8395 = vsub.s32 %v8391, %v8394
        %vm8396 = vcmp.lt.s32.totalorder %v8395, 0
        %v8397 = vsub.s32 0, %v8395
        %v8398 = vsel %vm8396, %v8397, %v8395
        %v8399 = vclz %v8398
        %v8400 = vsub.s32 %v8399, 2
        %vm8401 = vcmp.gt.s32.totalorder 0, %v8400
        %v8402 = vsel %vm8401, 0, %v8400
        %v8403 = vsub.s32 32, %v8402
        %v8404 = vshll.u32 %v8395, %v8402
        %v8405 = vshrl.u32 %v8387, %v8403
        %v8406 = vor.u32 %v8404, %v8405
        %v8407 = vsub.s32 4294967266, %v8402
        %v8408 = vadd.s32 %v8407, 127
        %v8409 = vshll.u32 %v8408, 23
        %v8410 = vor.u32 4788187, %v8409
        %v8411 = vand.u32 2147483647, %v8410
        %v8413 = vcvt.s32.f32 %v8406
        %v8414 = vmul.f32 %v8413, %v8411
        %v8415 = vxor.u32 %v8414, 2147483648
        %v8416 = vsel %vm8295, %v8415, %v8414
        %v8417 = vsub.s32 4, %v8393
        %v8418 = vsel %vm8295, %v8417, %v8393
        %v8419 = vsel %vm8294, %v5966, %v8416
        %v8420 = vsel %vm8294, 0, %v8418
        %v8421 = vmul.f32 %v8419, %v8419
        %v8422 = vmul.f32 %v8421, -0.001358992
        %v8423 = vadd.f32 %v8422, 0.041655596
        %v8424 = vmul.f32 %v8421, %v8423
        %v8425 = vadd.f32 %v8424, -0.4999988
        %v8426 = vmul.f32 %v8421, %v8425
        %v8427 = vadd.f32 1.0, %v8426
        %v8428 = vmul.f32 %v8419, %v8419
        %v8429 = vmul.f32 %v8428, -0.00019511016
        %v8430 = vadd.f32 %v8429, 0.008332121
        %v8431 = vmul.f32 %v8428, %v8430
        %v8432 = vadd.f32 %v8431, -0.16666654
        %v8433 = vmul.f32 %v8428, %v8432
        %v8434 = vadd.f32 %v8433, 1.0
        %v8435 = vmul.f32 %v8434, %v8419
        %vm8436 = vweird.f32 %v5966
        %v8437 = vadd.s32 %v8420, 3
        %v8438 = vand.u32 %v8437, 3
        %vm8439 = vcmp.lt.s32.totalorder %v8438, 2
        %vm8440 = vcmp.eq.s32.totalorder %v8438, 0
        %v8441 = vxor.u32 %v8435, 2147483648
        %v8442 = vsel %vm8440, %v8427, %v8441
        %vm8443 = vcmp.eq.s32.totalorder %v8438, 2
        %v8444 = vxor.u32 %v8427, 2147483648
        %v8445 = vsel %vm8443, %v8444, %v8435
        %v8446 = vsel %vm8439, %v8442, %v8445
        %v8447 = vsel %vm8436, nan, %v8446
        %8448 = vst [vmem:[%s218] sm:$0xff] %v6122
        %8449 = vst [vmem:[%s218 + $0x8] sm:$0xff] %v6277
        %8450 = vst [vmem:[%s218 + $0x10] sm:$0xff] %v6432
        %8451 = vst [vmem:[%s218 + $0x18] sm:$0xff] %v6587
        %8452 = vst [vmem:[%s218 + $0x20] sm:$0xff] %v6742
        %8453 = vst [vmem:[%s218 + $0x28] sm:$0xff] %v6897
        %8454 = vst [vmem:[%s218 + $0x30] sm:$0xff] %v7052
        %8455 = vst [vmem:[%s218 + $0x38] sm:$0xff] %v7207
        %8456 = vst [vmem:[%s218 + $0x40] sm:$0xff] %v7362
        %8457 = vst [vmem:[%s218 + $0x48] sm:$0xff] %v7517
        %8458 = vst [vmem:[%s218 + $0x50] sm:$0xff] %v7672
        %8459 = vst [vmem:[%s218 + $0x58] sm:$0xff] %v7827
        %8460 = vst [vmem:[%s218 + $0x60] sm:$0xff] %v7982
        %8461 = vst [vmem:[%s218 + $0x68] sm:$0xff] %v8137
        %8462 = vst [vmem:[%s218 + $0x70] sm:$0xff] %v8292
        %8463 = vst [vmem:[%s218 + $0x78] sm:$0xff] %v8447
        %s8464 = sand.u32 %s97, 1
        %s8465 = scalar_lea.sflag [#allocation4], %s8464
        %s8466 = sand.u32 %s97, 1
        %s8467 = smul.addr %s8466, 128
        %s8468 = scalar_lea.vmem [#allocation8], %s8467
        // Predicated region
        $region45: #{tpu_custom_call.1} parent=31 // pred_check
          %p8469 = pneg %p107
        $region46: #{tpu_custom_call.1} parent=31 // pred_check_branch
          %8471 = sbr.rel (%p8469) target = $region48
        $region47: #{tpu_custom_call.1} parent=31 // pred_region
          %8473 = vsyncadd %s8465, 0
          %s8474 = smul.addr %s21, 16
          %s8475 = smul.addr %s8474, 8
          %s8476 = scalar_lea.hbm %s3, %s8475
          %s8478 = sshll.u32 %s8468, 4
          %s8479 = int_to_ptr.vmem [resolvable:$true] %s8478
          %s8480 = sshll.u32 %s8476, 4
          %s8481 = int_to_ptr.hbm [resolvable:$true] %s8480
          %8483 = dma.vmem_to_hbm [thread:$0]  %s8479, 2048, %s8481, %s8465
        $region48: #{tpu_custom_call.1} parent=31 // pred_fallthru
          _
      $region32: #{tpu_custom_call.1} parent=5 // pred_fallthru
        _
      %p8484 = scmp.le.s32.totalorder 2, %s16
      // Predicated region
      $region49: #{tpu_custom_call.1} parent=5 // pred_check
        %p8485 = pneg %p8484
      $region50: #{tpu_custom_call.1} parent=5 // pred_check_branch
        %8487 = sbr.rel (%p8485) target = $region52
      $region51: #{tpu_custom_call.1} parent=5 // pred_region
        %s8488 = ssub.s32 %s16, 2
        // Predicated region
        $region53: #{tpu_custom_call.1} parent=51 // pred_check
          %p8489 = pneg %p113
        $region54: #{tpu_custom_call.1} parent=51 // pred_check_branch
          %8491 = sbr.rel (%p8489) target = $region56
        $region55: #{tpu_custom_call.1} parent=51 // pred_region
          %s8492 = sand.u32 %s98, 1
          %s8493 = scalar_lea.sflag [#allocation4], %s8492
          %s8494 = sand.u32 %s98, 1
          %s8495 = smul.addr %s8494, 128
          %s8496 = scalar_lea.vmem [#allocation8], %s8495
          %8498 = dma.done %s8493, 2048
        $region56: #{tpu_custom_call.1} parent=51 // pred_fallthru
          _
      $region52: #{tpu_custom_call.1} parent=5 // pred_fallthru
        _
    $region6: #{tpu_custom_call.1} parent=1 // loop_footer
      %s20 = sadd.s32 1, %s16
    $region7: #{tpu_custom_call.1} parent=1 // loop_footer_branch
      %15 = sbr.rel target = $region3
    $region8: #{tpu_custom_call.1} parent=1 // loop_exit
      _
    %8499 = vsyncpa [#allocation3], 1
    %s8500 = scalar_lea.sflag [#allocation3], 1
    %8501 = vsyncpa %s8500, 1
    %8502 = vsyncpa [#allocation6], 1
    %8503 = vsyncpa [#allocation4], 1
    %s8504 = scalar_lea.sflag [#allocation4], 1
    %8505 = vsyncpa %s8504, 1

</llo_original>
